<compile_context>
chip_gen: v6e
topology: v6e:2x2x1
jax: 0.10.0
libtpu: 0.0.40
codegen_flags: <defaults>
</compile_context>

<pallas_src>
import jax
import jax.numpy as jnp
from jax.experimental import pallas as pl
from jax.experimental.pallas import tpu as pltpu

BN_EPS = 1e-5

# ---------------------------------------------------------------------------
# Phase-decomposition tables for ConvTranspose2d(kernel=8, stride=4, pad=2).
# For output phase r = oh % 4, the only kernel rows kh with
# (oh + pad - kh) % stride == 0 are the two in _K_TAP[r]; the matching input
# row is ih = qh + d with d = _D_OFF[r][j] (qh = oh // 4).  Same for W axis.
# ---------------------------------------------------------------------------
_K_TAP = ((2, 6), (3, 7), (0, 4), (1, 5))
_D_OFF = ((0, -1), (0, -1), (1, 0), (1, 0))


def _phase_taps(p):
    """Phase p = rh*4 + rw -> [(kh, kw, a, b)] with a/b = halo-padded input
    offsets (d + 1) in {0,1,2}, fixed order j = jh*2 + jw."""
    rh, rw = p // 4, p % 4
    taps = []
    for jh in range(2):
        for jw in range(2):
            taps.append((_K_TAP[rh][jh], _K_TAP[rw][jw],
                         _D_OFF[rh][jh] + 1, _D_OFF[rw][jw] + 1))
    return taps


# ---------------------------------------------------------------------------
# Kernel 1: b_01 = depthwise ConvT(k=4,s=1,p=0) on 1x1 input + 1x1 pointwise
#           + BatchNorm (train stats) + ReLU, fully fused.
# x: (N, C0), wd: (16, C0), wp: (C0, C1), gamma/beta: (1, C1)
# o: (N*16, C1)   row = n*16 + kh*4 + kw
# ---------------------------------------------------------------------------
def _block1_kernel(x_ref, wd_ref, wp_ref, g_ref, b_ref, o_ref):
    x = x_ref[...]                                    # (N, C0)
    wd = wd_ref[...]                                  # (16, C0)
    n, c0 = x.shape
    dw = x[:, None, :] * wd[None, :, :]               # (N, 16, C0)
    y = jnp.dot(dw.reshape(n * 16, c0), wp_ref[...],
                preferred_element_type=jnp.float32)   # (N*16, C1)
    mean = jnp.mean(y, axis=0, keepdims=True)
    var = jnp.mean((y - mean) ** 2, axis=0, keepdims=True)
    yn = (y - mean) * jax.lax.rsqrt(var + BN_EPS) * g_ref[...] + b_ref[...]
    o_ref[...] = jnp.maximum(yn, 0.0)


# ---------------------------------------------------------------------------
# Kernel 2: b_03 = depthwise ConvT(k=8,s=4,p=2) via phase decomposition
#           + 1x1 pointwise + BN (train stats) + ReLU.
# x: (N, 6, 6, C1) halo-padded NHWC, wd: (16, 4, C1) per-phase taps,
# wp: (C1, C2), gamma/beta: (1, C2)
# o: (16, N*16, C2) phase-major  (p = rh*4+rw, row = n*16 + qh*4 + qw)
# ---------------------------------------------------------------------------
def _block3_kernel(x_ref, wd_ref, wp_ref, g_ref, b_ref, o_ref):
    x = x_ref[...]                                    # (N, 6, 6, C1)
    n, _, _, c1 = x.shape
    c2 = o_ref.shape[2]
    rows = n * 16
    total = 16 * rows
    sum_y = jnp.zeros((1, c2), jnp.float32)
    sum_y2 = jnp.zeros((1, c2), jnp.float32)
    for p in range(16):
        acc = jnp.zeros((n, 4, 4, c1), jnp.float32)   # tiny per-phase acc
        for j, (_, _, a, b) in enumerate(_phase_taps(p)):
            acc = acc + x[:, a:a + 4, b:b + 4, :] * wd_ref[p, j]
        y = jnp.dot(acc.reshape(rows, c1), wp_ref[...],
                    preferred_element_type=jnp.float32)          # (rows, C2)
        o_ref[p] = y                                   # stash raw activations
        sum_y = sum_y + jnp.sum(y, axis=0, keepdims=True)
        sum_y2 = sum_y2 + jnp.sum(y * y, axis=0, keepdims=True)
    mean = sum_y / total
    var = sum_y2 / total - mean * mean                 # biased batch variance
    scale = jax.lax.rsqrt(var + BN_EPS) * g_ref[...]
    shift = b_ref[...] - mean * scale
    for p in range(16):
        o_ref[p] = jnp.maximum(o_ref[p] * scale + shift, 0.0)


# ---------------------------------------------------------------------------
# Kernel 3: b_05 = ConvTranspose2d(C2 -> 3, k=8, s=4, p=2) + bias, + tanh,
#           phase-decomposed, channel-major (lane-dense) output.
# s:   (1, 9, C2, 256)  nine (a,b)-shifted channel-major slabs of one sample
# w:   (16, co, 4*C2)   per-phase folded weights
# bias:(co, 1)
# pre/out: (1, 16, co, 256)   [phase, out-channel, qh*16+qw]
# ---------------------------------------------------------------------------
def _block5_kernel(s_ref, w_ref, b_ref, pre_ref, out_ref):
    bias = b_ref[...]                                  # (co, 1)
    for p in range(16):
        slabs = [s_ref[0, 3 * a + b] for (_, _, a, b) in _phase_taps(p)]
        r = jnp.concatenate(slabs, axis=0)             # (4*C2, 256)
        y = jnp.dot(w_ref[p], r,
                    preferred_element_type=jnp.float32) + bias   # (co, 256)
        pre_ref[0, p] = y
        out_ref[0, p] = jnp.tanh(y)


# ---------------------------------------------------------------------------
# pallas_call wrappers (no oversized vmem requests)
# ---------------------------------------------------------------------------
def run_block1(x, wd, wpT, gamma, beta):
    n = x.shape[0]
    c1 = wpT.shape[1]
    return pl.pallas_call(
        _block1_kernel,
        out_shape=jax.ShapeDtypeStruct((n * 16, c1), jnp.float32),
    )(x, wd, wpT, gamma, beta)


def run_block3(xpad, wd3p, wp3T, gamma, beta):
    n = xpad.shape[0]
    c2 = wp3T.shape[1]
    return pl.pallas_call(
        _block3_kernel,
        out_shape=jax.ShapeDtypeStruct((16, n * 16, c2), jnp.float32),
    )(xpad, wd3p, wp3T, gamma, beta)


def run_block5(s9, w5p, bias):
    n, _, c2, _ = s9.shape
    co = w5p.shape[1]
    out_shape = (jax.ShapeDtypeStruct((n, 16, co, 256), jnp.float32),
                 jax.ShapeDtypeStruct((n, 16, co, 256), jnp.float32))
    return pl.pallas_call(
        _block5_kernel,
        out_shape=out_shape,
        grid=(n,),
        in_specs=[
            pl.BlockSpec((1, 9, c2, 256), lambda i: (i, 0, 0, 0)),
            pl.BlockSpec((16, co, 4 * c2), lambda i: (0, 0, 0)),
            pl.BlockSpec((co, 1), lambda i: (0, 0)),
        ],
        out_specs=(
            pl.BlockSpec((1, 16, co, 256), lambda i: (i, 0, 0, 0)),
            pl.BlockSpec((1, 16, co, 256), lambda i: (i, 0, 0, 0)),
        ),
        compiler_params=pltpu.CompilerParams(
            dimension_semantics=("parallel",)),
    )(s9, w5p, bias)


# ---------------------------------------------------------------------------
# Parameter init (deterministic; raw weights in PyTorch layout, then packed
# into the phase-folded layouts the kernels consume).
# ---------------------------------------------------------------------------
def init_params(key, num_classes, embed_size, z_dim, latent_size,
                img_channel, gen_dim):
    c0 = z_dim + embed_size + latent_size
    c1 = gen_dim * 16
    c2 = gen_dim * 4
    ks = jax.random.split(key, 7)

    embed_w = jax.random.normal(ks[0], (num_classes, embed_size), jnp.float32)
    # b_01: depthwise ConvT weight (C0,1,4,4) + pointwise (C1,C0,1,1), no bias
    wd1 = jax.random.normal(ks[1], (c0, 4, 4), jnp.float32) * 0.1
    wp1 = jax.random.normal(ks[2], (c1, c0), jnp.float32) / jnp.sqrt(c0)
    # b_03: depthwise ConvT weight (C1,1,8,8) + pointwise (C2,C1,1,1), no bias
    wd3 = jax.random.normal(ks[3], (c1, 8, 8), jnp.float32) * 0.1
    wp3 = jax.random.normal(ks[4], (c2, c1), jnp.float32) / jnp.sqrt(c1)
    # b_05: ConvTranspose2d weight (C2, img_channel, 8, 8) + bias
    w5 = jax.random.normal(ks[5], (c2, img_channel, 8, 8), jnp.float32) * 0.05
    b5 = jax.random.normal(ks[6], (img_channel,), jnp.float32) * 0.01

    # Per-phase folded depthwise taps for b_03: (16, 4, C1)
    wd3p = jnp.stack([
        jnp.stack([wd3[:, kh, kw] for (kh, kw, _, _) in _phase_taps(p)],
                  axis=0)
        for p in range(16)], axis=0)

    # Per-phase folded full-conv weights for b_05: (16, co, 4*C2)
    w5p = jnp.stack([
        jnp.concatenate([w5[:, :, kh, kw].T                 # (co, C2)
                         for (kh, kw, _, _) in _phase_taps(p)], axis=1)
        for p in range(16)], axis=0)

    return dict(
        embed_w=embed_w,
        # block1: taps-major, channels-last (no flip needed for 1x1 input)
        wd1=wd1.transpose(1, 2, 0).reshape(16, c0),
        wp1T=wp1.T,
        gamma1=jnp.ones((1, c1), jnp.float32),
        beta1=jnp.zeros((1, c1), jnp.float32),
        wd3p=wd3p,
        wp3T=wp3.T,
        gamma3=jnp.ones((1, c2), jnp.float32),
        beta3=jnp.zeros((1, c2), jnp.float32),
        w5p=w5p,
        bias5=b5.reshape(img_channel, 1),
    )


# ---------------------------------------------------------------------------
# Full forward (returns p_stem, l_01, l_03, l_05, out) — all NCHW like PyTorch
# ---------------------------------------------------------------------------
def generator3layers_forward(params, zz, labels, semantic_latent):
    n = zz.shape[0]
    # embedding lookup + concat (XLA glue)
    emb = params["embed_w"][labels]                                  # (N, E)
    p_stem_vec = jnp.concatenate(
        [zz.reshape(n, -1), emb, semantic_latent], axis=1)           # (N, C0)
    p_stem = p_stem_vec[:, :, None, None]                            # NCHW

    # ---- b_01 ----
    l01 = run_block1(p_stem_vec, params["wd1"], params["wp1T"],
                     params["gamma1"], params["beta1"])              # (N*16,C1)
    c1 = l01.shape[1]
    l01_nhwc = l01.reshape(n, 4, 4, c1)
    l_01 = l01_nhwc.transpose(0, 3, 1, 2)                            # NCHW

    # ---- b_03 : halo-padded un-expanded input, phase-major output ----
    x3 = jnp.pad(l01_nhwc, ((0, 0), (1, 1), (1, 1), (0, 0)))         # (N,6,6,C1)
    y3 = run_block3(x3, params["wd3p"], params["wp3T"],
                    params["gamma3"], params["beta3"])               # (16,N*16,C2)
    c2 = y3.shape[2]
    l03_nhwc = (y3.reshape(4, 4, n, 4, 4, c2)
                  .transpose(2, 3, 0, 4, 1, 5)
                  .reshape(n, 16, 16, c2))
    l_03 = l03_nhwc.transpose(0, 3, 1, 2)                            # (N,C2,16,16)

    # ---- b_05 + tanh : channel-major shifted slabs (layout plumbing only) ----
    xt_pad = jnp.pad(l_03, ((0, 0), (0, 0), (1, 1), (1, 1)))         # (N,C2,18,18)
    s9 = jnp.stack([xt_pad[:, :, a:a + 16, b:b + 16].reshape(n, c2, 256)
                    for a in range(3) for b in range(3)], axis=1)    # (N,9,C2,256)
    pre, tanh_out = run_block5(s9, params["w5p"], params["bias5"])   # (N,16,co,256)
    co = pre.shape[2]

    def unscramble5(t):
        t = t.reshape(n, 4, 4, co, 16, 16)        # (n, rh, rw, co, qh, qw)
        t = t.transpose(0, 3, 4, 1, 5, 2)         # (n, co, qh, rh, qw, rw)
        return t.reshape(n, co, 64, 64)

    l_05 = unscramble5(pre)
    out = unscramble5(tanh_out)
    return p_stem, l_01, l_03, l_05, out


if __name__ == "__main__":
    key = jax.random.PRNGKey(0)
    N = 2
    num_classes, embed_size, z_dim, latent_size = 10, 16, 16, 32
    img_channel, gen_dim = 3, 8

    kp, kz, kl, ks = jax.random.split(key, 4)
    params = init_params(kp, num_classes, embed_size, z_dim, latent_size,
                         img_channel, gen_dim)
    zz = jax.random.normal(kz, (N, z_dim, 1, 1), jnp.float32)
    labels = jax.random.randint(kl, (N,), 0, num_classes, dtype=jnp.int32)
    semantic_latent = jax.random.normal(ks, (N, latent_size), jnp.float32)

    fwd = jax.jit(generator3layers_forward)
    p_stem, l_01, l_03, l_05, out = jax.block_until_ready(
        fwd(params, zz, labels, semantic_latent))

    assert p_stem.shape == (N, z_dim + embed_size + latent_size, 1, 1)
    assert l_01.shape == (N, gen_dim * 16, 4, 4)
    assert l_03.shape == (N, gen_dim * 4, 16, 16)
    assert l_05.shape == (N, img_channel, 64, 64)
    assert out.shape == (N, img_channel, 64, 64)
    assert bool(jnp.all(jnp.isfinite(out)))
    print("KERNEL_OK")
</pallas_src>

<mosaic_0001>
module attributes {stable_mosaic.version = 11 : i64} {
  func.func @_block1_kernel(%arg0: memref<2x64xf32, #tpu.memory_space<vmem>>, %arg1: memref<16x64xf32, #tpu.memory_space<vmem>>, %arg2: memref<64x128xf32, #tpu.memory_space<vmem>>, %arg3: memref<1x128xf32, #tpu.memory_space<vmem>>, %arg4: memref<1x128xf32, #tpu.memory_space<vmem>>, %arg5: memref<32x128xf32, #tpu.memory_space<vmem>>) attributes {dimension_semantics = [], scalar_prefetch = 0 : i64, scratch_operands = 0 : i64, tpu.core_type = #tpu.core_type<tc>} {
    %c0 = arith.constant 0 : index
    %c0_0 = arith.constant 0 : index
    %0 = vector.load %arg0[%c0, %c0_0] : memref<2x64xf32, #tpu.memory_space<vmem>>, vector<2x64xf32>
    %c0_1 = arith.constant 0 : index
    %c0_2 = arith.constant 0 : index
    %1 = vector.load %arg1[%c0_1, %c0_2] : memref<16x64xf32, #tpu.memory_space<vmem>>, vector<16x64xf32>
    %2 = vector.shape_cast %0 : vector<2x64xf32> to vector<2x1x64xf32>
    %3 = vector.shape_cast %1 : vector<16x64xf32> to vector<1x16x64xf32>
    %4 = vector.broadcast %2 : vector<2x1x64xf32> to vector<2x16x64xf32>
    %5 = vector.broadcast %3 : vector<1x16x64xf32> to vector<2x16x64xf32>
    %6 = arith.mulf %4, %5 : vector<2x16x64xf32>
    %7 = vector.shape_cast %6 : vector<2x16x64xf32> to vector<32x64xf32>
    %c0_3 = arith.constant 0 : index
    %c0_4 = arith.constant 0 : index
    %8 = vector.load %arg2[%c0_3, %c0_4] : memref<64x128xf32, #tpu.memory_space<vmem>>, vector<64x128xf32>
    %cst = arith.constant dense<0.000000e+00> : vector<32x128xf32>
    %9 = tpu.matmul %7, %8, %cst {dimension_numbers = #tpu.dot_dimension_numbers<[1], [0], [0], [1], [0, 0, 1, 1], [], []>} : vector<32x64xf32>, vector<64x128xf32>, vector<32x128xf32> -> vector<32x128xf32>
    %cst_5 = arith.constant dense<0.000000e+00> : vector<128xf32>
    %10 = vector.multi_reduction <add>, %9, %cst_5 [0] : vector<32x128xf32> to vector<128xf32>
    %11 = vector.shape_cast %10 : vector<128xf32> to vector<1x128xf32>
    %cst_6 = arith.constant 3.200000e+01 : f32
    %12 = vector.broadcast %cst_6 : f32 to vector<1x128xf32>
    %13 = arith.divf %11, %12 : vector<1x128xf32>
    %14 = vector.broadcast %13 : vector<1x128xf32> to vector<32x128xf32>
    %15 = arith.subf %9, %14 : vector<32x128xf32>
    %16 = arith.mulf %15, %15 : vector<32x128xf32>
    %cst_7 = arith.constant dense<0.000000e+00> : vector<128xf32>
    %17 = vector.multi_reduction <add>, %16, %cst_7 [0] : vector<32x128xf32> to vector<128xf32>
    %18 = vector.shape_cast %17 : vector<128xf32> to vector<1x128xf32>
    %cst_8 = arith.constant 3.200000e+01 : f32
    %19 = vector.broadcast %cst_8 : f32 to vector<1x128xf32>
    %20 = arith.divf %18, %19 : vector<1x128xf32>
    %21 = vector.broadcast %13 : vector<1x128xf32> to vector<32x128xf32>
    %22 = arith.subf %9, %21 : vector<32x128xf32>
    %cst_9 = arith.constant 9.99999974E-6 : f32
    %23 = vector.broadcast %cst_9 : f32 to vector<1x128xf32>
    %24 = arith.addf %20, %23 : vector<1x128xf32>
    %25 = math.rsqrt %24 : vector<1x128xf32>
    %26 = vector.broadcast %25 : vector<1x128xf32> to vector<32x128xf32>
    %27 = arith.mulf %22, %26 : vector<32x128xf32>
    %c0_10 = arith.constant 0 : index
    %c0_11 = arith.constant 0 : index
    %28 = vector.load %arg3[%c0_10, %c0_11] : memref<1x128xf32, #tpu.memory_space<vmem>>, vector<1x128xf32>
    %29 = vector.broadcast %28 : vector<1x128xf32> to vector<32x128xf32>
    %30 = arith.mulf %27, %29 : vector<32x128xf32>
    %c0_12 = arith.constant 0 : index
    %c0_13 = arith.constant 0 : index
    %31 = vector.load %arg4[%c0_12, %c0_13] : memref<1x128xf32, #tpu.memory_space<vmem>>, vector<1x128xf32>
    %32 = vector.broadcast %31 : vector<1x128xf32> to vector<32x128xf32>
    %33 = arith.addf %30, %32 : vector<32x128xf32>
    %cst_14 = arith.constant 0.000000e+00 : f32
    %34 = vector.broadcast %cst_14 : f32 to vector<32x128xf32>
    %35 = arith.maximumf %33, %34 : vector<32x128xf32>
    %c0_15 = arith.constant 0 : index
    %c0_16 = arith.constant 0 : index
    %36 = vector.load %arg5[%c0_15, %c0_16] : memref<32x128xf32, #tpu.memory_space<vmem>>, vector<32x128xf32>
    tpu.vector_store %arg5[%c0_15, %c0_16], %35 {strides = array<i32>} : memref<32x128xf32, #tpu.memory_space<vmem>>, vector<32x128xf32>,
    return
  }
}

module attributes {stable_mosaic.version = 11 : i64} {
  func.func @_block3_kernel(%arg0: memref<2x6x6x128xf32, #tpu.memory_space<vmem>>, %arg1: memref<16x4x128xf32, #tpu.memory_space<vmem>>, %arg2: memref<128x32xf32, #tpu.memory_space<vmem>>, %arg3: memref<1x32xf32, #tpu.memory_space<vmem>>, %arg4: memref<1x32xf32, #tpu.memory_space<vmem>>, %arg5: memref<16x32x32xf32, #tpu.memory_space<vmem>>) attributes {dimension_semantics = [], scalar_prefetch = 0 : i64, scratch_operands = 0 : i64, tpu.core_type = #tpu.core_type<tc>} {
    %c0 = arith.constant 0 : index
    %c0_0 = arith.constant 0 : index
    %c0_1 = arith.constant 0 : index
    %c0_2 = arith.constant 0 : index
    %0 = vector.load %arg0[%c0, %c0_0, %c0_1, %c0_2] : memref<2x6x6x128xf32, #tpu.memory_space<vmem>>, vector<2x6x6x128xf32>
    %cst = arith.constant 0.000000e+00 : f32
    %1 = vector.broadcast %cst : f32 to vector<1x32xf32>
    %cst_3 = arith.constant 0.000000e+00 : f32
    %2 = vector.broadcast %cst_3 : f32 to vector<1x32xf32>
    %cst_4 = arith.constant 0.000000e+00 : f32
    %3 = vector.broadcast %cst_4 : f32 to vector<2x4x4x128xf32>
    %4 = vector.extract_strided_slice %0 {offsets = [0, 1, 1, 0], sizes = [2, 4, 4, 128], strides = [1, 1, 1, 1]} : vector<2x6x6x128xf32> to vector<2x4x4x128xf32>
    %c0_5 = arith.constant 0 : index
    %c0_6 = arith.constant 0 : index
    %c0_7 = arith.constant 0 : index
    %5 = vector.load %arg1[%c0_5, %c0_6, %c0_7] : memref<16x4x128xf32, #tpu.memory_space<vmem>>, vector<1x1x128xf32>
    %6 = vector.shape_cast %5 : vector<1x1x128xf32> to vector<128xf32>
    %7 = vector.shape_cast %6 : vector<128xf32> to vector<1x1x1x128xf32>
    %8 = vector.broadcast %7 : vector<1x1x1x128xf32> to vector<2x4x4x128xf32>
    %9 = arith.mulf %4, %8 : vector<2x4x4x128xf32>
    %10 = arith.addf %3, %9 : vector<2x4x4x128xf32>
    %11 = vector.extract_strided_slice %0 {offsets = [0, 1, 0, 0], sizes = [2, 4, 4, 128], strides = [1, 1, 1, 1]} : vector<2x6x6x128xf32> to vector<2x4x4x128xf32>
    %c0_8 = arith.constant 0 : index
    %c1 = arith.constant 1 : index
    %c0_9 = arith.constant 0 : index
    %12 = vector.load %arg1[%c0_8, %c1, %c0_9] : memref<16x4x128xf32, #tpu.memory_space<vmem>>, vector<1x1x128xf32>
    %13 = vector.shape_cast %12 : vector<1x1x128xf32> to vector<128xf32>
    %14 = vector.shape_cast %13 : vector<128xf32> to vector<1x1x1x128xf32>
    %15 = vector.broadcast %14 : vector<1x1x1x128xf32> to vector<2x4x4x128xf32>
    %16 = arith.mulf %11, %15 : vector<2x4x4x128xf32>
    %17 = arith.addf %10, %16 : vector<2x4x4x128xf32>
    %18 = vector.extract_strided_slice %0 {offsets = [0, 0, 1, 0], sizes = [2, 4, 4, 128], strides = [1, 1, 1, 1]} : vector<2x6x6x128xf32> to vector<2x4x4x128xf32>
    %c0_10 = arith.constant 0 : index
    %c2 = arith.constant 2 : index
    %c0_11 = arith.constant 0 : index
    %19 = vector.load %arg1[%c0_10, %c2, %c0_11] : memref<16x4x128xf32, #tpu.memory_space<vmem>>, vector<1x1x128xf32>
    %20 = vector.shape_cast %19 : vector<1x1x128xf32> to vector<128xf32>
    %21 = vector.shape_cast %20 : vector<128xf32> to vector<1x1x1x128xf32>
    %22 = vector.broadcast %21 : vector<1x1x1x128xf32> to vector<2x4x4x128xf32>
    %23 = arith.mulf %18, %22 : vector<2x4x4x128xf32>
    %24 = arith.addf %17, %23 : vector<2x4x4x128xf32>
    %25 = vector.extract_strided_slice %0 {offsets = [0, 0, 0, 0], sizes = [2, 4, 4, 128], strides = [1, 1, 1, 1]} : vector<2x6x6x128xf32> to vector<2x4x4x128xf32>
    %c0_12 = arith.constant 0 : index
    %c3 = arith.constant 3 : index
    %c0_13 = arith.constant 0 : index
    %26 = vector.load %arg1[%c0_12, %c3, %c0_13] : memref<16x4x128xf32, #tpu.memory_space<vmem>>, vector<1x1x128xf32>
    %27 = vector.shape_cast %26 : vector<1x1x128xf32> to vector<128xf32>
    %28 = vector.shape_cast %27 : vector<128xf32> to vector<1x1x1x128xf32>
    %29 = vector.broadcast %28 : vector<1x1x1x128xf32> to vector<2x4x4x128xf32>
    %30 = arith.mulf %25, %29 : vector<2x4x4x128xf32>
    %31 = arith.addf %24, %30 : vector<2x4x4x128xf32>
    %32 = vector.shape_cast %31 : vector<2x4x4x128xf32> to vector<32x128xf32>
    %c0_14 = arith.constant 0 : index
    %c0_15 = arith.constant 0 : index
    %33 = vector.load %arg2[%c0_14, %c0_15] : memref<128x32xf32, #tpu.memory_space<vmem>>, vector<128x32xf32>
    %cst_16 = arith.constant dense<0.000000e+00> : vector<32x32xf32>
    %34 = tpu.matmul %32, %33, %cst_16 {dimension_numbers = #tpu.dot_dimension_numbers<[1], [0], [0], [1], [0, 0, 1, 1], [], []>} : vector<32x128xf32>, vector<128x32xf32>, vector<32x32xf32> -> vector<32x32xf32>
    %c0_17 = arith.constant 0 : index
    %c0_18 = arith.constant 0 : index
    %c0_19 = arith.constant 0 : index
    %35 = vector.load %arg5[%c0_17, %c0_18, %c0_19] : memref<16x32x32xf32, #tpu.memory_space<vmem>>, vector<1x32x32xf32>
    %36 = vector.shape_cast %35 : vector<1x32x32xf32> to vector<32x32xf32>
    %37 = vector.shape_cast %34 : vector<32x32xf32> to vector<1x32x32xf32>
    tpu.vector_store %arg5[%c0_17, %c0_18, %c0_19], %37 {strides = array<i32>} : memref<16x32x32xf32, #tpu.memory_space<vmem>>, vector<1x32x32xf32>,
    %cst_20 = arith.constant dense<0.000000e+00> : vector<32xf32>
    %38 = vector.multi_reduction <add>, %34, %cst_20 [0] : vector<32x32xf32> to vector<32xf32>
    %39 = vector.shape_cast %38 : vector<32xf32> to vector<1x32xf32>
    %40 = arith.addf %1, %39 : vector<1x32xf32>
    %41 = arith.mulf %34, %34 : vector<32x32xf32>
    %cst_21 = arith.constant dense<0.000000e+00> : vector<32xf32>
    %42 = vector.multi_reduction <add>, %41, %cst_21 [0] : vector<32x32xf32> to vector<32xf32>
    %43 = vector.shape_cast %42 : vector<32xf32> to vector<1x32xf32>
    %44 = arith.addf %2, %43 : vector<1x32xf32>
    %cst_22 = arith.constant 0.000000e+00 : f32
    %45 = vector.broadcast %cst_22 : f32 to vector<2x4x4x128xf32>
    %46 = vector.extract_strided_slice %0 {offsets = [0, 1, 1, 0], sizes = [2, 4, 4, 128], strides = [1, 1, 1, 1]} : vector<2x6x6x128xf32> to vector<2x4x4x128xf32>
    %c1_23 = arith.constant 1 : index
    %c0_24 = arith.constant 0 : index
    %c0_25 = arith.constant 0 : index
    %47 = vector.load %arg1[%c1_23, %c0_24, %c0_25] : memref<16x4x128xf32, #tpu.memory_space<vmem>>, vector<1x1x128xf32>
    %48 = vector.shape_cast %47 : vector<1x1x128xf32> to vector<128xf32>
    %49 = vector.shape_cast %48 : vector<128xf32> to vector<1x1x1x128xf32>
    %50 = vector.broadcast %49 : vector<1x1x1x128xf32> to vector<2x4x4x128xf32>
    %51 = arith.mulf %46, %50 : vector<2x4x4x128xf32>
    %52 = arith.addf %45, %51 : vector<2x4x4x128xf32>
    %53 = vector.extract_strided_slice %0 {offsets = [0, 1, 0, 0], sizes = [2, 4, 4, 128], strides = [1, 1, 1, 1]} : vector<2x6x6x128xf32> to vector<2x4x4x128xf32>
    %c1_26 = arith.constant 1 : index
    %c1_27 = arith.constant 1 : index
    %c0_28 = arith.constant 0 : index
    %54 = vector.load %arg1[%c1_26, %c1_27, %c0_28] : memref<16x4x128xf32, #tpu.memory_space<vmem>>, vector<1x1x128xf32>
    %55 = vector.shape_cast %54 : vector<1x1x128xf32> to vector<128xf32>
    %56 = vector.shape_cast %55 : vector<128xf32> to vector<1x1x1x128xf32>
    %57 = vector.broadcast %56 : vector<1x1x1x128xf32> to vector<2x4x4x128xf32>
    %58 = arith.mulf %53, %57 : vector<2x4x4x128xf32>
    %59 = arith.addf %52, %58 : vector<2x4x4x128xf32>
    %60 = vector.extract_strided_slice %0 {offsets = [0, 0, 1, 0], sizes = [2, 4, 4, 128], strides = [1, 1, 1, 1]} : vector<2x6x6x128xf32> to vector<2x4x4x128xf32>
    %c1_29 = arith.constant 1 : index
    %c2_30 = arith.constant 2 : index
    %c0_31 = arith.constant 0 : index
    %61 = vector.load %arg1[%c1_29, %c2_30, %c0_31] : memref<16x4x128xf32, #tpu.memory_space<vmem>>, vector<1x1x128xf32>
    %62 = vector.shape_cast %61 : vector<1x1x128xf32> to vector<128xf32>
    %63 = vector.shape_cast %62 : vector<128xf32> to vector<1x1x1x128xf32>
    %64 = vector.broadcast %63 : vector<1x1x1x128xf32> to vector<2x4x4x128xf32>
    %65 = arith.mulf %60, %64 : vector<2x4x4x128xf32>
    %66 = arith.addf %59, %65 : vector<2x4x4x128xf32>
    %67 = vector.extract_strided_slice %0 {offsets = [0, 0, 0, 0], sizes = [2, 4, 4, 128], strides = [1, 1, 1, 1]} : vector<2x6x6x128xf32> to vector<2x4x4x128xf32>
    %c1_32 = arith.constant 1 : index
    %c3_33 = arith.constant 3 : index
    %c0_34 = arith.constant 0 : index
    %68 = vector.load %arg1[%c1_32, %c3_33, %c0_34] : memref<16x4x128xf32, #tpu.memory_space<vmem>>, vector<1x1x128xf32>
    %69 = vector.shape_cast %68 : vector<1x1x128xf32> to vector<128xf32>
    %70 = vector.shape_cast %69 : vector<128xf32> to vector<1x1x1x128xf32>
    %71 = vector.broadcast %70 : vector<1x1x1x128xf32> to vector<2x4x4x128xf32>
    %72 = arith.mulf %67, %71 : vector<2x4x4x128xf32>
    %73 = arith.addf %66, %72 : vector<2x4x4x128xf32>
    %74 = vector.shape_cast %73 : vector<2x4x4x128xf32> to vector<32x128xf32>
    %c0_35 = arith.constant 0 : index
    %c0_36 = arith.constant 0 : index
    %75 = vector.load %arg2[%c0_35, %c0_36] : memref<128x32xf32, #tpu.memory_space<vmem>>, vector<128x32xf32>
    %cst_37 = arith.constant dense<0.000000e+00> : vector<32x32xf32>
    %76 = tpu.matmul %74, %75, %cst_37 {dimension_numbers = #tpu.dot_dimension_numbers<[1], [0], [0], [1], [0, 0, 1, 1], [], []>} : vector<32x128xf32>, vector<128x32xf32>, vector<32x32xf32> -> vector<32x32xf32>
    %c1_38 = arith.constant 1 : index
    %c0_39 = arith.constant 0 : index
    %c0_40 = arith.constant 0 : index
    %77 = vector.load %arg5[%c1_38, %c0_39, %c0_40] : memref<16x32x32xf32, #tpu.memory_space<vmem>>, vector<1x32x32xf32>
    %78 = vector.shape_cast %77 : vector<1x32x32xf32> to vector<32x32xf32>
    %79 = vector.shape_cast %76 : vector<32x32xf32> to vector<1x32x32xf32>
    tpu.vector_store %arg5[%c1_38, %c0_39, %c0_40], %79 {strides = array<i32>} : memref<16x32x32xf32, #tpu.memory_space<vmem>>, vector<1x32x32xf32>,
    %cst_41 = arith.constant dense<0.000000e+00> : vector<32xf32>
    %80 = vector.multi_reduction <add>, %76, %cst_41 [0] : vector<32x32xf32> to vector<32xf32>
    %81 = vector.shape_cast %80 : vector<32xf32> to vector<1x32xf32>
    %82 = arith.addf %40, %81 : vector<1x32xf32>
    %83 = arith.mulf %76, %76 : vector<32x32xf32>
    %cst_42 = arith.constant dense<0.000000e+00> : vector<32xf32>
    %84 = vector.multi_reduction <add>, %83, %cst_42 [0] : vector<32x32xf32> to vector<32xf32>
    %85 = vector.shape_cast %84 : vector<32xf32> to vector<1x32xf32>
    %86 = arith.addf %44, %85 : vector<1x32xf32>
    %cst_43 = arith.constant 0.000000e+00 : f32
    %87 = vector.broadcast %cst_43 : f32 to vector<2x4x4x128xf32>
    %88 = vector.extract_strided_slice %0 {offsets = [0, 1, 2, 0], sizes = [2, 4, 4, 128], strides = [1, 1, 1, 1]} : vector<2x6x6x128xf32> to vector<2x4x4x128xf32>
    %c2_44 = arith.constant 2 : index
    %c0_45 = arith.constant 0 : index
    %c0_46 = arith.constant 0 : index
    %89 = vector.load %arg1[%c2_44, %c0_45, %c0_46] : memref<16x4x128xf32, #tpu.memory_space<vmem>>, vector<1x1x128xf32>
    %90 = vector.shape_cast %89 : vector<1x1x128xf32> to vector<128xf32>
    %91 = vector.shape_cast %90 : vector<128xf32> to vector<1x1x1x128xf32>
    %92 = vector.broadcast %91 : vector<1x1x1x128xf32> to vector<2x4x4x128xf32>
    %93 = arith.mulf %88, %92 : vector<2x4x4x128xf32>
    %94 = arith.addf %87, %93 : vector<2x4x4x128xf32>
    %95 = vector.extract_strided_slice %0 {offsets = [0, 1, 1, 0], sizes = [2, 4, 4, 128], strides = [1, 1, 1, 1]} : vector<2x6x6x128xf32> to vector<2x4x4x128xf32>
    %c2_47 = arith.constant 2 : index
    %c1_48 = arith.constant 1 : index
    %c0_49 = arith.constant 0 : index
    %96 = vector.load %arg1[%c2_47, %c1_48, %c0_49] : memref<16x4x128xf32, #tpu.memory_space<vmem>>, vector<1x1x128xf32>
    %97 = vector.shape_cast %96 : vector<1x1x128xf32> to vector<128xf32>
    %98 = vector.shape_cast %97 : vector<128xf32> to vector<1x1x1x128xf32>
    %99 = vector.broadcast %98 : vector<1x1x1x128xf32> to vector<2x4x4x128xf32>
    %100 = arith.mulf %95, %99 : vector<2x4x4x128xf32>
    %101 = arith.addf %94, %100 : vector<2x4x4x128xf32>
    %102 = vector.extract_strided_slice %0 {offsets = [0, 0, 2, 0], sizes = [2, 4, 4, 128], strides = [1, 1, 1, 1]} : vector<2x6x6x128xf32> to vector<2x4x4x128xf32>
    %c2_50 = arith.constant 2 : index
    %c2_51 = arith.constant 2 : index
    %c0_52 = arith.constant 0 : index
    %103 = vector.load %arg1[%c2_50, %c2_51, %c0_52] : memref<16x4x128xf32, #tpu.memory_space<vmem>>, vector<1x1x128xf32>
    %104 = vector.shape_cast %103 : vector<1x1x128xf32> to vector<128xf32>
    %105 = vector.shape_cast %104 : vector<128xf32> to vector<1x1x1x128xf32>
    %106 = vector.broadcast %105 : vector<1x1x1x128xf32> to vector<2x4x4x128xf32>
    %107 = arith.mulf %102, %106 : vector<2x4x4x128xf32>
    %108 = arith.addf %101, %107 : vector<2x4x4x128xf32>
    %109 = vector.extract_strided_slice %0 {offsets = [0, 0, 1, 0], sizes = [2, 4, 4, 128], strides = [1, 1, 1, 1]} : vector<2x6x6x128xf32> to vector<2x4x4x128xf32>
    %c2_53 = arith.constant 2 : index
    %c3_54 = arith.constant 3 : index
    %c0_55 = arith.constant 0 : index
    %110 = vector.load %arg1[%c2_53, %c3_54, %c0_55] : memref<16x4x128xf32, #tpu.memory_space<vmem>>, vector<1x1x128xf32>
    %111 = vector.shape_cast %110 : vector<1x1x128xf32> to vector<128xf32>
    %112 = vector.shape_cast %111 : vector<128xf32> to vector<1x1x1x128xf32>
    %113 = vector.broadcast %112 : vector<1x1x1x128xf32> to vector<2x4x4x128xf32>
    %114 = arith.mulf %109, %113 : vector<2x4x4x128xf32>
    %115 = arith.addf %108, %114 : vector<2x4x4x128xf32>
    %116 = vector.shape_cast %115 : vector<2x4x4x128xf32> to vector<32x128xf32>
    %c0_56 = arith.constant 0 : index
    %c0_57 = arith.constant 0 : index
    %117 = vector.load %arg2[%c0_56, %c0_57] : memref<128x32xf32, #tpu.memory_space<vmem>>, vector<128x32xf32>
    %cst_58 = arith.constant dense<0.000000e+00> : vector<32x32xf32>
    %118 = tpu.matmul %116, %117, %cst_58 {dimension_numbers = #tpu.dot_dimension_numbers<[1], [0], [0], [1], [0, 0, 1, 1], [], []>} : vector<32x128xf32>, vector<128x32xf32>, vector<32x32xf32> -> vector<32x32xf32>
    %c2_59 = arith.constant 2 : index
    %c0_60 = arith.constant 0 : index
    %c0_61 = arith.constant 0 : index
    %119 = vector.load %arg5[%c2_59, %c0_60, %c0_61] : memref<16x32x32xf32, #tpu.memory_space<vmem>>, vector<1x32x32xf32>
    %120 = vector.shape_cast %119 : vector<1x32x32xf32> to vector<32x32xf32>
    %121 = vector.shape_cast %118 : vector<32x32xf32> to vector<1x32x32xf32>
    tpu.vector_store %arg5[%c2_59, %c0_60, %c0_61], %121 {strides = array<i32>} : memref<16x32x32xf32, #tpu.memory_space<vmem>>, vector<1x32x32xf32>,
    %cst_62 = arith.constant dense<0.000000e+00> : vector<32xf32>
    %122 = vector.multi_reduction <add>, %118, %cst_62 [0] : vector<32x32xf32> to vector<32xf32>
    %123 = vector.shape_cast %122 : vector<32xf32> to vector<1x32xf32>
    %124 = arith.addf %82, %123 : vector<1x32xf32>
    %125 = arith.mulf %118, %118 : vector<32x32xf32>
    %cst_63 = arith.constant dense<0.000000e+00> : vector<32xf32>
    %126 = vector.multi_reduction <add>, %125, %cst_63 [0] : vector<32x32xf32> to vector<32xf32>
    %127 = vector.shape_cast %126 : vector<32xf32> to vector<1x32xf32>
    %128 = arith.addf %86, %127 : vector<1x32xf32>
    %cst_64 = arith.constant 0.000000e+00 : f32
    %129 = vector.broadcast %cst_64 : f32 to vector<2x4x4x128xf32>
    %130 = vector.extract_strided_slice %0 {offsets = [0, 1, 2, 0], sizes = [2, 4, 4, 128], strides = [1, 1, 1, 1]} : vector<2x6x6x128xf32> to vector<2x4x4x128xf32>
    %c3_65 = arith.constant 3 : index
    %c0_66 = arith.constant 0 : index
    %c0_67 = arith.constant 0 : index
    %131 = vector.load %arg1[%c3_65, %c0_66, %c0_67] : memref<16x4x128xf32, #tpu.memory_space<vmem>>, vector<1x1x128xf32>
    %132 = vector.shape_cast %131 : vector<1x1x128xf32> to vector<128xf32>
    %133 = vector.shape_cast %132 : vector<128xf32> to vector<1x1x1x128xf32>
    %134 = vector.broadcast %133 : vector<1x1x1x128xf32> to vector<2x4x4x128xf32>
    %135 = arith.mulf %130, %134 : vector<2x4x4x128xf32>
    %136 = arith.addf %129, %135 : vector<2x4x4x128xf32>
    %137 = vector.extract_strided_slice %0 {offsets = [0, 1, 1, 0], sizes = [2, 4, 4, 128], strides = [1, 1, 1, 1]} : vector<2x6x6x128xf32> to vector<2x4x4x128xf32>
    %c3_68 = arith.constant 3 : index
    %c1_69 = arith.constant 1 : index
    %c0_70 = arith.constant 0 : index
    %138 = vector.load %arg1[%c3_68, %c1_69, %c0_70] : memref<16x4x128xf32, #tpu.memory_space<vmem>>, vector<1x1x128xf32>
    %139 = vector.shape_cast %138 : vector<1x1x128xf32> to vector<128xf32>
    %140 = vector.shape_cast %139 : vector<128xf32> to vector<1x1x1x128xf32>
    %141 = vector.broadcast %140 : vector<1x1x1x128xf32> to vector<2x4x4x128xf32>
    %142 = arith.mulf %137, %141 : vector<2x4x4x128xf32>
    %143 = arith.addf %136, %142 : vector<2x4x4x128xf32>
    %144 = vector.extract_strided_slice %0 {offsets = [0, 0, 2, 0], sizes = [2, 4, 4, 128], strides = [1, 1, 1, 1]} : vector<2x6x6x128xf32> to vector<2x4x4x128xf32>
    %c3_71 = arith.constant 3 : index
    %c2_72 = arith.constant 2 : index
    %c0_73 = arith.constant 0 : index
    %145 = vector.load %arg1[%c3_71, %c2_72, %c0_73] : memref<16x4x128xf32, #tpu.memory_space<vmem>>, vector<1x1x128xf32>
    %146 = vector.shape_cast %145 : vector<1x1x128xf32> to vector<128xf32>
    %147 = vector.shape_cast %146 : vector<128xf32> to vector<1x1x1x128xf32>
    %148 = vector.broadcast %147 : vector<1x1x1x128xf32> to vector<2x4x4x128xf32>
    %149 = arith.mulf %144, %148 : vector<2x4x4x128xf32>
    %150 = arith.addf %143, %149 : vector<2x4x4x128xf32>
    %151 = vector.extract_strided_slice %0 {offsets = [0, 0, 1, 0], sizes = [2, 4, 4, 128], strides = [1, 1, 1, 1]} : vector<2x6x6x128xf32> to vector<2x4x4x128xf32>
    %c3_74 = arith.constant 3 : index
    %c3_75 = arith.constant 3 : index
    %c0_76 = arith.constant 0 : index
    %152 = vector.load %arg1[%c3_74, %c3_75, %c0_76] : memref<16x4x128xf32, #tpu.memory_space<vmem>>, vector<1x1x128xf32>
    %153 = vector.shape_cast %152 : vector<1x1x128xf32> to vector<128xf32>
    %154 = vector.shape_cast %153 : vector<128xf32> to vector<1x1x1x128xf32>
    %155 = vector.broadcast %154 : vector<1x1x1x128xf32> to vector<2x4x4x128xf32>
    %156 = arith.mulf %151, %155 : vector<2x4x4x128xf32>
    %157 = arith.addf %150, %156 : vector<2x4x4x128xf32>
    %158 = vector.shape_cast %157 : vector<2x4x4x128xf32> to vector<32x128xf32>
    %c0_77 = arith.constant 0 : index
    %c0_78 = arith.constant 0 : index
    %159 = vector.load %arg2[%c0_77, %c0_78] : memref<128x32xf32, #tpu.memory_space<vmem>>, vector<128x32xf32>
    %cst_79 = arith.constant dense<0.000000e+00> : vector<32x32xf32>
    %160 = tpu.matmul %158, %159, %cst_79 {dimension_numbers = #tpu.dot_dimension_numbers<[1], [0], [0], [1], [0, 0, 1, 1], [], []>} : vector<32x128xf32>, vector<128x32xf32>, vector<32x32xf32> -> vector<32x32xf32>
    %c3_80 = arith.constant 3 : index
    %c0_81 = arith.constant 0 : index
    %c0_82 = arith.constant 0 : index
    %161 = vector.load %arg5[%c3_80, %c0_81, %c0_82] : memref<16x32x32xf32, #tpu.memory_space<vmem>>, vector<1x32x32xf32>
    %162 = vector.shape_cast %161 : vector<1x32x32xf32> to vector<32x32xf32>
    %163 = vector.shape_cast %160 : vector<32x32xf32> to vector<1x32x32xf32>
    tpu.vector_store %arg5[%c3_80, %c0_81, %c0_82], %163 {strides = array<i32>} : memref<16x32x32xf32, #tpu.memory_space<vmem>>, vector<1x32x32xf32>,
    %cst_83 = arith.constant dense<0.000000e+00> : vector<32xf32>
    %164 = vector.multi_reduction <add>, %160, %cst_83 [0] : vector<32x32xf32> to vector<32xf32>
    %165 = vector.shape_cast %164 : vector<32xf32> to vector<1x32xf32>
    %166 = arith.addf %124, %165 : vector<1x32xf32>
    %167 = arith.mulf %160, %160 : vector<32x32xf32>
    %cst_84 = arith.constant dense<0.000000e+00> : vector<32xf32>
    %168 = vector.multi_reduction <add>, %167, %cst_84 [0] : vector<32x32xf32> to vector<32xf32>
    %169 = vector.shape_cast %168 : vector<32xf32> to vector<1x32xf32>
    %170 = arith.addf %128, %169 : vector<1x32xf32>
    %cst_85 = arith.constant 0.000000e+00 : f32
    %171 = vector.broadcast %cst_85 : f32 to vector<2x4x4x128xf32>
    %172 = vector.extract_strided_slice %0 {offsets = [0, 1, 1, 0], sizes = [2, 4, 4, 128], strides = [1, 1, 1, 1]} : vector<2x6x6x128xf32> to vector<2x4x4x128xf32>
    %c4 = arith.constant 4 : index
    %c0_86 = arith.constant 0 : index
    %c0_87 = arith.constant 0 : index
    %173 = vector.load %arg1[%c4, %c0_86, %c0_87] : memref<16x4x128xf32, #tpu.memory_space<vmem>>, vector<1x1x128xf32>
    %174 = vector.shape_cast %173 : vector<1x1x128xf32> to vector<128xf32>
    %175 = vector.shape_cast %174 : vector<128xf32> to vector<1x1x1x128xf32>
    %176 = vector.broadcast %175 : vector<1x1x1x128xf32> to vector<2x4x4x128xf32>
    %177 = arith.mulf %172, %176 : vector<2x4x4x128xf32>
    %178 = arith.addf %171, %177 : vector<2x4x4x128xf32>
    %179 = vector.extract_strided_slice %0 {offsets = [0, 1, 0, 0], sizes = [2, 4, 4, 128], strides = [1, 1, 1, 1]} : vector<2x6x6x128xf32> to vector<2x4x4x128xf32>
    %c4_88 = arith.constant 4 : index
    %c1_89 = arith.constant 1 : index
    %c0_90 = arith.constant 0 : index
    %180 = vector.load %arg1[%c4_88, %c1_89, %c0_90] : memref<16x4x128xf32, #tpu.memory_space<vmem>>, vector<1x1x128xf32>
    %181 = vector.shape_cast %180 : vector<1x1x128xf32> to vector<128xf32>
    %182 = vector.shape_cast %181 : vector<128xf32> to vector<1x1x1x128xf32>
    %183 = vector.broadcast %182 : vector<1x1x1x128xf32> to vector<2x4x4x128xf32>
    %184 = arith.mulf %179, %183 : vector<2x4x4x128xf32>
    %185 = arith.addf %178, %184 : vector<2x4x4x128xf32>
    %186 = vector.extract_strided_slice %0 {offsets = [0, 0, 1, 0], sizes = [2, 4, 4, 128], strides = [1, 1, 1, 1]} : vector<2x6x6x128xf32> to vector<2x4x4x128xf32>
    %c4_91 = arith.constant 4 : index
    %c2_92 = arith.constant 2 : index
    %c0_93 = arith.constant 0 : index
    %187 = vector.load %arg1[%c4_91, %c2_92, %c0_93] : memref<16x4x128xf32, #tpu.memory_space<vmem>>, vector<1x1x128xf32>
    %188 = vector.shape_cast %187 : vector<1x1x128xf32> to vector<128xf32>
    %189 = vector.shape_cast %188 : vector<128xf32> to vector<1x1x1x128xf32>
    %190 = vector.broadcast %189 : vector<1x1x1x128xf32> to vector<2x4x4x128xf32>
    %191 = arith.mulf %186, %190 : vector<2x4x4x128xf32>
    %192 = arith.addf %185, %191 : vector<2x4x4x128xf32>
    %193 = vector.extract_strided_slice %0 {offsets = [0, 0, 0, 0], sizes = [2, 4, 4, 128], strides = [1, 1, 1, 1]} : vector<2x6x6x128xf32> to vector<2x4x4x128xf32>
    %c4_94 = arith.constant 4 : index
    %c3_95 = arith.constant 3 : index
    %c0_96 = arith.constant 0 : index
    %194 = vector.load %arg1[%c4_94, %c3_95, %c0_96] : memref<16x4x128xf32, #tpu.memory_space<vmem>>, vector<1x1x128xf32>
    %195 = vector.shape_cast %194 : vector<1x1x128xf32> to vector<128xf32>
    %196 = vector.shape_cast %195 : vector<128xf32> to vector<1x1x1x128xf32>
    %197 = vector.broadcast %196 : vector<1x1x1x128xf32> to vector<2x4x4x128xf32>
    %198 = arith.mulf %193, %197 : vector<2x4x4x128xf32>
    %199 = arith.addf %192, %198 : vector<2x4x4x128xf32>
    %200 = vector.shape_cast %199 : vector<2x4x4x128xf32> to vector<32x128xf32>
    %c0_97 = arith.constant 0 : index
    %c0_98 = arith.constant 0 : index
    %201 = vector.load %arg2[%c0_97, %c0_98] : memref<128x32xf32, #tpu.memory_space<vmem>>, vector<128x32xf32>
    %cst_99 = arith.constant dense<0.000000e+00> : vector<32x32xf32>
    %202 = tpu.matmul %200, %201, %cst_99 {dimension_numbers = #tpu.dot_dimension_numbers<[1], [0], [0], [1], [0, 0, 1, 1], [], []>} : vector<32x128xf32>, vector<128x32xf32>, vector<32x32xf32> -> vector<32x32xf32>
    %c4_100 = arith.constant 4 : index
    %c0_101 = arith.constant 0 : index
    %c0_102 = arith.constant 0 : index
    %203 = vector.load %arg5[%c4_100, %c0_101, %c0_102] : memref<16x32x32xf32, #tpu.memory_space<vmem>>, vector<1x32x32xf32>
    %204 = vector.shape_cast %203 : vector<1x32x32xf32> to vector<32x32xf32>
    %205 = vector.shape_cast %202 : vector<32x32xf32> to vector<1x32x32xf32>
    tpu.vector_store %arg5[%c4_100, %c0_101, %c0_102], %205 {strides = array<i32>} : memref<16x32x32xf32, #tpu.memory_space<vmem>>, vector<1x32x32xf32>,
    %cst_103 = arith.constant dense<0.000000e+00> : vector<32xf32>
    %206 = vector.multi_reduction <add>, %202, %cst_103 [0] : vector<32x32xf32> to vector<32xf32>
    %207 = vector.shape_cast %206 : vector<32xf32> to vector<1x32xf32>
    %208 = arith.addf %166, %207 : vector<1x32xf32>
    %209 = arith.mulf %202, %202 : vector<32x32xf32>
    %cst_104 = arith.constant dense<0.000000e+00> : vector<32xf32>
    %210 = vector.multi_reduction <add>, %209, %cst_104 [0] : vector<32x32xf32> to vector<32xf32>
    %211 = vector.shape_cast %210 : vector<32xf32> to vector<1x32xf32>
    %212 = arith.addf %170, %211 : vector<1x32xf32>
    %cst_105 = arith.constant 0.000000e+00 : f32
    %213 = vector.broadcast %cst_105 : f32 to vector<2x4x4x128xf32>
    %214 = vector.extract_strided_slice %0 {offsets = [0, 1, 1, 0], sizes = [2, 4, 4, 128], strides = [1, 1, 1, 1]} : vector<2x6x6x128xf32> to vector<2x4x4x128xf32>
    %c5 = arith.constant 5 : index
    %c0_106 = arith.constant 0 : index
    %c0_107 = arith.constant 0 : index
    %215 = vector.load %arg1[%c5, %c0_106, %c0_107] : memref<16x4x128xf32, #tpu.memory_space<vmem>>, vector<1x1x128xf32>
    %216 = vector.shape_cast %215 : vector<1x1x128xf32> to vector<128xf32>
    %217 = vector.shape_cast %216 : vector<128xf32> to vector<1x1x1x128xf32>
    %218 = vector.broadcast %217 : vector<1x1x1x128xf32> to vector<2x4x4x128xf32>
    %219 = arith.mulf %214, %218 : vector<2x4x4x128xf32>
    %220 = arith.addf %213, %219 : vector<2x4x4x128xf32>
    %221 = vector.extract_strided_slice %0 {offsets = [0, 1, 0, 0], sizes = [2, 4, 4, 128], strides = [1, 1, 1, 1]} : vector<2x6x6x128xf32> to vector<2x4x4x128xf32>
    %c5_108 = arith.constant 5 : index
    %c1_109 = arith.constant 1 : index
    %c0_110 = arith.constant 0 : index
    %222 = vector.load %arg1[%c5_108, %c1_109, %c0_110] : memref<16x4x128xf32, #tpu.memory_space<vmem>>, vector<1x1x128xf32>
    %223 = vector.shape_cast %222 : vector<1x1x128xf32> to vector<128xf32>
    %224 = vector.shape_cast %223 : vector<128xf32> to vector<1x1x1x128xf32>
    %225 = vector.broadcast %224 : vector<1x1x1x128xf32> to vector<2x4x4x128xf32>
    %226 = arith.mulf %221, %225 : vector<2x4x4x128xf32>
    %227 = arith.addf %220, %226 : vector<2x4x4x128xf32>
    %228 = vector.extract_strided_slice %0 {offsets = [0, 0, 1, 0], sizes = [2, 4, 4, 128], strides = [1, 1, 1, 1]} : vector<2x6x6x128xf32> to vector<2x4x4x128xf32>
    %c5_111 = arith.constant 5 : index
    %c2_112 = arith.constant 2 : index
    %c0_113 = arith.constant 0 : index
    %229 = vector.load %arg1[%c5_111, %c2_112, %c0_113] : memref<16x4x128xf32, #tpu.memory_space<vmem>>, vector<1x1x128xf32>
    %230 = vector.shape_cast %229 : vector<1x1x128xf32> to vector<128xf32>
    %231 = vector.shape_cast %230 : vector<128xf32> to vector<1x1x1x128xf32>
    %232 = vector.broadcast %231 : vector<1x1x1x128xf32> to vector<2x4x4x128xf32>
    %233 = arith.mulf %228, %232 : vector<2x4x4x128xf32>
    %234 = arith.addf %227, %233 : vector<2x4x4x128xf32>
    %235 = vector.extract_strided_slice %0 {offsets = [0, 0, 0, 0], sizes = [2, 4, 4, 128], strides = [1, 1, 1, 1]} : vector<2x6x6x128xf32> to vector<2x4x4x128xf32>
    %c5_114 = arith.constant 5 : index
    %c3_115 = arith.constant 3 : index
    %c0_116 = arith.constant 0 : index
    %236 = vector.load %arg1[%c5_114, %c3_115, %c0_116] : memref<16x4x128xf32, #tpu.memory_space<vmem>>, vector<1x1x128xf32>
    %237 = vector.shape_cast %236 : vector<1x1x128xf32> to vector<128xf32>
    %238 = vector.shape_cast %237 : vector<128xf32> to vector<1x1x1x128xf32>
    %239 = vector.broadcast %238 : vector<1x1x1x128xf32> to vector<2x4x4x128xf32>
    %240 = arith.mulf %235, %239 : vector<2x4x4x128xf32>
    %241 = arith.addf %234, %240 : vector<2x4x4x128xf32>
    %242 = vector.shape_cast %241 : vector<2x4x4x128xf32> to vector<32x128xf32>
    %c0_117 = arith.constant 0 : index
    %c0_118 = arith.constant 0 : index
    %243 = vector.load %arg2[%c0_117, %c0_118] : memref<128x32xf32, #tpu.memory_space<vmem>>, vector<128x32xf32>
    %cst_119 = arith.constant dense<0.000000e+00> : vector<32x32xf32>
    %244 = tpu.matmul %242, %243, %cst_119 {dimension_numbers = #tpu.dot_dimension_numbers<[1], [0], [0], [1], [0, 0, 1, 1], [], []>} : vector<32x128xf32>, vector<128x32xf32>, vector<32x32xf32> -> vector<32x32xf32>
    %c5_120 = arith.constant 5 : index
    %c0_121 = arith.constant 0 : index
    %c0_122 = arith.constant 0 : index
    %245 = vector.load %arg5[%c5_120, %c0_121, %c0_122] : memref<16x32x32xf32, #tpu.memory_space<vmem>>, vector<1x32x32xf32>
    %246 = vector.shape_cast %245 : vector<1x32x32xf32> to vector<32x32xf32>
    %247 = vector.shape_cast %244 : vector<32x32xf32> to vector<1x32x32xf32>
    tpu.vector_store %arg5[%c5_120, %c0_121, %c0_122], %247 {strides = array<i32>} : memref<16x32x32xf32, #tpu.memory_space<vmem>>, vector<1x32x32xf32>,
    %cst_123 = arith.constant dense<0.000000e+00> : vector<32xf32>
    %248 = vector.multi_reduction <add>, %244, %cst_123 [0] : vector<32x32xf32> to vector<32xf32>
    %249 = vector.shape_cast %248 : vector<32xf32> to vector<1x32xf32>
    %250 = arith.addf %208, %249 : vector<1x32xf32>
    %251 = arith.mulf %244, %244 : vector<32x32xf32>
    %cst_124 = arith.constant dense<0.000000e+00> : vector<32xf32>
    %252 = vector.multi_reduction <add>, %251, %cst_124 [0] : vector<32x32xf32> to vector<32xf32>
    %253 = vector.shape_cast %252 : vector<32xf32> to vector<1x32xf32>
    %254 = arith.addf %212, %253 : vector<1x32xf32>
    %cst_125 = arith.constant 0.000000e+00 : f32
    %255 = vector.broadcast %cst_125 : f32 to vector<2x4x4x128xf32>
    %256 = vector.extract_strided_slice %0 {offsets = [0, 1, 2, 0], sizes = [2, 4, 4, 128], strides = [1, 1, 1, 1]} : vector<2x6x6x128xf32> to vector<2x4x4x128xf32>
    %c6 = arith.constant 6 : index
    %c0_126 = arith.constant 0 : index
    %c0_127 = arith.constant 0 : index
    %257 = vector.load %arg1[%c6, %c0_126, %c0_127] : memref<16x4x128xf32, #tpu.memory_space<vmem>>, vector<1x1x128xf32>
    %258 = vector.shape_cast %257 : vector<1x1x128xf32> to vector<128xf32>
    %259 = vector.shape_cast %258 : vector<128xf32> to vector<1x1x1x128xf32>
    %260 = vector.broadcast %259 : vector<1x1x1x128xf32> to vector<2x4x4x128xf32>
    %261 = arith.mulf %256, %260 : vector<2x4x4x128xf32>
    %262 = arith.addf %255, %261 : vector<2x4x4x128xf32>
    %263 = vector.extract_strided_slice %0 {offsets = [0, 1, 1, 0], sizes = [2, 4, 4, 128], strides = [1, 1, 1, 1]} : vector<2x6x6x128xf32> to vector<2x4x4x128xf32>
    %c6_128 = arith.constant 6 : index
    %c1_129 = arith.constant 1 : index
    %c0_130 = arith.constant 0 : index
    %264 = vector.load %arg1[%c6_128, %c1_129, %c0_130] : memref<16x4x128xf32, #tpu.memory_space<vmem>>, vector<1x1x128xf32>
    %265 = vector.shape_cast %264 : vector<1x1x128xf32> to vector<128xf32>
    %266 = vector.shape_cast %265 : vector<128xf32> to vector<1x1x1x128xf32>
    %267 = vector.broadcast %266 : vector<1x1x1x128xf32> to vector<2x4x4x128xf32>
    %268 = arith.mulf %263, %267 : vector<2x4x4x128xf32>
    %269 = arith.addf %262, %268 : vector<2x4x4x128xf32>
    %270 = vector.extract_strided_slice %0 {offsets = [0, 0, 2, 0], sizes = [2, 4, 4, 128], strides = [1, 1, 1, 1]} : vector<2x6x6x128xf32> to vector<2x4x4x128xf32>
    %c6_131 = arith.constant 6 : index
    %c2_132 = arith.constant 2 : index
    %c0_133 = arith.constant 0 : index
    %271 = vector.load %arg1[%c6_131, %c2_132, %c0_133] : memref<16x4x128xf32, #tpu.memory_space<vmem>>, vector<1x1x128xf32>
    %272 = vector.shape_cast %271 : vector<1x1x128xf32> to vector<128xf32>
    %273 = vector.shape_cast %272 : vector<128xf32> to vector<1x1x1x128xf32>
    %274 = vector.broadcast %273 : vector<1x1x1x128xf32> to vector<2x4x4x128xf32>
    %275 = arith.mulf %270, %274 : vector<2x4x4x128xf32>
    %276 = arith.addf %269, %275 : vector<2x4x4x128xf32>
    %277 = vector.extract_strided_slice %0 {offsets = [0, 0, 1, 0], sizes = [2, 4, 4, 128], strides = [1, 1, 1, 1]} : vector<2x6x6x128xf32> to vector<2x4x4x128xf32>
    %c6_134 = arith.constant 6 : index
    %c3_135 = arith.constant 3 : index
    %c0_136 = arith.constant 0 : index
    %278 = vector.load %arg1[%c6_134, %c3_135, %c0_136] : memref<16x4x128xf32, #tpu.memory_space<vmem>>, vector<1x1x128xf32>
    %279 = vector.shape_cast %278 : vector<1x1x128xf32> to vector<128xf32>
    %280 = vector.shape_cast %279 : vector<128xf32> to vector<1x1x1x128xf32>
    %281 = vector.broadcast %280 : vector<1x1x1x128xf32> to vector<2x4x4x128xf32>
    %282 = arith.mulf %277, %281 : vector<2x4x4x128xf32>
    %283 = arith.addf %276, %282 : vector<2x4x4x128xf32>
    %284 = vector.shape_cast %283 : vector<2x4x4x128xf32> to vector<32x128xf32>
    %c0_137 = arith.constant 0 : index
    %c0_138 = arith.constant 0 : index
    %285 = vector.load %arg2[%c0_137, %c0_138] : memref<128x32xf32, #tpu.memory_space<vmem>>, vector<128x32xf32>
    %cst_139 = arith.constant dense<0.000000e+00> : vector<32x32xf32>
    %286 = tpu.matmul %284, %285, %cst_139 {dimension_numbers = #tpu.dot_dimension_numbers<[1], [0], [0], [1], [0, 0, 1, 1], [], []>} : vector<32x128xf32>, vector<128x32xf32>, vector<32x32xf32> -> vector<32x32xf32>
    %c6_140 = arith.constant 6 : index
    %c0_141 = arith.constant 0 : index
    %c0_142 = arith.constant 0 : index
    %287 = vector.load %arg5[%c6_140, %c0_141, %c0_142] : memref<16x32x32xf32, #tpu.memory_space<vmem>>, vector<1x32x32xf32>
    %288 = vector.shape_cast %287 : vector<1x32x32xf32> to vector<32x32xf32>
    %289 = vector.shape_cast %286 : vector<32x32xf32> to vector<1x32x32xf32>
    tpu.vector_store %arg5[%c6_140, %c0_141, %c0_142], %289 {strides = array<i32>} : memref<16x32x32xf32, #tpu.memory_space<vmem>>, vector<1x32x32xf32>,
    %cst_143 = arith.constant dense<0.000000e+00> : vector<32xf32>
    %290 = vector.multi_reduction <add>, %286, %cst_143 [0] : vector<32x32xf32> to vector<32xf32>
    %291 = vector.shape_cast %290 : vector<32xf32> to vector<1x32xf32>
    %292 = arith.addf %250, %291 : vector<1x32xf32>
    %293 = arith.mulf %286, %286 : vector<32x32xf32>
    %cst_144 = arith.constant dense<0.000000e+00> : vector<32xf32>
    %294 = vector.multi_reduction <add>, %293, %cst_144 [0] : vector<32x32xf32> to vector<32xf32>
    %295 = vector.shape_cast %294 : vector<32xf32> to vector<1x32xf32>
    %296 = arith.addf %254, %295 : vector<1x32xf32>
    %cst_145 = arith.constant 0.000000e+00 : f32
    %297 = vector.broadcast %cst_145 : f32 to vector<2x4x4x128xf32>
    %298 = vector.extract_strided_slice %0 {offsets = [0, 1, 2, 0], sizes = [2, 4, 4, 128], strides = [1, 1, 1, 1]} : vector<2x6x6x128xf32> to vector<2x4x4x128xf32>
    %c7 = arith.constant 7 : index
    %c0_146 = arith.constant 0 : index
    %c0_147 = arith.constant 0 : index
    %299 = vector.load %arg1[%c7, %c0_146, %c0_147] : memref<16x4x128xf32, #tpu.memory_space<vmem>>, vector<1x1x128xf32>
    %300 = vector.shape_cast %299 : vector<1x1x128xf32> to vector<128xf32>
    %301 = vector.shape_cast %300 : vector<128xf32> to vector<1x1x1x128xf32>
    %302 = vector.broadcast %301 : vector<1x1x1x128xf32> to vector<2x4x4x128xf32>
    %303 = arith.mulf %298, %302 : vector<2x4x4x128xf32>
    %304 = arith.addf %297, %303 : vector<2x4x4x128xf32>
    %305 = vector.extract_strided_slice %0 {offsets = [0, 1, 1, 0], sizes = [2, 4, 4, 128], strides = [1, 1, 1, 1]} : vector<2x6x6x128xf32> to vector<2x4x4x128xf32>
    %c7_148 = arith.constant 7 : index
    %c1_149 = arith.constant 1 : index
    %c0_150 = arith.constant 0 : index
    %306 = vector.load %arg1[%c7_148, %c1_149, %c0_150] : memref<16x4x128xf32, #tpu.memory_space<vmem>>, vector<1x1x128xf32>
    %307 = vector.shape_cast %306 : vector<1x1x128xf32> to vector<128xf32>
    %308 = vector.shape_cast %307 : vector<128xf32> to vector<1x1x1x128xf32>
    %309 = vector.broadcast %308 : vector<1x1x1x128xf32> to vector<2x4x4x128xf32>
    %310 = arith.mulf %305, %309 : vector<2x4x4x128xf32>
    %311 = arith.addf %304, %310 : vector<2x4x4x128xf32>
    %312 = vector.extract_strided_slice %0 {offsets = [0, 0, 2, 0], sizes = [2, 4, 4, 128], strides = [1, 1, 1, 1]} : vector<2x6x6x128xf32> to vector<2x4x4x128xf32>
    %c7_151 = arith.constant 7 : index
    %c2_152 = arith.constant 2 : index
    %c0_153 = arith.constant 0 : index
    %313 = vector.load %arg1[%c7_151, %c2_152, %c0_153] : memref<16x4x128xf32, #tpu.memory_space<vmem>>, vector<1x1x128xf32>
    %314 = vector.shape_cast %313 : vector<1x1x128xf32> to vector<128xf32>
    %315 = vector.shape_cast %314 : vector<128xf32> to vector<1x1x1x128xf32>
    %316 = vector.broadcast %315 : vector<1x1x1x128xf32> to vector<2x4x4x128xf32>
    %317 = arith.mulf %312, %316 : vector<2x4x4x128xf32>
    %318 = arith.addf %311, %317 : vector<2x4x4x128xf32>
    %319 = vector.extract_strided_slice %0 {offsets = [0, 0, 1, 0], sizes = [2, 4, 4, 128], strides = [1, 1, 1, 1]} : vector<2x6x6x128xf32> to vector<2x4x4x128xf32>
    %c7_154 = arith.constant 7 : index
    %c3_155 = arith.constant 3 : index
    %c0_156 = arith.constant 0 : index
    %320 = vector.load %arg1[%c7_154, %c3_155, %c0_156] : memref<16x4x128xf32, #tpu.memory_space<vmem>>, vector<1x1x128xf32>
    %321 = vector.shape_cast %320 : vector<1x1x128xf32> to vector<128xf32>
    %322 = vector.shape_cast %321 : vector<128xf32> to vector<1x1x1x128xf32>
    %323 = vector.broadcast %322 : vector<1x1x1x128xf32> to vector<2x4x4x128xf32>
    %324 = arith.mulf %319, %323 : vector<2x4x4x128xf32>
    %325 = arith.addf %318, %324 : vector<2x4x4x128xf32>
    %326 = vector.shape_cast %325 : vector<2x4x4x128xf32> to vector<32x128xf32>
    %c0_157 = arith.constant 0 : index
    %c0_158 = arith.constant 0 : index
    %327 = vector.load %arg2[%c0_157, %c0_158] : memref<128x32xf32, #tpu.memory_space<vmem>>, vector<128x32xf32>
    %cst_159 = arith.constant dense<0.000000e+00> : vector<32x32xf32>
    %328 = tpu.matmul %326, %327, %cst_159 {dimension_numbers = #tpu.dot_dimension_numbers<[1], [0], [0], [1], [0, 0, 1, 1], [], []>} : vector<32x128xf32>, vector<128x32xf32>, vector<32x32xf32> -> vector<32x32xf32>
    %c7_160 = arith.constant 7 : index
    %c0_161 = arith.constant 0 : index
    %c0_162 = arith.constant 0 : index
    %329 = vector.load %arg5[%c7_160, %c0_161, %c0_162] : memref<16x32x32xf32, #tpu.memory_space<vmem>>, vector<1x32x32xf32>
    %330 = vector.shape_cast %329 : vector<1x32x32xf32> to vector<32x32xf32>
    %331 = vector.shape_cast %328 : vector<32x32xf32> to vector<1x32x32xf32>
    tpu.vector_store %arg5[%c7_160, %c0_161, %c0_162], %331 {strides = array<i32>} : memref<16x32x32xf32, #tpu.memory_space<vmem>>, vector<1x32x32xf32>,
    %cst_163 = arith.constant dense<0.000000e+00> : vector<32xf32>
    %332 = vector.multi_reduction <add>, %328, %cst_163 [0] : vector<32x32xf32> to vector<32xf32>
    %333 = vector.shape_cast %332 : vector<32xf32> to vector<1x32xf32>
    %334 = arith.addf %292, %333 : vector<1x32xf32>
    %335 = arith.mulf %328, %328 : vector<32x32xf32>
    %cst_164 = arith.constant dense<0.000000e+00> : vector<32xf32>
    %336 = vector.multi_reduction <add>, %335, %cst_164 [0] : vector<32x32xf32> to vector<32xf32>
    %337 = vector.shape_cast %336 : vector<32xf32> to vector<1x32xf32>
    %338 = arith.addf %296, %337 : vector<1x32xf32>
    %cst_165 = arith.constant 0.000000e+00 : f32
    %339 = vector.broadcast %cst_165 : f32 to vector<2x4x4x128xf32>
    %340 = vector.extract_strided_slice %0 {offsets = [0, 2, 1, 0], sizes = [2, 4, 4, 128], strides = [1, 1, 1, 1]} : vector<2x6x6x128xf32> to vector<2x4x4x128xf32>
    %c8 = arith.constant 8 : index
    %c0_166 = arith.constant 0 : index
    %c0_167 = arith.constant 0 : index
    %341 = vector.load %arg1[%c8, %c0_166, %c0_167] : memref<16x4x128xf32, #tpu.memory_space<vmem>>, vector<1x1x128xf32>
    %342 = vector.shape_cast %341 : vector<1x1x128xf32> to vector<128xf32>
    %343 = vector.shape_cast %342 : vector<128xf32> to vector<1x1x1x128xf32>
    %344 = vector.broadcast %343 : vector<1x1x1x128xf32> to vector<2x4x4x128xf32>
    %345 = arith.mulf %340, %344 : vector<2x4x4x128xf32>
    %346 = arith.addf %339, %345 : vector<2x4x4x128xf32>
    %347 = vector.extract_strided_slice %0 {offsets = [0, 2, 0, 0], sizes = [2, 4, 4, 128], strides = [1, 1, 1, 1]} : vector<2x6x6x128xf32> to vector<2x4x4x128xf32>
    %c8_168 = arith.constant 8 : index
    %c1_169 = arith.constant 1 : index
    %c0_170 = arith.constant 0 : index
    %348 = vector.load %arg1[%c8_168, %c1_169, %c0_170] : memref<16x4x128xf32, #tpu.memory_space<vmem>>, vector<1x1x128xf32>
    %349 = vector.shape_cast %348 : vector<1x1x128xf32> to vector<128xf32>
    %350 = vector.shape_cast %349 : vector<128xf32> to vector<1x1x1x128xf32>
    %351 = vector.broadcast %350 : vector<1x1x1x128xf32> to vector<2x4x4x128xf32>
    %352 = arith.mulf %347, %351 : vector<2x4x4x128xf32>
    %353 = arith.addf %346, %352 : vector<2x4x4x128xf32>
    %354 = vector.extract_strided_slice %0 {offsets = [0, 1, 1, 0], sizes = [2, 4, 4, 128], strides = [1, 1, 1, 1]} : vector<2x6x6x128xf32> to vector<2x4x4x128xf32>
    %c8_171 = arith.constant 8 : index
    %c2_172 = arith.constant 2 : index
    %c0_173 = arith.constant 0 : index
    %355 = vector.load %arg1[%c8_171, %c2_172, %c0_173] : memref<16x4x128xf32, #tpu.memory_space<vmem>>, vector<1x1x128xf32>
    %356 = vector.shape_cast %355 : vector<1x1x128xf32> to vector<128xf32>
    %357 = vector.shape_cast %356 : vector<128xf32> to vector<1x1x1x128xf32>
    %358 = vector.broadcast %357 : vector<1x1x1x128xf32> to vector<2x4x4x128xf32>
    %359 = arith.mulf %354, %358 : vector<2x4x4x128xf32>
    %360 = arith.addf %353, %359 : vector<2x4x4x128xf32>
    %361 = vector.extract_strided_slice %0 {offsets = [0, 1, 0, 0], sizes = [2, 4, 4, 128], strides = [1, 1, 1, 1]} : vector<2x6x6x128xf32> to vector<2x4x4x128xf32>
    %c8_174 = arith.constant 8 : index
    %c3_175 = arith.constant 3 : index
    %c0_176 = arith.constant 0 : index
    %362 = vector.load %arg1[%c8_174, %c3_175, %c0_176] : memref<16x4x128xf32, #tpu.memory_space<vmem>>, vector<1x1x128xf32>
    %363 = vector.shape_cast %362 : vector<1x1x128xf32> to vector<128xf32>
    %364 = vector.shape_cast %363 : vector<128xf32> to vector<1x1x1x128xf32>
    %365 = vector.broadcast %364 : vector<1x1x1x128xf32> to vector<2x4x4x128xf32>
    %366 = arith.mulf %361, %365 : vector<2x4x4x128xf32>
    %367 = arith.addf %360, %366 : vector<2x4x4x128xf32>
    %368 = vector.shape_cast %367 : vector<2x4x4x128xf32> to vector<32x128xf32>
    %c0_177 = arith.constant 0 : index
    %c0_178 = arith.constant 0 : index
    %369 = vector.load %arg2[%c0_177, %c0_178] : memref<128x32xf32, #tpu.memory_space<vmem>>, vector<128x32xf32>
    %cst_179 = arith.constant dense<0.000000e+00> : vector<32x32xf32>
    %370 = tpu.matmul %368, %369, %cst_179 {dimension_numbers = #tpu.dot_dimension_numbers<[1], [0], [0], [1], [0, 0, 1, 1], [], []>} : vector<32x128xf32>, vector<128x32xf32>, vector<32x32xf32> -> vector<32x32xf32>
    %c8_180 = arith.constant 8 : index
    %c0_181 = arith.constant 0 : index
    %c0_182 = arith.constant 0 : index
    %371 = vector.load %arg5[%c8_180, %c0_181, %c0_182] : memref<16x32x32xf32, #tpu.memory_space<vmem>>, vector<1x32x32xf32>
    %372 = vector.shape_cast %371 : vector<1x32x32xf32> to vector<32x32xf32>
    %373 = vector.shape_cast %370 : vector<32x32xf32> to vector<1x32x32xf32>
    tpu.vector_store %arg5[%c8_180, %c0_181, %c0_182], %373 {strides = array<i32>} : memref<16x32x32xf32, #tpu.memory_space<vmem>>, vector<1x32x32xf32>,
    %cst_183 = arith.constant dense<0.000000e+00> : vector<32xf32>
    %374 = vector.multi_reduction <add>, %370, %cst_183 [0] : vector<32x32xf32> to vector<32xf32>
    %375 = vector.shape_cast %374 : vector<32xf32> to vector<1x32xf32>
    %376 = arith.addf %334, %375 : vector<1x32xf32>
    %377 = arith.mulf %370, %370 : vector<32x32xf32>
    %cst_184 = arith.constant dense<0.000000e+00> : vector<32xf32>
    %378 = vector.multi_reduction <add>, %377, %cst_184 [0] : vector<32x32xf32> to vector<32xf32>
    %379 = vector.shape_cast %378 : vector<32xf32> to vector<1x32xf32>
    %380 = arith.addf %338, %379 : vector<1x32xf32>
    %cst_185 = arith.constant 0.000000e+00 : f32
    %381 = vector.broadcast %cst_185 : f32 to vector<2x4x4x128xf32>
    %382 = vector.extract_strided_slice %0 {offsets = [0, 2, 1, 0], sizes = [2, 4, 4, 128], strides = [1, 1, 1, 1]} : vector<2x6x6x128xf32> to vector<2x4x4x128xf32>
    %c9 = arith.constant 9 : index
    %c0_186 = arith.constant 0 : index
    %c0_187 = arith.constant 0 : index
    %383 = vector.load %arg1[%c9, %c0_186, %c0_187] : memref<16x4x128xf32, #tpu.memory_space<vmem>>, vector<1x1x128xf32>
    %384 = vector.shape_cast %383 : vector<1x1x128xf32> to vector<128xf32>
    %385 = vector.shape_cast %384 : vector<128xf32> to vector<1x1x1x128xf32>
    %386 = vector.broadcast %385 : vector<1x1x1x128xf32> to vector<2x4x4x128xf32>
    %387 = arith.mulf %382, %386 : vector<2x4x4x128xf32>
    %388 = arith.addf %381, %387 : vector<2x4x4x128xf32>
    %389 = vector.extract_strided_slice %0 {offsets = [0, 2, 0, 0], sizes = [2, 4, 4, 128], strides = [1, 1, 1, 1]} : vector<2x6x6x128xf32> to vector<2x4x4x128xf32>
    %c9_188 = arith.constant 9 : index
    %c1_189 = arith.constant 1 : index
    %c0_190 = arith.constant 0 : index
    %390 = vector.load %arg1[%c9_188, %c1_189, %c0_190] : memref<16x4x128xf32, #tpu.memory_space<vmem>>, vector<1x1x128xf32>
    %391 = vector.shape_cast %390 : vector<1x1x128xf32> to vector<128xf32>
    %392 = vector.shape_cast %391 : vector<128xf32> to vector<1x1x1x128xf32>
    %393 = vector.broadcast %392 : vector<1x1x1x128xf32> to vector<2x4x4x128xf32>
    %394 = arith.mulf %389, %393 : vector<2x4x4x128xf32>
    %395 = arith.addf %388, %394 : vector<2x4x4x128xf32>
    %396 = vector.extract_strided_slice %0 {offsets = [0, 1, 1, 0], sizes = [2, 4, 4, 128], strides = [1, 1, 1, 1]} : vector<2x6x6x128xf32> to vector<2x4x4x128xf32>
    %c9_191 = arith.constant 9 : index
    %c2_192 = arith.constant 2 : index
    %c0_193 = arith.constant 0 : index
    %397 = vector.load %arg1[%c9_191, %c2_192, %c0_193] : memref<16x4x128xf32, #tpu.memory_space<vmem>>, vector<1x1x128xf32>
    %398 = vector.shape_cast %397 : vector<1x1x128xf32> to vector<128xf32>
    %399 = vector.shape_cast %398 : vector<128xf32> to vector<1x1x1x128xf32>
    %400 = vector.broadcast %399 : vector<1x1x1x128xf32> to vector<2x4x4x128xf32>
    %401 = arith.mulf %396, %400 : vector<2x4x4x128xf32>
    %402 = arith.addf %395, %401 : vector<2x4x4x128xf32>
    %403 = vector.extract_strided_slice %0 {offsets = [0, 1, 0, 0], sizes = [2, 4, 4, 128], strides = [1, 1, 1, 1]} : vector<2x6x6x128xf32> to vector<2x4x4x128xf32>
    %c9_194 = arith.constant 9 : index
    %c3_195 = arith.constant 3 : index
    %c0_196 = arith.constant 0 : index
    %404 = vector.load %arg1[%c9_194, %c3_195, %c0_196] : memref<16x4x128xf32, #tpu.memory_space<vmem>>, vector<1x1x128xf32>
    %405 = vector.shape_cast %404 : vector<1x1x128xf32> to vector<128xf32>
    %406 = vector.shape_cast %405 : vector<128xf32> to vector<1x1x1x128xf32>
    %407 = vector.broadcast %406 : vector<1x1x1x128xf32> to vector<2x4x4x128xf32>
    %408 = arith.mulf %403, %407 : vector<2x4x4x128xf32>
    %409 = arith.addf %402, %408 : vector<2x4x4x128xf32>
    %410 = vector.shape_cast %409 : vector<2x4x4x128xf32> to vector<32x128xf32>
    %c0_197 = arith.constant 0 : index
    %c0_198 = arith.constant 0 : index
    %411 = vector.load %arg2[%c0_197, %c0_198] : memref<128x32xf32, #tpu.memory_space<vmem>>, vector<128x32xf32>
    %cst_199 = arith.constant dense<0.000000e+00> : vector<32x32xf32>
    %412 = tpu.matmul %410, %411, %cst_199 {dimension_numbers = #tpu.dot_dimension_numbers<[1], [0], [0], [1], [0, 0, 1, 1], [], []>} : vector<32x128xf32>, vector<128x32xf32>, vector<32x32xf32> -> vector<32x32xf32>
    %c9_200 = arith.constant 9 : index
    %c0_201 = arith.constant 0 : index
    %c0_202 = arith.constant 0 : index
    %413 = vector.load %arg5[%c9_200, %c0_201, %c0_202] : memref<16x32x32xf32, #tpu.memory_space<vmem>>, vector<1x32x32xf32>
    %414 = vector.shape_cast %413 : vector<1x32x32xf32> to vector<32x32xf32>
    %415 = vector.shape_cast %412 : vector<32x32xf32> to vector<1x32x32xf32>
    tpu.vector_store %arg5[%c9_200, %c0_201, %c0_202], %415 {strides = array<i32>} : memref<16x32x32xf32, #tpu.memory_space<vmem>>, vector<1x32x32xf32>,
    %cst_203 = arith.constant dense<0.000000e+00> : vector<32xf32>
    %416 = vector.multi_reduction <add>, %412, %cst_203 [0] : vector<32x32xf32> to vector<32xf32>
    %417 = vector.shape_cast %416 : vector<32xf32> to vector<1x32xf32>
    %418 = arith.addf %376, %417 : vector<1x32xf32>
    %419 = arith.mulf %412, %412 : vector<32x32xf32>
    %cst_204 = arith.constant dense<0.000000e+00> : vector<32xf32>
    %420 = vector.multi_reduction <add>, %419, %cst_204 [0] : vector<32x32xf32> to vector<32xf32>
    %421 = vector.shape_cast %420 : vector<32xf32> to vector<1x32xf32>
    %422 = arith.addf %380, %421 : vector<1x32xf32>
    %cst_205 = arith.constant 0.000000e+00 : f32
    %423 = vector.broadcast %cst_205 : f32 to vector<2x4x4x128xf32>
    %424 = vector.extract_strided_slice %0 {offsets = [0, 2, 2, 0], sizes = [2, 4, 4, 128], strides = [1, 1, 1, 1]} : vector<2x6x6x128xf32> to vector<2x4x4x128xf32>
    %c10 = arith.constant 10 : index
    %c0_206 = arith.constant 0 : index
    %c0_207 = arith.constant 0 : index
    %425 = vector.load %arg1[%c10, %c0_206, %c0_207] : memref<16x4x128xf32, #tpu.memory_space<vmem>>, vector<1x1x128xf32>
    %426 = vector.shape_cast %425 : vector<1x1x128xf32> to vector<128xf32>
    %427 = vector.shape_cast %426 : vector<128xf32> to vector<1x1x1x128xf32>
    %428 = vector.broadcast %427 : vector<1x1x1x128xf32> to vector<2x4x4x128xf32>
    %429 = arith.mulf %424, %428 : vector<2x4x4x128xf32>
    %430 = arith.addf %423, %429 : vector<2x4x4x128xf32>
    %431 = vector.extract_strided_slice %0 {offsets = [0, 2, 1, 0], sizes = [2, 4, 4, 128], strides = [1, 1, 1, 1]} : vector<2x6x6x128xf32> to vector<2x4x4x128xf32>
    %c10_208 = arith.constant 10 : index
    %c1_209 = arith.constant 1 : index
    %c0_210 = arith.constant 0 : index
    %432 = vector.load %arg1[%c10_208, %c1_209, %c0_210] : memref<16x4x128xf32, #tpu.memory_space<vmem>>, vector<1x1x128xf32>
    %433 = vector.shape_cast %432 : vector<1x1x128xf32> to vector<128xf32>
    %434 = vector.shape_cast %433 : vector<128xf32> to vector<1x1x1x128xf32>
    %435 = vector.broadcast %434 : vector<1x1x1x128xf32> to vector<2x4x4x128xf32>
    %436 = arith.mulf %431, %435 : vector<2x4x4x128xf32>
    %437 = arith.addf %430, %436 : vector<2x4x4x128xf32>
    %438 = vector.extract_strided_slice %0 {offsets = [0, 1, 2, 0], sizes = [2, 4, 4, 128], strides = [1, 1, 1, 1]} : vector<2x6x6x128xf32> to vector<2x4x4x128xf32>
    %c10_211 = arith.constant 10 : index
    %c2_212 = arith.constant 2 : index
    %c0_213 = arith.constant 0 : index
    %439 = vector.load %arg1[%c10_211, %c2_212, %c0_213] : memref<16x4x128xf32, #tpu.memory_space<vmem>>, vector<1x1x128xf32>
    %440 = vector.shape_cast %439 : vector<1x1x128xf32> to vector<128xf32>
    %441 = vector.shape_cast %440 : vector<128xf32> to vector<1x1x1x128xf32>
    %442 = vector.broadcast %441 : vector<1x1x1x128xf32> to vector<2x4x4x128xf32>
    %443 = arith.mulf %438, %442 : vector<2x4x4x128xf32>
    %444 = arith.addf %437, %443 : vector<2x4x4x128xf32>
    %445 = vector.extract_strided_slice %0 {offsets = [0, 1, 1, 0], sizes = [2, 4, 4, 128], strides = [1, 1, 1, 1]} : vector<2x6x6x128xf32> to vector<2x4x4x128xf32>
    %c10_214 = arith.constant 10 : index
    %c3_215 = arith.constant 3 : index
    %c0_216 = arith.constant 0 : index
    %446 = vector.load %arg1[%c10_214, %c3_215, %c0_216] : memref<16x4x128xf32, #tpu.memory_space<vmem>>, vector<1x1x128xf32>
    %447 = vector.shape_cast %446 : vector<1x1x128xf32> to vector<128xf32>
    %448 = vector.shape_cast %447 : vector<128xf32> to vector<1x1x1x128xf32>
    %449 = vector.broadcast %448 : vector<1x1x1x128xf32> to vector<2x4x4x128xf32>
    %450 = arith.mulf %445, %449 : vector<2x4x4x128xf32>
    %451 = arith.addf %444, %450 : vector<2x4x4x128xf32>
    %452 = vector.shape_cast %451 : vector<2x4x4x128xf32> to vector<32x128xf32>
    %c0_217 = arith.constant 0 : index
    %c0_218 = arith.constant 0 : index
    %453 = vector.load %arg2[%c0_217, %c0_218] : memref<128x32xf32, #tpu.memory_space<vmem>>, vector<128x32xf32>
    %cst_219 = arith.constant dense<0.000000e+00> : vector<32x32xf32>
    %454 = tpu.matmul %452, %453, %cst_219 {dimension_numbers = #tpu.dot_dimension_numbers<[1], [0], [0], [1], [0, 0, 1, 1], [], []>} : vector<32x128xf32>, vector<128x32xf32>, vector<32x32xf32> -> vector<32x32xf32>
    %c10_220 = arith.constant 10 : index
    %c0_221 = arith.constant 0 : index
    %c0_222 = arith.constant 0 : index
    %455 = vector.load %arg5[%c10_220, %c0_221, %c0_222] : memref<16x32x32xf32, #tpu.memory_space<vmem>>, vector<1x32x32xf32>
    %456 = vector.shape_cast %455 : vector<1x32x32xf32> to vector<32x32xf32>
    %457 = vector.shape_cast %454 : vector<32x32xf32> to vector<1x32x32xf32>
    tpu.vector_store %arg5[%c10_220, %c0_221, %c0_222], %457 {strides = array<i32>} : memref<16x32x32xf32, #tpu.memory_space<vmem>>, vector<1x32x32xf32>,
    %cst_223 = arith.constant dense<0.000000e+00> : vector<32xf32>
    %458 = vector.multi_reduction <add>, %454, %cst_223 [0] : vector<32x32xf32> to vector<32xf32>
    %459 = vector.shape_cast %458 : vector<32xf32> to vector<1x32xf32>
    %460 = arith.addf %418, %459 : vector<1x32xf32>
    %461 = arith.mulf %454, %454 : vector<32x32xf32>
    %cst_224 = arith.constant dense<0.000000e+00> : vector<32xf32>
    %462 = vector.multi_reduction <add>, %461, %cst_224 [0] : vector<32x32xf32> to vector<32xf32>
    %463 = vector.shape_cast %462 : vector<32xf32> to vector<1x32xf32>
    %464 = arith.addf %422, %463 : vector<1x32xf32>
    %cst_225 = arith.constant 0.000000e+00 : f32
    %465 = vector.broadcast %cst_225 : f32 to vector<2x4x4x128xf32>
    %466 = vector.extract_strided_slice %0 {offsets = [0, 2, 2, 0], sizes = [2, 4, 4, 128], strides = [1, 1, 1, 1]} : vector<2x6x6x128xf32> to vector<2x4x4x128xf32>
    %c11 = arith.constant 11 : index
    %c0_226 = arith.constant 0 : index
    %c0_227 = arith.constant 0 : index
    %467 = vector.load %arg1[%c11, %c0_226, %c0_227] : memref<16x4x128xf32, #tpu.memory_space<vmem>>, vector<1x1x128xf32>
    %468 = vector.shape_cast %467 : vector<1x1x128xf32> to vector<128xf32>
    %469 = vector.shape_cast %468 : vector<128xf32> to vector<1x1x1x128xf32>
    %470 = vector.broadcast %469 : vector<1x1x1x128xf32> to vector<2x4x4x128xf32>
    %471 = arith.mulf %466, %470 : vector<2x4x4x128xf32>
    %472 = arith.addf %465, %471 : vector<2x4x4x128xf32>
    %473 = vector.extract_strided_slice %0 {offsets = [0, 2, 1, 0], sizes = [2, 4, 4, 128], strides = [1, 1, 1, 1]} : vector<2x6x6x128xf32> to vector<2x4x4x128xf32>
    %c11_228 = arith.constant 11 : index
    %c1_229 = arith.constant 1 : index
    %c0_230 = arith.constant 0 : index
    %474 = vector.load %arg1[%c11_228, %c1_229, %c0_230] : memref<16x4x128xf32, #tpu.memory_space<vmem>>, vector<1x1x128xf32>
    %475 = vector.shape_cast %474 : vector<1x1x128xf32> to vector<128xf32>
    %476 = vector.shape_cast %475 : vector<128xf32> to vector<1x1x1x128xf32>
    %477 = vector.broadcast %476 : vector<1x1x1x128xf32> to vector<2x4x4x128xf32>
    %478 = arith.mulf %473, %477 : vector<2x4x4x128xf32>
    %479 = arith.addf %472, %478 : vector<2x4x4x128xf32>
    %480 = vector.extract_strided_slice %0 {offsets = [0, 1, 2, 0], sizes = [2, 4, 4, 128], strides = [1, 1, 1, 1]} : vector<2x6x6x128xf32> to vector<2x4x4x128xf32>
    %c11_231 = arith.constant 11 : index
    %c2_232 = arith.constant 2 : index
    %c0_233 = arith.constant 0 : index
    %481 = vector.load %arg1[%c11_231, %c2_232, %c0_233] : memref<16x4x128xf32, #tpu.memory_space<vmem>>, vector<1x1x128xf32>
    %482 = vector.shape_cast %481 : vector<1x1x128xf32> to vector<128xf32>
    %483 = vector.shape_cast %482 : vector<128xf32> to vector<1x1x1x128xf32>
    %484 = vector.broadcast %483 : vector<1x1x1x128xf32> to vector<2x4x4x128xf32>
    %485 = arith.mulf %480, %484 : vector<2x4x4x128xf32>
    %486 = arith.addf %479, %485 : vector<2x4x4x128xf32>
    %487 = vector.extract_strided_slice %0 {offsets = [0, 1, 1, 0], sizes = [2, 4, 4, 128], strides = [1, 1, 1, 1]} : vector<2x6x6x128xf32> to vector<2x4x4x128xf32>
    %c11_234 = arith.constant 11 : index
    %c3_235 = arith.constant 3 : index
    %c0_236 = arith.constant 0 : index
    %488 = vector.load %arg1[%c11_234, %c3_235, %c0_236] : memref<16x4x128xf32, #tpu.memory_space<vmem>>, vector<1x1x128xf32>
    %489 = vector.shape_cast %488 : vector<1x1x128xf32> to vector<128xf32>
    %490 = vector.shape_cast %489 : vector<128xf32> to vector<1x1x1x128xf32>
    %491 = vector.broadcast %490 : vector<1x1x1x128xf32> to vector<2x4x4x128xf32>
    %492 = arith.mulf %487, %491 : vector<2x4x4x128xf32>
    %493 = arith.addf %486, %492 : vector<2x4x4x128xf32>
    %494 = vector.shape_cast %493 : vector<2x4x4x128xf32> to vector<32x128xf32>
    %c0_237 = arith.constant 0 : index
    %c0_238 = arith.constant 0 : index
    %495 = vector.load %arg2[%c0_237, %c0_238] : memref<128x32xf32, #tpu.memory_space<vmem>>, vector<128x32xf32>
    %cst_239 = arith.constant dense<0.000000e+00> : vector<32x32xf32>
    %496 = tpu.matmul %494, %495, %cst_239 {dimension_numbers = #tpu.dot_dimension_numbers<[1], [0], [0], [1], [0, 0, 1, 1], [], []>} : vector<32x128xf32>, vector<128x32xf32>, vector<32x32xf32> -> vector<32x32xf32>
    %c11_240 = arith.constant 11 : index
    %c0_241 = arith.constant 0 : index
    %c0_242 = arith.constant 0 : index
    %497 = vector.load %arg5[%c11_240, %c0_241, %c0_242] : memref<16x32x32xf32, #tpu.memory_space<vmem>>, vector<1x32x32xf32>
    %498 = vector.shape_cast %497 : vector<1x32x32xf32> to vector<32x32xf32>
    %499 = vector.shape_cast %496 : vector<32x32xf32> to vector<1x32x32xf32>
    tpu.vector_store %arg5[%c11_240, %c0_241, %c0_242], %499 {strides = array<i32>} : memref<16x32x32xf32, #tpu.memory_space<vmem>>, vector<1x32x32xf32>,
    %cst_243 = arith.constant dense<0.000000e+00> : vector<32xf32>
    %500 = vector.multi_reduction <add>, %496, %cst_243 [0] : vector<32x32xf32> to vector<32xf32>
    %501 = vector.shape_cast %500 : vector<32xf32> to vector<1x32xf32>
    %502 = arith.addf %460, %501 : vector<1x32xf32>
    %503 = arith.mulf %496, %496 : vector<32x32xf32>
    %cst_244 = arith.constant dense<0.000000e+00> : vector<32xf32>
    %504 = vector.multi_reduction <add>, %503, %cst_244 [0] : vector<32x32xf32> to vector<32xf32>
    %505 = vector.shape_cast %504 : vector<32xf32> to vector<1x32xf32>
    %506 = arith.addf %464, %505 : vector<1x32xf32>
    %cst_245 = arith.constant 0.000000e+00 : f32
    %507 = vector.broadcast %cst_245 : f32 to vector<2x4x4x128xf32>
    %508 = vector.extract_strided_slice %0 {offsets = [0, 2, 1, 0], sizes = [2, 4, 4, 128], strides = [1, 1, 1, 1]} : vector<2x6x6x128xf32> to vector<2x4x4x128xf32>
    %c12 = arith.constant 12 : index
    %c0_246 = arith.constant 0 : index
    %c0_247 = arith.constant 0 : index
    %509 = vector.load %arg1[%c12, %c0_246, %c0_247] : memref<16x4x128xf32, #tpu.memory_space<vmem>>, vector<1x1x128xf32>
    %510 = vector.shape_cast %509 : vector<1x1x128xf32> to vector<128xf32>
    %511 = vector.shape_cast %510 : vector<128xf32> to vector<1x1x1x128xf32>
    %512 = vector.broadcast %511 : vector<1x1x1x128xf32> to vector<2x4x4x128xf32>
    %513 = arith.mulf %508, %512 : vector<2x4x4x128xf32>
    %514 = arith.addf %507, %513 : vector<2x4x4x128xf32>
    %515 = vector.extract_strided_slice %0 {offsets = [0, 2, 0, 0], sizes = [2, 4, 4, 128], strides = [1, 1, 1, 1]} : vector<2x6x6x128xf32> to vector<2x4x4x128xf32>
    %c12_248 = arith.constant 12 : index
    %c1_249 = arith.constant 1 : index
    %c0_250 = arith.constant 0 : index
    %516 = vector.load %arg1[%c12_248, %c1_249, %c0_250] : memref<16x4x128xf32, #tpu.memory_space<vmem>>, vector<1x1x128xf32>
    %517 = vector.shape_cast %516 : vector<1x1x128xf32> to vector<128xf32>
    %518 = vector.shape_cast %517 : vector<128xf32> to vector<1x1x1x128xf32>
    %519 = vector.broadcast %518 : vector<1x1x1x128xf32> to vector<2x4x4x128xf32>
    %520 = arith.mulf %515, %519 : vector<2x4x4x128xf32>
    %521 = arith.addf %514, %520 : vector<2x4x4x128xf32>
    %522 = vector.extract_strided_slice %0 {offsets = [0, 1, 1, 0], sizes = [2, 4, 4, 128], strides = [1, 1, 1, 1]} : vector<2x6x6x128xf32> to vector<2x4x4x128xf32>
    %c12_251 = arith.constant 12 : index
    %c2_252 = arith.constant 2 : index
    %c0_253 = arith.constant 0 : index
    %523 = vector.load %arg1[%c12_251, %c2_252, %c0_253] : memref<16x4x128xf32, #tpu.memory_space<vmem>>, vector<1x1x128xf32>
    %524 = vector.shape_cast %523 : vector<1x1x128xf32> to vector<128xf32>
    %525 = vector.shape_cast %524 : vector<128xf32> to vector<1x1x1x128xf32>
    %526 = vector.broadcast %525 : vector<1x1x1x128xf32> to vector<2x4x4x128xf32>
    %527 = arith.mulf %522, %526 : vector<2x4x4x128xf32>
    %528 = arith.addf %521, %527 : vector<2x4x4x128xf32>
    %529 = vector.extract_strided_slice %0 {offsets = [0, 1, 0, 0], sizes = [2, 4, 4, 128], strides = [1, 1, 1, 1]} : vector<2x6x6x128xf32> to vector<2x4x4x128xf32>
    %c12_254 = arith.constant 12 : index
    %c3_255 = arith.constant 3 : index
    %c0_256 = arith.constant 0 : index
    %530 = vector.load %arg1[%c12_254, %c3_255, %c0_256] : memref<16x4x128xf32, #tpu.memory_space<vmem>>, vector<1x1x128xf32>
    %531 = vector.shape_cast %530 : vector<1x1x128xf32> to vector<128xf32>
    %532 = vector.shape_cast %531 : vector<128xf32> to vector<1x1x1x128xf32>
    %533 = vector.broadcast %532 : vector<1x1x1x128xf32> to vector<2x4x4x128xf32>
    %534 = arith.mulf %529, %533 : vector<2x4x4x128xf32>
    %535 = arith.addf %528, %534 : vector<2x4x4x128xf32>
    %536 = vector.shape_cast %535 : vector<2x4x4x128xf32> to vector<32x128xf32>
    %c0_257 = arith.constant 0 : index
    %c0_258 = arith.constant 0 : index
    %537 = vector.load %arg2[%c0_257, %c0_258] : memref<128x32xf32, #tpu.memory_space<vmem>>, vector<128x32xf32>
    %cst_259 = arith.constant dense<0.000000e+00> : vector<32x32xf32>
    %538 = tpu.matmul %536, %537, %cst_259 {dimension_numbers = #tpu.dot_dimension_numbers<[1], [0], [0], [1], [0, 0, 1, 1], [], []>} : vector<32x128xf32>, vector<128x32xf32>, vector<32x32xf32> -> vector<32x32xf32>
    %c12_260 = arith.constant 12 : index
    %c0_261 = arith.constant 0 : index
    %c0_262 = arith.constant 0 : index
    %539 = vector.load %arg5[%c12_260, %c0_261, %c0_262] : memref<16x32x32xf32, #tpu.memory_space<vmem>>, vector<1x32x32xf32>
    %540 = vector.shape_cast %539 : vector<1x32x32xf32> to vector<32x32xf32>
    %541 = vector.shape_cast %538 : vector<32x32xf32> to vector<1x32x32xf32>
    tpu.vector_store %arg5[%c12_260, %c0_261, %c0_262], %541 {strides = array<i32>} : memref<16x32x32xf32, #tpu.memory_space<vmem>>, vector<1x32x32xf32>,
    %cst_263 = arith.constant dense<0.000000e+00> : vector<32xf32>
    %542 = vector.multi_reduction <add>, %538, %cst_263 [0] : vector<32x32xf32> to vector<32xf32>
    %543 = vector.shape_cast %542 : vector<32xf32> to vector<1x32xf32>
    %544 = arith.addf %502, %543 : vector<1x32xf32>
    %545 = arith.mulf %538, %538 : vector<32x32xf32>
    %cst_264 = arith.constant dense<0.000000e+00> : vector<32xf32>
    %546 = vector.multi_reduction <add>, %545, %cst_264 [0] : vector<32x32xf32> to vector<32xf32>
    %547 = vector.shape_cast %546 : vector<32xf32> to vector<1x32xf32>
    %548 = arith.addf %506, %547 : vector<1x32xf32>
    %cst_265 = arith.constant 0.000000e+00 : f32
    %549 = vector.broadcast %cst_265 : f32 to vector<2x4x4x128xf32>
    %550 = vector.extract_strided_slice %0 {offsets = [0, 2, 1, 0], sizes = [2, 4, 4, 128], strides = [1, 1, 1, 1]} : vector<2x6x6x128xf32> to vector<2x4x4x128xf32>
    %c13 = arith.constant 13 : index
    %c0_266 = arith.constant 0 : index
    %c0_267 = arith.constant 0 : index
    %551 = vector.load %arg1[%c13, %c0_266, %c0_267] : memref<16x4x128xf32, #tpu.memory_space<vmem>>, vector<1x1x128xf32>
    %552 = vector.shape_cast %551 : vector<1x1x128xf32> to vector<128xf32>
    %553 = vector.shape_cast %552 : vector<128xf32> to vector<1x1x1x128xf32>
    %554 = vector.broadcast %553 : vector<1x1x1x128xf32> to vector<2x4x4x128xf32>
    %555 = arith.mulf %550, %554 : vector<2x4x4x128xf32>
    %556 = arith.addf %549, %555 : vector<2x4x4x128xf32>
    %557 = vector.extract_strided_slice %0 {offsets = [0, 2, 0, 0], sizes = [2, 4, 4, 128], strides = [1, 1, 1, 1]} : vector<2x6x6x128xf32> to vector<2x4x4x128xf32>
    %c13_268 = arith.constant 13 : index
    %c1_269 = arith.constant 1 : index
    %c0_270 = arith.constant 0 : index
    %558 = vector.load %arg1[%c13_268, %c1_269, %c0_270] : memref<16x4x128xf32, #tpu.memory_space<vmem>>, vector<1x1x128xf32>
    %559 = vector.shape_cast %558 : vector<1x1x128xf32> to vector<128xf32>
    %560 = vector.shape_cast %559 : vector<128xf32> to vector<1x1x1x128xf32>
    %561 = vector.broadcast %560 : vector<1x1x1x128xf32> to vector<2x4x4x128xf32>
    %562 = arith.mulf %557, %561 : vector<2x4x4x128xf32>
    %563 = arith.addf %556, %562 : vector<2x4x4x128xf32>
    %564 = vector.extract_strided_slice %0 {offsets = [0, 1, 1, 0], sizes = [2, 4, 4, 128], strides = [1, 1, 1, 1]} : vector<2x6x6x128xf32> to vector<2x4x4x128xf32>
    %c13_271 = arith.constant 13 : index
    %c2_272 = arith.constant 2 : index
    %c0_273 = arith.constant 0 : index
    %565 = vector.load %arg1[%c13_271, %c2_272, %c0_273] : memref<16x4x128xf32, #tpu.memory_space<vmem>>, vector<1x1x128xf32>
    %566 = vector.shape_cast %565 : vector<1x1x128xf32> to vector<128xf32>
    %567 = vector.shape_cast %566 : vector<128xf32> to vector<1x1x1x128xf32>
    %568 = vector.broadcast %567 : vector<1x1x1x128xf32> to vector<2x4x4x128xf32>
    %569 = arith.mulf %564, %568 : vector<2x4x4x128xf32>
    %570 = arith.addf %563, %569 : vector<2x4x4x128xf32>
    %571 = vector.extract_strided_slice %0 {offsets = [0, 1, 0, 0], sizes = [2, 4, 4, 128], strides = [1, 1, 1, 1]} : vector<2x6x6x128xf32> to vector<2x4x4x128xf32>
    %c13_274 = arith.constant 13 : index
    %c3_275 = arith.constant 3 : index
    %c0_276 = arith.constant 0 : index
    %572 = vector.load %arg1[%c13_274, %c3_275, %c0_276] : memref<16x4x128xf32, #tpu.memory_space<vmem>>, vector<1x1x128xf32>
    %573 = vector.shape_cast %572 : vector<1x1x128xf32> to vector<128xf32>
    %574 = vector.shape_cast %573 : vector<128xf32> to vector<1x1x1x128xf32>
    %575 = vector.broadcast %574 : vector<1x1x1x128xf32> to vector<2x4x4x128xf32>
    %576 = arith.mulf %571, %575 : vector<2x4x4x128xf32>
    %577 = arith.addf %570, %576 : vector<2x4x4x128xf32>
    %578 = vector.shape_cast %577 : vector<2x4x4x128xf32> to vector<32x128xf32>
    %c0_277 = arith.constant 0 : index
    %c0_278 = arith.constant 0 : index
    %579 = vector.load %arg2[%c0_277, %c0_278] : memref<128x32xf32, #tpu.memory_space<vmem>>, vector<128x32xf32>
    %cst_279 = arith.constant dense<0.000000e+00> : vector<32x32xf32>
    %580 = tpu.matmul %578, %579, %cst_279 {dimension_numbers = #tpu.dot_dimension_numbers<[1], [0], [0], [1], [0, 0, 1, 1], [], []>} : vector<32x128xf32>, vector<128x32xf32>, vector<32x32xf32> -> vector<32x32xf32>
    %c13_280 = arith.constant 13 : index
    %c0_281 = arith.constant 0 : index
    %c0_282 = arith.constant 0 : index
    %581 = vector.load %arg5[%c13_280, %c0_281, %c0_282] : memref<16x32x32xf32, #tpu.memory_space<vmem>>, vector<1x32x32xf32>
    %582 = vector.shape_cast %581 : vector<1x32x32xf32> to vector<32x32xf32>
    %583 = vector.shape_cast %580 : vector<32x32xf32> to vector<1x32x32xf32>
    tpu.vector_store %arg5[%c13_280, %c0_281, %c0_282], %583 {strides = array<i32>} : memref<16x32x32xf32, #tpu.memory_space<vmem>>, vector<1x32x32xf32>,
    %cst_283 = arith.constant dense<0.000000e+00> : vector<32xf32>
    %584 = vector.multi_reduction <add>, %580, %cst_283 [0] : vector<32x32xf32> to vector<32xf32>
    %585 = vector.shape_cast %584 : vector<32xf32> to vector<1x32xf32>
    %586 = arith.addf %544, %585 : vector<1x32xf32>
    %587 = arith.mulf %580, %580 : vector<32x32xf32>
    %cst_284 = arith.constant dense<0.000000e+00> : vector<32xf32>
    %588 = vector.multi_reduction <add>, %587, %cst_284 [0] : vector<32x32xf32> to vector<32xf32>
    %589 = vector.shape_cast %588 : vector<32xf32> to vector<1x32xf32>
    %590 = arith.addf %548, %589 : vector<1x32xf32>
    %cst_285 = arith.constant 0.000000e+00 : f32
    %591 = vector.broadcast %cst_285 : f32 to vector<2x4x4x128xf32>
    %592 = vector.extract_strided_slice %0 {offsets = [0, 2, 2, 0], sizes = [2, 4, 4, 128], strides = [1, 1, 1, 1]} : vector<2x6x6x128xf32> to vector<2x4x4x128xf32>
    %c14 = arith.constant 14 : index
    %c0_286 = arith.constant 0 : index
    %c0_287 = arith.constant 0 : index
    %593 = vector.load %arg1[%c14, %c0_286, %c0_287] : memref<16x4x128xf32, #tpu.memory_space<vmem>>, vector<1x1x128xf32>
    %594 = vector.shape_cast %593 : vector<1x1x128xf32> to vector<128xf32>
    %595 = vector.shape_cast %594 : vector<128xf32> to vector<1x1x1x128xf32>
    %596 = vector.broadcast %595 : vector<1x1x1x128xf32> to vector<2x4x4x128xf32>
    %597 = arith.mulf %592, %596 : vector<2x4x4x128xf32>
    %598 = arith.addf %591, %597 : vector<2x4x4x128xf32>
    %599 = vector.extract_strided_slice %0 {offsets = [0, 2, 1, 0], sizes = [2, 4, 4, 128], strides = [1, 1, 1, 1]} : vector<2x6x6x128xf32> to vector<2x4x4x128xf32>
    %c14_288 = arith.constant 14 : index
    %c1_289 = arith.constant 1 : index
    %c0_290 = arith.constant 0 : index
    %600 = vector.load %arg1[%c14_288, %c1_289, %c0_290] : memref<16x4x128xf32, #tpu.memory_space<vmem>>, vector<1x1x128xf32>
    %601 = vector.shape_cast %600 : vector<1x1x128xf32> to vector<128xf32>
    %602 = vector.shape_cast %601 : vector<128xf32> to vector<1x1x1x128xf32>
    %603 = vector.broadcast %602 : vector<1x1x1x128xf32> to vector<2x4x4x128xf32>
    %604 = arith.mulf %599, %603 : vector<2x4x4x128xf32>
    %605 = arith.addf %598, %604 : vector<2x4x4x128xf32>
    %606 = vector.extract_strided_slice %0 {offsets = [0, 1, 2, 0], sizes = [2, 4, 4, 128], strides = [1, 1, 1, 1]} : vector<2x6x6x128xf32> to vector<2x4x4x128xf32>
    %c14_291 = arith.constant 14 : index
    %c2_292 = arith.constant 2 : index
    %c0_293 = arith.constant 0 : index
    %607 = vector.load %arg1[%c14_291, %c2_292, %c0_293] : memref<16x4x128xf32, #tpu.memory_space<vmem>>, vector<1x1x128xf32>
    %608 = vector.shape_cast %607 : vector<1x1x128xf32> to vector<128xf32>
    %609 = vector.shape_cast %608 : vector<128xf32> to vector<1x1x1x128xf32>
    %610 = vector.broadcast %609 : vector<1x1x1x128xf32> to vector<2x4x4x128xf32>
    %611 = arith.mulf %606, %610 : vector<2x4x4x128xf32>
    %612 = arith.addf %605, %611 : vector<2x4x4x128xf32>
    %613 = vector.extract_strided_slice %0 {offsets = [0, 1, 1, 0], sizes = [2, 4, 4, 128], strides = [1, 1, 1, 1]} : vector<2x6x6x128xf32> to vector<2x4x4x128xf32>
    %c14_294 = arith.constant 14 : index
    %c3_295 = arith.constant 3 : index
    %c0_296 = arith.constant 0 : index
    %614 = vector.load %arg1[%c14_294, %c3_295, %c0_296] : memref<16x4x128xf32, #tpu.memory_space<vmem>>, vector<1x1x128xf32>
    %615 = vector.shape_cast %614 : vector<1x1x128xf32> to vector<128xf32>
    %616 = vector.shape_cast %615 : vector<128xf32> to vector<1x1x1x128xf32>
    %617 = vector.broadcast %616 : vector<1x1x1x128xf32> to vector<2x4x4x128xf32>
    %618 = arith.mulf %613, %617 : vector<2x4x4x128xf32>
    %619 = arith.addf %612, %618 : vector<2x4x4x128xf32>
    %620 = vector.shape_cast %619 : vector<2x4x4x128xf32> to vector<32x128xf32>
    %c0_297 = arith.constant 0 : index
    %c0_298 = arith.constant 0 : index
    %621 = vector.load %arg2[%c0_297, %c0_298] : memref<128x32xf32, #tpu.memory_space<vmem>>, vector<128x32xf32>
    %cst_299 = arith.constant dense<0.000000e+00> : vector<32x32xf32>
    %622 = tpu.matmul %620, %621, %cst_299 {dimension_numbers = #tpu.dot_dimension_numbers<[1], [0], [0], [1], [0, 0, 1, 1], [], []>} : vector<32x128xf32>, vector<128x32xf32>, vector<32x32xf32> -> vector<32x32xf32>
    %c14_300 = arith.constant 14 : index
    %c0_301 = arith.constant 0 : index
    %c0_302 = arith.constant 0 : index
    %623 = vector.load %arg5[%c14_300, %c0_301, %c0_302] : memref<16x32x32xf32, #tpu.memory_space<vmem>>, vector<1x32x32xf32>
    %624 = vector.shape_cast %623 : vector<1x32x32xf32> to vector<32x32xf32>
    %625 = vector.shape_cast %622 : vector<32x32xf32> to vector<1x32x32xf32>
    tpu.vector_store %arg5[%c14_300, %c0_301, %c0_302], %625 {strides = array<i32>} : memref<16x32x32xf32, #tpu.memory_space<vmem>>, vector<1x32x32xf32>,
    %cst_303 = arith.constant dense<0.000000e+00> : vector<32xf32>
    %626 = vector.multi_reduction <add>, %622, %cst_303 [0] : vector<32x32xf32> to vector<32xf32>
    %627 = vector.shape_cast %626 : vector<32xf32> to vector<1x32xf32>
    %628 = arith.addf %586, %627 : vector<1x32xf32>
    %629 = arith.mulf %622, %622 : vector<32x32xf32>
    %cst_304 = arith.constant dense<0.000000e+00> : vector<32xf32>
    %630 = vector.multi_reduction <add>, %629, %cst_304 [0] : vector<32x32xf32> to vector<32xf32>
    %631 = vector.shape_cast %630 : vector<32xf32> to vector<1x32xf32>
    %632 = arith.addf %590, %631 : vector<1x32xf32>
    %cst_305 = arith.constant 0.000000e+00 : f32
    %633 = vector.broadcast %cst_305 : f32 to vector<2x4x4x128xf32>
    %634 = vector.extract_strided_slice %0 {offsets = [0, 2, 2, 0], sizes = [2, 4, 4, 128], strides = [1, 1, 1, 1]} : vector<2x6x6x128xf32> to vector<2x4x4x128xf32>
    %c15 = arith.constant 15 : index
    %c0_306 = arith.constant 0 : index
    %c0_307 = arith.constant 0 : index
    %635 = vector.load %arg1[%c15, %c0_306, %c0_307] : memref<16x4x128xf32, #tpu.memory_space<vmem>>, vector<1x1x128xf32>
    %636 = vector.shape_cast %635 : vector<1x1x128xf32> to vector<128xf32>
    %637 = vector.shape_cast %636 : vector<128xf32> to vector<1x1x1x128xf32>
    %638 = vector.broadcast %637 : vector<1x1x1x128xf32> to vector<2x4x4x128xf32>
    %639 = arith.mulf %634, %638 : vector<2x4x4x128xf32>
    %640 = arith.addf %633, %639 : vector<2x4x4x128xf32>
    %641 = vector.extract_strided_slice %0 {offsets = [0, 2, 1, 0], sizes = [2, 4, 4, 128], strides = [1, 1, 1, 1]} : vector<2x6x6x128xf32> to vector<2x4x4x128xf32>
    %c15_308 = arith.constant 15 : index
    %c1_309 = arith.constant 1 : index
    %c0_310 = arith.constant 0 : index
    %642 = vector.load %arg1[%c15_308, %c1_309, %c0_310] : memref<16x4x128xf32, #tpu.memory_space<vmem>>, vector<1x1x128xf32>
    %643 = vector.shape_cast %642 : vector<1x1x128xf32> to vector<128xf32>
    %644 = vector.shape_cast %643 : vector<128xf32> to vector<1x1x1x128xf32>
    %645 = vector.broadcast %644 : vector<1x1x1x128xf32> to vector<2x4x4x128xf32>
    %646 = arith.mulf %641, %645 : vector<2x4x4x128xf32>
    %647 = arith.addf %640, %646 : vector<2x4x4x128xf32>
    %648 = vector.extract_strided_slice %0 {offsets = [0, 1, 2, 0], sizes = [2, 4, 4, 128], strides = [1, 1, 1, 1]} : vector<2x6x6x128xf32> to vector<2x4x4x128xf32>
    %c15_311 = arith.constant 15 : index
    %c2_312 = arith.constant 2 : index
    %c0_313 = arith.constant 0 : index
    %649 = vector.load %arg1[%c15_311, %c2_312, %c0_313] : memref<16x4x128xf32, #tpu.memory_space<vmem>>, vector<1x1x128xf32>
    %650 = vector.shape_cast %649 : vector<1x1x128xf32> to vector<128xf32>
    %651 = vector.shape_cast %650 : vector<128xf32> to vector<1x1x1x128xf32>
    %652 = vector.broadcast %651 : vector<1x1x1x128xf32> to vector<2x4x4x128xf32>
    %653 = arith.mulf %648, %652 : vector<2x4x4x128xf32>
    %654 = arith.addf %647, %653 : vector<2x4x4x128xf32>
    %655 = vector.extract_strided_slice %0 {offsets = [0, 1, 1, 0], sizes = [2, 4, 4, 128], strides = [1, 1, 1, 1]} : vector<2x6x6x128xf32> to vector<2x4x4x128xf32>
    %c15_314 = arith.constant 15 : index
    %c3_315 = arith.constant 3 : index
    %c0_316 = arith.constant 0 : index
    %656 = vector.load %arg1[%c15_314, %c3_315, %c0_316] : memref<16x4x128xf32, #tpu.memory_space<vmem>>, vector<1x1x128xf32>
    %657 = vector.shape_cast %656 : vector<1x1x128xf32> to vector<128xf32>
    %658 = vector.shape_cast %657 : vector<128xf32> to vector<1x1x1x128xf32>
    %659 = vector.broadcast %658 : vector<1x1x1x128xf32> to vector<2x4x4x128xf32>
    %660 = arith.mulf %655, %659 : vector<2x4x4x128xf32>
    %661 = arith.addf %654, %660 : vector<2x4x4x128xf32>
    %662 = vector.shape_cast %661 : vector<2x4x4x128xf32> to vector<32x128xf32>
    %c0_317 = arith.constant 0 : index
    %c0_318 = arith.constant 0 : index
    %663 = vector.load %arg2[%c0_317, %c0_318] : memref<128x32xf32, #tpu.memory_space<vmem>>, vector<128x32xf32>
    %cst_319 = arith.constant dense<0.000000e+00> : vector<32x32xf32>
    %664 = tpu.matmul %662, %663, %cst_319 {dimension_numbers = #tpu.dot_dimension_numbers<[1], [0], [0], [1], [0, 0, 1, 1], [], []>} : vector<32x128xf32>, vector<128x32xf32>, vector<32x32xf32> -> vector<32x32xf32>
    %c15_320 = arith.constant 15 : index
    %c0_321 = arith.constant 0 : index
    %c0_322 = arith.constant 0 : index
    %665 = vector.load %arg5[%c15_320, %c0_321, %c0_322] : memref<16x32x32xf32, #tpu.memory_space<vmem>>, vector<1x32x32xf32>
    %666 = vector.shape_cast %665 : vector<1x32x32xf32> to vector<32x32xf32>
    %667 = vector.shape_cast %664 : vector<32x32xf32> to vector<1x32x32xf32>
    tpu.vector_store %arg5[%c15_320, %c0_321, %c0_322], %667 {strides = array<i32>} : memref<16x32x32xf32, #tpu.memory_space<vmem>>, vector<1x32x32xf32>,
    %cst_323 = arith.constant dense<0.000000e+00> : vector<32xf32>
    %668 = vector.multi_reduction <add>, %664, %cst_323 [0] : vector<32x32xf32> to vector<32xf32>
    %669 = vector.shape_cast %668 : vector<32xf32> to vector<1x32xf32>
    %670 = arith.addf %628, %669 : vector<1x32xf32>
    %671 = arith.mulf %664, %664 : vector<32x32xf32>
    %cst_324 = arith.constant dense<0.000000e+00> : vector<32xf32>
    %672 = vector.multi_reduction <add>, %671, %cst_324 [0] : vector<32x32xf32> to vector<32xf32>
    %673 = vector.shape_cast %672 : vector<32xf32> to vector<1x32xf32>
    %674 = arith.addf %632, %673 : vector<1x32xf32>
    %cst_325 = arith.constant 5.120000e+02 : f32
    %675 = vector.broadcast %cst_325 : f32 to vector<1x32xf32>
    %676 = arith.divf %670, %675 : vector<1x32xf32>
    %cst_326 = arith.constant 5.120000e+02 : f32
    %677 = vector.broadcast %cst_326 : f32 to vector<1x32xf32>
    %678 = arith.divf %674, %677 : vector<1x32xf32>
    %679 = arith.mulf %676, %676 : vector<1x32xf32>
    %680 = arith.subf %678, %679 : vector<1x32xf32>
    %cst_327 = arith.constant 9.99999974E-6 : f32
    %681 = vector.broadcast %cst_327 : f32 to vector<1x32xf32>
    %682 = arith.addf %680, %681 : vector<1x32xf32>
    %683 = math.rsqrt %682 : vector<1x32xf32>
    %c0_328 = arith.constant 0 : index
    %c0_329 = arith.constant 0 : index
    %684 = vector.load %arg3[%c0_328, %c0_329] : memref<1x32xf32, #tpu.memory_space<vmem>>, vector<1x32xf32>
    %685 = arith.mulf %683, %684 : vector<1x32xf32>
    %c0_330 = arith.constant 0 : index
    %c0_331 = arith.constant 0 : index
    %686 = vector.load %arg4[%c0_330, %c0_331] : memref<1x32xf32, #tpu.memory_space<vmem>>, vector<1x32xf32>
    %687 = arith.mulf %676, %685 : vector<1x32xf32>
    %688 = arith.subf %686, %687 : vector<1x32xf32>
    %c0_332 = arith.constant 0 : index
    %c0_333 = arith.constant 0 : index
    %c0_334 = arith.constant 0 : index
    %689 = vector.load %arg5[%c0_332, %c0_333, %c0_334] : memref<16x32x32xf32, #tpu.memory_space<vmem>>, vector<1x32x32xf32>
    %690 = vector.shape_cast %689 : vector<1x32x32xf32> to vector<32x32xf32>
    %691 = vector.broadcast %685 : vector<1x32xf32> to vector<32x32xf32>
    %692 = arith.mulf %690, %691 : vector<32x32xf32>
    %693 = vector.broadcast %688 : vector<1x32xf32> to vector<32x32xf32>
    %694 = arith.addf %692, %693 : vector<32x32xf32>
    %cst_335 = arith.constant 0.000000e+00 : f32
    %695 = vector.broadcast %cst_335 : f32 to vector<32x32xf32>
    %696 = arith.maximumf %694, %695 : vector<32x32xf32>
    %c0_336 = arith.constant 0 : index
    %c0_337 = arith.constant 0 : index
    %c0_338 = arith.constant 0 : index
    %697 = vector.load %arg5[%c0_336, %c0_337, %c0_338] : memref<16x32x32xf32, #tpu.memory_space<vmem>>, vector<1x32x32xf32>
    %698 = vector.shape_cast %697 : vector<1x32x32xf32> to vector<32x32xf32>
    %699 = vector.shape_cast %696 : vector<32x32xf32> to vector<1x32x32xf32>
    tpu.vector_store %arg5[%c0_336, %c0_337, %c0_338], %699 {strides = array<i32>} : memref<16x32x32xf32, #tpu.memory_space<vmem>>, vector<1x32x32xf32>,
    %c1_339 = arith.constant 1 : index
    %c0_340 = arith.constant 0 : index
    %c0_341 = arith.constant 0 : index
    %700 = vector.load %arg5[%c1_339, %c0_340, %c0_341] : memref<16x32x32xf32, #tpu.memory_space<vmem>>, vector<1x32x32xf32>
    %701 = vector.shape_cast %700 : vector<1x32x32xf32> to vector<32x32xf32>
    %702 = vector.broadcast %685 : vector<1x32xf32> to vector<32x32xf32>
    %703 = arith.mulf %701, %702 : vector<32x32xf32>
    %704 = vector.broadcast %688 : vector<1x32xf32> to vector<32x32xf32>
    %705 = arith.addf %703, %704 : vector<32x32xf32>
    %cst_342 = arith.constant 0.000000e+00 : f32
    %706 = vector.broadcast %cst_342 : f32 to vector<32x32xf32>
    %707 = arith.maximumf %705, %706 : vector<32x32xf32>
    %c1_343 = arith.constant 1 : index
    %c0_344 = arith.constant 0 : index
    %c0_345 = arith.constant 0 : index
    %708 = vector.load %arg5[%c1_343, %c0_344, %c0_345] : memref<16x32x32xf32, #tpu.memory_space<vmem>>, vector<1x32x32xf32>
    %709 = vector.shape_cast %708 : vector<1x32x32xf32> to vector<32x32xf32>
    %710 = vector.shape_cast %707 : vector<32x32xf32> to vector<1x32x32xf32>
    tpu.vector_store %arg5[%c1_343, %c0_344, %c0_345], %710 {strides = array<i32>} : memref<16x32x32xf32, #tpu.memory_space<vmem>>, vector<1x32x32xf32>,
    %c2_346 = arith.constant 2 : index
    %c0_347 = arith.constant 0 : index
    %c0_348 = arith.constant 0 : index
    %711 = vector.load %arg5[%c2_346, %c0_347, %c0_348] : memref<16x32x32xf32, #tpu.memory_space<vmem>>, vector<1x32x32xf32>
    %712 = vector.shape_cast %711 : vector<1x32x32xf32> to vector<32x32xf32>
    %713 = vector.broadcast %685 : vector<1x32xf32> to vector<32x32xf32>
    %714 = arith.mulf %712, %713 : vector<32x32xf32>
    %715 = vector.broadcast %688 : vector<1x32xf32> to vector<32x32xf32>
    %716 = arith.addf %714, %715 : vector<32x32xf32>
    %cst_349 = arith.constant 0.000000e+00 : f32
    %717 = vector.broadcast %cst_349 : f32 to vector<32x32xf32>
    %718 = arith.maximumf %716, %717 : vector<32x32xf32>
    %c2_350 = arith.constant 2 : index
    %c0_351 = arith.constant 0 : index
    %c0_352 = arith.constant 0 : index
    %719 = vector.load %arg5[%c2_350, %c0_351, %c0_352] : memref<16x32x32xf32, #tpu.memory_space<vmem>>, vector<1x32x32xf32>
    %720 = vector.shape_cast %719 : vector<1x32x32xf32> to vector<32x32xf32>
    %721 = vector.shape_cast %718 : vector<32x32xf32> to vector<1x32x32xf32>
    tpu.vector_store %arg5[%c2_350, %c0_351, %c0_352], %721 {strides = array<i32>} : memref<16x32x32xf32, #tpu.memory_space<vmem>>, vector<1x32x32xf32>,
    %c3_353 = arith.constant 3 : index
    %c0_354 = arith.constant 0 : index
    %c0_355 = arith.constant 0 : index
    %722 = vector.load %arg5[%c3_353, %c0_354, %c0_355] : memref<16x32x32xf32, #tpu.memory_space<vmem>>, vector<1x32x32xf32>
    %723 = vector.shape_cast %722 : vector<1x32x32xf32> to vector<32x32xf32>
    %724 = vector.broadcast %685 : vector<1x32xf32> to vector<32x32xf32>
    %725 = arith.mulf %723, %724 : vector<32x32xf32>
    %726 = vector.broadcast %688 : vector<1x32xf32> to vector<32x32xf32>
    %727 = arith.addf %725, %726 : vector<32x32xf32>
    %cst_356 = arith.constant 0.000000e+00 : f32
    %728 = vector.broadcast %cst_356 : f32 to vector<32x32xf32>
    %729 = arith.maximumf %727, %728 : vector<32x32xf32>
    %c3_357 = arith.constant 3 : index
    %c0_358 = arith.constant 0 : index
    %c0_359 = arith.constant 0 : index
    %730 = vector.load %arg5[%c3_357, %c0_358, %c0_359] : memref<16x32x32xf32, #tpu.memory_space<vmem>>, vector<1x32x32xf32>
    %731 = vector.shape_cast %730 : vector<1x32x32xf32> to vector<32x32xf32>
    %732 = vector.shape_cast %729 : vector<32x32xf32> to vector<1x32x32xf32>
    tpu.vector_store %arg5[%c3_357, %c0_358, %c0_359], %732 {strides = array<i32>} : memref<16x32x32xf32, #tpu.memory_space<vmem>>, vector<1x32x32xf32>,
    %c4_360 = arith.constant 4 : index
    %c0_361 = arith.constant 0 : index
    %c0_362 = arith.constant 0 : index
    %733 = vector.load %arg5[%c4_360, %c0_361, %c0_362] : memref<16x32x32xf32, #tpu.memory_space<vmem>>, vector<1x32x32xf32>
    %734 = vector.shape_cast %733 : vector<1x32x32xf32> to vector<32x32xf32>
    %735 = vector.broadcast %685 : vector<1x32xf32> to vector<32x32xf32>
    %736 = arith.mulf %734, %735 : vector<32x32xf32>
    %737 = vector.broadcast %688 : vector<1x32xf32> to vector<32x32xf32>
    %738 = arith.addf %736, %737 : vector<32x32xf32>
    %cst_363 = arith.constant 0.000000e+00 : f32
    %739 = vector.broadcast %cst_363 : f32 to vector<32x32xf32>
    %740 = arith.maximumf %738, %739 : vector<32x32xf32>
    %c4_364 = arith.constant 4 : index
    %c0_365 = arith.constant 0 : index
    %c0_366 = arith.constant 0 : index
    %741 = vector.load %arg5[%c4_364, %c0_365, %c0_366] : memref<16x32x32xf32, #tpu.memory_space<vmem>>, vector<1x32x32xf32>
    %742 = vector.shape_cast %741 : vector<1x32x32xf32> to vector<32x32xf32>
    %743 = vector.shape_cast %740 : vector<32x32xf32> to vector<1x32x32xf32>
    tpu.vector_store %arg5[%c4_364, %c0_365, %c0_366], %743 {strides = array<i32>} : memref<16x32x32xf32, #tpu.memory_space<vmem>>, vector<1x32x32xf32>,
    %c5_367 = arith.constant 5 : index
    %c0_368 = arith.constant 0 : index
    %c0_369 = arith.constant 0 : index
    %744 = vector.load %arg5[%c5_367, %c0_368, %c0_369] : memref<16x32x32xf32, #tpu.memory_space<vmem>>, vector<1x32x32xf32>
    %745 = vector.shape_cast %744 : vector<1x32x32xf32> to vector<32x32xf32>
    %746 = vector.broadcast %685 : vector<1x32xf32> to vector<32x32xf32>
    %747 = arith.mulf %745, %746 : vector<32x32xf32>
    %748 = vector.broadcast %688 : vector<1x32xf32> to vector<32x32xf32>
    %749 = arith.addf %747, %748 : vector<32x32xf32>
    %cst_370 = arith.constant 0.000000e+00 : f32
    %750 = vector.broadcast %cst_370 : f32 to vector<32x32xf32>
    %751 = arith.maximumf %749, %750 : vector<32x32xf32>
    %c5_371 = arith.constant 5 : index
    %c0_372 = arith.constant 0 : index
    %c0_373 = arith.constant 0 : index
    %752 = vector.load %arg5[%c5_371, %c0_372, %c0_373] : memref<16x32x32xf32, #tpu.memory_space<vmem>>, vector<1x32x32xf32>
    %753 = vector.shape_cast %752 : vector<1x32x32xf32> to vector<32x32xf32>
    %754 = vector.shape_cast %751 : vector<32x32xf32> to vector<1x32x32xf32>
    tpu.vector_store %arg5[%c5_371, %c0_372, %c0_373], %754 {strides = array<i32>} : memref<16x32x32xf32, #tpu.memory_space<vmem>>, vector<1x32x32xf32>,
    %c6_374 = arith.constant 6 : index
    %c0_375 = arith.constant 0 : index
    %c0_376 = arith.constant 0 : index
    %755 = vector.load %arg5[%c6_374, %c0_375, %c0_376] : memref<16x32x32xf32, #tpu.memory_space<vmem>>, vector<1x32x32xf32>
    %756 = vector.shape_cast %755 : vector<1x32x32xf32> to vector<32x32xf32>
    %757 = vector.broadcast %685 : vector<1x32xf32> to vector<32x32xf32>
    %758 = arith.mulf %756, %757 : vector<32x32xf32>
    %759 = vector.broadcast %688 : vector<1x32xf32> to vector<32x32xf32>
    %760 = arith.addf %758, %759 : vector<32x32xf32>
    %cst_377 = arith.constant 0.000000e+00 : f32
    %761 = vector.broadcast %cst_377 : f32 to vector<32x32xf32>
    %762 = arith.maximumf %760, %761 : vector<32x32xf32>
    %c6_378 = arith.constant 6 : index
    %c0_379 = arith.constant 0 : index
    %c0_380 = arith.constant 0 : index
    %763 = vector.load %arg5[%c6_378, %c0_379, %c0_380] : memref<16x32x32xf32, #tpu.memory_space<vmem>>, vector<1x32x32xf32>
    %764 = vector.shape_cast %763 : vector<1x32x32xf32> to vector<32x32xf32>
    %765 = vector.shape_cast %762 : vector<32x32xf32> to vector<1x32x32xf32>
    tpu.vector_store %arg5[%c6_378, %c0_379, %c0_380], %765 {strides = array<i32>} : memref<16x32x32xf32, #tpu.memory_space<vmem>>, vector<1x32x32xf32>,
    %c7_381 = arith.constant 7 : index
    %c0_382 = arith.constant 0 : index
    %c0_383 = arith.constant 0 : index
    %766 = vector.load %arg5[%c7_381, %c0_382, %c0_383] : memref<16x32x32xf32, #tpu.memory_space<vmem>>, vector<1x32x32xf32>
    %767 = vector.shape_cast %766 : vector<1x32x32xf32> to vector<32x32xf32>
    %768 = vector.broadcast %685 : vector<1x32xf32> to vector<32x32xf32>
    %769 = arith.mulf %767, %768 : vector<32x32xf32>
    %770 = vector.broadcast %688 : vector<1x32xf32> to vector<32x32xf32>
    %771 = arith.addf %769, %770 : vector<32x32xf32>
    %cst_384 = arith.constant 0.000000e+00 : f32
    %772 = vector.broadcast %cst_384 : f32 to vector<32x32xf32>
    %773 = arith.maximumf %771, %772 : vector<32x32xf32>
    %c7_385 = arith.constant 7 : index
    %c0_386 = arith.constant 0 : index
    %c0_387 = arith.constant 0 : index
    %774 = vector.load %arg5[%c7_385, %c0_386, %c0_387] : memref<16x32x32xf32, #tpu.memory_space<vmem>>, vector<1x32x32xf32>
    %775 = vector.shape_cast %774 : vector<1x32x32xf32> to vector<32x32xf32>
    %776 = vector.shape_cast %773 : vector<32x32xf32> to vector<1x32x32xf32>
    tpu.vector_store %arg5[%c7_385, %c0_386, %c0_387], %776 {strides = array<i32>} : memref<16x32x32xf32, #tpu.memory_space<vmem>>, vector<1x32x32xf32>,
    %c8_388 = arith.constant 8 : index
    %c0_389 = arith.constant 0 : index
    %c0_390 = arith.constant 0 : index
    %777 = vector.load %arg5[%c8_388, %c0_389, %c0_390] : memref<16x32x32xf32, #tpu.memory_space<vmem>>, vector<1x32x32xf32>
    %778 = vector.shape_cast %777 : vector<1x32x32xf32> to vector<32x32xf32>
    %779 = vector.broadcast %685 : vector<1x32xf32> to vector<32x32xf32>
    %780 = arith.mulf %778, %779 : vector<32x32xf32>
    %781 = vector.broadcast %688 : vector<1x32xf32> to vector<32x32xf32>
    %782 = arith.addf %780, %781 : vector<32x32xf32>
    %cst_391 = arith.constant 0.000000e+00 : f32
    %783 = vector.broadcast %cst_391 : f32 to vector<32x32xf32>
    %784 = arith.maximumf %782, %783 : vector<32x32xf32>
    %c8_392 = arith.constant 8 : index
    %c0_393 = arith.constant 0 : index
    %c0_394 = arith.constant 0 : index
    %785 = vector.load %arg5[%c8_392, %c0_393, %c0_394] : memref<16x32x32xf32, #tpu.memory_space<vmem>>, vector<1x32x32xf32>
    %786 = vector.shape_cast %785 : vector<1x32x32xf32> to vector<32x32xf32>
    %787 = vector.shape_cast %784 : vector<32x32xf32> to vector<1x32x32xf32>
    tpu.vector_store %arg5[%c8_392, %c0_393, %c0_394], %787 {strides = array<i32>} : memref<16x32x32xf32, #tpu.memory_space<vmem>>, vector<1x32x32xf32>,
    %c9_395 = arith.constant 9 : index
    %c0_396 = arith.constant 0 : index
    %c0_397 = arith.constant 0 : index
    %788 = vector.load %arg5[%c9_395, %c0_396, %c0_397] : memref<16x32x32xf32, #tpu.memory_space<vmem>>, vector<1x32x32xf32>
    %789 = vector.shape_cast %788 : vector<1x32x32xf32> to vector<32x32xf32>
    %790 = vector.broadcast %685 : vector<1x32xf32> to vector<32x32xf32>
    %791 = arith.mulf %789, %790 : vector<32x32xf32>
    %792 = vector.broadcast %688 : vector<1x32xf32> to vector<32x32xf32>
    %793 = arith.addf %791, %792 : vector<32x32xf32>
    %cst_398 = arith.constant 0.000000e+00 : f32
    %794 = vector.broadcast %cst_398 : f32 to vector<32x32xf32>
    %795 = arith.maximumf %793, %794 : vector<32x32xf32>
    %c9_399 = arith.constant 9 : index
    %c0_400 = arith.constant 0 : index
    %c0_401 = arith.constant 0 : index
    %796 = vector.load %arg5[%c9_399, %c0_400, %c0_401] : memref<16x32x32xf32, #tpu.memory_space<vmem>>, vector<1x32x32xf32>
    %797 = vector.shape_cast %796 : vector<1x32x32xf32> to vector<32x32xf32>
    %798 = vector.shape_cast %795 : vector<32x32xf32> to vector<1x32x32xf32>
    tpu.vector_store %arg5[%c9_399, %c0_400, %c0_401], %798 {strides = array<i32>} : memref<16x32x32xf32, #tpu.memory_space<vmem>>, vector<1x32x32xf32>,
    %c10_402 = arith.constant 10 : index
    %c0_403 = arith.constant 0 : index
    %c0_404 = arith.constant 0 : index
    %799 = vector.load %arg5[%c10_402, %c0_403, %c0_404] : memref<16x32x32xf32, #tpu.memory_space<vmem>>, vector<1x32x32xf32>
    %800 = vector.shape_cast %799 : vector<1x32x32xf32> to vector<32x32xf32>
    %801 = vector.broadcast %685 : vector<1x32xf32> to vector<32x32xf32>
    %802 = arith.mulf %800, %801 : vector<32x32xf32>
    %803 = vector.broadcast %688 : vector<1x32xf32> to vector<32x32xf32>
    %804 = arith.addf %802, %803 : vector<32x32xf32>
    %cst_405 = arith.constant 0.000000e+00 : f32
    %805 = vector.broadcast %cst_405 : f32 to vector<32x32xf32>
    %806 = arith.maximumf %804, %805 : vector<32x32xf32>
    %c10_406 = arith.constant 10 : index
    %c0_407 = arith.constant 0 : index
    %c0_408 = arith.constant 0 : index
    %807 = vector.load %arg5[%c10_406, %c0_407, %c0_408] : memref<16x32x32xf32, #tpu.memory_space<vmem>>, vector<1x32x32xf32>
    %808 = vector.shape_cast %807 : vector<1x32x32xf32> to vector<32x32xf32>
    %809 = vector.shape_cast %806 : vector<32x32xf32> to vector<1x32x32xf32>
    tpu.vector_store %arg5[%c10_406, %c0_407, %c0_408], %809 {strides = array<i32>} : memref<16x32x32xf32, #tpu.memory_space<vmem>>, vector<1x32x32xf32>,
    %c11_409 = arith.constant 11 : index
    %c0_410 = arith.constant 0 : index
    %c0_411 = arith.constant 0 : index
    %810 = vector.load %arg5[%c11_409, %c0_410, %c0_411] : memref<16x32x32xf32, #tpu.memory_space<vmem>>, vector<1x32x32xf32>
    %811 = vector.shape_cast %810 : vector<1x32x32xf32> to vector<32x32xf32>
    %812 = vector.broadcast %685 : vector<1x32xf32> to vector<32x32xf32>
    %813 = arith.mulf %811, %812 : vector<32x32xf32>
    %814 = vector.broadcast %688 : vector<1x32xf32> to vector<32x32xf32>
    %815 = arith.addf %813, %814 : vector<32x32xf32>
    %cst_412 = arith.constant 0.000000e+00 : f32
    %816 = vector.broadcast %cst_412 : f32 to vector<32x32xf32>
    %817 = arith.maximumf %815, %816 : vector<32x32xf32>
    %c11_413 = arith.constant 11 : index
    %c0_414 = arith.constant 0 : index
    %c0_415 = arith.constant 0 : index
    %818 = vector.load %arg5[%c11_413, %c0_414, %c0_415] : memref<16x32x32xf32, #tpu.memory_space<vmem>>, vector<1x32x32xf32>
    %819 = vector.shape_cast %818 : vector<1x32x32xf32> to vector<32x32xf32>
    %820 = vector.shape_cast %817 : vector<32x32xf32> to vector<1x32x32xf32>
    tpu.vector_store %arg5[%c11_413, %c0_414, %c0_415], %820 {strides = array<i32>} : memref<16x32x32xf32, #tpu.memory_space<vmem>>, vector<1x32x32xf32>,
    %c12_416 = arith.constant 12 : index
    %c0_417 = arith.constant 0 : index
    %c0_418 = arith.constant 0 : index
    %821 = vector.load %arg5[%c12_416, %c0_417, %c0_418] : memref<16x32x32xf32, #tpu.memory_space<vmem>>, vector<1x32x32xf32>
    %822 = vector.shape_cast %821 : vector<1x32x32xf32> to vector<32x32xf32>
    %823 = vector.broadcast %685 : vector<1x32xf32> to vector<32x32xf32>
    %824 = arith.mulf %822, %823 : vector<32x32xf32>
    %825 = vector.broadcast %688 : vector<1x32xf32> to vector<32x32xf32>
    %826 = arith.addf %824, %825 : vector<32x32xf32>
    %cst_419 = arith.constant 0.000000e+00 : f32
    %827 = vector.broadcast %cst_419 : f32 to vector<32x32xf32>
    %828 = arith.maximumf %826, %827 : vector<32x32xf32>
    %c12_420 = arith.constant 12 : index
    %c0_421 = arith.constant 0 : index
    %c0_422 = arith.constant 0 : index
    %829 = vector.load %arg5[%c12_420, %c0_421, %c0_422] : memref<16x32x32xf32, #tpu.memory_space<vmem>>, vector<1x32x32xf32>
    %830 = vector.shape_cast %829 : vector<1x32x32xf32> to vector<32x32xf32>
    %831 = vector.shape_cast %828 : vector<32x32xf32> to vector<1x32x32xf32>
    tpu.vector_store %arg5[%c12_420, %c0_421, %c0_422], %831 {strides = array<i32>} : memref<16x32x32xf32, #tpu.memory_space<vmem>>, vector<1x32x32xf32>,
    %c13_423 = arith.constant 13 : index
    %c0_424 = arith.constant 0 : index
    %c0_425 = arith.constant 0 : index
    %832 = vector.load %arg5[%c13_423, %c0_424, %c0_425] : memref<16x32x32xf32, #tpu.memory_space<vmem>>, vector<1x32x32xf32>
    %833 = vector.shape_cast %832 : vector<1x32x32xf32> to vector<32x32xf32>
    %834 = vector.broadcast %685 : vector<1x32xf32> to vector<32x32xf32>
    %835 = arith.mulf %833, %834 : vector<32x32xf32>
    %836 = vector.broadcast %688 : vector<1x32xf32> to vector<32x32xf32>
    %837 = arith.addf %835, %836 : vector<32x32xf32>
    %cst_426 = arith.constant 0.000000e+00 : f32
    %838 = vector.broadcast %cst_426 : f32 to vector<32x32xf32>
    %839 = arith.maximumf %837, %838 : vector<32x32xf32>
    %c13_427 = arith.constant 13 : index
    %c0_428 = arith.constant 0 : index
    %c0_429 = arith.constant 0 : index
    %840 = vector.load %arg5[%c13_427, %c0_428, %c0_429] : memref<16x32x32xf32, #tpu.memory_space<vmem>>, vector<1x32x32xf32>
    %841 = vector.shape_cast %840 : vector<1x32x32xf32> to vector<32x32xf32>
    %842 = vector.shape_cast %839 : vector<32x32xf32> to vector<1x32x32xf32>
    tpu.vector_store %arg5[%c13_427, %c0_428, %c0_429], %842 {strides = array<i32>} : memref<16x32x32xf32, #tpu.memory_space<vmem>>, vector<1x32x32xf32>,
    %c14_430 = arith.constant 14 : index
    %c0_431 = arith.constant 0 : index
    %c0_432 = arith.constant 0 : index
    %843 = vector.load %arg5[%c14_430, %c0_431, %c0_432] : memref<16x32x32xf32, #tpu.memory_space<vmem>>, vector<1x32x32xf32>
    %844 = vector.shape_cast %843 : vector<1x32x32xf32> to vector<32x32xf32>
    %845 = vector.broadcast %685 : vector<1x32xf32> to vector<32x32xf32>
    %846 = arith.mulf %844, %845 : vector<32x32xf32>
    %847 = vector.broadcast %688 : vector<1x32xf32> to vector<32x32xf32>
    %848 = arith.addf %846, %847 : vector<32x32xf32>
    %cst_433 = arith.constant 0.000000e+00 : f32
    %849 = vector.broadcast %cst_433 : f32 to vector<32x32xf32>
    %850 = arith.maximumf %848, %849 : vector<32x32xf32>
    %c14_434 = arith.constant 14 : index
    %c0_435 = arith.constant 0 : index
    %c0_436 = arith.constant 0 : index
    %851 = vector.load %arg5[%c14_434, %c0_435, %c0_436] : memref<16x32x32xf32, #tpu.memory_space<vmem>>, vector<1x32x32xf32>
    %852 = vector.shape_cast %851 : vector<1x32x32xf32> to vector<32x32xf32>
    %853 = vector.shape_cast %850 : vector<32x32xf32> to vector<1x32x32xf32>
    tpu.vector_store %arg5[%c14_434, %c0_435, %c0_436], %853 {strides = array<i32>} : memref<16x32x32xf32, #tpu.memory_space<vmem>>, vector<1x32x32xf32>,
    %c15_437 = arith.constant 15 : index
    %c0_438 = arith.constant 0 : index
    %c0_439 = arith.constant 0 : index
    %854 = vector.load %arg5[%c15_437, %c0_438, %c0_439] : memref<16x32x32xf32, #tpu.memory_space<vmem>>, vector<1x32x32xf32>
    %855 = vector.shape_cast %854 : vector<1x32x32xf32> to vector<32x32xf32>
    %856 = vector.broadcast %685 : vector<1x32xf32> to vector<32x32xf32>
    %857 = arith.mulf %855, %856 : vector<32x32xf32>
    %858 = vector.broadcast %688 : vector<1x32xf32> to vector<32x32xf32>
    %859 = arith.addf %857, %858 : vector<32x32xf32>
    %cst_440 = arith.constant 0.000000e+00 : f32
    %860 = vector.broadcast %cst_440 : f32 to vector<32x32xf32>
    %861 = arith.maximumf %859, %860 : vector<32x32xf32>
    %c15_441 = arith.constant 15 : index
    %c0_442 = arith.constant 0 : index
    %c0_443 = arith.constant 0 : index
    %862 = vector.load %arg5[%c15_441, %c0_442, %c0_443] : memref<16x32x32xf32, #tpu.memory_space<vmem>>, vector<1x32x32xf32>
    %863 = vector.shape_cast %862 : vector<1x32x32xf32> to vector<32x32xf32>
    %864 = vector.shape_cast %861 : vector<32x32xf32> to vector<1x32x32xf32>
    tpu.vector_store %arg5[%c15_441, %c0_442, %c0_443], %864 {strides = array<i32>} : memref<16x32x32xf32, #tpu.memory_space<vmem>>, vector<1x32x32xf32>,
    return
  }
}

module attributes {stable_mosaic.version = 11 : i64} {
  func.func @_block5_kernel(%arg0: i32, %arg1: memref<1x9x32x256xf32, #tpu.memory_space<vmem>>, %arg2: memref<16x3x128xf32, #tpu.memory_space<vmem>>, %arg3: memref<3x1xf32, #tpu.memory_space<vmem>>, %arg4: memref<1x16x3x256xf32, #tpu.memory_space<vmem>>, %arg5: memref<1x16x3x256xf32, #tpu.memory_space<vmem>>) attributes {dimension_semantics = [#tpu.dimension_semantics<parallel>], iteration_bounds = array<i64: 2>, scalar_prefetch = 0 : i64, scratch_operands = 0 : i64, tpu.core_type = #tpu.core_type<tc>, window_params = [{transform_indices = @transform_0, window_bounds = array<i64: 1, 9, 32, 256>}, {pipeline_mode = #tpu.pipeline_mode<synchronous>, transform_indices = @transform_1, window_bounds = array<i64: 16, 3, 128>}, {pipeline_mode = #tpu.pipeline_mode<synchronous>, transform_indices = @transform_2, window_bounds = array<i64: 3, 1>}, {transform_indices = @transform_3, window_bounds = array<i64: 1, 16, 3, 256>}, {transform_indices = @transform_4, window_bounds = array<i64: 1, 16, 3, 256>}]} {
    %c0 = arith.constant 0 : index
    %c0_0 = arith.constant 0 : index
    %0 = vector.load %arg3[%c0, %c0_0] : memref<3x1xf32, #tpu.memory_space<vmem>>, vector<3x1xf32>
    %c0_1 = arith.constant 0 : index
    %c4 = arith.constant 4 : index
    %c0_2 = arith.constant 0 : index
    %c0_3 = arith.constant 0 : index
    %1 = vector.load %arg1[%c0_1, %c4, %c0_2, %c0_3] : memref<1x9x32x256xf32, #tpu.memory_space<vmem>>, vector<1x1x32x256xf32>
    %2 = vector.shape_cast %1 : vector<1x1x32x256xf32> to vector<32x256xf32>
    %c0_4 = arith.constant 0 : index
    %c3 = arith.constant 3 : index
    %c0_5 = arith.constant 0 : index
    %c0_6 = arith.constant 0 : index
    %3 = vector.load %arg1[%c0_4, %c3, %c0_5, %c0_6] : memref<1x9x32x256xf32, #tpu.memory_space<vmem>>, vector<1x1x32x256xf32>
    %4 = vector.shape_cast %3 : vector<1x1x32x256xf32> to vector<32x256xf32>
    %c0_7 = arith.constant 0 : index
    %c1 = arith.constant 1 : index
    %c0_8 = arith.constant 0 : index
    %c0_9 = arith.constant 0 : index
    %5 = vector.load %arg1[%c0_7, %c1, %c0_8, %c0_9] : memref<1x9x32x256xf32, #tpu.memory_space<vmem>>, vector<1x1x32x256xf32>
    %6 = vector.shape_cast %5 : vector<1x1x32x256xf32> to vector<32x256xf32>
    %c0_10 = arith.constant 0 : index
    %c0_11 = arith.constant 0 : index
    %c0_12 = arith.constant 0 : index
    %c0_13 = arith.constant 0 : index
    %7 = vector.load %arg1[%c0_10, %c0_11, %c0_12, %c0_13] : memref<1x9x32x256xf32, #tpu.memory_space<vmem>>, vector<1x1x32x256xf32>
    %8 = vector.shape_cast %7 : vector<1x1x32x256xf32> to vector<32x256xf32>
    %9 = tpu.concatenate %2, %4, %6, %8 in 0 : vector<32x256xf32>, vector<32x256xf32>, vector<32x256xf32>, vector<32x256xf32> -> vector<128x256xf32>
    %c0_14 = arith.constant 0 : index
    %c0_15 = arith.constant 0 : index
    %c0_16 = arith.constant 0 : index
    %10 = vector.load %arg2[%c0_14, %c0_15, %c0_16] : memref<16x3x128xf32, #tpu.memory_space<vmem>>, vector<1x3x128xf32>
    %11 = vector.shape_cast %10 : vector<1x3x128xf32> to vector<3x128xf32>
    %cst = arith.constant dense<0.000000e+00> : vector<3x256xf32>
    %12 = tpu.matmul %11, %9, %cst {dimension_numbers = #tpu.dot_dimension_numbers<[1], [0], [0], [1], [0, 0, 1, 1], [], []>} : vector<3x128xf32>, vector<128x256xf32>, vector<3x256xf32> -> vector<3x256xf32>
    %13 = vector.broadcast %0 : vector<3x1xf32> to vector<3x256xf32>
    %14 = arith.addf %12, %13 : vector<3x256xf32>
    %c0_17 = arith.constant 0 : index
    %c0_18 = arith.constant 0 : index
    %c0_19 = arith.constant 0 : index
    %c0_20 = arith.constant 0 : index
    %15 = vector.load %arg4[%c0_17, %c0_18, %c0_19, %c0_20] : memref<1x16x3x256xf32, #tpu.memory_space<vmem>>, vector<1x1x3x256xf32>
    %16 = vector.shape_cast %15 : vector<1x1x3x256xf32> to vector<3x256xf32>
    %17 = vector.shape_cast %14 : vector<3x256xf32> to vector<1x1x3x256xf32>
    tpu.vector_store %arg4[%c0_17, %c0_18, %c0_19, %c0_20], %17 {strides = array<i32>} : memref<1x16x3x256xf32, #tpu.memory_space<vmem>>, vector<1x1x3x256xf32>,
    %18 = math.tanh %14 : vector<3x256xf32>
    %c0_21 = arith.constant 0 : index
    %c0_22 = arith.constant 0 : index
    %c0_23 = arith.constant 0 : index
    %c0_24 = arith.constant 0 : index
    %19 = vector.load %arg5[%c0_21, %c0_22, %c0_23, %c0_24] : memref<1x16x3x256xf32, #tpu.memory_space<vmem>>, vector<1x1x3x256xf32>
    %20 = vector.shape_cast %19 : vector<1x1x3x256xf32> to vector<3x256xf32>
    %21 = vector.shape_cast %18 : vector<3x256xf32> to vector<1x1x3x256xf32>
    tpu.vector_store %arg5[%c0_21, %c0_22, %c0_23, %c0_24], %21 {strides = array<i32>} : memref<1x16x3x256xf32, #tpu.memory_space<vmem>>, vector<1x1x3x256xf32>,
    %c0_25 = arith.constant 0 : index
    %c4_26 = arith.constant 4 : index
    %c0_27 = arith.constant 0 : index
    %c0_28 = arith.constant 0 : index
    %22 = vector.load %arg1[%c0_25, %c4_26, %c0_27, %c0_28] : memref<1x9x32x256xf32, #tpu.memory_space<vmem>>, vector<1x1x32x256xf32>
    %23 = vector.shape_cast %22 : vector<1x1x32x256xf32> to vector<32x256xf32>
    %c0_29 = arith.constant 0 : index
    %c3_30 = arith.constant 3 : index
    %c0_31 = arith.constant 0 : index
    %c0_32 = arith.constant 0 : index
    %24 = vector.load %arg1[%c0_29, %c3_30, %c0_31, %c0_32] : memref<1x9x32x256xf32, #tpu.memory_space<vmem>>, vector<1x1x32x256xf32>
    %25 = vector.shape_cast %24 : vector<1x1x32x256xf32> to vector<32x256xf32>
    %c0_33 = arith.constant 0 : index
    %c1_34 = arith.constant 1 : index
    %c0_35 = arith.constant 0 : index
    %c0_36 = arith.constant 0 : index
    %26 = vector.load %arg1[%c0_33, %c1_34, %c0_35, %c0_36] : memref<1x9x32x256xf32, #tpu.memory_space<vmem>>, vector<1x1x32x256xf32>
    %27 = vector.shape_cast %26 : vector<1x1x32x256xf32> to vector<32x256xf32>
    %c0_37 = arith.constant 0 : index
    %c0_38 = arith.constant 0 : index
    %c0_39 = arith.constant 0 : index
    %c0_40 = arith.constant 0 : index
    %28 = vector.load %arg1[%c0_37, %c0_38, %c0_39, %c0_40] : memref<1x9x32x256xf32, #tpu.memory_space<vmem>>, vector<1x1x32x256xf32>
    %29 = vector.shape_cast %28 : vector<1x1x32x256xf32> to vector<32x256xf32>
    %30 = tpu.concatenate %23, %25, %27, %29 in 0 : vector<32x256xf32>, vector<32x256xf32>, vector<32x256xf32>, vector<32x256xf32> -> vector<128x256xf32>
    %c1_41 = arith.constant 1 : index
    %c0_42 = arith.constant 0 : index
    %c0_43 = arith.constant 0 : index
    %31 = vector.load %arg2[%c1_41, %c0_42, %c0_43] : memref<16x3x128xf32, #tpu.memory_space<vmem>>, vector<1x3x128xf32>
    %32 = vector.shape_cast %31 : vector<1x3x128xf32> to vector<3x128xf32>
    %cst_44 = arith.constant dense<0.000000e+00> : vector<3x256xf32>
    %33 = tpu.matmul %32, %30, %cst_44 {dimension_numbers = #tpu.dot_dimension_numbers<[1], [0], [0], [1], [0, 0, 1, 1], [], []>} : vector<3x128xf32>, vector<128x256xf32>, vector<3x256xf32> -> vector<3x256xf32>
    %34 = vector.broadcast %0 : vector<3x1xf32> to vector<3x256xf32>
    %35 = arith.addf %33, %34 : vector<3x256xf32>
    %c0_45 = arith.constant 0 : index
    %c1_46 = arith.constant 1 : index
    %c0_47 = arith.constant 0 : index
    %c0_48 = arith.constant 0 : index
    %36 = vector.load %arg4[%c0_45, %c1_46, %c0_47, %c0_48] : memref<1x16x3x256xf32, #tpu.memory_space<vmem>>, vector<1x1x3x256xf32>
    %37 = vector.shape_cast %36 : vector<1x1x3x256xf32> to vector<3x256xf32>
    %38 = vector.shape_cast %35 : vector<3x256xf32> to vector<1x1x3x256xf32>
    tpu.vector_store %arg4[%c0_45, %c1_46, %c0_47, %c0_48], %38 {strides = array<i32>} : memref<1x16x3x256xf32, #tpu.memory_space<vmem>>, vector<1x1x3x256xf32>,
    %39 = math.tanh %35 : vector<3x256xf32>
    %c0_49 = arith.constant 0 : index
    %c1_50 = arith.constant 1 : index
    %c0_51 = arith.constant 0 : index
    %c0_52 = arith.constant 0 : index
    %40 = vector.load %arg5[%c0_49, %c1_50, %c0_51, %c0_52] : memref<1x16x3x256xf32, #tpu.memory_space<vmem>>, vector<1x1x3x256xf32>
    %41 = vector.shape_cast %40 : vector<1x1x3x256xf32> to vector<3x256xf32>
    %42 = vector.shape_cast %39 : vector<3x256xf32> to vector<1x1x3x256xf32>
    tpu.vector_store %arg5[%c0_49, %c1_50, %c0_51, %c0_52], %42 {strides = array<i32>} : memref<1x16x3x256xf32, #tpu.memory_space<vmem>>, vector<1x1x3x256xf32>,
    %c0_53 = arith.constant 0 : index
    %c5 = arith.constant 5 : index
    %c0_54 = arith.constant 0 : index
    %c0_55 = arith.constant 0 : index
    %43 = vector.load %arg1[%c0_53, %c5, %c0_54, %c0_55] : memref<1x9x32x256xf32, #tpu.memory_space<vmem>>, vector<1x1x32x256xf32>
    %44 = vector.shape_cast %43 : vector<1x1x32x256xf32> to vector<32x256xf32>
    %c0_56 = arith.constant 0 : index
    %c4_57 = arith.constant 4 : index
    %c0_58 = arith.constant 0 : index
    %c0_59 = arith.constant 0 : index
    %45 = vector.load %arg1[%c0_56, %c4_57, %c0_58, %c0_59] : memref<1x9x32x256xf32, #tpu.memory_space<vmem>>, vector<1x1x32x256xf32>
    %46 = vector.shape_cast %45 : vector<1x1x32x256xf32> to vector<32x256xf32>
    %c0_60 = arith.constant 0 : index
    %c2 = arith.constant 2 : index
    %c0_61 = arith.constant 0 : index
    %c0_62 = arith.constant 0 : index
    %47 = vector.load %arg1[%c0_60, %c2, %c0_61, %c0_62] : memref<1x9x32x256xf32, #tpu.memory_space<vmem>>, vector<1x1x32x256xf32>
    %48 = vector.shape_cast %47 : vector<1x1x32x256xf32> to vector<32x256xf32>
    %c0_63 = arith.constant 0 : index
    %c1_64 = arith.constant 1 : index
    %c0_65 = arith.constant 0 : index
    %c0_66 = arith.constant 0 : index
    %49 = vector.load %arg1[%c0_63, %c1_64, %c0_65, %c0_66] : memref<1x9x32x256xf32, #tpu.memory_space<vmem>>, vector<1x1x32x256xf32>
    %50 = vector.shape_cast %49 : vector<1x1x32x256xf32> to vector<32x256xf32>
    %51 = tpu.concatenate %44, %46, %48, %50 in 0 : vector<32x256xf32>, vector<32x256xf32>, vector<32x256xf32>, vector<32x256xf32> -> vector<128x256xf32>
    %c2_67 = arith.constant 2 : index
    %c0_68 = arith.constant 0 : index
    %c0_69 = arith.constant 0 : index
    %52 = vector.load %arg2[%c2_67, %c0_68, %c0_69] : memref<16x3x128xf32, #tpu.memory_space<vmem>>, vector<1x3x128xf32>
    %53 = vector.shape_cast %52 : vector<1x3x128xf32> to vector<3x128xf32>
    %cst_70 = arith.constant dense<0.000000e+00> : vector<3x256xf32>
    %54 = tpu.matmul %53, %51, %cst_70 {dimension_numbers = #tpu.dot_dimension_numbers<[1], [0], [0], [1], [0, 0, 1, 1], [], []>} : vector<3x128xf32>, vector<128x256xf32>, vector<3x256xf32> -> vector<3x256xf32>
    %55 = vector.broadcast %0 : vector<3x1xf32> to vector<3x256xf32>
    %56 = arith.addf %54, %55 : vector<3x256xf32>
    %c0_71 = arith.constant 0 : index
    %c2_72 = arith.constant 2 : index
    %c0_73 = arith.constant 0 : index
    %c0_74 = arith.constant 0 : index
    %57 = vector.load %arg4[%c0_71, %c2_72, %c0_73, %c0_74] : memref<1x16x3x256xf32, #tpu.memory_space<vmem>>, vector<1x1x3x256xf32>
    %58 = vector.shape_cast %57 : vector<1x1x3x256xf32> to vector<3x256xf32>
    %59 = vector.shape_cast %56 : vector<3x256xf32> to vector<1x1x3x256xf32>
    tpu.vector_store %arg4[%c0_71, %c2_72, %c0_73, %c0_74], %59 {strides = array<i32>} : memref<1x16x3x256xf32, #tpu.memory_space<vmem>>, vector<1x1x3x256xf32>,
    %60 = math.tanh %56 : vector<3x256xf32>
    %c0_75 = arith.constant 0 : index
    %c2_76 = arith.constant 2 : index
    %c0_77 = arith.constant 0 : index
    %c0_78 = arith.constant 0 : index
    %61 = vector.load %arg5[%c0_75, %c2_76, %c0_77, %c0_78] : memref<1x16x3x256xf32, #tpu.memory_space<vmem>>, vector<1x1x3x256xf32>
    %62 = vector.shape_cast %61 : vector<1x1x3x256xf32> to vector<3x256xf32>
    %63 = vector.shape_cast %60 : vector<3x256xf32> to vector<1x1x3x256xf32>
    tpu.vector_store %arg5[%c0_75, %c2_76, %c0_77, %c0_78], %63 {strides = array<i32>} : memref<1x16x3x256xf32, #tpu.memory_space<vmem>>, vector<1x1x3x256xf32>,
    %c0_79 = arith.constant 0 : index
    %c5_80 = arith.constant 5 : index
    %c0_81 = arith.constant 0 : index
    %c0_82 = arith.constant 0 : index
    %64 = vector.load %arg1[%c0_79, %c5_80, %c0_81, %c0_82] : memref<1x9x32x256xf32, #tpu.memory_space<vmem>>, vector<1x1x32x256xf32>
    %65 = vector.shape_cast %64 : vector<1x1x32x256xf32> to vector<32x256xf32>
    %c0_83 = arith.constant 0 : index
    %c4_84 = arith.constant 4 : index
    %c0_85 = arith.constant 0 : index
    %c0_86 = arith.constant 0 : index
    %66 = vector.load %arg1[%c0_83, %c4_84, %c0_85, %c0_86] : memref<1x9x32x256xf32, #tpu.memory_space<vmem>>, vector<1x1x32x256xf32>
    %67 = vector.shape_cast %66 : vector<1x1x32x256xf32> to vector<32x256xf32>
    %c0_87 = arith.constant 0 : index
    %c2_88 = arith.constant 2 : index
    %c0_89 = arith.constant 0 : index
    %c0_90 = arith.constant 0 : index
    %68 = vector.load %arg1[%c0_87, %c2_88, %c0_89, %c0_90] : memref<1x9x32x256xf32, #tpu.memory_space<vmem>>, vector<1x1x32x256xf32>
    %69 = vector.shape_cast %68 : vector<1x1x32x256xf32> to vector<32x256xf32>
    %c0_91 = arith.constant 0 : index
    %c1_92 = arith.constant 1 : index
    %c0_93 = arith.constant 0 : index
    %c0_94 = arith.constant 0 : index
    %70 = vector.load %arg1[%c0_91, %c1_92, %c0_93, %c0_94] : memref<1x9x32x256xf32, #tpu.memory_space<vmem>>, vector<1x1x32x256xf32>
    %71 = vector.shape_cast %70 : vector<1x1x32x256xf32> to vector<32x256xf32>
    %72 = tpu.concatenate %65, %67, %69, %71 in 0 : vector<32x256xf32>, vector<32x256xf32>, vector<32x256xf32>, vector<32x256xf32> -> vector<128x256xf32>
    %c3_95 = arith.constant 3 : index
    %c0_96 = arith.constant 0 : index
    %c0_97 = arith.constant 0 : index
    %73 = vector.load %arg2[%c3_95, %c0_96, %c0_97] : memref<16x3x128xf32, #tpu.memory_space<vmem>>, vector<1x3x128xf32>
    %74 = vector.shape_cast %73 : vector<1x3x128xf32> to vector<3x128xf32>
    %cst_98 = arith.constant dense<0.000000e+00> : vector<3x256xf32>
    %75 = tpu.matmul %74, %72, %cst_98 {dimension_numbers = #tpu.dot_dimension_numbers<[1], [0], [0], [1], [0, 0, 1, 1], [], []>} : vector<3x128xf32>, vector<128x256xf32>, vector<3x256xf32> -> vector<3x256xf32>
    %76 = vector.broadcast %0 : vector<3x1xf32> to vector<3x256xf32>
    %77 = arith.addf %75, %76 : vector<3x256xf32>
    %c0_99 = arith.constant 0 : index
    %c3_100 = arith.constant 3 : index
    %c0_101 = arith.constant 0 : index
    %c0_102 = arith.constant 0 : index
    %78 = vector.load %arg4[%c0_99, %c3_100, %c0_101, %c0_102] : memref<1x16x3x256xf32, #tpu.memory_space<vmem>>, vector<1x1x3x256xf32>
    %79 = vector.shape_cast %78 : vector<1x1x3x256xf32> to vector<3x256xf32>
    %80 = vector.shape_cast %77 : vector<3x256xf32> to vector<1x1x3x256xf32>
    tpu.vector_store %arg4[%c0_99, %c3_100, %c0_101, %c0_102], %80 {strides = array<i32>} : memref<1x16x3x256xf32, #tpu.memory_space<vmem>>, vector<1x1x3x256xf32>,
    %81 = math.tanh %77 : vector<3x256xf32>
    %c0_103 = arith.constant 0 : index
    %c3_104 = arith.constant 3 : index
    %c0_105 = arith.constant 0 : index
    %c0_106 = arith.constant 0 : index
    %82 = vector.load %arg5[%c0_103, %c3_104, %c0_105, %c0_106] : memref<1x16x3x256xf32, #tpu.memory_space<vmem>>, vector<1x1x3x256xf32>
    %83 = vector.shape_cast %82 : vector<1x1x3x256xf32> to vector<3x256xf32>
    %84 = vector.shape_cast %81 : vector<3x256xf32> to vector<1x1x3x256xf32>
    tpu.vector_store %arg5[%c0_103, %c3_104, %c0_105, %c0_106], %84 {strides = array<i32>} : memref<1x16x3x256xf32, #tpu.memory_space<vmem>>, vector<1x1x3x256xf32>,
    %c0_107 = arith.constant 0 : index
    %c4_108 = arith.constant 4 : index
    %c0_109 = arith.constant 0 : index
    %c0_110 = arith.constant 0 : index
    %85 = vector.load %arg1[%c0_107, %c4_108, %c0_109, %c0_110] : memref<1x9x32x256xf32, #tpu.memory_space<vmem>>, vector<1x1x32x256xf32>
    %86 = vector.shape_cast %85 : vector<1x1x32x256xf32> to vector<32x256xf32>
    %c0_111 = arith.constant 0 : index
    %c3_112 = arith.constant 3 : index
    %c0_113 = arith.constant 0 : index
    %c0_114 = arith.constant 0 : index
    %87 = vector.load %arg1[%c0_111, %c3_112, %c0_113, %c0_114] : memref<1x9x32x256xf32, #tpu.memory_space<vmem>>, vector<1x1x32x256xf32>
    %88 = vector.shape_cast %87 : vector<1x1x32x256xf32> to vector<32x256xf32>
    %c0_115 = arith.constant 0 : index
    %c1_116 = arith.constant 1 : index
    %c0_117 = arith.constant 0 : index
    %c0_118 = arith.constant 0 : index
    %89 = vector.load %arg1[%c0_115, %c1_116, %c0_117, %c0_118] : memref<1x9x32x256xf32, #tpu.memory_space<vmem>>, vector<1x1x32x256xf32>
    %90 = vector.shape_cast %89 : vector<1x1x32x256xf32> to vector<32x256xf32>
    %c0_119 = arith.constant 0 : index
    %c0_120 = arith.constant 0 : index
    %c0_121 = arith.constant 0 : index
    %c0_122 = arith.constant 0 : index
    %91 = vector.load %arg1[%c0_119, %c0_120, %c0_121, %c0_122] : memref<1x9x32x256xf32, #tpu.memory_space<vmem>>, vector<1x1x32x256xf32>
    %92 = vector.shape_cast %91 : vector<1x1x32x256xf32> to vector<32x256xf32>
    %93 = tpu.concatenate %86, %88, %90, %92 in 0 : vector<32x256xf32>, vector<32x256xf32>, vector<32x256xf32>, vector<32x256xf32> -> vector<128x256xf32>
    %c4_123 = arith.constant 4 : index
    %c0_124 = arith.constant 0 : index
    %c0_125 = arith.constant 0 : index
    %94 = vector.load %arg2[%c4_123, %c0_124, %c0_125] : memref<16x3x128xf32, #tpu.memory_space<vmem>>, vector<1x3x128xf32>
    %95 = vector.shape_cast %94 : vector<1x3x128xf32> to vector<3x128xf32>
    %cst_126 = arith.constant dense<0.000000e+00> : vector<3x256xf32>
    %96 = tpu.matmul %95, %93, %cst_126 {dimension_numbers = #tpu.dot_dimension_numbers<[1], [0], [0], [1], [0, 0, 1, 1], [], []>} : vector<3x128xf32>, vector<128x256xf32>, vector<3x256xf32> -> vector<3x256xf32>
    %97 = vector.broadcast %0 : vector<3x1xf32> to vector<3x256xf32>
    %98 = arith.addf %96, %97 : vector<3x256xf32>
    %c0_127 = arith.constant 0 : index
    %c4_128 = arith.constant 4 : index
    %c0_129 = arith.constant 0 : index
    %c0_130 = arith.constant 0 : index
    %99 = vector.load %arg4[%c0_127, %c4_128, %c0_129, %c0_130] : memref<1x16x3x256xf32, #tpu.memory_space<vmem>>, vector<1x1x3x256xf32>
    %100 = vector.shape_cast %99 : vector<1x1x3x256xf32> to vector<3x256xf32>
    %101 = vector.shape_cast %98 : vector<3x256xf32> to vector<1x1x3x256xf32>
    tpu.vector_store %arg4[%c0_127, %c4_128, %c0_129, %c0_130], %101 {strides = array<i32>} : memref<1x16x3x256xf32, #tpu.memory_space<vmem>>, vector<1x1x3x256xf32>,
    %102 = math.tanh %98 : vector<3x256xf32>
    %c0_131 = arith.constant 0 : index
    %c4_132 = arith.constant 4 : index
    %c0_133 = arith.constant 0 : index
    %c0_134 = arith.constant 0 : index
    %103 = vector.load %arg5[%c0_131, %c4_132, %c0_133, %c0_134] : memref<1x16x3x256xf32, #tpu.memory_space<vmem>>, vector<1x1x3x256xf32>
    %104 = vector.shape_cast %103 : vector<1x1x3x256xf32> to vector<3x256xf32>
    %105 = vector.shape_cast %102 : vector<3x256xf32> to vector<1x1x3x256xf32>
    tpu.vector_store %arg5[%c0_131, %c4_132, %c0_133, %c0_134], %105 {strides = array<i32>} : memref<1x16x3x256xf32, #tpu.memory_space<vmem>>, vector<1x1x3x256xf32>,
    %c0_135 = arith.constant 0 : index
    %c4_136 = arith.constant 4 : index
    %c0_137 = arith.constant 0 : index
    %c0_138 = arith.constant 0 : index
    %106 = vector.load %arg1[%c0_135, %c4_136, %c0_137, %c0_138] : memref<1x9x32x256xf32, #tpu.memory_space<vmem>>, vector<1x1x32x256xf32>
    %107 = vector.shape_cast %106 : vector<1x1x32x256xf32> to vector<32x256xf32>
    %c0_139 = arith.constant 0 : index
    %c3_140 = arith.constant 3 : index
    %c0_141 = arith.constant 0 : index
    %c0_142 = arith.constant 0 : index
    %108 = vector.load %arg1[%c0_139, %c3_140, %c0_141, %c0_142] : memref<1x9x32x256xf32, #tpu.memory_space<vmem>>, vector<1x1x32x256xf32>
    %109 = vector.shape_cast %108 : vector<1x1x32x256xf32> to vector<32x256xf32>
    %c0_143 = arith.constant 0 : index
    %c1_144 = arith.constant 1 : index
    %c0_145 = arith.constant 0 : index
    %c0_146 = arith.constant 0 : index
    %110 = vector.load %arg1[%c0_143, %c1_144, %c0_145, %c0_146] : memref<1x9x32x256xf32, #tpu.memory_space<vmem>>, vector<1x1x32x256xf32>
    %111 = vector.shape_cast %110 : vector<1x1x32x256xf32> to vector<32x256xf32>
    %c0_147 = arith.constant 0 : index
    %c0_148 = arith.constant 0 : index
    %c0_149 = arith.constant 0 : index
    %c0_150 = arith.constant 0 : index
    %112 = vector.load %arg1[%c0_147, %c0_148, %c0_149, %c0_150] : memref<1x9x32x256xf32, #tpu.memory_space<vmem>>, vector<1x1x32x256xf32>
    %113 = vector.shape_cast %112 : vector<1x1x32x256xf32> to vector<32x256xf32>
    %114 = tpu.concatenate %107, %109, %111, %113 in 0 : vector<32x256xf32>, vector<32x256xf32>, vector<32x256xf32>, vector<32x256xf32> -> vector<128x256xf32>
    %c5_151 = arith.constant 5 : index
    %c0_152 = arith.constant 0 : index
    %c0_153 = arith.constant 0 : index
    %115 = vector.load %arg2[%c5_151, %c0_152, %c0_153] : memref<16x3x128xf32, #tpu.memory_space<vmem>>, vector<1x3x128xf32>
    %116 = vector.shape_cast %115 : vector<1x3x128xf32> to vector<3x128xf32>
    %cst_154 = arith.constant dense<0.000000e+00> : vector<3x256xf32>
    %117 = tpu.matmul %116, %114, %cst_154 {dimension_numbers = #tpu.dot_dimension_numbers<[1], [0], [0], [1], [0, 0, 1, 1], [], []>} : vector<3x128xf32>, vector<128x256xf32>, vector<3x256xf32> -> vector<3x256xf32>
    %118 = vector.broadcast %0 : vector<3x1xf32> to vector<3x256xf32>
    %119 = arith.addf %117, %118 : vector<3x256xf32>
    %c0_155 = arith.constant 0 : index
    %c5_156 = arith.constant 5 : index
    %c0_157 = arith.constant 0 : index
    %c0_158 = arith.constant 0 : index
    %120 = vector.load %arg4[%c0_155, %c5_156, %c0_157, %c0_158] : memref<1x16x3x256xf32, #tpu.memory_space<vmem>>, vector<1x1x3x256xf32>
    %121 = vector.shape_cast %120 : vector<1x1x3x256xf32> to vector<3x256xf32>
    %122 = vector.shape_cast %119 : vector<3x256xf32> to vector<1x1x3x256xf32>
    tpu.vector_store %arg4[%c0_155, %c5_156, %c0_157, %c0_158], %122 {strides = array<i32>} : memref<1x16x3x256xf32, #tpu.memory_space<vmem>>, vector<1x1x3x256xf32>,
    %123 = math.tanh %119 : vector<3x256xf32>
    %c0_159 = arith.constant 0 : index
    %c5_160 = arith.constant 5 : index
    %c0_161 = arith.constant 0 : index
    %c0_162 = arith.constant 0 : index
    %124 = vector.load %arg5[%c0_159, %c5_160, %c0_161, %c0_162] : memref<1x16x3x256xf32, #tpu.memory_space<vmem>>, vector<1x1x3x256xf32>
    %125 = vector.shape_cast %124 : vector<1x1x3x256xf32> to vector<3x256xf32>
    %126 = vector.shape_cast %123 : vector<3x256xf32> to vector<1x1x3x256xf32>
    tpu.vector_store %arg5[%c0_159, %c5_160, %c0_161, %c0_162], %126 {strides = array<i32>} : memref<1x16x3x256xf32, #tpu.memory_space<vmem>>, vector<1x1x3x256xf32>,
    %c0_163 = arith.constant 0 : index
    %c5_164 = arith.constant 5 : index
    %c0_165 = arith.constant 0 : index
    %c0_166 = arith.constant 0 : index
    %127 = vector.load %arg1[%c0_163, %c5_164, %c0_165, %c0_166] : memref<1x9x32x256xf32, #tpu.memory_space<vmem>>, vector<1x1x32x256xf32>
    %128 = vector.shape_cast %127 : vector<1x1x32x256xf32> to vector<32x256xf32>
    %c0_167 = arith.constant 0 : index
    %c4_168 = arith.constant 4 : index
    %c0_169 = arith.constant 0 : index
    %c0_170 = arith.constant 0 : index
    %129 = vector.load %arg1[%c0_167, %c4_168, %c0_169, %c0_170] : memref<1x9x32x256xf32, #tpu.memory_space<vmem>>, vector<1x1x32x256xf32>
    %130 = vector.shape_cast %129 : vector<1x1x32x256xf32> to vector<32x256xf32>
    %c0_171 = arith.constant 0 : index
    %c2_172 = arith.constant 2 : index
    %c0_173 = arith.constant 0 : index
    %c0_174 = arith.constant 0 : index
    %131 = vector.load %arg1[%c0_171, %c2_172, %c0_173, %c0_174] : memref<1x9x32x256xf32, #tpu.memory_space<vmem>>, vector<1x1x32x256xf32>
    %132 = vector.shape_cast %131 : vector<1x1x32x256xf32> to vector<32x256xf32>
    %c0_175 = arith.constant 0 : index
    %c1_176 = arith.constant 1 : index
    %c0_177 = arith.constant 0 : index
    %c0_178 = arith.constant 0 : index
    %133 = vector.load %arg1[%c0_175, %c1_176, %c0_177, %c0_178] : memref<1x9x32x256xf32, #tpu.memory_space<vmem>>, vector<1x1x32x256xf32>
    %134 = vector.shape_cast %133 : vector<1x1x32x256xf32> to vector<32x256xf32>
    %135 = tpu.concatenate %128, %130, %132, %134 in 0 : vector<32x256xf32>, vector<32x256xf32>, vector<32x256xf32>, vector<32x256xf32> -> vector<128x256xf32>
    %c6 = arith.constant 6 : index
    %c0_179 = arith.constant 0 : index
    %c0_180 = arith.constant 0 : index
    %136 = vector.load %arg2[%c6, %c0_179, %c0_180] : memref<16x3x128xf32, #tpu.memory_space<vmem>>, vector<1x3x128xf32>
    %137 = vector.shape_cast %136 : vector<1x3x128xf32> to vector<3x128xf32>
    %cst_181 = arith.constant dense<0.000000e+00> : vector<3x256xf32>
    %138 = tpu.matmul %137, %135, %cst_181 {dimension_numbers = #tpu.dot_dimension_numbers<[1], [0], [0], [1], [0, 0, 1, 1], [], []>} : vector<3x128xf32>, vector<128x256xf32>, vector<3x256xf32> -> vector<3x256xf32>
    %139 = vector.broadcast %0 : vector<3x1xf32> to vector<3x256xf32>
    %140 = arith.addf %138, %139 : vector<3x256xf32>
    %c0_182 = arith.constant 0 : index
    %c6_183 = arith.constant 6 : index
    %c0_184 = arith.constant 0 : index
    %c0_185 = arith.constant 0 : index
    %141 = vector.load %arg4[%c0_182, %c6_183, %c0_184, %c0_185] : memref<1x16x3x256xf32, #tpu.memory_space<vmem>>, vector<1x1x3x256xf32>
    %142 = vector.shape_cast %141 : vector<1x1x3x256xf32> to vector<3x256xf32>
    %143 = vector.shape_cast %140 : vector<3x256xf32> to vector<1x1x3x256xf32>
    tpu.vector_store %arg4[%c0_182, %c6_183, %c0_184, %c0_185], %143 {strides = array<i32>} : memref<1x16x3x256xf32, #tpu.memory_space<vmem>>, vector<1x1x3x256xf32>,
    %144 = math.tanh %140 : vector<3x256xf32>
    %c0_186 = arith.constant 0 : index
    %c6_187 = arith.constant 6 : index
    %c0_188 = arith.constant 0 : index
    %c0_189 = arith.constant 0 : index
    %145 = vector.load %arg5[%c0_186, %c6_187, %c0_188, %c0_189] : memref<1x16x3x256xf32, #tpu.memory_space<vmem>>, vector<1x1x3x256xf32>
    %146 = vector.shape_cast %145 : vector<1x1x3x256xf32> to vector<3x256xf32>
    %147 = vector.shape_cast %144 : vector<3x256xf32> to vector<1x1x3x256xf32>
    tpu.vector_store %arg5[%c0_186, %c6_187, %c0_188, %c0_189], %147 {strides = array<i32>} : memref<1x16x3x256xf32, #tpu.memory_space<vmem>>, vector<1x1x3x256xf32>,
    %c0_190 = arith.constant 0 : index
    %c5_191 = arith.constant 5 : index
    %c0_192 = arith.constant 0 : index
    %c0_193 = arith.constant 0 : index
    %148 = vector.load %arg1[%c0_190, %c5_191, %c0_192, %c0_193] : memref<1x9x32x256xf32, #tpu.memory_space<vmem>>, vector<1x1x32x256xf32>
    %149 = vector.shape_cast %148 : vector<1x1x32x256xf32> to vector<32x256xf32>
    %c0_194 = arith.constant 0 : index
    %c4_195 = arith.constant 4 : index
    %c0_196 = arith.constant 0 : index
    %c0_197 = arith.constant 0 : index
    %150 = vector.load %arg1[%c0_194, %c4_195, %c0_196, %c0_197] : memref<1x9x32x256xf32, #tpu.memory_space<vmem>>, vector<1x1x32x256xf32>
    %151 = vector.shape_cast %150 : vector<1x1x32x256xf32> to vector<32x256xf32>
    %c0_198 = arith.constant 0 : index
    %c2_199 = arith.constant 2 : index
    %c0_200 = arith.constant 0 : index
    %c0_201 = arith.constant 0 : index
    %152 = vector.load %arg1[%c0_198, %c2_199, %c0_200, %c0_201] : memref<1x9x32x256xf32, #tpu.memory_space<vmem>>, vector<1x1x32x256xf32>
    %153 = vector.shape_cast %152 : vector<1x1x32x256xf32> to vector<32x256xf32>
    %c0_202 = arith.constant 0 : index
    %c1_203 = arith.constant 1 : index
    %c0_204 = arith.constant 0 : index
    %c0_205 = arith.constant 0 : index
    %154 = vector.load %arg1[%c0_202, %c1_203, %c0_204, %c0_205] : memref<1x9x32x256xf32, #tpu.memory_space<vmem>>, vector<1x1x32x256xf32>
    %155 = vector.shape_cast %154 : vector<1x1x32x256xf32> to vector<32x256xf32>
    %156 = tpu.concatenate %149, %151, %153, %155 in 0 : vector<32x256xf32>, vector<32x256xf32>, vector<32x256xf32>, vector<32x256xf32> -> vector<128x256xf32>
    %c7 = arith.constant 7 : index
    %c0_206 = arith.constant 0 : index
    %c0_207 = arith.constant 0 : index
    %157 = vector.load %arg2[%c7, %c0_206, %c0_207] : memref<16x3x128xf32, #tpu.memory_space<vmem>>, vector<1x3x128xf32>
    %158 = vector.shape_cast %157 : vector<1x3x128xf32> to vector<3x128xf32>
    %cst_208 = arith.constant dense<0.000000e+00> : vector<3x256xf32>
    %159 = tpu.matmul %158, %156, %cst_208 {dimension_numbers = #tpu.dot_dimension_numbers<[1], [0], [0], [1], [0, 0, 1, 1], [], []>} : vector<3x128xf32>, vector<128x256xf32>, vector<3x256xf32> -> vector<3x256xf32>
    %160 = vector.broadcast %0 : vector<3x1xf32> to vector<3x256xf32>
    %161 = arith.addf %159, %160 : vector<3x256xf32>
    %c0_209 = arith.constant 0 : index
    %c7_210 = arith.constant 7 : index
    %c0_211 = arith.constant 0 : index
    %c0_212 = arith.constant 0 : index
    %162 = vector.load %arg4[%c0_209, %c7_210, %c0_211, %c0_212] : memref<1x16x3x256xf32, #tpu.memory_space<vmem>>, vector<1x1x3x256xf32>
    %163 = vector.shape_cast %162 : vector<1x1x3x256xf32> to vector<3x256xf32>
    %164 = vector.shape_cast %161 : vector<3x256xf32> to vector<1x1x3x256xf32>
    tpu.vector_store %arg4[%c0_209, %c7_210, %c0_211, %c0_212], %164 {strides = array<i32>} : memref<1x16x3x256xf32, #tpu.memory_space<vmem>>, vector<1x1x3x256xf32>,
    %165 = math.tanh %161 : vector<3x256xf32>
    %c0_213 = arith.constant 0 : index
    %c7_214 = arith.constant 7 : index
    %c0_215 = arith.constant 0 : index
    %c0_216 = arith.constant 0 : index
    %166 = vector.load %arg5[%c0_213, %c7_214, %c0_215, %c0_216] : memref<1x16x3x256xf32, #tpu.memory_space<vmem>>, vector<1x1x3x256xf32>
    %167 = vector.shape_cast %166 : vector<1x1x3x256xf32> to vector<3x256xf32>
    %168 = vector.shape_cast %165 : vector<3x256xf32> to vector<1x1x3x256xf32>
    tpu.vector_store %arg5[%c0_213, %c7_214, %c0_215, %c0_216], %168 {strides = array<i32>} : memref<1x16x3x256xf32, #tpu.memory_space<vmem>>, vector<1x1x3x256xf32>,
    %c0_217 = arith.constant 0 : index
    %c7_218 = arith.constant 7 : index
    %c0_219 = arith.constant 0 : index
    %c0_220 = arith.constant 0 : index
    %169 = vector.load %arg1[%c0_217, %c7_218, %c0_219, %c0_220] : memref<1x9x32x256xf32, #tpu.memory_space<vmem>>, vector<1x1x32x256xf32>
    %170 = vector.shape_cast %169 : vector<1x1x32x256xf32> to vector<32x256xf32>
    %c0_221 = arith.constant 0 : index
    %c6_222 = arith.constant 6 : index
    %c0_223 = arith.constant 0 : index
    %c0_224 = arith.constant 0 : index
    %171 = vector.load %arg1[%c0_221, %c6_222, %c0_223, %c0_224] : memref<1x9x32x256xf32, #tpu.memory_space<vmem>>, vector<1x1x32x256xf32>
    %172 = vector.shape_cast %171 : vector<1x1x32x256xf32> to vector<32x256xf32>
    %c0_225 = arith.constant 0 : index
    %c4_226 = arith.constant 4 : index
    %c0_227 = arith.constant 0 : index
    %c0_228 = arith.constant 0 : index
    %173 = vector.load %arg1[%c0_225, %c4_226, %c0_227, %c0_228] : memref<1x9x32x256xf32, #tpu.memory_space<vmem>>, vector<1x1x32x256xf32>
    %174 = vector.shape_cast %173 : vector<1x1x32x256xf32> to vector<32x256xf32>
    %c0_229 = arith.constant 0 : index
    %c3_230 = arith.constant 3 : index
    %c0_231 = arith.constant 0 : index
    %c0_232 = arith.constant 0 : index
    %175 = vector.load %arg1[%c0_229, %c3_230, %c0_231, %c0_232] : memref<1x9x32x256xf32, #tpu.memory_space<vmem>>, vector<1x1x32x256xf32>
    %176 = vector.shape_cast %175 : vector<1x1x32x256xf32> to vector<32x256xf32>
    %177 = tpu.concatenate %170, %172, %174, %176 in 0 : vector<32x256xf32>, vector<32x256xf32>, vector<32x256xf32>, vector<32x256xf32> -> vector<128x256xf32>
    %c8 = arith.constant 8 : index
    %c0_233 = arith.constant 0 : index
    %c0_234 = arith.constant 0 : index
    %178 = vector.load %arg2[%c8, %c0_233, %c0_234] : memref<16x3x128xf32, #tpu.memory_space<vmem>>, vector<1x3x128xf32>
    %179 = vector.shape_cast %178 : vector<1x3x128xf32> to vector<3x128xf32>
    %cst_235 = arith.constant dense<0.000000e+00> : vector<3x256xf32>
    %180 = tpu.matmul %179, %177, %cst_235 {dimension_numbers = #tpu.dot_dimension_numbers<[1], [0], [0], [1], [0, 0, 1, 1], [], []>} : vector<3x128xf32>, vector<128x256xf32>, vector<3x256xf32> -> vector<3x256xf32>
    %181 = vector.broadcast %0 : vector<3x1xf32> to vector<3x256xf32>
    %182 = arith.addf %180, %181 : vector<3x256xf32>
    %c0_236 = arith.constant 0 : index
    %c8_237 = arith.constant 8 : index
    %c0_238 = arith.constant 0 : index
    %c0_239 = arith.constant 0 : index
    %183 = vector.load %arg4[%c0_236, %c8_237, %c0_238, %c0_239] : memref<1x16x3x256xf32, #tpu.memory_space<vmem>>, vector<1x1x3x256xf32>
    %184 = vector.shape_cast %183 : vector<1x1x3x256xf32> to vector<3x256xf32>
    %185 = vector.shape_cast %182 : vector<3x256xf32> to vector<1x1x3x256xf32>
    tpu.vector_store %arg4[%c0_236, %c8_237, %c0_238, %c0_239], %185 {strides = array<i32>} : memref<1x16x3x256xf32, #tpu.memory_space<vmem>>, vector<1x1x3x256xf32>,
    %186 = math.tanh %182 : vector<3x256xf32>
    %c0_240 = arith.constant 0 : index
    %c8_241 = arith.constant 8 : index
    %c0_242 = arith.constant 0 : index
    %c0_243 = arith.constant 0 : index
    %187 = vector.load %arg5[%c0_240, %c8_241, %c0_242, %c0_243] : memref<1x16x3x256xf32, #tpu.memory_space<vmem>>, vector<1x1x3x256xf32>
    %188 = vector.shape_cast %187 : vector<1x1x3x256xf32> to vector<3x256xf32>
    %189 = vector.shape_cast %186 : vector<3x256xf32> to vector<1x1x3x256xf32>
    tpu.vector_store %arg5[%c0_240, %c8_241, %c0_242, %c0_243], %189 {strides = array<i32>} : memref<1x16x3x256xf32, #tpu.memory_space<vmem>>, vector<1x1x3x256xf32>,
    %c0_244 = arith.constant 0 : index
    %c7_245 = arith.constant 7 : index
    %c0_246 = arith.constant 0 : index
    %c0_247 = arith.constant 0 : index
    %190 = vector.load %arg1[%c0_244, %c7_245, %c0_246, %c0_247] : memref<1x9x32x256xf32, #tpu.memory_space<vmem>>, vector<1x1x32x256xf32>
    %191 = vector.shape_cast %190 : vector<1x1x32x256xf32> to vector<32x256xf32>
    %c0_248 = arith.constant 0 : index
    %c6_249 = arith.constant 6 : index
    %c0_250 = arith.constant 0 : index
    %c0_251 = arith.constant 0 : index
    %192 = vector.load %arg1[%c0_248, %c6_249, %c0_250, %c0_251] : memref<1x9x32x256xf32, #tpu.memory_space<vmem>>, vector<1x1x32x256xf32>
    %193 = vector.shape_cast %192 : vector<1x1x32x256xf32> to vector<32x256xf32>
    %c0_252 = arith.constant 0 : index
    %c4_253 = arith.constant 4 : index
    %c0_254 = arith.constant 0 : index
    %c0_255 = arith.constant 0 : index
    %194 = vector.load %arg1[%c0_252, %c4_253, %c0_254, %c0_255] : memref<1x9x32x256xf32, #tpu.memory_space<vmem>>, vector<1x1x32x256xf32>
    %195 = vector.shape_cast %194 : vector<1x1x32x256xf32> to vector<32x256xf32>
    %c0_256 = arith.constant 0 : index
    %c3_257 = arith.constant 3 : index
    %c0_258 = arith.constant 0 : index
    %c0_259 = arith.constant 0 : index
    %196 = vector.load %arg1[%c0_256, %c3_257, %c0_258, %c0_259] : memref<1x9x32x256xf32, #tpu.memory_space<vmem>>, vector<1x1x32x256xf32>
    %197 = vector.shape_cast %196 : vector<1x1x32x256xf32> to vector<32x256xf32>
    %198 = tpu.concatenate %191, %193, %195, %197 in 0 : vector<32x256xf32>, vector<32x256xf32>, vector<32x256xf32>, vector<32x256xf32> -> vector<128x256xf32>
    %c9 = arith.constant 9 : index
    %c0_260 = arith.constant 0 : index
    %c0_261 = arith.constant 0 : index
    %199 = vector.load %arg2[%c9, %c0_260, %c0_261] : memref<16x3x128xf32, #tpu.memory_space<vmem>>, vector<1x3x128xf32>
    %200 = vector.shape_cast %199 : vector<1x3x128xf32> to vector<3x128xf32>
    %cst_262 = arith.constant dense<0.000000e+00> : vector<3x256xf32>
    %201 = tpu.matmul %200, %198, %cst_262 {dimension_numbers = #tpu.dot_dimension_numbers<[1], [0], [0], [1], [0, 0, 1, 1], [], []>} : vector<3x128xf32>, vector<128x256xf32>, vector<3x256xf32> -> vector<3x256xf32>
    %202 = vector.broadcast %0 : vector<3x1xf32> to vector<3x256xf32>
    %203 = arith.addf %201, %202 : vector<3x256xf32>
    %c0_263 = arith.constant 0 : index
    %c9_264 = arith.constant 9 : index
    %c0_265 = arith.constant 0 : index
    %c0_266 = arith.constant 0 : index
    %204 = vector.load %arg4[%c0_263, %c9_264, %c0_265, %c0_266] : memref<1x16x3x256xf32, #tpu.memory_space<vmem>>, vector<1x1x3x256xf32>
    %205 = vector.shape_cast %204 : vector<1x1x3x256xf32> to vector<3x256xf32>
    %206 = vector.shape_cast %203 : vector<3x256xf32> to vector<1x1x3x256xf32>
    tpu.vector_store %arg4[%c0_263, %c9_264, %c0_265, %c0_266], %206 {strides = array<i32>} : memref<1x16x3x256xf32, #tpu.memory_space<vmem>>, vector<1x1x3x256xf32>,
    %207 = math.tanh %203 : vector<3x256xf32>
    %c0_267 = arith.constant 0 : index
    %c9_268 = arith.constant 9 : index
    %c0_269 = arith.constant 0 : index
    %c0_270 = arith.constant 0 : index
    %208 = vector.load %arg5[%c0_267, %c9_268, %c0_269, %c0_270] : memref<1x16x3x256xf32, #tpu.memory_space<vmem>>, vector<1x1x3x256xf32>
    %209 = vector.shape_cast %208 : vector<1x1x3x256xf32> to vector<3x256xf32>
    %210 = vector.shape_cast %207 : vector<3x256xf32> to vector<1x1x3x256xf32>
    tpu.vector_store %arg5[%c0_267, %c9_268, %c0_269, %c0_270], %210 {strides = array<i32>} : memref<1x16x3x256xf32, #tpu.memory_space<vmem>>, vector<1x1x3x256xf32>,
    %c0_271 = arith.constant 0 : index
    %c8_272 = arith.constant 8 : index
    %c0_273 = arith.constant 0 : index
    %c0_274 = arith.constant 0 : index
    %211 = vector.load %arg1[%c0_271, %c8_272, %c0_273, %c0_274] : memref<1x9x32x256xf32, #tpu.memory_space<vmem>>, vector<1x1x32x256xf32>
    %212 = vector.shape_cast %211 : vector<1x1x32x256xf32> to vector<32x256xf32>
    %c0_275 = arith.constant 0 : index
    %c7_276 = arith.constant 7 : index
    %c0_277 = arith.constant 0 : index
    %c0_278 = arith.constant 0 : index
    %213 = vector.load %arg1[%c0_275, %c7_276, %c0_277, %c0_278] : memref<1x9x32x256xf32, #tpu.memory_space<vmem>>, vector<1x1x32x256xf32>
    %214 = vector.shape_cast %213 : vector<1x1x32x256xf32> to vector<32x256xf32>
    %c0_279 = arith.constant 0 : index
    %c5_280 = arith.constant 5 : index
    %c0_281 = arith.constant 0 : index
    %c0_282 = arith.constant 0 : index
    %215 = vector.load %arg1[%c0_279, %c5_280, %c0_281, %c0_282] : memref<1x9x32x256xf32, #tpu.memory_space<vmem>>, vector<1x1x32x256xf32>
    %216 = vector.shape_cast %215 : vector<1x1x32x256xf32> to vector<32x256xf32>
    %c0_283 = arith.constant 0 : index
    %c4_284 = arith.constant 4 : index
    %c0_285 = arith.constant 0 : index
    %c0_286 = arith.constant 0 : index
    %217 = vector.load %arg1[%c0_283, %c4_284, %c0_285, %c0_286] : memref<1x9x32x256xf32, #tpu.memory_space<vmem>>, vector<1x1x32x256xf32>
    %218 = vector.shape_cast %217 : vector<1x1x32x256xf32> to vector<32x256xf32>
    %219 = tpu.concatenate %212, %214, %216, %218 in 0 : vector<32x256xf32>, vector<32x256xf32>, vector<32x256xf32>, vector<32x256xf32> -> vector<128x256xf32>
    %c10 = arith.constant 10 : index
    %c0_287 = arith.constant 0 : index
    %c0_288 = arith.constant 0 : index
    %220 = vector.load %arg2[%c10, %c0_287, %c0_288] : memref<16x3x128xf32, #tpu.memory_space<vmem>>, vector<1x3x128xf32>
    %221 = vector.shape_cast %220 : vector<1x3x128xf32> to vector<3x128xf32>
    %cst_289 = arith.constant dense<0.000000e+00> : vector<3x256xf32>
    %222 = tpu.matmul %221, %219, %cst_289 {dimension_numbers = #tpu.dot_dimension_numbers<[1], [0], [0], [1], [0, 0, 1, 1], [], []>} : vector<3x128xf32>, vector<128x256xf32>, vector<3x256xf32> -> vector<3x256xf32>
    %223 = vector.broadcast %0 : vector<3x1xf32> to vector<3x256xf32>
    %224 = arith.addf %222, %223 : vector<3x256xf32>
    %c0_290 = arith.constant 0 : index
    %c10_291 = arith.constant 10 : index
    %c0_292 = arith.constant 0 : index
    %c0_293 = arith.constant 0 : index
    %225 = vector.load %arg4[%c0_290, %c10_291, %c0_292, %c0_293] : memref<1x16x3x256xf32, #tpu.memory_space<vmem>>, vector<1x1x3x256xf32>
    %226 = vector.shape_cast %225 : vector<1x1x3x256xf32> to vector<3x256xf32>
    %227 = vector.shape_cast %224 : vector<3x256xf32> to vector<1x1x3x256xf32>
    tpu.vector_store %arg4[%c0_290, %c10_291, %c0_292, %c0_293], %227 {strides = array<i32>} : memref<1x16x3x256xf32, #tpu.memory_space<vmem>>, vector<1x1x3x256xf32>,
    %228 = math.tanh %224 : vector<3x256xf32>
    %c0_294 = arith.constant 0 : index
    %c10_295 = arith.constant 10 : index
    %c0_296 = arith.constant 0 : index
    %c0_297 = arith.constant 0 : index
    %229 = vector.load %arg5[%c0_294, %c10_295, %c0_296, %c0_297] : memref<1x16x3x256xf32, #tpu.memory_space<vmem>>, vector<1x1x3x256xf32>
    %230 = vector.shape_cast %229 : vector<1x1x3x256xf32> to vector<3x256xf32>
    %231 = vector.shape_cast %228 : vector<3x256xf32> to vector<1x1x3x256xf32>
    tpu.vector_store %arg5[%c0_294, %c10_295, %c0_296, %c0_297], %231 {strides = array<i32>} : memref<1x16x3x256xf32, #tpu.memory_space<vmem>>, vector<1x1x3x256xf32>,
    %c0_298 = arith.constant 0 : index
    %c8_299 = arith.constant 8 : index
    %c0_300 = arith.constant 0 : index
    %c0_301 = arith.constant 0 : index
    %232 = vector.load %arg1[%c0_298, %c8_299, %c0_300, %c0_301] : memref<1x9x32x256xf32, #tpu.memory_space<vmem>>, vector<1x1x32x256xf32>
    %233 = vector.shape_cast %232 : vector<1x1x32x256xf32> to vector<32x256xf32>
    %c0_302 = arith.constant 0 : index
    %c7_303 = arith.constant 7 : index
    %c0_304 = arith.constant 0 : index
    %c0_305 = arith.constant 0 : index
    %234 = vector.load %arg1[%c0_302, %c7_303, %c0_304, %c0_305] : memref<1x9x32x256xf32, #tpu.memory_space<vmem>>, vector<1x1x32x256xf32>
    %235 = vector.shape_cast %234 : vector<1x1x32x256xf32> to vector<32x256xf32>
    %c0_306 = arith.constant 0 : index
    %c5_307 = arith.constant 5 : index
    %c0_308 = arith.constant 0 : index
    %c0_309 = arith.constant 0 : index
    %236 = vector.load %arg1[%c0_306, %c5_307, %c0_308, %c0_309] : memref<1x9x32x256xf32, #tpu.memory_space<vmem>>, vector<1x1x32x256xf32>
    %237 = vector.shape_cast %236 : vector<1x1x32x256xf32> to vector<32x256xf32>
    %c0_310 = arith.constant 0 : index
    %c4_311 = arith.constant 4 : index
    %c0_312 = arith.constant 0 : index
    %c0_313 = arith.constant 0 : index
    %238 = vector.load %arg1[%c0_310, %c4_311, %c0_312, %c0_313] : memref<1x9x32x256xf32, #tpu.memory_space<vmem>>, vector<1x1x32x256xf32>
    %239 = vector.shape_cast %238 : vector<1x1x32x256xf32> to vector<32x256xf32>
    %240 = tpu.concatenate %233, %235, %237, %239 in 0 : vector<32x256xf32>, vector<32x256xf32>, vector<32x256xf32>, vector<32x256xf32> -> vector<128x256xf32>
    %c11 = arith.constant 11 : index
    %c0_314 = arith.constant 0 : index
    %c0_315 = arith.constant 0 : index
    %241 = vector.load %arg2[%c11, %c0_314, %c0_315] : memref<16x3x128xf32, #tpu.memory_space<vmem>>, vector<1x3x128xf32>
    %242 = vector.shape_cast %241 : vector<1x3x128xf32> to vector<3x128xf32>
    %cst_316 = arith.constant dense<0.000000e+00> : vector<3x256xf32>
    %243 = tpu.matmul %242, %240, %cst_316 {dimension_numbers = #tpu.dot_dimension_numbers<[1], [0], [0], [1], [0, 0, 1, 1], [], []>} : vector<3x128xf32>, vector<128x256xf32>, vector<3x256xf32> -> vector<3x256xf32>
    %244 = vector.broadcast %0 : vector<3x1xf32> to vector<3x256xf32>
    %245 = arith.addf %243, %244 : vector<3x256xf32>
    %c0_317 = arith.constant 0 : index
    %c11_318 = arith.constant 11 : index
    %c0_319 = arith.constant 0 : index
    %c0_320 = arith.constant 0 : index
    %246 = vector.load %arg4[%c0_317, %c11_318, %c0_319, %c0_320] : memref<1x16x3x256xf32, #tpu.memory_space<vmem>>, vector<1x1x3x256xf32>
    %247 = vector.shape_cast %246 : vector<1x1x3x256xf32> to vector<3x256xf32>
    %248 = vector.shape_cast %245 : vector<3x256xf32> to vector<1x1x3x256xf32>
    tpu.vector_store %arg4[%c0_317, %c11_318, %c0_319, %c0_320], %248 {strides = array<i32>} : memref<1x16x3x256xf32, #tpu.memory_space<vmem>>, vector<1x1x3x256xf32>,
    %249 = math.tanh %245 : vector<3x256xf32>
    %c0_321 = arith.constant 0 : index
    %c11_322 = arith.constant 11 : index
    %c0_323 = arith.constant 0 : index
    %c0_324 = arith.constant 0 : index
    %250 = vector.load %arg5[%c0_321, %c11_322, %c0_323, %c0_324] : memref<1x16x3x256xf32, #tpu.memory_space<vmem>>, vector<1x1x3x256xf32>
    %251 = vector.shape_cast %250 : vector<1x1x3x256xf32> to vector<3x256xf32>
    %252 = vector.shape_cast %249 : vector<3x256xf32> to vector<1x1x3x256xf32>
    tpu.vector_store %arg5[%c0_321, %c11_322, %c0_323, %c0_324], %252 {strides = array<i32>} : memref<1x16x3x256xf32, #tpu.memory_space<vmem>>, vector<1x1x3x256xf32>,
    %c0_325 = arith.constant 0 : index
    %c7_326 = arith.constant 7 : index
    %c0_327 = arith.constant 0 : index
    %c0_328 = arith.constant 0 : index
    %253 = vector.load %arg1[%c0_325, %c7_326, %c0_327, %c0_328] : memref<1x9x32x256xf32, #tpu.memory_space<vmem>>, vector<1x1x32x256xf32>
    %254 = vector.shape_cast %253 : vector<1x1x32x256xf32> to vector<32x256xf32>
    %c0_329 = arith.constant 0 : index
    %c6_330 = arith.constant 6 : index
    %c0_331 = arith.constant 0 : index
    %c0_332 = arith.constant 0 : index
    %255 = vector.load %arg1[%c0_329, %c6_330, %c0_331, %c0_332] : memref<1x9x32x256xf32, #tpu.memory_space<vmem>>, vector<1x1x32x256xf32>
    %256 = vector.shape_cast %255 : vector<1x1x32x256xf32> to vector<32x256xf32>
    %c0_333 = arith.constant 0 : index
    %c4_334 = arith.constant 4 : index
    %c0_335 = arith.constant 0 : index
    %c0_336 = arith.constant 0 : index
    %257 = vector.load %arg1[%c0_333, %c4_334, %c0_335, %c0_336] : memref<1x9x32x256xf32, #tpu.memory_space<vmem>>, vector<1x1x32x256xf32>
    %258 = vector.shape_cast %257 : vector<1x1x32x256xf32> to vector<32x256xf32>
    %c0_337 = arith.constant 0 : index
    %c3_338 = arith.constant 3 : index
    %c0_339 = arith.constant 0 : index
    %c0_340 = arith.constant 0 : index
    %259 = vector.load %arg1[%c0_337, %c3_338, %c0_339, %c0_340] : memref<1x9x32x256xf32, #tpu.memory_space<vmem>>, vector<1x1x32x256xf32>
    %260 = vector.shape_cast %259 : vector<1x1x32x256xf32> to vector<32x256xf32>
    %261 = tpu.concatenate %254, %256, %258, %260 in 0 : vector<32x256xf32>, vector<32x256xf32>, vector<32x256xf32>, vector<32x256xf32> -> vector<128x256xf32>
    %c12 = arith.constant 12 : index
    %c0_341 = arith.constant 0 : index
    %c0_342 = arith.constant 0 : index
    %262 = vector.load %arg2[%c12, %c0_341, %c0_342] : memref<16x3x128xf32, #tpu.memory_space<vmem>>, vector<1x3x128xf32>
    %263 = vector.shape_cast %262 : vector<1x3x128xf32> to vector<3x128xf32>
    %cst_343 = arith.constant dense<0.000000e+00> : vector<3x256xf32>
    %264 = tpu.matmul %263, %261, %cst_343 {dimension_numbers = #tpu.dot_dimension_numbers<[1], [0], [0], [1], [0, 0, 1, 1], [], []>} : vector<3x128xf32>, vector<128x256xf32>, vector<3x256xf32> -> vector<3x256xf32>
    %265 = vector.broadcast %0 : vector<3x1xf32> to vector<3x256xf32>
    %266 = arith.addf %264, %265 : vector<3x256xf32>
    %c0_344 = arith.constant 0 : index
    %c12_345 = arith.constant 12 : index
    %c0_346 = arith.constant 0 : index
    %c0_347 = arith.constant 0 : index
    %267 = vector.load %arg4[%c0_344, %c12_345, %c0_346, %c0_347] : memref<1x16x3x256xf32, #tpu.memory_space<vmem>>, vector<1x1x3x256xf32>
    %268 = vector.shape_cast %267 : vector<1x1x3x256xf32> to vector<3x256xf32>
    %269 = vector.shape_cast %266 : vector<3x256xf32> to vector<1x1x3x256xf32>
    tpu.vector_store %arg4[%c0_344, %c12_345, %c0_346, %c0_347], %269 {strides = array<i32>} : memref<1x16x3x256xf32, #tpu.memory_space<vmem>>, vector<1x1x3x256xf32>,
    %270 = math.tanh %266 : vector<3x256xf32>
    %c0_348 = arith.constant 0 : index
    %c12_349 = arith.constant 12 : index
    %c0_350 = arith.constant 0 : index
    %c0_351 = arith.constant 0 : index
    %271 = vector.load %arg5[%c0_348, %c12_349, %c0_350, %c0_351] : memref<1x16x3x256xf32, #tpu.memory_space<vmem>>, vector<1x1x3x256xf32>
    %272 = vector.shape_cast %271 : vector<1x1x3x256xf32> to vector<3x256xf32>
    %273 = vector.shape_cast %270 : vector<3x256xf32> to vector<1x1x3x256xf32>
    tpu.vector_store %arg5[%c0_348, %c12_349, %c0_350, %c0_351], %273 {strides = array<i32>} : memref<1x16x3x256xf32, #tpu.memory_space<vmem>>, vector<1x1x3x256xf32>,
    %c0_352 = arith.constant 0 : index
    %c7_353 = arith.constant 7 : index
    %c0_354 = arith.constant 0 : index
    %c0_355 = arith.constant 0 : index
    %274 = vector.load %arg1[%c0_352, %c7_353, %c0_354, %c0_355] : memref<1x9x32x256xf32, #tpu.memory_space<vmem>>, vector<1x1x32x256xf32>
    %275 = vector.shape_cast %274 : vector<1x1x32x256xf32> to vector<32x256xf32>
    %c0_356 = arith.constant 0 : index
    %c6_357 = arith.constant 6 : index
    %c0_358 = arith.constant 0 : index
    %c0_359 = arith.constant 0 : index
    %276 = vector.load %arg1[%c0_356, %c6_357, %c0_358, %c0_359] : memref<1x9x32x256xf32, #tpu.memory_space<vmem>>, vector<1x1x32x256xf32>
    %277 = vector.shape_cast %276 : vector<1x1x32x256xf32> to vector<32x256xf32>
    %c0_360 = arith.constant 0 : index
    %c4_361 = arith.constant 4 : index
    %c0_362 = arith.constant 0 : index
    %c0_363 = arith.constant 0 : index
    %278 = vector.load %arg1[%c0_360, %c4_361, %c0_362, %c0_363] : memref<1x9x32x256xf32, #tpu.memory_space<vmem>>, vector<1x1x32x256xf32>
    %279 = vector.shape_cast %278 : vector<1x1x32x256xf32> to vector<32x256xf32>
    %c0_364 = arith.constant 0 : index
    %c3_365 = arith.constant 3 : index
    %c0_366 = arith.constant 0 : index
    %c0_367 = arith.constant 0 : index
    %280 = vector.load %arg1[%c0_364, %c3_365, %c0_366, %c0_367] : memref<1x9x32x256xf32, #tpu.memory_space<vmem>>, vector<1x1x32x256xf32>
    %281 = vector.shape_cast %280 : vector<1x1x32x256xf32> to vector<32x256xf32>
    %282 = tpu.concatenate %275, %277, %279, %281 in 0 : vector<32x256xf32>, vector<32x256xf32>, vector<32x256xf32>, vector<32x256xf32> -> vector<128x256xf32>
    %c13 = arith.constant 13 : index
    %c0_368 = arith.constant 0 : index
    %c0_369 = arith.constant 0 : index
    %283 = vector.load %arg2[%c13, %c0_368, %c0_369] : memref<16x3x128xf32, #tpu.memory_space<vmem>>, vector<1x3x128xf32>
    %284 = vector.shape_cast %283 : vector<1x3x128xf32> to vector<3x128xf32>
    %cst_370 = arith.constant dense<0.000000e+00> : vector<3x256xf32>
    %285 = tpu.matmul %284, %282, %cst_370 {dimension_numbers = #tpu.dot_dimension_numbers<[1], [0], [0], [1], [0, 0, 1, 1], [], []>} : vector<3x128xf32>, vector<128x256xf32>, vector<3x256xf32> -> vector<3x256xf32>
    %286 = vector.broadcast %0 : vector<3x1xf32> to vector<3x256xf32>
    %287 = arith.addf %285, %286 : vector<3x256xf32>
    %c0_371 = arith.constant 0 : index
    %c13_372 = arith.constant 13 : index
    %c0_373 = arith.constant 0 : index
    %c0_374 = arith.constant 0 : index
    %288 = vector.load %arg4[%c0_371, %c13_372, %c0_373, %c0_374] : memref<1x16x3x256xf32, #tpu.memory_space<vmem>>, vector<1x1x3x256xf32>
    %289 = vector.shape_cast %288 : vector<1x1x3x256xf32> to vector<3x256xf32>
    %290 = vector.shape_cast %287 : vector<3x256xf32> to vector<1x1x3x256xf32>
    tpu.vector_store %arg4[%c0_371, %c13_372, %c0_373, %c0_374], %290 {strides = array<i32>} : memref<1x16x3x256xf32, #tpu.memory_space<vmem>>, vector<1x1x3x256xf32>,
    %291 = math.tanh %287 : vector<3x256xf32>
    %c0_375 = arith.constant 0 : index
    %c13_376 = arith.constant 13 : index
    %c0_377 = arith.constant 0 : index
    %c0_378 = arith.constant 0 : index
    %292 = vector.load %arg5[%c0_375, %c13_376, %c0_377, %c0_378] : memref<1x16x3x256xf32, #tpu.memory_space<vmem>>, vector<1x1x3x256xf32>
    %293 = vector.shape_cast %292 : vector<1x1x3x256xf32> to vector<3x256xf32>
    %294 = vector.shape_cast %291 : vector<3x256xf32> to vector<1x1x3x256xf32>
    tpu.vector_store %arg5[%c0_375, %c13_376, %c0_377, %c0_378], %294 {strides = array<i32>} : memref<1x16x3x256xf32, #tpu.memory_space<vmem>>, vector<1x1x3x256xf32>,
    %c0_379 = arith.constant 0 : index
    %c8_380 = arith.constant 8 : index
    %c0_381 = arith.constant 0 : index
    %c0_382 = arith.constant 0 : index
    %295 = vector.load %arg1[%c0_379, %c8_380, %c0_381, %c0_382] : memref<1x9x32x256xf32, #tpu.memory_space<vmem>>, vector<1x1x32x256xf32>
    %296 = vector.shape_cast %295 : vector<1x1x32x256xf32> to vector<32x256xf32>
    %c0_383 = arith.constant 0 : index
    %c7_384 = arith.constant 7 : index
    %c0_385 = arith.constant 0 : index
    %c0_386 = arith.constant 0 : index
    %297 = vector.load %arg1[%c0_383, %c7_384, %c0_385, %c0_386] : memref<1x9x32x256xf32, #tpu.memory_space<vmem>>, vector<1x1x32x256xf32>
    %298 = vector.shape_cast %297 : vector<1x1x32x256xf32> to vector<32x256xf32>
    %c0_387 = arith.constant 0 : index
    %c5_388 = arith.constant 5 : index
    %c0_389 = arith.constant 0 : index
    %c0_390 = arith.constant 0 : index
    %299 = vector.load %arg1[%c0_387, %c5_388, %c0_389, %c0_390] : memref<1x9x32x256xf32, #tpu.memory_space<vmem>>, vector<1x1x32x256xf32>
    %300 = vector.shape_cast %299 : vector<1x1x32x256xf32> to vector<32x256xf32>
    %c0_391 = arith.constant 0 : index
    %c4_392 = arith.constant 4 : index
    %c0_393 = arith.constant 0 : index
    %c0_394 = arith.constant 0 : index
    %301 = vector.load %arg1[%c0_391, %c4_392, %c0_393, %c0_394] : memref<1x9x32x256xf32, #tpu.memory_space<vmem>>, vector<1x1x32x256xf32>
    %302 = vector.shape_cast %301 : vector<1x1x32x256xf32> to vector<32x256xf32>
    %303 = tpu.concatenate %296, %298, %300, %302 in 0 : vector<32x256xf32>, vector<32x256xf32>, vector<32x256xf32>, vector<32x256xf32> -> vector<128x256xf32>
    %c14 = arith.constant 14 : index
    %c0_395 = arith.constant 0 : index
    %c0_396 = arith.constant 0 : index
    %304 = vector.load %arg2[%c14, %c0_395, %c0_396] : memref<16x3x128xf32, #tpu.memory_space<vmem>>, vector<1x3x128xf32>
    %305 = vector.shape_cast %304 : vector<1x3x128xf32> to vector<3x128xf32>
    %cst_397 = arith.constant dense<0.000000e+00> : vector<3x256xf32>
    %306 = tpu.matmul %305, %303, %cst_397 {dimension_numbers = #tpu.dot_dimension_numbers<[1], [0], [0], [1], [0, 0, 1, 1], [], []>} : vector<3x128xf32>, vector<128x256xf32>, vector<3x256xf32> -> vector<3x256xf32>
    %307 = vector.broadcast %0 : vector<3x1xf32> to vector<3x256xf32>
    %308 = arith.addf %306, %307 : vector<3x256xf32>
    %c0_398 = arith.constant 0 : index
    %c14_399 = arith.constant 14 : index
    %c0_400 = arith.constant 0 : index
    %c0_401 = arith.constant 0 : index
    %309 = vector.load %arg4[%c0_398, %c14_399, %c0_400, %c0_401] : memref<1x16x3x256xf32, #tpu.memory_space<vmem>>, vector<1x1x3x256xf32>
    %310 = vector.shape_cast %309 : vector<1x1x3x256xf32> to vector<3x256xf32>
    %311 = vector.shape_cast %308 : vector<3x256xf32> to vector<1x1x3x256xf32>
    tpu.vector_store %arg4[%c0_398, %c14_399, %c0_400, %c0_401], %311 {strides = array<i32>} : memref<1x16x3x256xf32, #tpu.memory_space<vmem>>, vector<1x1x3x256xf32>,
    %312 = math.tanh %308 : vector<3x256xf32>
    %c0_402 = arith.constant 0 : index
    %c14_403 = arith.constant 14 : index
    %c0_404 = arith.constant 0 : index
    %c0_405 = arith.constant 0 : index
    %313 = vector.load %arg5[%c0_402, %c14_403, %c0_404, %c0_405] : memref<1x16x3x256xf32, #tpu.memory_space<vmem>>, vector<1x1x3x256xf32>
    %314 = vector.shape_cast %313 : vector<1x1x3x256xf32> to vector<3x256xf32>
    %315 = vector.shape_cast %312 : vector<3x256xf32> to vector<1x1x3x256xf32>
    tpu.vector_store %arg5[%c0_402, %c14_403, %c0_404, %c0_405], %315 {strides = array<i32>} : memref<1x16x3x256xf32, #tpu.memory_space<vmem>>, vector<1x1x3x256xf32>,
    %c0_406 = arith.constant 0 : index
    %c8_407 = arith.constant 8 : index
    %c0_408 = arith.constant 0 : index
    %c0_409 = arith.constant 0 : index
    %316 = vector.load %arg1[%c0_406, %c8_407, %c0_408, %c0_409] : memref<1x9x32x256xf32, #tpu.memory_space<vmem>>, vector<1x1x32x256xf32>
    %317 = vector.shape_cast %316 : vector<1x1x32x256xf32> to vector<32x256xf32>
    %c0_410 = arith.constant 0 : index
    %c7_411 = arith.constant 7 : index
    %c0_412 = arith.constant 0 : index
    %c0_413 = arith.constant 0 : index
    %318 = vector.load %arg1[%c0_410, %c7_411, %c0_412, %c0_413] : memref<1x9x32x256xf32, #tpu.memory_space<vmem>>, vector<1x1x32x256xf32>
    %319 = vector.shape_cast %318 : vector<1x1x32x256xf32> to vector<32x256xf32>
    %c0_414 = arith.constant 0 : index
    %c5_415 = arith.constant 5 : index
    %c0_416 = arith.constant 0 : index
    %c0_417 = arith.constant 0 : index
    %320 = vector.load %arg1[%c0_414, %c5_415, %c0_416, %c0_417] : memref<1x9x32x256xf32, #tpu.memory_space<vmem>>, vector<1x1x32x256xf32>
    %321 = vector.shape_cast %320 : vector<1x1x32x256xf32> to vector<32x256xf32>
    %c0_418 = arith.constant 0 : index
    %c4_419 = arith.constant 4 : index
    %c0_420 = arith.constant 0 : index
    %c0_421 = arith.constant 0 : index
    %322 = vector.load %arg1[%c0_418, %c4_419, %c0_420, %c0_421] : memref<1x9x32x256xf32, #tpu.memory_space<vmem>>, vector<1x1x32x256xf32>
    %323 = vector.shape_cast %322 : vector<1x1x32x256xf32> to vector<32x256xf32>
    %324 = tpu.concatenate %317, %319, %321, %323 in 0 : vector<32x256xf32>, vector<32x256xf32>, vector<32x256xf32>, vector<32x256xf32> -> vector<128x256xf32>
    %c15 = arith.constant 15 : index
    %c0_422 = arith.constant 0 : index
    %c0_423 = arith.constant 0 : index
    %325 = vector.load %arg2[%c15, %c0_422, %c0_423] : memref<16x3x128xf32, #tpu.memory_space<vmem>>, vector<1x3x128xf32>
    %326 = vector.shape_cast %325 : vector<1x3x128xf32> to vector<3x128xf32>
    %cst_424 = arith.constant dense<0.000000e+00> : vector<3x256xf32>
    %327 = tpu.matmul %326, %324, %cst_424 {dimension_numbers = #tpu.dot_dimension_numbers<[1], [0], [0], [1], [0, 0, 1, 1], [], []>} : vector<3x128xf32>, vector<128x256xf32>, vector<3x256xf32> -> vector<3x256xf32>
    %328 = vector.broadcast %0 : vector<3x1xf32> to vector<3x256xf32>
    %329 = arith.addf %327, %328 : vector<3x256xf32>
    %c0_425 = arith.constant 0 : index
    %c15_426 = arith.constant 15 : index
    %c0_427 = arith.constant 0 : index
    %c0_428 = arith.constant 0 : index
    %330 = vector.load %arg4[%c0_425, %c15_426, %c0_427, %c0_428] : memref<1x16x3x256xf32, #tpu.memory_space<vmem>>, vector<1x1x3x256xf32>
    %331 = vector.shape_cast %330 : vector<1x1x3x256xf32> to vector<3x256xf32>
    %332 = vector.shape_cast %329 : vector<3x256xf32> to vector<1x1x3x256xf32>
    tpu.vector_store %arg4[%c0_425, %c15_426, %c0_427, %c0_428], %332 {strides = array<i32>} : memref<1x16x3x256xf32, #tpu.memory_space<vmem>>, vector<1x1x3x256xf32>,
    %333 = math.tanh %329 : vector<3x256xf32>
    %c0_429 = arith.constant 0 : index
    %c15_430 = arith.constant 15 : index
    %c0_431 = arith.constant 0 : index
    %c0_432 = arith.constant 0 : index
    %334 = vector.load %arg5[%c0_429, %c15_430, %c0_431, %c0_432] : memref<1x16x3x256xf32, #tpu.memory_space<vmem>>, vector<1x1x3x256xf32>
    %335 = vector.shape_cast %334 : vector<1x1x3x256xf32> to vector<3x256xf32>
    %336 = vector.shape_cast %333 : vector<3x256xf32> to vector<1x1x3x256xf32>
    tpu.vector_store %arg5[%c0_429, %c15_430, %c0_431, %c0_432], %336 {strides = array<i32>} : memref<1x16x3x256xf32, #tpu.memory_space<vmem>>, vector<1x1x3x256xf32>,
    return
  }
  func.func @transform_0(%arg0: i32) -> (i32, i32, i32, i32) {
    %c0_i32 = arith.constant 0 : i32
    %c0_i32_0 = arith.constant 0 : i32
    %c0_i32_1 = arith.constant 0 : i32
    %c0_i32_2 = arith.constant 0 : i32
    return %arg0, %c0_i32, %c0_i32_0, %c0_i32_1 : i32, i32, i32, i32
  }
  func.func @transform_1(%arg0: i32) -> (i32, i32, i32) {
    %c0_i32 = arith.constant 0 : i32
    %c0_i32_0 = arith.constant 0 : i32
    %c0_i32_1 = arith.constant 0 : i32
    %c0_i32_2 = arith.constant 0 : i32
    return %c0_i32, %c0_i32_0, %c0_i32_1 : i32, i32, i32
  }
  func.func @transform_2(%arg0: i32) -> (i32, i32) {
    %c0_i32 = arith.constant 0 : i32
    %c0_i32_0 = arith.constant 0 : i32
    %c0_i32_1 = arith.constant 0 : i32
    return %c0_i32, %c0_i32_0 : i32, i32
  }
  func.func @transform_3(%arg0: i32) -> (i32, i32, i32, i32) {
    %c0_i32 = arith.constant 0 : i32
    %c0_i32_0 = arith.constant 0 : i32
    %c0_i32_1 = arith.constant 0 : i32
    %c0_i32_2 = arith.constant 0 : i32
    return %arg0, %c0_i32, %c0_i32_0, %c0_i32_1 : i32, i32, i32, i32
  }
  func.func @transform_4(%arg0: i32) -> (i32, i32, i32, i32) {
    %c0_i32 = arith.constant 0 : i32
    %c0_i32_0 = arith.constant 0 : i32
    %c0_i32_1 = arith.constant 0 : i32
    %c0_i32_2 = arith.constant 0 : i32
    return %arg0, %c0_i32, %c0_i32_0, %c0_i32_1 : i32, i32, i32, i32
  }
}

</mosaic_0001>

<llo_original>
// kernel: generator3layers_forward.3
$region0: #{generator3layers_forward.3}
  #allocation0 [shape = 'u32[]', space=smem, size = 0x4, offset = 0x4, fixed_abs, tag = 'smem constant byte address 0x4 - core index']
  #allocation1 [shape = 'u32[144,128]{1,0:T(1,128)}', space=vmem, size = 0x12000, scoped, tag = 'internal scratch']
  %s0 = inlined_call_operand.vmem [shape: f32[2,64], index: 0, kind: input, shape index: {}]
  %s1 = inlined_call_operand.hbm [shape: f32[16,64], index: 1, kind: input, shape index: {}]
  %s2 = inlined_call_operand.hbm [shape: f32[64,128], index: 2, kind: input, shape index: {}]
  %s3 = inlined_call_operand.hbm [shape: f32[1,128], index: 3, kind: input, shape index: {}]
  %s4 = inlined_call_operand.hbm [shape: f32[1,128], index: 4, kind: input, shape index: {}]
  %s5 = inlined_call_operand.vmem [shape: f32[32,128], index: 5, kind: output, shape index: {}]
  %s6 = sld [smem:[#allocation0]]
  $region46: #{generator3layers_forward.3} parent=0
    _
  %s8 = ssub.s32 1, %s6
  %s9 = scalar_select 0, %s8, %s6
  $region1: #{generator3layers_forward.3} parent=0
    #allocation2 [shape = 'u8[8192]{0}', space=vmem, size = 0x2000, scoped, tag = 'input window, operand 1, single buffered']
    #allocation3 [shape = 's32[1]{0}', space=sflag, size = 0x4, scoped, tag = 'scoped memory for generator3layers_forward.3']
    #allocation4 [shape = 'u8[32768]{0}', space=vmem, size = 0x8000, scoped, tag = 'input window, operand 2, single buffered']
    #allocation5 [shape = 's32[1]{0}', space=sflag, size = 0x4, scoped, tag = 'scoped memory for generator3layers_forward.3']
    #allocation6 [shape = 'u8[512]{0}', space=vmem, size = 0x400, scoped, tag = 'input window, operand 3, single buffered']
    #allocation7 [shape = 'u8[512]{0}', space=vmem, size = 0x400, scoped, tag = 'input window, operand 4, single buffered']
    #allocation8 [shape = 's32[1]{0}', space=sflag, size = 0x4, scoped, tag = 'scoped memory for generator3layers_forward.3']
    %10 = vsyncpa [#allocation3], 0
    %11 = vsyncpa [#allocation5], 0
    %12 = vsyncpa [#allocation8], 0
    // Predicated region
    $region2: #{generator3layers_forward.3} parent=1 // pred_check
      _
    $region3: #{generator3layers_forward.3} parent=1 // pred_check_branch
      %14 = sbr.rel (0) target = $region5
    $region4: #{generator3layers_forward.3} parent=1 // pred_region
      _
    $region5: #{generator3layers_forward.3} parent=1 // pred_fallthru
      _
    // Predicated region
    $region6: #{generator3layers_forward.3} parent=1 // pred_check
      _
    $region7: #{generator3layers_forward.3} parent=1 // pred_check_branch
      %16 = sbr.rel (0) target = $region9
    $region8: #{generator3layers_forward.3} parent=1 // pred_region
      %s18 = ssub.s32 256, 256
      %19 = vsyncadd [#allocation3], %s18
      %s20 = sshll.u32 [#allocation2], 4
      %s21 = int_to_ptr.vmem [resolvable:$true] %s20
      %26 = dma.hbm_to_vmem [thread:$0]  %s1, 256, %s21, [#allocation3], 128, 128, 8
    $region9: #{generator3layers_forward.3} parent=1 // pred_fallthru
      _
    // Predicated region
    $region10: #{generator3layers_forward.3} parent=1 // pred_check
      _
    $region11: #{generator3layers_forward.3} parent=1 // pred_check_branch
      %28 = sbr.rel (0) target = $region13
    $region12: #{generator3layers_forward.3} parent=1 // pred_region
      %s30 = ssub.s32 1024, 1024
      %31 = vsyncadd [#allocation5], %s30
      %s32 = sshll.u32 [#allocation4], 4
      %s33 = int_to_ptr.vmem [resolvable:$true] %s32
      %38 = dma.hbm_to_vmem [thread:$0]  %s2, 1024, %s33, [#allocation5], 128, 128, 8
    $region13: #{generator3layers_forward.3} parent=1 // pred_fallthru
      _
    // Predicated region
    $region14: #{generator3layers_forward.3} parent=1 // pred_check
      _
    $region15: #{generator3layers_forward.3} parent=1 // pred_check_branch
      %40 = sbr.rel (0) target = $region17
    $region16: #{generator3layers_forward.3} parent=1 // pred_region
      %s42 = ssub.s32 16, 16
      %43 = vsyncadd [#allocation5], %s42
      %s45 = sshll.u32 [#allocation6], 4
      %s46 = int_to_ptr.vmem [resolvable:$true] %s45
      %48 = dma.hbm_to_vmem [thread:$0]  %s3, 16, %s46, [#allocation5]
    $region17: #{generator3layers_forward.3} parent=1 // pred_fallthru
      _
    // Predicated region
    $region18: #{generator3layers_forward.3} parent=1 // pred_check
      _
    $region19: #{generator3layers_forward.3} parent=1 // pred_check_branch
      %50 = sbr.rel (0) target = $region21
    $region20: #{generator3layers_forward.3} parent=1 // pred_region
      %s52 = ssub.s32 16, 16
      %53 = vsyncadd [#allocation8], %s52
      %s55 = sshll.u32 [#allocation7], 4
      %s56 = int_to_ptr.vmem [resolvable:$true] %s55
      %58 = dma.hbm_to_vmem [thread:$0]  %s4, 16, %s56, [#allocation8]
    $region21: #{generator3layers_forward.3} parent=1 // pred_fallthru
      _
    // Predicated region
    $region22: #{generator3layers_forward.3} parent=1 // pred_check
      _
    $region23: #{generator3layers_forward.3} parent=1 // pred_check_branch
      %60 = sbr.rel (0) target = $region25
    $region24: #{generator3layers_forward.3} parent=1 // pred_region
      %61 = dma.done [#allocation3], 256
    $region25: #{generator3layers_forward.3} parent=1 // pred_fallthru
      _
    // Predicated region
    $region26: #{generator3layers_forward.3} parent=1 // pred_check
      _
    $region27: #{generator3layers_forward.3} parent=1 // pred_check_branch
      %63 = sbr.rel (0) target = $region29
    $region28: #{generator3layers_forward.3} parent=1 // pred_region
      %64 = dma.done [#allocation5], 1024
    $region29: #{generator3layers_forward.3} parent=1 // pred_fallthru
      _
    // Predicated region
    $region30: #{generator3layers_forward.3} parent=1 // pred_check
      _
    $region31: #{generator3layers_forward.3} parent=1 // pred_check_branch
      %66 = sbr.rel (0) target = $region33
    $region32: #{generator3layers_forward.3} parent=1 // pred_region
      %67 = dma.done [#allocation5], 16
    $region33: #{generator3layers_forward.3} parent=1 // pred_fallthru
      _
    // Predicated region
    $region34: #{generator3layers_forward.3} parent=1 // pred_check
      _
    $region35: #{generator3layers_forward.3} parent=1 // pred_check_branch
      %69 = sbr.rel (0) target = $region37
    $region36: #{generator3layers_forward.3} parent=1 // pred_region
      %70 = dma.done [#allocation8], 16
    $region37: #{generator3layers_forward.3} parent=1 // pred_fallthru
      _
    %v71 = vld [vmem:[%s0] sm:$0x3]
    %v72 = vld [vmem:[#allocation2] sm:$0xff]
    %v73 = vld [vmem:[#allocation2 + $0x8] sm:$0xff]
    %v76 = vunpack.c.l.s4 1966171168
    %v77 = vunpack.c.0.s8 %v76
    %v78 = vlaneseq
    %v79 = vshrl.u32 %v78, 7
    %v80 = vsub.s32 %v77, %v79
    %v81 = vrot.slane %v71, %v80
    %v82 = vcombine.high %v81, %v81
    %v84 = vunpack.c.l.s4 1966171168
    %v85 = vunpack.c.0.s8 %v84
    %v86 = vlaneseq
    %v87 = vshrl.u32 %v86, 7
    %v88 = vsub.s32 %v85, %v87
    %v89 = vrot.slane %v81, %v88
    %v91 = vunpack.c.l.s4 1966171168
    %v92 = vunpack.c.0.s8 %v91
    %v93 = vlaneseq
    %v94 = vshrl.u32 %v93, 7
    %v95 = vsub.s32 %v92, %v94
    %v96 = vrot.slane %v82, %v95
    %v97 = vlaneseq
    %v98 = vshrl.u32 %v97, 7
    %v99 = vsub.s32 0, %v98
    %v100 = vrot.slane %v89, %v99
    %v101 = vlaneseq
    %v102 = vshrl.u32 %v101, 7
    %v103 = vsub.s32 0, %v102
    %v104 = vrot.slane %v96, %v103
    %v107 = vmul.f32 %v100, %v72
    %v108 = vmul.f32 %v100, %v73
    %v109 = vmul.f32 %v104, %v72
    %v110 = vmul.f32 %v104, %v73
    %v111 = vld [vmem:[#allocation4] sm:$0xff]
    %v112 = vld [vmem:[#allocation4 + $0x8] sm:$0xff]
    %v113 = vld [vmem:[#allocation4 + $0x10] sm:$0xff]
    %v114 = vld [vmem:[#allocation4 + $0x18] sm:$0xff]
    %v115 = vld [vmem:[#allocation4 + $0x20] sm:$0xff]
    %v116 = vld [vmem:[#allocation4 + $0x28] sm:$0xff]
    %v117 = vld [vmem:[#allocation4 + $0x30] sm:$0xff]
    %v118 = vld [vmem:[#allocation4 + $0x38] sm:$0xff]
    %vm119 = vcmask 523264
    %v121 = vsel %vm119, %v107, 0
    %v124 = vsel %vm119, %v108, 0
    %v127 = vsel %vm119, %v109, 0
    %v130 = vsel %vm119, %v110, 0
    %132 = vmatprep.subr.mxu0 0.0
    %133 = vmatpush1.msra.mxu0 0.0
    %134 = vmatprep.subr.mxu0 0.0
    %135 = vmatpush1.msra.mxu0 0.0
    %136 = vmatprep.subr.mxu0 0.0
    %137 = vmatpush1.msra.mxu0 0.0
    %138 = vmatprep.subr.mxu0 0.0
    %139 = vmatpush1.msra.mxu0 0.0
    %140 = vmatprep.subr.mxu0 0.0
    %141 = vmatpush1.msra.mxu0 0.0
    %142 = vmatprep.subr.mxu0 0.0
    %143 = vmatpush1.msra.mxu0 0.0
    %144 = vmatprep.subr.mxu0 0.0
    %145 = vmatpush1.msra.mxu0 0.0
    %146 = vmatprep.subr.mxu0 0.0
    %147 = vmatpush1.msra.mxu0 0.0
    %148 = vmatprep.subr.mxu0 0.0
    %149 = vmatpush1.msra.mxu0 %v118
    %150 = vmatprep.subr.mxu0 0.0
    %151 = vmatpush1.msra.mxu0 %v117
    %152 = vmatprep.subr.mxu0 0.0
    %153 = vmatpush1.msra.mxu0 %v116
    %154 = vmatprep.subr.mxu0 0.0
    %155 = vmatpush1.msra.mxu0 %v115
    %156 = vmatprep.subr.mxu0 0.0
    %157 = vmatpush1.msra.mxu0 %v114
    %158 = vmatprep.subr.mxu0 0.0
    %159 = vmatpush1.msra.mxu0 %v113
    %160 = vmatprep.subr.mxu0 0.0
    %161 = vmatpush1.msra.mxu0 %v112
    %162 = vmatprep.subr.mxu0 0.0
    %163 = vmatpush1.msra.mxu0 %v111
    %164 = vmatprep.subr.mxu0 0.0
    %165 = vmatpush2.msra.mxu0 0.0
    %166 = vmatprep.subr.mxu0 0.0
    %167 = vmatpush2.msra.mxu0 0.0
    %168 = vmatprep.subr.mxu0 0.0
    %169 = vmatpush2.msra.mxu0 0.0
    %170 = vmatprep.subr.mxu0 0.0
    %171 = vmatpush2.msra.mxu0 0.0
    %172 = vmatprep.subr.mxu0 0.0
    %173 = vmatpush2.msra.mxu0 0.0
    %174 = vmatprep.subr.mxu0 0.0
    %175 = vmatpush2.msra.mxu0 0.0
    %176 = vmatprep.subr.mxu0 0.0
    %177 = vmatpush2.msra.mxu0 0.0
    %178 = vmatprep.subr.mxu0 0.0
    %179 = vmatpush2.msra.mxu0 0.0
    %180 = vmatprep.subr.mxu0 0.0
    %181 = vmatpush2.msra.mxu0 0.0
    %182 = vmatprep.subr.mxu0 0.0
    %183 = vmatpush2.msra.mxu0 0.0
    %184 = vmatprep.subr.mxu0 0.0
    %185 = vmatpush2.msra.mxu0 0.0
    %186 = vmatprep.subr.mxu0 0.0
    %187 = vmatpush2.msra.mxu0 0.0
    %188 = vmatprep.subr.mxu0 0.0
    %189 = vmatpush2.msra.mxu0 0.0
    %190 = vmatprep.subr.mxu0 0.0
    %191 = vmatpush2.msra.mxu0 0.0
    %192 = vmatprep.subr.mxu0 0.0
    %193 = vmatpush2.msra.mxu0 0.0
    %194 = vmatprep.subr.mxu0 0.0
    %195 = vmatpush2.msra.mxu0 0.0
    %196 = vmatprep.mubr.f32.mxu0 0.0
    %197 = vmatmul.mubr.f32.gmra.mxu0 %v121
    %v198 = vpop.f32.mrf.mxu0
    %v199 = vadd.f32 0.0, %v198
    %v200 = vpop.f32.mrf.mxu0
    %201 = vmatprep.mubr.f32.mxu0 0.0
    %202 = vmatmul.mubr.f32.gmra.mxu0 %v124
    %v203 = vpop.f32.mrf.mxu0
    %v204 = vadd.f32 0.0, %v203
    %v205 = vpop.f32.mrf.mxu0
    %206 = vmatprep.mubr.f32.mxu0 0.0
    %207 = vmatmul.mubr.f32.gmra.mxu0 %v127
    %v208 = vpop.f32.mrf.mxu0
    %v209 = vadd.f32 0.0, %v208
    %v210 = vpop.f32.mrf.mxu0
    %211 = vmatprep.mubr.f32.mxu0 0.0
    %212 = vmatmul.mubr.f32.gmra.mxu0 %v130
    %v213 = vpop.f32.mrf.mxu0
    %v214 = vadd.f32 0.0, %v213
    %v215 = vpop.f32.mrf.mxu0
    %216 = vdwg.mxu0
    %v217 = vadd.f32 %v199, %v204
    %v218 = vadd.f32 %v217, %v209
    %v219 = vadd.f32 %v218, %v214
    %v220 = vrot.slane %v219, 4
    %v221 = vadd.f32 %v219, %v220
    %v222 = vrot.slane %v221, 2
    %v223 = vadd.f32 %v221, %v222
    %v224 = vrot.slane %v223, 1
    %v225 = vadd.f32 %v223, %v224
    %v226 = vrcp.pop 32.0
    %v227 = vmul.f32 %v225, %v226
    %v228 = vsub.f32 %v199, %v227
    %v229 = vsub.f32 %v204, %v227
    %v230 = vsub.f32 %v209, %v227
    %v231 = vsub.f32 %v214, %v227
    %v232 = vmul.f32 %v228, %v228
    %v233 = vmul.f32 %v229, %v229
    %v234 = vmul.f32 %v230, %v230
    %v235 = vmul.f32 %v231, %v231
    %v236 = vadd.f32 %v232, %v233
    %v237 = vadd.f32 %v236, %v234
    %v238 = vadd.f32 %v237, %v235
    %v239 = vrot.slane %v238, 4
    %v240 = vadd.f32 %v238, %v239
    %v241 = vrot.slane %v240, 2
    %v242 = vadd.f32 %v240, %v241
    %v243 = vrot.slane %v242, 1
    %v244 = vadd.f32 %v242, %v243
    %v245 = vmul.f32 %v244, %v226
    %v246 = vadd.f32 %v245, 1e-05
    %v247 = vrsqrt.pop %v246
    %v248 = vmul.f32 %v228, %v247
    %v249 = vmul.f32 %v229, %v247
    %v250 = vmul.f32 %v230, %v247
    %v251 = vmul.f32 %v231, %v247
    %v252 = vld [vmem:[#allocation6] sm:$0x1]
    %v254 = vlaneseq
    %v255 = vshrl.u32 %v254, 7
    %v256 = vsub.s32 0, %v255
    %v257 = vrot.slane %v252, %v256
    %v259 = vmul.f32 %v248, %v257
    %v260 = vmul.f32 %v249, %v257
    %v261 = vmul.f32 %v250, %v257
    %v262 = vmul.f32 %v251, %v257
    %v263 = vld [vmem:[#allocation7] sm:$0x1]
    %v265 = vlaneseq
    %v266 = vshrl.u32 %v265, 7
    %v267 = vsub.s32 0, %v266
    %v268 = vrot.slane %v263, %v267
    %v270 = vadd.f32 %v259, %v268
    %v271 = vadd.f32 %v260, %v268
    %v272 = vadd.f32 %v261, %v268
    %v273 = vadd.f32 %v262, %v268
    %v274 = vmax.f32 %v270, 0.0
    %v275 = vmax.f32 %v271, 0.0
    %v276 = vmax.f32 %v272, 0.0
    %v277 = vmax.f32 %v273, 0.0
    %278 = vst [vmem:[%s5] sm:$0xff] %v274
    %279 = vst [vmem:[%s5 + $0x8] sm:$0xff] %v275
    %280 = vst [vmem:[%s5 + $0x10] sm:$0xff] %v276
    %281 = vst [vmem:[%s5 + $0x18] sm:$0xff] %v277
    // Predicated region
    $region38: #{generator3layers_forward.3} parent=1 // pred_check
      _
    $region39: #{generator3layers_forward.3} parent=1 // pred_check_branch
      %283 = sbr.rel (0) target = $region41
    $region40: #{generator3layers_forward.3} parent=1 // pred_region
      _
    $region41: #{generator3layers_forward.3} parent=1 // pred_fallthru
      _
    // Predicated region
    $region42: #{generator3layers_forward.3} parent=1 // pred_check
      _
    $region43: #{generator3layers_forward.3} parent=1 // pred_check_branch
      %285 = sbr.rel (0) target = $region45
    $region44: #{generator3layers_forward.3} parent=1 // pred_region
      _
    $region45: #{generator3layers_forward.3} parent=1 // pred_fallthru
      _
    %286 = vsyncpa [#allocation3], 1
    %287 = vsyncpa [#allocation5], 1
    %288 = vsyncpa [#allocation8], 1

// kernel: generator3layers_forward.5
$region0: #{generator3layers_forward.5}
  #allocation0 [shape = 'u32[]', space=smem, size = 0x4, offset = 0x4, fixed_abs, tag = 'smem constant byte address 0x4 - core index']
  #allocation1 [shape = 'u32[144,128]{1,0:T(1,128)}', space=vmem, size = 0x12000, scoped, tag = 'internal scratch']
  %s0 = inlined_call_operand.vmem [shape: f32[2,9,32,256], index: 0, kind: input, shape index: {}]
  %s1 = inlined_call_operand.vmem [shape: f32[16,3,128], index: 1, kind: input, shape index: {}]
  %s2 = inlined_call_operand.vmem [shape: f32[3,1], index: 2, kind: input, shape index: {}]
  %s3 = inlined_call_operand.vmem [shape: f32[2,16,3,256], index: 3, kind: output, shape index: {0}]
  %s4 = inlined_call_operand.vmem [shape: f32[2,16,3,256], index: 4, kind: output, shape index: {1}]
  %5 = xla_tuple %s3, %s4
  %s6 = sld [smem:[#allocation0]]
  $region53: #{generator3layers_forward.5} parent=0
    _
  %s8 = ssub.s32 1, %s6
  %s9 = scalar_select 0, %s8, %s6
  loop: start=0, step=1, limit=4
  $region2: #{generator3layers_forward.5} parent=0 // loop_pre_header
    _
  $region3: #{generator3layers_forward.5} parent=0 // loop_header
    %s11 = sphi 0, %s15
    %p12 = scmp.ge.s32.totalorder %s11, 4
    %s21 = sphi 0, %s23
    %s24 = sphi 0, %s21
    %s25 = sphi 0, %s24
    %s41 = sphi 0, %s25
    %s45 = sphi 0, %s45
    %s47 = sphi 0, %s45
    %s48 = sphi 0, %s47
    %s62 = sphi 0, %s48
    %s66 = sphi 0, %s66
    %s68 = sphi 0, %s66
    %s69 = sphi 0, %s68
    %s83 = sphi 0, %s69
    %s89 = sphi 0, %s91
    %s92 = sphi 0, %s89
    %s93 = sphi 0, %s92
    %s109 = sphi 0, %s93
    %s115 = sphi 0, %s117
    %s118 = sphi 0, %s115
    %s119 = sphi 0, %s118
    %s135 = sphi 0, %s119
  $region4: #{generator3layers_forward.5} parent=0 // loop_header_branch
    %14 = sbr.rel (%p12) target = $region8
  $region5: #{generator3layers_forward.5} parent=0 // loop_body
    %s16 = ssub.s32 %s11, 1
    %s17 = ssub.s32 %s11, 2
    %s18 = sadd.s32 %s11, 1
    %s19 = ssub.s32 %s11, %s18
    %p20 = scmp.eq.s32.totalorder %s19, 0
    %s22 = sadd.s32 %s21, 1
    %s23 = scalar_select %p20, %s21, %s22
    %p26 = pneg %p20
    %p27 = scmp.eq.s32.totalorder %s11, 1
    %p28 = por %p26, %p27
    %p29 = scmp.ne.s32.totalorder %s21, %s24
    %p30 = scmp.eq.s32.totalorder %s11, 0
    %p31 = por %p29, %p30
    %p32 = scmp.ne.s32.totalorder %s21, %s24
    %p33 = scmp.eq.s32.totalorder %s16, 1
    %p34 = por %p32, %p33
    %p35 = scmp.ne.s32.totalorder %s24, %s25
    %p36 = scmp.eq.s32.totalorder %s16, 0
    %p37 = por %p35, %p36
    %p38 = scmp.ne.s32.totalorder %s24, %s25
    %p39 = scmp.eq.s32.totalorder %s17, 1
    %p40 = por %p38, %p39
    %p42 = scmp.ne.s32.totalorder %s25, %s41
    %p43 = scmp.eq.s32.totalorder %s17, 0
    %p44 = por %p42, %p43
    %s46 = sadd.s32 %s45, 1
    %p49 = scmp.eq.s32.totalorder %s11, 1
    %p50 = scmp.ne.s32.totalorder %s45, %s47
    %p51 = scmp.eq.s32.totalorder %s11, 0
    %p52 = por %p50, %p51
    %p53 = scmp.ne.s32.totalorder %s45, %s47
    %p54 = scmp.eq.s32.totalorder %s16, 1
    %p55 = por %p53, %p54
    %p56 = scmp.ne.s32.totalorder %s47, %s48
    %p57 = scmp.eq.s32.totalorder %s16, 0
    %p58 = por %p56, %p57
    %p59 = scmp.ne.s32.totalorder %s47, %s48
    %p60 = scmp.eq.s32.totalorder %s17, 1
    %p61 = por %p59, %p60
    %p63 = scmp.ne.s32.totalorder %s48, %s62
    %p64 = scmp.eq.s32.totalorder %s17, 0
    %p65 = por %p63, %p64
    %s67 = sadd.s32 %s66, 1
    %p70 = scmp.eq.s32.totalorder %s11, 1
    %p71 = scmp.ne.s32.totalorder %s66, %s68
    %p72 = scmp.eq.s32.totalorder %s11, 0
    %p73 = por %p71, %p72
    %p74 = scmp.ne.s32.totalorder %s66, %s68
    %p75 = scmp.eq.s32.totalorder %s16, 1
    %p76 = por %p74, %p75
    %p77 = scmp.ne.s32.totalorder %s68, %s69
    %p78 = scmp.eq.s32.totalorder %s16, 0
    %p79 = por %p77, %p78
    %p80 = scmp.ne.s32.totalorder %s68, %s69
    %p81 = scmp.eq.s32.totalorder %s17, 1
    %p82 = por %p80, %p81
    %p84 = scmp.ne.s32.totalorder %s69, %s83
    %p85 = scmp.eq.s32.totalorder %s17, 0
    %p86 = por %p84, %p85
    %s87 = ssub.s32 %s11, %s18
    %p88 = scmp.eq.s32.totalorder %s87, 0
    %s90 = sadd.s32 %s89, 1
    %s91 = scalar_select %p88, %s89, %s90
    %p94 = pneg %p88
    %p95 = scmp.eq.s32.totalorder %s11, 1
    %p96 = por %p94, %p95
    %p97 = scmp.ne.s32.totalorder %s89, %s92
    %p98 = scmp.eq.s32.totalorder %s11, 0
    %p99 = por %p97, %p98
    %p100 = scmp.ne.s32.totalorder %s89, %s92
    %p101 = scmp.eq.s32.totalorder %s16, 1
    %p102 = por %p100, %p101
    %p103 = scmp.ne.s32.totalorder %s92, %s93
    %p104 = scmp.eq.s32.totalorder %s16, 0
    %p105 = por %p103, %p104
    %p106 = scmp.ne.s32.totalorder %s92, %s93
    %p107 = scmp.eq.s32.totalorder %s17, 1
    %p108 = por %p106, %p107
    %p110 = scmp.ne.s32.totalorder %s93, %s109
    %p111 = scmp.eq.s32.totalorder %s17, 0
    %p112 = por %p110, %p111
    %s113 = ssub.s32 %s11, %s18
    %p114 = scmp.eq.s32.totalorder %s113, 0
    %s116 = sadd.s32 %s115, 1
    %s117 = scalar_select %p114, %s115, %s116
    %p120 = pneg %p114
    %p121 = scmp.eq.s32.totalorder %s11, 1
    %p122 = por %p120, %p121
    %p123 = scmp.ne.s32.totalorder %s115, %s118
    %p124 = scmp.eq.s32.totalorder %s11, 0
    %p125 = por %p123, %p124
    %p126 = scmp.ne.s32.totalorder %s115, %s118
    %p127 = scmp.eq.s32.totalorder %s16, 1
    %p128 = por %p126, %p127
    %p129 = scmp.ne.s32.totalorder %s118, %s119
    %p130 = scmp.eq.s32.totalorder %s16, 0
    %p131 = por %p129, %p130
    %p132 = scmp.ne.s32.totalorder %s118, %s119
    %p133 = scmp.eq.s32.totalorder %s17, 1
    %p134 = por %p132, %p133
    %p136 = scmp.ne.s32.totalorder %s119, %s135
    %p137 = scmp.eq.s32.totalorder %s17, 0
    %p138 = por %p136, %p137
    %p139 = scmp.le.s32.totalorder 1, %s11
    %p140 = scmp.lt.s32.totalorder %s11, 3
    %p141 = pnand %p139, %p140
    %p142 = pneg %p141
    // Predicated region
    $region9: #{generator3layers_forward.5} parent=5 // pred_check
      _
    $region10: #{generator3layers_forward.5} parent=5 // pred_check_branch
      %144 = sbr.rel (%p141) target = $region12
    $region11: #{generator3layers_forward.5} parent=5 // pred_region
      %s145 = ssub.s32 %s11, 1
      // Predicated region
      $region13: #{generator3layers_forward.5} parent=11 // pred_check
        %p146 = pneg %p58
      $region14: #{generator3layers_forward.5} parent=11 // pred_check_branch
        %148 = sbr.rel (%p146) target = $region16
      $region15: #{generator3layers_forward.5} parent=11 // pred_region
        _
      $region16: #{generator3layers_forward.5} parent=11 // pred_fallthru
        _
      // Predicated region
      $region17: #{generator3layers_forward.5} parent=11 // pred_check
        %p149 = pneg %p79
      $region18: #{generator3layers_forward.5} parent=11 // pred_check_branch
        %151 = sbr.rel (%p149) target = $region20
      $region19: #{generator3layers_forward.5} parent=11 // pred_region
        _
      $region20: #{generator3layers_forward.5} parent=11 // pred_fallthru
        _
    $region12: #{generator3layers_forward.5} parent=5 // pred_fallthru
      _
    %p152 = scmp.lt.s32.totalorder %s11, 2
    // Predicated region
    $region21: #{generator3layers_forward.5} parent=5 // pred_check
      %p153 = pneg %p152
    $region22: #{generator3layers_forward.5} parent=5 // pred_check_branch
      %155 = sbr.rel (%p153) target = $region24
    $region23: #{generator3layers_forward.5} parent=5 // pred_region
      // Predicated region
      $region25: #{generator3layers_forward.5} parent=23 // pred_check
        %p156 = pneg %p31
      $region26: #{generator3layers_forward.5} parent=23 // pred_check_branch
        %158 = sbr.rel (%p156) target = $region28
      $region27: #{generator3layers_forward.5} parent=23 // pred_region
        %p159 = scmp.lt.s32.totalorder %s11, 1
        %s160 = scalar_select %p159, %s11, 1
        %s161 = smul.addr %s160, 72
        %s162 = smul.addr %s161, 8
        %s163 = scalar_lea.vmem %s0, %s162
      $region28: #{generator3layers_forward.5} parent=23 // pred_fallthru
        _
    $region24: #{generator3layers_forward.5} parent=5 // pred_fallthru
      _
    %p164 = scmp.le.s32.totalorder 1, %s11
    %p165 = scmp.lt.s32.totalorder %s11, 3
    %p166 = pnand %p164, %p165
    %p167 = pneg %p166
    // Predicated region
    $region29: #{generator3layers_forward.5} parent=5 // pred_check
      _
    $region30: #{generator3layers_forward.5} parent=5 // pred_check_branch
      %169 = sbr.rel (%p166) target = $region32
    $region31: #{generator3layers_forward.5} parent=5 // pred_region
      %s170 = ssub.s32 %s11, 1
      %p171 = scmp.lt.s32.totalorder %s16, 1
      %s172 = scalar_select %p171, %s16, 1
      %s173 = smul.addr %s172, 72
      %s174 = smul.addr %s173, 8
      %s175 = scalar_lea.vmem %s0, %s174
      %p176 = pneg %p37
      %p177 = pneg %p34
      %p178 = pneg %p58
      %p179 = pneg %p55
      %p180 = pneg %p79
      %p181 = pneg %p76
      %p182 = pneg %p105
      %p183 = pneg %p102
      %p184 = scmp.lt.s32.totalorder %s16, 1
      %s185 = scalar_select %p184, %s16, 1
      %s186 = smul.addr %s185, 32
      %s187 = smul.addr %s186, 4
      %s188 = scalar_lea.vmem %s3, %s187
      %p189 = pneg %p131
      %p190 = pneg %p128
      %p191 = scmp.lt.s32.totalorder %s16, 1
      %s192 = scalar_select %p191, %s16, 1
      %s193 = smul.addr %s192, 32
      %s194 = smul.addr %s193, 4
      %s195 = scalar_lea.vmem %s4, %s194
      %p196 = scmp.lt.s32.totalorder %s16, 1
      %s197 = scalar_select %p196, %s16, 1
      %s198 = smul.addr %s197, 72
      %s199 = smul.addr %s198, 8
      %s200 = scalar_lea.vmem %s0, %s199
      %p201 = scmp.lt.s32.totalorder %s16, 1
      %s202 = scalar_select %p201, %s16, 1
      %s203 = smul.addr %s202, 32
      %s204 = smul.addr %s203, 4
      %s205 = scalar_lea.vmem %s3, %s204
      %p206 = scmp.lt.s32.totalorder %s16, 1
      %s207 = scalar_select %p206, %s16, 1
      %s208 = smul.addr %s207, 32
      %s209 = smul.addr %s208, 4
      %s210 = scalar_lea.vmem %s4, %s209
      %v211 = vld [vmem:[%s2] sm:$0x7]
      %s212 = scalar_lea.vmem %s200, 256
      %v213 = vld [vmem:[%s212] sm:$0xff]
      %v214 = vld [vmem:[%s212 + $0x8] sm:$0xff]
      %v215 = vld [vmem:[%s212 + $0x10] sm:$0xff]
      %v216 = vld [vmem:[%s212 + $0x18] sm:$0xff]
      %v217 = vld [vmem:[%s212 + $0x20] sm:$0xff]
      %v218 = vld [vmem:[%s212 + $0x28] sm:$0xff]
      %v219 = vld [vmem:[%s212 + $0x30] sm:$0xff]
      %v220 = vld [vmem:[%s212 + $0x38] sm:$0xff]
      %s221 = scalar_lea.vmem %s200, 192
      %v222 = vld [vmem:[%s221] sm:$0xff]
      %v223 = vld [vmem:[%s221 + $0x8] sm:$0xff]
      %v224 = vld [vmem:[%s221 + $0x10] sm:$0xff]
      %v225 = vld [vmem:[%s221 + $0x18] sm:$0xff]
      %v226 = vld [vmem:[%s221 + $0x20] sm:$0xff]
      %v227 = vld [vmem:[%s221 + $0x28] sm:$0xff]
      %v228 = vld [vmem:[%s221 + $0x30] sm:$0xff]
      %v229 = vld [vmem:[%s221 + $0x38] sm:$0xff]
      %s230 = scalar_lea.vmem %s200, 64
      %v231 = vld [vmem:[%s230] sm:$0xff]
      %v232 = vld [vmem:[%s230 + $0x8] sm:$0xff]
      %v233 = vld [vmem:[%s230 + $0x10] sm:$0xff]
      %v234 = vld [vmem:[%s230 + $0x18] sm:$0xff]
      %v235 = vld [vmem:[%s230 + $0x20] sm:$0xff]
      %v236 = vld [vmem:[%s230 + $0x28] sm:$0xff]
      %v237 = vld [vmem:[%s230 + $0x30] sm:$0xff]
      %v238 = vld [vmem:[%s230 + $0x38] sm:$0xff]
      %v239 = vld [vmem:[%s200] sm:$0xff]
      %v240 = vld [vmem:[%s200 + $0x8] sm:$0xff]
      %v241 = vld [vmem:[%s200 + $0x10] sm:$0xff]
      %v242 = vld [vmem:[%s200 + $0x18] sm:$0xff]
      %v243 = vld [vmem:[%s200 + $0x20] sm:$0xff]
      %v244 = vld [vmem:[%s200 + $0x28] sm:$0xff]
      %v245 = vld [vmem:[%s200 + $0x30] sm:$0xff]
      %v246 = vld [vmem:[%s200 + $0x38] sm:$0xff]
      %v247 = vld [vmem:[%s1] sm:$0x7]
      %249 = vset.pattern.permute.xlu0 0
      %250 = vperm.xlu0 %249, %v211
      %v251 = vpop.permute.xlu0 %250
      %253 = vmatprep.subr.mxu0 %v246
      %254 = vmatpush1.msra.mxu0 %v245
      %255 = vmatprep.subr.mxu0 %v244
      %256 = vmatpush1.msra.mxu0 %v243
      %257 = vmatprep.subr.mxu0 %v242
      %258 = vmatpush1.msra.mxu0 %v241
      %259 = vmatprep.subr.mxu0 %v240
      %260 = vmatpush1.msra.mxu0 %v239
      %261 = vmatprep.subr.mxu0 %v238
      %262 = vmatpush1.msra.mxu0 %v237
      %263 = vmatprep.subr.mxu0 %v236
      %264 = vmatpush1.msra.mxu0 %v235
      %265 = vmatprep.subr.mxu0 %v234
      %266 = vmatpush1.msra.mxu0 %v233
      %267 = vmatprep.subr.mxu0 %v232
      %268 = vmatpush1.msra.mxu0 %v231
      %269 = vmatprep.subr.mxu0 %v229
      %270 = vmatpush1.msra.mxu0 %v228
      %271 = vmatprep.subr.mxu0 %v227
      %272 = vmatpush1.msra.mxu0 %v226
      %273 = vmatprep.subr.mxu0 %v225
      %274 = vmatpush1.msra.mxu0 %v224
      %275 = vmatprep.subr.mxu0 %v223
      %276 = vmatpush1.msra.mxu0 %v222
      %277 = vmatprep.subr.mxu0 %v220
      %278 = vmatpush1.msra.mxu0 %v219
      %279 = vmatprep.subr.mxu0 %v218
      %280 = vmatpush1.msra.mxu0 %v217
      %281 = vmatprep.subr.mxu0 %v216
      %282 = vmatpush1.msra.mxu0 %v215
      %283 = vmatprep.subr.mxu0 %v214
      %284 = vmatpush1.msra.mxu0 %v213
      %285 = vmatprep.subr.mxu0 0.0
      %286 = vmatpush2.msra.mxu0 0.0
      %287 = vmatprep.subr.mxu0 0.0
      %288 = vmatpush2.msra.mxu0 0.0
      %289 = vmatprep.subr.mxu0 0.0
      %290 = vmatpush2.msra.mxu0 0.0
      %291 = vmatprep.subr.mxu0 0.0
      %292 = vmatpush2.msra.mxu0 0.0
      %293 = vmatprep.subr.mxu0 0.0
      %294 = vmatpush2.msra.mxu0 0.0
      %295 = vmatprep.subr.mxu0 0.0
      %296 = vmatpush2.msra.mxu0 0.0
      %297 = vmatprep.subr.mxu0 0.0
      %298 = vmatpush2.msra.mxu0 0.0
      %299 = vmatprep.subr.mxu0 0.0
      %300 = vmatpush2.msra.mxu0 0.0
      %301 = vmatprep.subr.mxu0 0.0
      %302 = vmatpush2.msra.mxu0 0.0
      %303 = vmatprep.subr.mxu0 0.0
      %304 = vmatpush2.msra.mxu0 0.0
      %305 = vmatprep.subr.mxu0 0.0
      %306 = vmatpush2.msra.mxu0 0.0
      %307 = vmatprep.subr.mxu0 0.0
      %308 = vmatpush2.msra.mxu0 0.0
      %309 = vmatprep.subr.mxu0 0.0
      %310 = vmatpush2.msra.mxu0 0.0
      %311 = vmatprep.subr.mxu0 0.0
      %312 = vmatpush2.msra.mxu0 0.0
      %313 = vmatprep.subr.mxu0 0.0
      %314 = vmatpush2.msra.mxu0 0.0
      %315 = vmatprep.subr.mxu0 0.0
      %316 = vmatpush2.msra.mxu0 0.0
      %317 = vmatprep.mubr.f32.mxu0 0.0
      %318 = vmatmul.mubr.f32.gmra.mxu0 %v247
      %v319 = vpop.f32.mrf.mxu0
      %v320 = vadd.f32 %v251, %v319
      %v321 = vpop.f32.mrf.mxu0
      %v322 = vadd.f32 %v251, %v321
      %323 = vdwg.mxu0
      %v326 = vcombine.low %v320, %v322
      %328 = vst [vmem:[%s205] sm:$0x77] %v326
      %v329 = vtanh.pop %v320
      %v330 = vtanh.pop %v322
      %v333 = vcombine.low %v329, %v330
      %335 = vst [vmem:[%s210] sm:$0x77] %v333
      %v336 = vld [vmem:[%s212] sm:$0xff]
      %v337 = vld [vmem:[%s212 + $0x8] sm:$0xff]
      %v338 = vld [vmem:[%s212 + $0x10] sm:$0xff]
      %v339 = vld [vmem:[%s212 + $0x18] sm:$0xff]
      %v340 = vld [vmem:[%s212 + $0x20] sm:$0xff]
      %v341 = vld [vmem:[%s212 + $0x28] sm:$0xff]
      %v342 = vld [vmem:[%s212 + $0x30] sm:$0xff]
      %v343 = vld [vmem:[%s212 + $0x38] sm:$0xff]
      %v344 = vld [vmem:[%s221] sm:$0xff]
      %v345 = vld [vmem:[%s221 + $0x8] sm:$0xff]
      %v346 = vld [vmem:[%s221 + $0x10] sm:$0xff]
      %v347 = vld [vmem:[%s221 + $0x18] sm:$0xff]
      %v348 = vld [vmem:[%s221 + $0x20] sm:$0xff]
      %v349 = vld [vmem:[%s221 + $0x28] sm:$0xff]
      %v350 = vld [vmem:[%s221 + $0x30] sm:$0xff]
      %v351 = vld [vmem:[%s221 + $0x38] sm:$0xff]
      %v352 = vld [vmem:[%s230] sm:$0xff]
      %v353 = vld [vmem:[%s230 + $0x8] sm:$0xff]
      %v354 = vld [vmem:[%s230 + $0x10] sm:$0xff]
      %v355 = vld [vmem:[%s230 + $0x18] sm:$0xff]
      %v356 = vld [vmem:[%s230 + $0x20] sm:$0xff]
      %v357 = vld [vmem:[%s230 + $0x28] sm:$0xff]
      %v358 = vld [vmem:[%s230 + $0x30] sm:$0xff]
      %v359 = vld [vmem:[%s230 + $0x38] sm:$0xff]
      %v360 = vld [vmem:[%s200] sm:$0xff]
      %v361 = vld [vmem:[%s200 + $0x8] sm:$0xff]
      %v362 = vld [vmem:[%s200 + $0x10] sm:$0xff]
      %v363 = vld [vmem:[%s200 + $0x18] sm:$0xff]
      %v364 = vld [vmem:[%s200 + $0x20] sm:$0xff]
      %v365 = vld [vmem:[%s200 + $0x28] sm:$0xff]
      %v366 = vld [vmem:[%s200 + $0x30] sm:$0xff]
      %v367 = vld [vmem:[%s200 + $0x38] sm:$0xff]
      %s368 = scalar_lea.vmem %s1, 4
      %v369 = vld [vmem:[%s368] sm:$0x7]
      %370 = vmatprep.subr.mxu0 %v367
      %371 = vmatpush1.msra.mxu0 %v366
      %372 = vmatprep.subr.mxu0 %v365
      %373 = vmatpush1.msra.mxu0 %v364
      %374 = vmatprep.subr.mxu0 %v363
      %375 = vmatpush1.msra.mxu0 %v362
      %376 = vmatprep.subr.mxu0 %v361
      %377 = vmatpush1.msra.mxu0 %v360
      %378 = vmatprep.subr.mxu0 %v359
      %379 = vmatpush1.msra.mxu0 %v358
      %380 = vmatprep.subr.mxu0 %v357
      %381 = vmatpush1.msra.mxu0 %v356
      %382 = vmatprep.subr.mxu0 %v355
      %383 = vmatpush1.msra.mxu0 %v354
      %384 = vmatprep.subr.mxu0 %v353
      %385 = vmatpush1.msra.mxu0 %v352
      %386 = vmatprep.subr.mxu0 %v351
      %387 = vmatpush1.msra.mxu0 %v350
      %388 = vmatprep.subr.mxu0 %v349
      %389 = vmatpush1.msra.mxu0 %v348
      %390 = vmatprep.subr.mxu0 %v347
      %391 = vmatpush1.msra.mxu0 %v346
      %392 = vmatprep.subr.mxu0 %v345
      %393 = vmatpush1.msra.mxu0 %v344
      %394 = vmatprep.subr.mxu0 %v343
      %395 = vmatpush1.msra.mxu0 %v342
      %396 = vmatprep.subr.mxu0 %v341
      %397 = vmatpush1.msra.mxu0 %v340
      %398 = vmatprep.subr.mxu0 %v339
      %399 = vmatpush1.msra.mxu0 %v338
      %400 = vmatprep.subr.mxu0 %v337
      %401 = vmatpush1.msra.mxu0 %v336
      %402 = vmatprep.subr.mxu0 0.0
      %403 = vmatpush2.msra.mxu0 0.0
      %404 = vmatprep.subr.mxu0 0.0
      %405 = vmatpush2.msra.mxu0 0.0
      %406 = vmatprep.subr.mxu0 0.0
      %407 = vmatpush2.msra.mxu0 0.0
      %408 = vmatprep.subr.mxu0 0.0
      %409 = vmatpush2.msra.mxu0 0.0
      %410 = vmatprep.subr.mxu0 0.0
      %411 = vmatpush2.msra.mxu0 0.0
      %412 = vmatprep.subr.mxu0 0.0
      %413 = vmatpush2.msra.mxu0 0.0
      %414 = vmatprep.subr.mxu0 0.0
      %415 = vmatpush2.msra.mxu0 0.0
      %416 = vmatprep.subr.mxu0 0.0
      %417 = vmatpush2.msra.mxu0 0.0
      %418 = vmatprep.subr.mxu0 0.0
      %419 = vmatpush2.msra.mxu0 0.0
      %420 = vmatprep.subr.mxu0 0.0
      %421 = vmatpush2.msra.mxu0 0.0
      %422 = vmatprep.subr.mxu0 0.0
      %423 = vmatpush2.msra.mxu0 0.0
      %424 = vmatprep.subr.mxu0 0.0
      %425 = vmatpush2.msra.mxu0 0.0
      %426 = vmatprep.subr.mxu0 0.0
      %427 = vmatpush2.msra.mxu0 0.0
      %428 = vmatprep.subr.mxu0 0.0
      %429 = vmatpush2.msra.mxu0 0.0
      %430 = vmatprep.subr.mxu0 0.0
      %431 = vmatpush2.msra.mxu0 0.0
      %432 = vmatprep.subr.mxu0 0.0
      %433 = vmatpush2.msra.mxu0 0.0
      %434 = vmatprep.mubr.f32.mxu0 0.0
      %435 = vmatmul.mubr.f32.gmra.mxu0 %v369
      %v436 = vpop.f32.mrf.mxu0
      %v437 = vadd.f32 %v251, %v436
      %v438 = vpop.f32.mrf.mxu0
      %v439 = vadd.f32 %v251, %v438
      %440 = vdwg.mxu0
      %v443 = vcombine.low %v437, %v439
      %s445 = scalar_lea.vmem %s205, 8
      %446 = vst [vmem:[%s445] sm:$0x77] %v443
      %v447 = vtanh.pop %v437
      %v448 = vtanh.pop %v439
      %v451 = vcombine.low %v447, %v448
      %s453 = scalar_lea.vmem %s210, 8
      %454 = vst [vmem:[%s453] sm:$0x77] %v451
      %s455 = scalar_lea.vmem %s200, 320
      %v456 = vld [vmem:[%s455] sm:$0xff]
      %v457 = vld [vmem:[%s455 + $0x8] sm:$0xff]
      %v458 = vld [vmem:[%s455 + $0x10] sm:$0xff]
      %v459 = vld [vmem:[%s455 + $0x18] sm:$0xff]
      %v460 = vld [vmem:[%s455 + $0x20] sm:$0xff]
      %v461 = vld [vmem:[%s455 + $0x28] sm:$0xff]
      %v462 = vld [vmem:[%s455 + $0x30] sm:$0xff]
      %v463 = vld [vmem:[%s455 + $0x38] sm:$0xff]
      %v464 = vld [vmem:[%s212] sm:$0xff]
      %v465 = vld [vmem:[%s212 + $0x8] sm:$0xff]
      %v466 = vld [vmem:[%s212 + $0x10] sm:$0xff]
      %v467 = vld [vmem:[%s212 + $0x18] sm:$0xff]
      %v468 = vld [vmem:[%s212 + $0x20] sm:$0xff]
      %v469 = vld [vmem:[%s212 + $0x28] sm:$0xff]
      %v470 = vld [vmem:[%s212 + $0x30] sm:$0xff]
      %v471 = vld [vmem:[%s212 + $0x38] sm:$0xff]
      %s472 = scalar_lea.vmem %s200, 128
      %v473 = vld [vmem:[%s472] sm:$0xff]
      %v474 = vld [vmem:[%s472 + $0x8] sm:$0xff]
      %v475 = vld [vmem:[%s472 + $0x10] sm:$0xff]
      %v476 = vld [vmem:[%s472 + $0x18] sm:$0xff]
      %v477 = vld [vmem:[%s472 + $0x20] sm:$0xff]
      %v478 = vld [vmem:[%s472 + $0x28] sm:$0xff]
      %v479 = vld [vmem:[%s472 + $0x30] sm:$0xff]
      %v480 = vld [vmem:[%s472 + $0x38] sm:$0xff]
      %v481 = vld [vmem:[%s230] sm:$0xff]
      %v482 = vld [vmem:[%s230 + $0x8] sm:$0xff]
      %v483 = vld [vmem:[%s230 + $0x10] sm:$0xff]
      %v484 = vld [vmem:[%s230 + $0x18] sm:$0xff]
      %v485 = vld [vmem:[%s230 + $0x20] sm:$0xff]
      %v486 = vld [vmem:[%s230 + $0x28] sm:$0xff]
      %v487 = vld [vmem:[%s230 + $0x30] sm:$0xff]
      %v488 = vld [vmem:[%s230 + $0x38] sm:$0xff]
      %s489 = scalar_lea.vmem %s1, 8
      %v490 = vld [vmem:[%s489] sm:$0x7]
      %491 = vmatprep.subr.mxu0 %v488
      %492 = vmatpush1.msra.mxu0 %v487
      %493 = vmatprep.subr.mxu0 %v486
      %494 = vmatpush1.msra.mxu0 %v485
      %495 = vmatprep.subr.mxu0 %v484
      %496 = vmatpush1.msra.mxu0 %v483
      %497 = vmatprep.subr.mxu0 %v482
      %498 = vmatpush1.msra.mxu0 %v481
      %499 = vmatprep.subr.mxu0 %v480
      %500 = vmatpush1.msra.mxu0 %v479
      %501 = vmatprep.subr.mxu0 %v478
      %502 = vmatpush1.msra.mxu0 %v477
      %503 = vmatprep.subr.mxu0 %v476
      %504 = vmatpush1.msra.mxu0 %v475
      %505 = vmatprep.subr.mxu0 %v474
      %506 = vmatpush1.msra.mxu0 %v473
      %507 = vmatprep.subr.mxu0 %v471
      %508 = vmatpush1.msra.mxu0 %v470
      %509 = vmatprep.subr.mxu0 %v469
      %510 = vmatpush1.msra.mxu0 %v468
      %511 = vmatprep.subr.mxu0 %v467
      %512 = vmatpush1.msra.mxu0 %v466
      %513 = vmatprep.subr.mxu0 %v465
      %514 = vmatpush1.msra.mxu0 %v464
      %515 = vmatprep.subr.mxu0 %v463
      %516 = vmatpush1.msra.mxu0 %v462
      %517 = vmatprep.subr.mxu0 %v461
      %518 = vmatpush1.msra.mxu0 %v460
      %519 = vmatprep.subr.mxu0 %v459
      %520 = vmatpush1.msra.mxu0 %v458
      %521 = vmatprep.subr.mxu0 %v457
      %522 = vmatpush1.msra.mxu0 %v456
      %523 = vmatprep.subr.mxu0 0.0
      %524 = vmatpush2.msra.mxu0 0.0
      %525 = vmatprep.subr.mxu0 0.0
      %526 = vmatpush2.msra.mxu0 0.0
      %527 = vmatprep.subr.mxu0 0.0
      %528 = vmatpush2.msra.mxu0 0.0
      %529 = vmatprep.subr.mxu0 0.0
      %530 = vmatpush2.msra.mxu0 0.0
      %531 = vmatprep.subr.mxu0 0.0
      %532 = vmatpush2.msra.mxu0 0.0
      %533 = vmatprep.subr.mxu0 0.0
      %534 = vmatpush2.msra.mxu0 0.0
      %535 = vmatprep.subr.mxu0 0.0
      %536 = vmatpush2.msra.mxu0 0.0
      %537 = vmatprep.subr.mxu0 0.0
      %538 = vmatpush2.msra.mxu0 0.0
      %539 = vmatprep.subr.mxu0 0.0
      %540 = vmatpush2.msra.mxu0 0.0
      %541 = vmatprep.subr.mxu0 0.0
      %542 = vmatpush2.msra.mxu0 0.0
      %543 = vmatprep.subr.mxu0 0.0
      %544 = vmatpush2.msra.mxu0 0.0
      %545 = vmatprep.subr.mxu0 0.0
      %546 = vmatpush2.msra.mxu0 0.0
      %547 = vmatprep.subr.mxu0 0.0
      %548 = vmatpush2.msra.mxu0 0.0
      %549 = vmatprep.subr.mxu0 0.0
      %550 = vmatpush2.msra.mxu0 0.0
      %551 = vmatprep.subr.mxu0 0.0
      %552 = vmatpush2.msra.mxu0 0.0
      %553 = vmatprep.subr.mxu0 0.0
      %554 = vmatpush2.msra.mxu0 0.0
      %555 = vmatprep.mubr.f32.mxu0 0.0
      %556 = vmatmul.mubr.f32.gmra.mxu0 %v490
      %v557 = vpop.f32.mrf.mxu0
      %v558 = vadd.f32 %v251, %v557
      %v559 = vpop.f32.mrf.mxu0
      %v560 = vadd.f32 %v251, %v559
      %561 = vdwg.mxu0
      %v564 = vcombine.low %v558, %v560
      %s566 = scalar_lea.vmem %s205, 16
      %567 = vst [vmem:[%s566] sm:$0x77] %v564
      %v568 = vtanh.pop %v558
      %v569 = vtanh.pop %v560
      %v572 = vcombine.low %v568, %v569
      %s574 = scalar_lea.vmem %s210, 16
      %575 = vst [vmem:[%s574] sm:$0x77] %v572
      %v576 = vld [vmem:[%s455] sm:$0xff]
      %v577 = vld [vmem:[%s455 + $0x8] sm:$0xff]
      %v578 = vld [vmem:[%s455 + $0x10] sm:$0xff]
      %v579 = vld [vmem:[%s455 + $0x18] sm:$0xff]
      %v580 = vld [vmem:[%s455 + $0x20] sm:$0xff]
      %v581 = vld [vmem:[%s455 + $0x28] sm:$0xff]
      %v582 = vld [vmem:[%s455 + $0x30] sm:$0xff]
      %v583 = vld [vmem:[%s455 + $0x38] sm:$0xff]
      %v584 = vld [vmem:[%s212] sm:$0xff]
      %v585 = vld [vmem:[%s212 + $0x8] sm:$0xff]
      %v586 = vld [vmem:[%s212 + $0x10] sm:$0xff]
      %v587 = vld [vmem:[%s212 + $0x18] sm:$0xff]
      %v588 = vld [vmem:[%s212 + $0x20] sm:$0xff]
      %v589 = vld [vmem:[%s212 + $0x28] sm:$0xff]
      %v590 = vld [vmem:[%s212 + $0x30] sm:$0xff]
      %v591 = vld [vmem:[%s212 + $0x38] sm:$0xff]
      %v592 = vld [vmem:[%s472] sm:$0xff]
      %v593 = vld [vmem:[%s472 + $0x8] sm:$0xff]
      %v594 = vld [vmem:[%s472 + $0x10] sm:$0xff]
      %v595 = vld [vmem:[%s472 + $0x18] sm:$0xff]
      %v596 = vld [vmem:[%s472 + $0x20] sm:$0xff]
      %v597 = vld [vmem:[%s472 + $0x28] sm:$0xff]
      %v598 = vld [vmem:[%s472 + $0x30] sm:$0xff]
      %v599 = vld [vmem:[%s472 + $0x38] sm:$0xff]
      %v600 = vld [vmem:[%s230] sm:$0xff]
      %v601 = vld [vmem:[%s230 + $0x8] sm:$0xff]
      %v602 = vld [vmem:[%s230 + $0x10] sm:$0xff]
      %v603 = vld [vmem:[%s230 + $0x18] sm:$0xff]
      %v604 = vld [vmem:[%s230 + $0x20] sm:$0xff]
      %v605 = vld [vmem:[%s230 + $0x28] sm:$0xff]
      %v606 = vld [vmem:[%s230 + $0x30] sm:$0xff]
      %v607 = vld [vmem:[%s230 + $0x38] sm:$0xff]
      %s608 = scalar_lea.vmem %s1, 12
      %v609 = vld [vmem:[%s608] sm:$0x7]
      %610 = vmatprep.subr.mxu0 %v607
      %611 = vmatpush1.msra.mxu0 %v606
      %612 = vmatprep.subr.mxu0 %v605
      %613 = vmatpush1.msra.mxu0 %v604
      %614 = vmatprep.subr.mxu0 %v603
      %615 = vmatpush1.msra.mxu0 %v602
      %616 = vmatprep.subr.mxu0 %v601
      %617 = vmatpush1.msra.mxu0 %v600
      %618 = vmatprep.subr.mxu0 %v599
      %619 = vmatpush1.msra.mxu0 %v598
      %620 = vmatprep.subr.mxu0 %v597
      %621 = vmatpush1.msra.mxu0 %v596
      %622 = vmatprep.subr.mxu0 %v595
      %623 = vmatpush1.msra.mxu0 %v594
      %624 = vmatprep.subr.mxu0 %v593
      %625 = vmatpush1.msra.mxu0 %v592
      %626 = vmatprep.subr.mxu0 %v591
      %627 = vmatpush1.msra.mxu0 %v590
      %628 = vmatprep.subr.mxu0 %v589
      %629 = vmatpush1.msra.mxu0 %v588
      %630 = vmatprep.subr.mxu0 %v587
      %631 = vmatpush1.msra.mxu0 %v586
      %632 = vmatprep.subr.mxu0 %v585
      %633 = vmatpush1.msra.mxu0 %v584
      %634 = vmatprep.subr.mxu0 %v583
      %635 = vmatpush1.msra.mxu0 %v582
      %636 = vmatprep.subr.mxu0 %v581
      %637 = vmatpush1.msra.mxu0 %v580
      %638 = vmatprep.subr.mxu0 %v579
      %639 = vmatpush1.msra.mxu0 %v578
      %640 = vmatprep.subr.mxu0 %v577
      %641 = vmatpush1.msra.mxu0 %v576
      %642 = vmatprep.subr.mxu0 0.0
      %643 = vmatpush2.msra.mxu0 0.0
      %644 = vmatprep.subr.mxu0 0.0
      %645 = vmatpush2.msra.mxu0 0.0
      %646 = vmatprep.subr.mxu0 0.0
      %647 = vmatpush2.msra.mxu0 0.0
      %648 = vmatprep.subr.mxu0 0.0
      %649 = vmatpush2.msra.mxu0 0.0
      %650 = vmatprep.subr.mxu0 0.0
      %651 = vmatpush2.msra.mxu0 0.0
      %652 = vmatprep.subr.mxu0 0.0
      %653 = vmatpush2.msra.mxu0 0.0
      %654 = vmatprep.subr.mxu0 0.0
      %655 = vmatpush2.msra.mxu0 0.0
      %656 = vmatprep.subr.mxu0 0.0
      %657 = vmatpush2.msra.mxu0 0.0
      %658 = vmatprep.subr.mxu0 0.0
      %659 = vmatpush2.msra.mxu0 0.0
      %660 = vmatprep.subr.mxu0 0.0
      %661 = vmatpush2.msra.mxu0 0.0
      %662 = vmatprep.subr.mxu0 0.0
      %663 = vmatpush2.msra.mxu0 0.0
      %664 = vmatprep.subr.mxu0 0.0
      %665 = vmatpush2.msra.mxu0 0.0
      %666 = vmatprep.subr.mxu0 0.0
      %667 = vmatpush2.msra.mxu0 0.0
      %668 = vmatprep.subr.mxu0 0.0
      %669 = vmatpush2.msra.mxu0 0.0
      %670 = vmatprep.subr.mxu0 0.0
      %671 = vmatpush2.msra.mxu0 0.0
      %672 = vmatprep.subr.mxu0 0.0
      %673 = vmatpush2.msra.mxu0 0.0
      %674 = vmatprep.mubr.f32.mxu0 0.0
      %675 = vmatmul.mubr.f32.gmra.mxu0 %v609
      %v676 = vpop.f32.mrf.mxu0
      %v677 = vadd.f32 %v251, %v676
      %v678 = vpop.f32.mrf.mxu0
      %v679 = vadd.f32 %v251, %v678
      %680 = vdwg.mxu0
      %v683 = vcombine.low %v677, %v679
      %s685 = scalar_lea.vmem %s205, 24
      %686 = vst [vmem:[%s685] sm:$0x77] %v683
      %v687 = vtanh.pop %v677
      %v688 = vtanh.pop %v679
      %v691 = vcombine.low %v687, %v688
      %s693 = scalar_lea.vmem %s210, 24
      %694 = vst [vmem:[%s693] sm:$0x77] %v691
      %v695 = vld [vmem:[%s212] sm:$0xff]
      %v696 = vld [vmem:[%s212 + $0x8] sm:$0xff]
      %v697 = vld [vmem:[%s212 + $0x10] sm:$0xff]
      %v698 = vld [vmem:[%s212 + $0x18] sm:$0xff]
      %v699 = vld [vmem:[%s212 + $0x20] sm:$0xff]
      %v700 = vld [vmem:[%s212 + $0x28] sm:$0xff]
      %v701 = vld [vmem:[%s212 + $0x30] sm:$0xff]
      %v702 = vld [vmem:[%s212 + $0x38] sm:$0xff]
      %v703 = vld [vmem:[%s221] sm:$0xff]
      %v704 = vld [vmem:[%s221 + $0x8] sm:$0xff]
      %v705 = vld [vmem:[%s221 + $0x10] sm:$0xff]
      %v706 = vld [vmem:[%s221 + $0x18] sm:$0xff]
      %v707 = vld [vmem:[%s221 + $0x20] sm:$0xff]
      %v708 = vld [vmem:[%s221 + $0x28] sm:$0xff]
      %v709 = vld [vmem:[%s221 + $0x30] sm:$0xff]
      %v710 = vld [vmem:[%s221 + $0x38] sm:$0xff]
      %v711 = vld [vmem:[%s230] sm:$0xff]
      %v712 = vld [vmem:[%s230 + $0x8] sm:$0xff]
      %v713 = vld [vmem:[%s230 + $0x10] sm:$0xff]
      %v714 = vld [vmem:[%s230 + $0x18] sm:$0xff]
      %v715 = vld [vmem:[%s230 + $0x20] sm:$0xff]
      %v716 = vld [vmem:[%s230 + $0x28] sm:$0xff]
      %v717 = vld [vmem:[%s230 + $0x30] sm:$0xff]
      %v718 = vld [vmem:[%s230 + $0x38] sm:$0xff]
      %v719 = vld [vmem:[%s200] sm:$0xff]
      %v720 = vld [vmem:[%s200 + $0x8] sm:$0xff]
      %v721 = vld [vmem:[%s200 + $0x10] sm:$0xff]
      %v722 = vld [vmem:[%s200 + $0x18] sm:$0xff]
      %v723 = vld [vmem:[%s200 + $0x20] sm:$0xff]
      %v724 = vld [vmem:[%s200 + $0x28] sm:$0xff]
      %v725 = vld [vmem:[%s200 + $0x30] sm:$0xff]
      %v726 = vld [vmem:[%s200 + $0x38] sm:$0xff]
      %s727 = scalar_lea.vmem %s1, 16
      %v728 = vld [vmem:[%s727] sm:$0x7]
      %729 = vmatprep.subr.mxu0 %v726
      %730 = vmatpush1.msra.mxu0 %v725
      %731 = vmatprep.subr.mxu0 %v724
      %732 = vmatpush1.msra.mxu0 %v723
      %733 = vmatprep.subr.mxu0 %v722
      %734 = vmatpush1.msra.mxu0 %v721
      %735 = vmatprep.subr.mxu0 %v720
      %736 = vmatpush1.msra.mxu0 %v719
      %737 = vmatprep.subr.mxu0 %v718
      %738 = vmatpush1.msra.mxu0 %v717
      %739 = vmatprep.subr.mxu0 %v716
      %740 = vmatpush1.msra.mxu0 %v715
      %741 = vmatprep.subr.mxu0 %v714
      %742 = vmatpush1.msra.mxu0 %v713
      %743 = vmatprep.subr.mxu0 %v712
      %744 = vmatpush1.msra.mxu0 %v711
      %745 = vmatprep.subr.mxu0 %v710
      %746 = vmatpush1.msra.mxu0 %v709
      %747 = vmatprep.subr.mxu0 %v708
      %748 = vmatpush1.msra.mxu0 %v707
      %749 = vmatprep.subr.mxu0 %v706
      %750 = vmatpush1.msra.mxu0 %v705
      %751 = vmatprep.subr.mxu0 %v704
      %752 = vmatpush1.msra.mxu0 %v703
      %753 = vmatprep.subr.mxu0 %v702
      %754 = vmatpush1.msra.mxu0 %v701
      %755 = vmatprep.subr.mxu0 %v700
      %756 = vmatpush1.msra.mxu0 %v699
      %757 = vmatprep.subr.mxu0 %v698
      %758 = vmatpush1.msra.mxu0 %v697
      %759 = vmatprep.subr.mxu0 %v696
      %760 = vmatpush1.msra.mxu0 %v695
      %761 = vmatprep.subr.mxu0 0.0
      %762 = vmatpush2.msra.mxu0 0.0
      %763 = vmatprep.subr.mxu0 0.0
      %764 = vmatpush2.msra.mxu0 0.0
      %765 = vmatprep.subr.mxu0 0.0
      %766 = vmatpush2.msra.mxu0 0.0
      %767 = vmatprep.subr.mxu0 0.0
      %768 = vmatpush2.msra.mxu0 0.0
      %769 = vmatprep.subr.mxu0 0.0
      %770 = vmatpush2.msra.mxu0 0.0
      %771 = vmatprep.subr.mxu0 0.0
      %772 = vmatpush2.msra.mxu0 0.0
      %773 = vmatprep.subr.mxu0 0.0
      %774 = vmatpush2.msra.mxu0 0.0
      %775 = vmatprep.subr.mxu0 0.0
      %776 = vmatpush2.msra.mxu0 0.0
      %777 = vmatprep.subr.mxu0 0.0
      %778 = vmatpush2.msra.mxu0 0.0
      %779 = vmatprep.subr.mxu0 0.0
      %780 = vmatpush2.msra.mxu0 0.0
      %781 = vmatprep.subr.mxu0 0.0
      %782 = vmatpush2.msra.mxu0 0.0
      %783 = vmatprep.subr.mxu0 0.0
      %784 = vmatpush2.msra.mxu0 0.0
      %785 = vmatprep.subr.mxu0 0.0
      %786 = vmatpush2.msra.mxu0 0.0
      %787 = vmatprep.subr.mxu0 0.0
      %788 = vmatpush2.msra.mxu0 0.0
      %789 = vmatprep.subr.mxu0 0.0
      %790 = vmatpush2.msra.mxu0 0.0
      %791 = vmatprep.subr.mxu0 0.0
      %792 = vmatpush2.msra.mxu0 0.0
      %793 = vmatprep.mubr.f32.mxu0 0.0
      %794 = vmatmul.mubr.f32.gmra.mxu0 %v728
      %v795 = vpop.f32.mrf.mxu0
      %v796 = vadd.f32 %v251, %v795
      %v797 = vpop.f32.mrf.mxu0
      %v798 = vadd.f32 %v251, %v797
      %799 = vdwg.mxu0
      %v802 = vcombine.low %v796, %v798
      %s804 = scalar_lea.vmem %s205, 32
      %805 = vst [vmem:[%s804] sm:$0x77] %v802
      %v806 = vtanh.pop %v796
      %v807 = vtanh.pop %v798
      %v810 = vcombine.low %v806, %v807
      %s812 = scalar_lea.vmem %s210, 32
      %813 = vst [vmem:[%s812] sm:$0x77] %v810
      %v814 = vld [vmem:[%s212] sm:$0xff]
      %v815 = vld [vmem:[%s212 + $0x8] sm:$0xff]
      %v816 = vld [vmem:[%s212 + $0x10] sm:$0xff]
      %v817 = vld [vmem:[%s212 + $0x18] sm:$0xff]
      %v818 = vld [vmem:[%s212 + $0x20] sm:$0xff]
      %v819 = vld [vmem:[%s212 + $0x28] sm:$0xff]
      %v820 = vld [vmem:[%s212 + $0x30] sm:$0xff]
      %v821 = vld [vmem:[%s212 + $0x38] sm:$0xff]
      %v822 = vld [vmem:[%s221] sm:$0xff]
      %v823 = vld [vmem:[%s221 + $0x8] sm:$0xff]
      %v824 = vld [vmem:[%s221 + $0x10] sm:$0xff]
      %v825 = vld [vmem:[%s221 + $0x18] sm:$0xff]
      %v826 = vld [vmem:[%s221 + $0x20] sm:$0xff]
      %v827 = vld [vmem:[%s221 + $0x28] sm:$0xff]
      %v828 = vld [vmem:[%s221 + $0x30] sm:$0xff]
      %v829 = vld [vmem:[%s221 + $0x38] sm:$0xff]
      %v830 = vld [vmem:[%s230] sm:$0xff]
      %v831 = vld [vmem:[%s230 + $0x8] sm:$0xff]
      %v832 = vld [vmem:[%s230 + $0x10] sm:$0xff]
      %v833 = vld [vmem:[%s230 + $0x18] sm:$0xff]
      %v834 = vld [vmem:[%s230 + $0x20] sm:$0xff]
      %v835 = vld [vmem:[%s230 + $0x28] sm:$0xff]
      %v836 = vld [vmem:[%s230 + $0x30] sm:$0xff]
      %v837 = vld [vmem:[%s230 + $0x38] sm:$0xff]
      %v838 = vld [vmem:[%s200] sm:$0xff]
      %v839 = vld [vmem:[%s200 + $0x8] sm:$0xff]
      %v840 = vld [vmem:[%s200 + $0x10] sm:$0xff]
      %v841 = vld [vmem:[%s200 + $0x18] sm:$0xff]
      %v842 = vld [vmem:[%s200 + $0x20] sm:$0xff]
      %v843 = vld [vmem:[%s200 + $0x28] sm:$0xff]
      %v844 = vld [vmem:[%s200 + $0x30] sm:$0xff]
      %v845 = vld [vmem:[%s200 + $0x38] sm:$0xff]
      %s846 = scalar_lea.vmem %s1, 20
      %v847 = vld [vmem:[%s846] sm:$0x7]
      %848 = vmatprep.subr.mxu0 %v845
      %849 = vmatpush1.msra.mxu0 %v844
      %850 = vmatprep.subr.mxu0 %v843
      %851 = vmatpush1.msra.mxu0 %v842
      %852 = vmatprep.subr.mxu0 %v841
      %853 = vmatpush1.msra.mxu0 %v840
      %854 = vmatprep.subr.mxu0 %v839
      %855 = vmatpush1.msra.mxu0 %v838
      %856 = vmatprep.subr.mxu0 %v837
      %857 = vmatpush1.msra.mxu0 %v836
      %858 = vmatprep.subr.mxu0 %v835
      %859 = vmatpush1.msra.mxu0 %v834
      %860 = vmatprep.subr.mxu0 %v833
      %861 = vmatpush1.msra.mxu0 %v832
      %862 = vmatprep.subr.mxu0 %v831
      %863 = vmatpush1.msra.mxu0 %v830
      %864 = vmatprep.subr.mxu0 %v829
      %865 = vmatpush1.msra.mxu0 %v828
      %866 = vmatprep.subr.mxu0 %v827
      %867 = vmatpush1.msra.mxu0 %v826
      %868 = vmatprep.subr.mxu0 %v825
      %869 = vmatpush1.msra.mxu0 %v824
      %870 = vmatprep.subr.mxu0 %v823
      %871 = vmatpush1.msra.mxu0 %v822
      %872 = vmatprep.subr.mxu0 %v821
      %873 = vmatpush1.msra.mxu0 %v820
      %874 = vmatprep.subr.mxu0 %v819
      %875 = vmatpush1.msra.mxu0 %v818
      %876 = vmatprep.subr.mxu0 %v817
      %877 = vmatpush1.msra.mxu0 %v816
      %878 = vmatprep.subr.mxu0 %v815
      %879 = vmatpush1.msra.mxu0 %v814
      %880 = vmatprep.subr.mxu0 0.0
      %881 = vmatpush2.msra.mxu0 0.0
      %882 = vmatprep.subr.mxu0 0.0
      %883 = vmatpush2.msra.mxu0 0.0
      %884 = vmatprep.subr.mxu0 0.0
      %885 = vmatpush2.msra.mxu0 0.0
      %886 = vmatprep.subr.mxu0 0.0
      %887 = vmatpush2.msra.mxu0 0.0
      %888 = vmatprep.subr.mxu0 0.0
      %889 = vmatpush2.msra.mxu0 0.0
      %890 = vmatprep.subr.mxu0 0.0
      %891 = vmatpush2.msra.mxu0 0.0
      %892 = vmatprep.subr.mxu0 0.0
      %893 = vmatpush2.msra.mxu0 0.0
      %894 = vmatprep.subr.mxu0 0.0
      %895 = vmatpush2.msra.mxu0 0.0
      %896 = vmatprep.subr.mxu0 0.0
      %897 = vmatpush2.msra.mxu0 0.0
      %898 = vmatprep.subr.mxu0 0.0
      %899 = vmatpush2.msra.mxu0 0.0
      %900 = vmatprep.subr.mxu0 0.0
      %901 = vmatpush2.msra.mxu0 0.0
      %902 = vmatprep.subr.mxu0 0.0
      %903 = vmatpush2.msra.mxu0 0.0
      %904 = vmatprep.subr.mxu0 0.0
      %905 = vmatpush2.msra.mxu0 0.0
      %906 = vmatprep.subr.mxu0 0.0
      %907 = vmatpush2.msra.mxu0 0.0
      %908 = vmatprep.subr.mxu0 0.0
      %909 = vmatpush2.msra.mxu0 0.0
      %910 = vmatprep.subr.mxu0 0.0
      %911 = vmatpush2.msra.mxu0 0.0
      %912 = vmatprep.mubr.f32.mxu0 0.0
      %913 = vmatmul.mubr.f32.gmra.mxu0 %v847
      %v914 = vpop.f32.mrf.mxu0
      %v915 = vadd.f32 %v251, %v914
      %v916 = vpop.f32.mrf.mxu0
      %v917 = vadd.f32 %v251, %v916
      %918 = vdwg.mxu0
      %v921 = vcombine.low %v915, %v917
      %s923 = scalar_lea.vmem %s205, 40
      %924 = vst [vmem:[%s923] sm:$0x77] %v921
      %v925 = vtanh.pop %v915
      %v926 = vtanh.pop %v917
      %v929 = vcombine.low %v925, %v926
      %s931 = scalar_lea.vmem %s210, 40
      %932 = vst [vmem:[%s931] sm:$0x77] %v929
      %v933 = vld [vmem:[%s455] sm:$0xff]
      %v934 = vld [vmem:[%s455 + $0x8] sm:$0xff]
      %v935 = vld [vmem:[%s455 + $0x10] sm:$0xff]
      %v936 = vld [vmem:[%s455 + $0x18] sm:$0xff]
      %v937 = vld [vmem:[%s455 + $0x20] sm:$0xff]
      %v938 = vld [vmem:[%s455 + $0x28] sm:$0xff]
      %v939 = vld [vmem:[%s455 + $0x30] sm:$0xff]
      %v940 = vld [vmem:[%s455 + $0x38] sm:$0xff]
      %v941 = vld [vmem:[%s212] sm:$0xff]
      %v942 = vld [vmem:[%s212 + $0x8] sm:$0xff]
      %v943 = vld [vmem:[%s212 + $0x10] sm:$0xff]
      %v944 = vld [vmem:[%s212 + $0x18] sm:$0xff]
      %v945 = vld [vmem:[%s212 + $0x20] sm:$0xff]
      %v946 = vld [vmem:[%s212 + $0x28] sm:$0xff]
      %v947 = vld [vmem:[%s212 + $0x30] sm:$0xff]
      %v948 = vld [vmem:[%s212 + $0x38] sm:$0xff]
      %v949 = vld [vmem:[%s472] sm:$0xff]
      %v950 = vld [vmem:[%s472 + $0x8] sm:$0xff]
      %v951 = vld [vmem:[%s472 + $0x10] sm:$0xff]
      %v952 = vld [vmem:[%s472 + $0x18] sm:$0xff]
      %v953 = vld [vmem:[%s472 + $0x20] sm:$0xff]
      %v954 = vld [vmem:[%s472 + $0x28] sm:$0xff]
      %v955 = vld [vmem:[%s472 + $0x30] sm:$0xff]
      %v956 = vld [vmem:[%s472 + $0x38] sm:$0xff]
      %v957 = vld [vmem:[%s230] sm:$0xff]
      %v958 = vld [vmem:[%s230 + $0x8] sm:$0xff]
      %v959 = vld [vmem:[%s230 + $0x10] sm:$0xff]
      %v960 = vld [vmem:[%s230 + $0x18] sm:$0xff]
      %v961 = vld [vmem:[%s230 + $0x20] sm:$0xff]
      %v962 = vld [vmem:[%s230 + $0x28] sm:$0xff]
      %v963 = vld [vmem:[%s230 + $0x30] sm:$0xff]
      %v964 = vld [vmem:[%s230 + $0x38] sm:$0xff]
      %s965 = scalar_lea.vmem %s1, 24
      %v966 = vld [vmem:[%s965] sm:$0x7]
      %967 = vmatprep.subr.mxu0 %v964
      %968 = vmatpush1.msra.mxu0 %v963
      %969 = vmatprep.subr.mxu0 %v962
      %970 = vmatpush1.msra.mxu0 %v961
      %971 = vmatprep.subr.mxu0 %v960
      %972 = vmatpush1.msra.mxu0 %v959
      %973 = vmatprep.subr.mxu0 %v958
      %974 = vmatpush1.msra.mxu0 %v957
      %975 = vmatprep.subr.mxu0 %v956
      %976 = vmatpush1.msra.mxu0 %v955
      %977 = vmatprep.subr.mxu0 %v954
      %978 = vmatpush1.msra.mxu0 %v953
      %979 = vmatprep.subr.mxu0 %v952
      %980 = vmatpush1.msra.mxu0 %v951
      %981 = vmatprep.subr.mxu0 %v950
      %982 = vmatpush1.msra.mxu0 %v949
      %983 = vmatprep.subr.mxu0 %v948
      %984 = vmatpush1.msra.mxu0 %v947
      %985 = vmatprep.subr.mxu0 %v946
      %986 = vmatpush1.msra.mxu0 %v945
      %987 = vmatprep.subr.mxu0 %v944
      %988 = vmatpush1.msra.mxu0 %v943
      %989 = vmatprep.subr.mxu0 %v942
      %990 = vmatpush1.msra.mxu0 %v941
      %991 = vmatprep.subr.mxu0 %v940
      %992 = vmatpush1.msra.mxu0 %v939
      %993 = vmatprep.subr.mxu0 %v938
      %994 = vmatpush1.msra.mxu0 %v937
      %995 = vmatprep.subr.mxu0 %v936
      %996 = vmatpush1.msra.mxu0 %v935
      %997 = vmatprep.subr.mxu0 %v934
      %998 = vmatpush1.msra.mxu0 %v933
      %999 = vmatprep.subr.mxu0 0.0
      %1000 = vmatpush2.msra.mxu0 0.0
      %1001 = vmatprep.subr.mxu0 0.0
      %1002 = vmatpush2.msra.mxu0 0.0
      %1003 = vmatprep.subr.mxu0 0.0
      %1004 = vmatpush2.msra.mxu0 0.0
      %1005 = vmatprep.subr.mxu0 0.0
      %1006 = vmatpush2.msra.mxu0 0.0
      %1007 = vmatprep.subr.mxu0 0.0
      %1008 = vmatpush2.msra.mxu0 0.0
      %1009 = vmatprep.subr.mxu0 0.0
      %1010 = vmatpush2.msra.mxu0 0.0
      %1011 = vmatprep.subr.mxu0 0.0
      %1012 = vmatpush2.msra.mxu0 0.0
      %1013 = vmatprep.subr.mxu0 0.0
      %1014 = vmatpush2.msra.mxu0 0.0
      %1015 = vmatprep.subr.mxu0 0.0
      %1016 = vmatpush2.msra.mxu0 0.0
      %1017 = vmatprep.subr.mxu0 0.0
      %1018 = vmatpush2.msra.mxu0 0.0
      %1019 = vmatprep.subr.mxu0 0.0
      %1020 = vmatpush2.msra.mxu0 0.0
      %1021 = vmatprep.subr.mxu0 0.0
      %1022 = vmatpush2.msra.mxu0 0.0
      %1023 = vmatprep.subr.mxu0 0.0
      %1024 = vmatpush2.msra.mxu0 0.0
      %1025 = vmatprep.subr.mxu0 0.0
      %1026 = vmatpush2.msra.mxu0 0.0
      %1027 = vmatprep.subr.mxu0 0.0
      %1028 = vmatpush2.msra.mxu0 0.0
      %1029 = vmatprep.subr.mxu0 0.0
      %1030 = vmatpush2.msra.mxu0 0.0
      %1031 = vmatprep.mubr.f32.mxu0 0.0
      %1032 = vmatmul.mubr.f32.gmra.mxu0 %v966
      %v1033 = vpop.f32.mrf.mxu0
      %v1034 = vadd.f32 %v251, %v1033
      %v1035 = vpop.f32.mrf.mxu0
      %v1036 = vadd.f32 %v251, %v1035
      %1037 = vdwg.mxu0
      %v1040 = vcombine.low %v1034, %v1036
      %s1042 = scalar_lea.vmem %s205, 48
      %1043 = vst [vmem:[%s1042] sm:$0x77] %v1040
      %v1044 = vtanh.pop %v1034
      %v1045 = vtanh.pop %v1036
      %v1048 = vcombine.low %v1044, %v1045
      %s1050 = scalar_lea.vmem %s210, 48
      %1051 = vst [vmem:[%s1050] sm:$0x77] %v1048
      %v1052 = vld [vmem:[%s455] sm:$0xff]
      %v1053 = vld [vmem:[%s455 + $0x8] sm:$0xff]
      %v1054 = vld [vmem:[%s455 + $0x10] sm:$0xff]
      %v1055 = vld [vmem:[%s455 + $0x18] sm:$0xff]
      %v1056 = vld [vmem:[%s455 + $0x20] sm:$0xff]
      %v1057 = vld [vmem:[%s455 + $0x28] sm:$0xff]
      %v1058 = vld [vmem:[%s455 + $0x30] sm:$0xff]
      %v1059 = vld [vmem:[%s455 + $0x38] sm:$0xff]
      %v1060 = vld [vmem:[%s212] sm:$0xff]
      %v1061 = vld [vmem:[%s212 + $0x8] sm:$0xff]
      %v1062 = vld [vmem:[%s212 + $0x10] sm:$0xff]
      %v1063 = vld [vmem:[%s212 + $0x18] sm:$0xff]
      %v1064 = vld [vmem:[%s212 + $0x20] sm:$0xff]
      %v1065 = vld [vmem:[%s212 + $0x28] sm:$0xff]
      %v1066 = vld [vmem:[%s212 + $0x30] sm:$0xff]
      %v1067 = vld [vmem:[%s212 + $0x38] sm:$0xff]
      %v1068 = vld [vmem:[%s472] sm:$0xff]
      %v1069 = vld [vmem:[%s472 + $0x8] sm:$0xff]
      %v1070 = vld [vmem:[%s472 + $0x10] sm:$0xff]
      %v1071 = vld [vmem:[%s472 + $0x18] sm:$0xff]
      %v1072 = vld [vmem:[%s472 + $0x20] sm:$0xff]
      %v1073 = vld [vmem:[%s472 + $0x28] sm:$0xff]
      %v1074 = vld [vmem:[%s472 + $0x30] sm:$0xff]
      %v1075 = vld [vmem:[%s472 + $0x38] sm:$0xff]
      %v1076 = vld [vmem:[%s230] sm:$0xff]
      %v1077 = vld [vmem:[%s230 + $0x8] sm:$0xff]
      %v1078 = vld [vmem:[%s230 + $0x10] sm:$0xff]
      %v1079 = vld [vmem:[%s230 + $0x18] sm:$0xff]
      %v1080 = vld [vmem:[%s230 + $0x20] sm:$0xff]
      %v1081 = vld [vmem:[%s230 + $0x28] sm:$0xff]
      %v1082 = vld [vmem:[%s230 + $0x30] sm:$0xff]
      %v1083 = vld [vmem:[%s230 + $0x38] sm:$0xff]
      %s1084 = scalar_lea.vmem %s1, 28
      %v1085 = vld [vmem:[%s1084] sm:$0x7]
      %1086 = vmatprep.subr.mxu0 %v1083
      %1087 = vmatpush1.msra.mxu0 %v1082
      %1088 = vmatprep.subr.mxu0 %v1081
      %1089 = vmatpush1.msra.mxu0 %v1080
      %1090 = vmatprep.subr.mxu0 %v1079
      %1091 = vmatpush1.msra.mxu0 %v1078
      %1092 = vmatprep.subr.mxu0 %v1077
      %1093 = vmatpush1.msra.mxu0 %v1076
      %1094 = vmatprep.subr.mxu0 %v1075
      %1095 = vmatpush1.msra.mxu0 %v1074
      %1096 = vmatprep.subr.mxu0 %v1073
      %1097 = vmatpush1.msra.mxu0 %v1072
      %1098 = vmatprep.subr.mxu0 %v1071
      %1099 = vmatpush1.msra.mxu0 %v1070
      %1100 = vmatprep.subr.mxu0 %v1069
      %1101 = vmatpush1.msra.mxu0 %v1068
      %1102 = vmatprep.subr.mxu0 %v1067
      %1103 = vmatpush1.msra.mxu0 %v1066
      %1104 = vmatprep.subr.mxu0 %v1065
      %1105 = vmatpush1.msra.mxu0 %v1064
      %1106 = vmatprep.subr.mxu0 %v1063
      %1107 = vmatpush1.msra.mxu0 %v1062
      %1108 = vmatprep.subr.mxu0 %v1061
      %1109 = vmatpush1.msra.mxu0 %v1060
      %1110 = vmatprep.subr.mxu0 %v1059
      %1111 = vmatpush1.msra.mxu0 %v1058
      %1112 = vmatprep.subr.mxu0 %v1057
      %1113 = vmatpush1.msra.mxu0 %v1056
      %1114 = vmatprep.subr.mxu0 %v1055
      %1115 = vmatpush1.msra.mxu0 %v1054
      %1116 = vmatprep.subr.mxu0 %v1053
      %1117 = vmatpush1.msra.mxu0 %v1052
      %1118 = vmatprep.subr.mxu0 0.0
      %1119 = vmatpush2.msra.mxu0 0.0
      %1120 = vmatprep.subr.mxu0 0.0
      %1121 = vmatpush2.msra.mxu0 0.0
      %1122 = vmatprep.subr.mxu0 0.0
      %1123 = vmatpush2.msra.mxu0 0.0
      %1124 = vmatprep.subr.mxu0 0.0
      %1125 = vmatpush2.msra.mxu0 0.0
      %1126 = vmatprep.subr.mxu0 0.0
      %1127 = vmatpush2.msra.mxu0 0.0
      %1128 = vmatprep.subr.mxu0 0.0
      %1129 = vmatpush2.msra.mxu0 0.0
      %1130 = vmatprep.subr.mxu0 0.0
      %1131 = vmatpush2.msra.mxu0 0.0
      %1132 = vmatprep.subr.mxu0 0.0
      %1133 = vmatpush2.msra.mxu0 0.0
      %1134 = vmatprep.subr.mxu0 0.0
      %1135 = vmatpush2.msra.mxu0 0.0
      %1136 = vmatprep.subr.mxu0 0.0
      %1137 = vmatpush2.msra.mxu0 0.0
      %1138 = vmatprep.subr.mxu0 0.0
      %1139 = vmatpush2.msra.mxu0 0.0
      %1140 = vmatprep.subr.mxu0 0.0
      %1141 = vmatpush2.msra.mxu0 0.0
      %1142 = vmatprep.subr.mxu0 0.0
      %1143 = vmatpush2.msra.mxu0 0.0
      %1144 = vmatprep.subr.mxu0 0.0
      %1145 = vmatpush2.msra.mxu0 0.0
      %1146 = vmatprep.subr.mxu0 0.0
      %1147 = vmatpush2.msra.mxu0 0.0
      %1148 = vmatprep.subr.mxu0 0.0
      %1149 = vmatpush2.msra.mxu0 0.0
      %1150 = vmatprep.mubr.f32.mxu0 0.0
      %1151 = vmatmul.mubr.f32.gmra.mxu0 %v1085
      %v1152 = vpop.f32.mrf.mxu0
      %v1153 = vadd.f32 %v251, %v1152
      %v1154 = vpop.f32.mrf.mxu0
      %v1155 = vadd.f32 %v251, %v1154
      %1156 = vdwg.mxu0
      %v1159 = vcombine.low %v1153, %v1155
      %s1161 = scalar_lea.vmem %s205, 56
      %1162 = vst [vmem:[%s1161] sm:$0x77] %v1159
      %v1163 = vtanh.pop %v1153
      %v1164 = vtanh.pop %v1155
      %v1167 = vcombine.low %v1163, %v1164
      %s1169 = scalar_lea.vmem %s210, 56
      %1170 = vst [vmem:[%s1169] sm:$0x77] %v1167
      %s1171 = scalar_lea.vmem %s200, 448
      %v1172 = vld [vmem:[%s1171] sm:$0xff]
      %v1173 = vld [vmem:[%s1171 + $0x8] sm:$0xff]
      %v1174 = vld [vmem:[%s1171 + $0x10] sm:$0xff]
      %v1175 = vld [vmem:[%s1171 + $0x18] sm:$0xff]
      %v1176 = vld [vmem:[%s1171 + $0x20] sm:$0xff]
      %v1177 = vld [vmem:[%s1171 + $0x28] sm:$0xff]
      %v1178 = vld [vmem:[%s1171 + $0x30] sm:$0xff]
      %v1179 = vld [vmem:[%s1171 + $0x38] sm:$0xff]
      %s1180 = scalar_lea.vmem %s200, 384
      %v1181 = vld [vmem:[%s1180] sm:$0xff]
      %v1182 = vld [vmem:[%s1180 + $0x8] sm:$0xff]
      %v1183 = vld [vmem:[%s1180 + $0x10] sm:$0xff]
      %v1184 = vld [vmem:[%s1180 + $0x18] sm:$0xff]
      %v1185 = vld [vmem:[%s1180 + $0x20] sm:$0xff]
      %v1186 = vld [vmem:[%s1180 + $0x28] sm:$0xff]
      %v1187 = vld [vmem:[%s1180 + $0x30] sm:$0xff]
      %v1188 = vld [vmem:[%s1180 + $0x38] sm:$0xff]
      %v1189 = vld [vmem:[%s212] sm:$0xff]
      %v1190 = vld [vmem:[%s212 + $0x8] sm:$0xff]
      %v1191 = vld [vmem:[%s212 + $0x10] sm:$0xff]
      %v1192 = vld [vmem:[%s212 + $0x18] sm:$0xff]
      %v1193 = vld [vmem:[%s212 + $0x20] sm:$0xff]
      %v1194 = vld [vmem:[%s212 + $0x28] sm:$0xff]
      %v1195 = vld [vmem:[%s212 + $0x30] sm:$0xff]
      %v1196 = vld [vmem:[%s212 + $0x38] sm:$0xff]
      %v1197 = vld [vmem:[%s221] sm:$0xff]
      %v1198 = vld [vmem:[%s221 + $0x8] sm:$0xff]
      %v1199 = vld [vmem:[%s221 + $0x10] sm:$0xff]
      %v1200 = vld [vmem:[%s221 + $0x18] sm:$0xff]
      %v1201 = vld [vmem:[%s221 + $0x20] sm:$0xff]
      %v1202 = vld [vmem:[%s221 + $0x28] sm:$0xff]
      %v1203 = vld [vmem:[%s221 + $0x30] sm:$0xff]
      %v1204 = vld [vmem:[%s221 + $0x38] sm:$0xff]
      %s1205 = scalar_lea.vmem %s1, 32
      %v1206 = vld [vmem:[%s1205] sm:$0x7]
      %1207 = vmatprep.subr.mxu0 %v1204
      %1208 = vmatpush1.msra.mxu0 %v1203
      %1209 = vmatprep.subr.mxu0 %v1202
      %1210 = vmatpush1.msra.mxu0 %v1201
      %1211 = vmatprep.subr.mxu0 %v1200
      %1212 = vmatpush1.msra.mxu0 %v1199
      %1213 = vmatprep.subr.mxu0 %v1198
      %1214 = vmatpush1.msra.mxu0 %v1197
      %1215 = vmatprep.subr.mxu0 %v1196
      %1216 = vmatpush1.msra.mxu0 %v1195
      %1217 = vmatprep.subr.mxu0 %v1194
      %1218 = vmatpush1.msra.mxu0 %v1193
      %1219 = vmatprep.subr.mxu0 %v1192
      %1220 = vmatpush1.msra.mxu0 %v1191
      %1221 = vmatprep.subr.mxu0 %v1190
      %1222 = vmatpush1.msra.mxu0 %v1189
      %1223 = vmatprep.subr.mxu0 %v1188
      %1224 = vmatpush1.msra.mxu0 %v1187
      %1225 = vmatprep.subr.mxu0 %v1186
      %1226 = vmatpush1.msra.mxu0 %v1185
      %1227 = vmatprep.subr.mxu0 %v1184
      %1228 = vmatpush1.msra.mxu0 %v1183
      %1229 = vmatprep.subr.mxu0 %v1182
      %1230 = vmatpush1.msra.mxu0 %v1181
      %1231 = vmatprep.subr.mxu0 %v1179
      %1232 = vmatpush1.msra.mxu0 %v1178
      %1233 = vmatprep.subr.mxu0 %v1177
      %1234 = vmatpush1.msra.mxu0 %v1176
      %1235 = vmatprep.subr.mxu0 %v1175
      %1236 = vmatpush1.msra.mxu0 %v1174
      %1237 = vmatprep.subr.mxu0 %v1173
      %1238 = vmatpush1.msra.mxu0 %v1172
      %1239 = vmatprep.subr.mxu0 0.0
      %1240 = vmatpush2.msra.mxu0 0.0
      %1241 = vmatprep.subr.mxu0 0.0
      %1242 = vmatpush2.msra.mxu0 0.0
      %1243 = vmatprep.subr.mxu0 0.0
      %1244 = vmatpush2.msra.mxu0 0.0
      %1245 = vmatprep.subr.mxu0 0.0
      %1246 = vmatpush2.msra.mxu0 0.0
      %1247 = vmatprep.subr.mxu0 0.0
      %1248 = vmatpush2.msra.mxu0 0.0
      %1249 = vmatprep.subr.mxu0 0.0
      %1250 = vmatpush2.msra.mxu0 0.0
      %1251 = vmatprep.subr.mxu0 0.0
      %1252 = vmatpush2.msra.mxu0 0.0
      %1253 = vmatprep.subr.mxu0 0.0
      %1254 = vmatpush2.msra.mxu0 0.0
      %1255 = vmatprep.subr.mxu0 0.0
      %1256 = vmatpush2.msra.mxu0 0.0
      %1257 = vmatprep.subr.mxu0 0.0
      %1258 = vmatpush2.msra.mxu0 0.0
      %1259 = vmatprep.subr.mxu0 0.0
      %1260 = vmatpush2.msra.mxu0 0.0
      %1261 = vmatprep.subr.mxu0 0.0
      %1262 = vmatpush2.msra.mxu0 0.0
      %1263 = vmatprep.subr.mxu0 0.0
      %1264 = vmatpush2.msra.mxu0 0.0
      %1265 = vmatprep.subr.mxu0 0.0
      %1266 = vmatpush2.msra.mxu0 0.0
      %1267 = vmatprep.subr.mxu0 0.0
      %1268 = vmatpush2.msra.mxu0 0.0
      %1269 = vmatprep.subr.mxu0 0.0
      %1270 = vmatpush2.msra.mxu0 0.0
      %1271 = vmatprep.mubr.f32.mxu0 0.0
      %1272 = vmatmul.mubr.f32.gmra.mxu0 %v1206
      %v1273 = vpop.f32.mrf.mxu0
      %v1274 = vadd.f32 %v251, %v1273
      %v1275 = vpop.f32.mrf.mxu0
      %v1276 = vadd.f32 %v251, %v1275
      %1277 = vdwg.mxu0
      %v1280 = vcombine.low %v1274, %v1276
      %s1282 = scalar_lea.vmem %s205, 64
      %1283 = vst [vmem:[%s1282] sm:$0x77] %v1280
      %v1284 = vtanh.pop %v1274
      %v1285 = vtanh.pop %v1276
      %v1288 = vcombine.low %v1284, %v1285
      %s1290 = scalar_lea.vmem %s210, 64
      %1291 = vst [vmem:[%s1290] sm:$0x77] %v1288
      %v1292 = vld [vmem:[%s1171] sm:$0xff]
      %v1293 = vld [vmem:[%s1171 + $0x8] sm:$0xff]
      %v1294 = vld [vmem:[%s1171 + $0x10] sm:$0xff]
      %v1295 = vld [vmem:[%s1171 + $0x18] sm:$0xff]
      %v1296 = vld [vmem:[%s1171 + $0x20] sm:$0xff]
      %v1297 = vld [vmem:[%s1171 + $0x28] sm:$0xff]
      %v1298 = vld [vmem:[%s1171 + $0x30] sm:$0xff]
      %v1299 = vld [vmem:[%s1171 + $0x38] sm:$0xff]
      %v1300 = vld [vmem:[%s1180] sm:$0xff]
      %v1301 = vld [vmem:[%s1180 + $0x8] sm:$0xff]
      %v1302 = vld [vmem:[%s1180 + $0x10] sm:$0xff]
      %v1303 = vld [vmem:[%s1180 + $0x18] sm:$0xff]
      %v1304 = vld [vmem:[%s1180 + $0x20] sm:$0xff]
      %v1305 = vld [vmem:[%s1180 + $0x28] sm:$0xff]
      %v1306 = vld [vmem:[%s1180 + $0x30] sm:$0xff]
      %v1307 = vld [vmem:[%s1180 + $0x38] sm:$0xff]
      %v1308 = vld [vmem:[%s212] sm:$0xff]
      %v1309 = vld [vmem:[%s212 + $0x8] sm:$0xff]
      %v1310 = vld [vmem:[%s212 + $0x10] sm:$0xff]
      %v1311 = vld [vmem:[%s212 + $0x18] sm:$0xff]
      %v1312 = vld [vmem:[%s212 + $0x20] sm:$0xff]
      %v1313 = vld [vmem:[%s212 + $0x28] sm:$0xff]
      %v1314 = vld [vmem:[%s212 + $0x30] sm:$0xff]
      %v1315 = vld [vmem:[%s212 + $0x38] sm:$0xff]
      %v1316 = vld [vmem:[%s221] sm:$0xff]
      %v1317 = vld [vmem:[%s221 + $0x8] sm:$0xff]
      %v1318 = vld [vmem:[%s221 + $0x10] sm:$0xff]
      %v1319 = vld [vmem:[%s221 + $0x18] sm:$0xff]
      %v1320 = vld [vmem:[%s221 + $0x20] sm:$0xff]
      %v1321 = vld [vmem:[%s221 + $0x28] sm:$0xff]
      %v1322 = vld [vmem:[%s221 + $0x30] sm:$0xff]
      %v1323 = vld [vmem:[%s221 + $0x38] sm:$0xff]
      %s1324 = scalar_lea.vmem %s1, 36
      %v1325 = vld [vmem:[%s1324] sm:$0x7]
      %1326 = vmatprep.subr.mxu0 %v1323
      %1327 = vmatpush1.msra.mxu0 %v1322
      %1328 = vmatprep.subr.mxu0 %v1321
      %1329 = vmatpush1.msra.mxu0 %v1320
      %1330 = vmatprep.subr.mxu0 %v1319
      %1331 = vmatpush1.msra.mxu0 %v1318
      %1332 = vmatprep.subr.mxu0 %v1317
      %1333 = vmatpush1.msra.mxu0 %v1316
      %1334 = vmatprep.subr.mxu0 %v1315
      %1335 = vmatpush1.msra.mxu0 %v1314
      %1336 = vmatprep.subr.mxu0 %v1313
      %1337 = vmatpush1.msra.mxu0 %v1312
      %1338 = vmatprep.subr.mxu0 %v1311
      %1339 = vmatpush1.msra.mxu0 %v1310
      %1340 = vmatprep.subr.mxu0 %v1309
      %1341 = vmatpush1.msra.mxu0 %v1308
      %1342 = vmatprep.subr.mxu0 %v1307
      %1343 = vmatpush1.msra.mxu0 %v1306
      %1344 = vmatprep.subr.mxu0 %v1305
      %1345 = vmatpush1.msra.mxu0 %v1304
      %1346 = vmatprep.subr.mxu0 %v1303
      %1347 = vmatpush1.msra.mxu0 %v1302
      %1348 = vmatprep.subr.mxu0 %v1301
      %1349 = vmatpush1.msra.mxu0 %v1300
      %1350 = vmatprep.subr.mxu0 %v1299
      %1351 = vmatpush1.msra.mxu0 %v1298
      %1352 = vmatprep.subr.mxu0 %v1297
      %1353 = vmatpush1.msra.mxu0 %v1296
      %1354 = vmatprep.subr.mxu0 %v1295
      %1355 = vmatpush1.msra.mxu0 %v1294
      %1356 = vmatprep.subr.mxu0 %v1293
      %1357 = vmatpush1.msra.mxu0 %v1292
      %1358 = vmatprep.subr.mxu0 0.0
      %1359 = vmatpush2.msra.mxu0 0.0
      %1360 = vmatprep.subr.mxu0 0.0
      %1361 = vmatpush2.msra.mxu0 0.0
      %1362 = vmatprep.subr.mxu0 0.0
      %1363 = vmatpush2.msra.mxu0 0.0
      %1364 = vmatprep.subr.mxu0 0.0
      %1365 = vmatpush2.msra.mxu0 0.0
      %1366 = vmatprep.subr.mxu0 0.0
      %1367 = vmatpush2.msra.mxu0 0.0
      %1368 = vmatprep.subr.mxu0 0.0
      %1369 = vmatpush2.msra.mxu0 0.0
      %1370 = vmatprep.subr.mxu0 0.0
      %1371 = vmatpush2.msra.mxu0 0.0
      %1372 = vmatprep.subr.mxu0 0.0
      %1373 = vmatpush2.msra.mxu0 0.0
      %1374 = vmatprep.subr.mxu0 0.0
      %1375 = vmatpush2.msra.mxu0 0.0
      %1376 = vmatprep.subr.mxu0 0.0
      %1377 = vmatpush2.msra.mxu0 0.0
      %1378 = vmatprep.subr.mxu0 0.0
      %1379 = vmatpush2.msra.mxu0 0.0
      %1380 = vmatprep.subr.mxu0 0.0
      %1381 = vmatpush2.msra.mxu0 0.0
      %1382 = vmatprep.subr.mxu0 0.0
      %1383 = vmatpush2.msra.mxu0 0.0
      %1384 = vmatprep.subr.mxu0 0.0
      %1385 = vmatpush2.msra.mxu0 0.0
      %1386 = vmatprep.subr.mxu0 0.0
      %1387 = vmatpush2.msra.mxu0 0.0
      %1388 = vmatprep.subr.mxu0 0.0
      %1389 = vmatpush2.msra.mxu0 0.0
      %1390 = vmatprep.mubr.f32.mxu0 0.0
      %1391 = vmatmul.mubr.f32.gmra.mxu0 %v1325
      %v1392 = vpop.f32.mrf.mxu0
      %v1393 = vadd.f32 %v251, %v1392
      %v1394 = vpop.f32.mrf.mxu0
      %v1395 = vadd.f32 %v251, %v1394
      %1396 = vdwg.mxu0
      %v1399 = vcombine.low %v1393, %v1395
      %s1401 = scalar_lea.vmem %s205, 72
      %1402 = vst [vmem:[%s1401] sm:$0x77] %v1399
      %v1403 = vtanh.pop %v1393
      %v1404 = vtanh.pop %v1395
      %v1407 = vcombine.low %v1403, %v1404
      %s1409 = scalar_lea.vmem %s210, 72
      %1410 = vst [vmem:[%s1409] sm:$0x77] %v1407
      %s1411 = scalar_lea.vmem %s200, 512
      %v1412 = vld [vmem:[%s1411] sm:$0xff]
      %v1413 = vld [vmem:[%s1411 + $0x8] sm:$0xff]
      %v1414 = vld [vmem:[%s1411 + $0x10] sm:$0xff]
      %v1415 = vld [vmem:[%s1411 + $0x18] sm:$0xff]
      %v1416 = vld [vmem:[%s1411 + $0x20] sm:$0xff]
      %v1417 = vld [vmem:[%s1411 + $0x28] sm:$0xff]
      %v1418 = vld [vmem:[%s1411 + $0x30] sm:$0xff]
      %v1419 = vld [vmem:[%s1411 + $0x38] sm:$0xff]
      %v1420 = vld [vmem:[%s1171] sm:$0xff]
      %v1421 = vld [vmem:[%s1171 + $0x8] sm:$0xff]
      %v1422 = vld [vmem:[%s1171 + $0x10] sm:$0xff]
      %v1423 = vld [vmem:[%s1171 + $0x18] sm:$0xff]
      %v1424 = vld [vmem:[%s1171 + $0x20] sm:$0xff]
      %v1425 = vld [vmem:[%s1171 + $0x28] sm:$0xff]
      %v1426 = vld [vmem:[%s1171 + $0x30] sm:$0xff]
      %v1427 = vld [vmem:[%s1171 + $0x38] sm:$0xff]
      %v1428 = vld [vmem:[%s455] sm:$0xff]
      %v1429 = vld [vmem:[%s455 + $0x8] sm:$0xff]
      %v1430 = vld [vmem:[%s455 + $0x10] sm:$0xff]
      %v1431 = vld [vmem:[%s455 + $0x18] sm:$0xff]
      %v1432 = vld [vmem:[%s455 + $0x20] sm:$0xff]
      %v1433 = vld [vmem:[%s455 + $0x28] sm:$0xff]
      %v1434 = vld [vmem:[%s455 + $0x30] sm:$0xff]
      %v1435 = vld [vmem:[%s455 + $0x38] sm:$0xff]
      %v1436 = vld [vmem:[%s212] sm:$0xff]
      %v1437 = vld [vmem:[%s212 + $0x8] sm:$0xff]
      %v1438 = vld [vmem:[%s212 + $0x10] sm:$0xff]
      %v1439 = vld [vmem:[%s212 + $0x18] sm:$0xff]
      %v1440 = vld [vmem:[%s212 + $0x20] sm:$0xff]
      %v1441 = vld [vmem:[%s212 + $0x28] sm:$0xff]
      %v1442 = vld [vmem:[%s212 + $0x30] sm:$0xff]
      %v1443 = vld [vmem:[%s212 + $0x38] sm:$0xff]
      %s1444 = scalar_lea.vmem %s1, 40
      %v1445 = vld [vmem:[%s1444] sm:$0x7]
      %1446 = vmatprep.subr.mxu0 %v1443
      %1447 = vmatpush1.msra.mxu0 %v1442
      %1448 = vmatprep.subr.mxu0 %v1441
      %1449 = vmatpush1.msra.mxu0 %v1440
      %1450 = vmatprep.subr.mxu0 %v1439
      %1451 = vmatpush1.msra.mxu0 %v1438
      %1452 = vmatprep.subr.mxu0 %v1437
      %1453 = vmatpush1.msra.mxu0 %v1436
      %1454 = vmatprep.subr.mxu0 %v1435
      %1455 = vmatpush1.msra.mxu0 %v1434
      %1456 = vmatprep.subr.mxu0 %v1433
      %1457 = vmatpush1.msra.mxu0 %v1432
      %1458 = vmatprep.subr.mxu0 %v1431
      %1459 = vmatpush1.msra.mxu0 %v1430
      %1460 = vmatprep.subr.mxu0 %v1429
      %1461 = vmatpush1.msra.mxu0 %v1428
      %1462 = vmatprep.subr.mxu0 %v1427
      %1463 = vmatpush1.msra.mxu0 %v1426
      %1464 = vmatprep.subr.mxu0 %v1425
      %1465 = vmatpush1.msra.mxu0 %v1424
      %1466 = vmatprep.subr.mxu0 %v1423
      %1467 = vmatpush1.msra.mxu0 %v1422
      %1468 = vmatprep.subr.mxu0 %v1421
      %1469 = vmatpush1.msra.mxu0 %v1420
      %1470 = vmatprep.subr.mxu0 %v1419
      %1471 = vmatpush1.msra.mxu0 %v1418
      %1472 = vmatprep.subr.mxu0 %v1417
      %1473 = vmatpush1.msra.mxu0 %v1416
      %1474 = vmatprep.subr.mxu0 %v1415
      %1475 = vmatpush1.msra.mxu0 %v1414
      %1476 = vmatprep.subr.mxu0 %v1413
      %1477 = vmatpush1.msra.mxu0 %v1412
      %1478 = vmatprep.subr.mxu0 0.0
      %1479 = vmatpush2.msra.mxu0 0.0
      %1480 = vmatprep.subr.mxu0 0.0
      %1481 = vmatpush2.msra.mxu0 0.0
      %1482 = vmatprep.subr.mxu0 0.0
      %1483 = vmatpush2.msra.mxu0 0.0
      %1484 = vmatprep.subr.mxu0 0.0
      %1485 = vmatpush2.msra.mxu0 0.0
      %1486 = vmatprep.subr.mxu0 0.0
      %1487 = vmatpush2.msra.mxu0 0.0
      %1488 = vmatprep.subr.mxu0 0.0
      %1489 = vmatpush2.msra.mxu0 0.0
      %1490 = vmatprep.subr.mxu0 0.0
      %1491 = vmatpush2.msra.mxu0 0.0
      %1492 = vmatprep.subr.mxu0 0.0
      %1493 = vmatpush2.msra.mxu0 0.0
      %1494 = vmatprep.subr.mxu0 0.0
      %1495 = vmatpush2.msra.mxu0 0.0
      %1496 = vmatprep.subr.mxu0 0.0
      %1497 = vmatpush2.msra.mxu0 0.0
      %1498 = vmatprep.subr.mxu0 0.0
      %1499 = vmatpush2.msra.mxu0 0.0
      %1500 = vmatprep.subr.mxu0 0.0
      %1501 = vmatpush2.msra.mxu0 0.0
      %1502 = vmatprep.subr.mxu0 0.0
      %1503 = vmatpush2.msra.mxu0 0.0
      %1504 = vmatprep.subr.mxu0 0.0
      %1505 = vmatpush2.msra.mxu0 0.0
      %1506 = vmatprep.subr.mxu0 0.0
      %1507 = vmatpush2.msra.mxu0 0.0
      %1508 = vmatprep.subr.mxu0 0.0
      %1509 = vmatpush2.msra.mxu0 0.0
      %1510 = vmatprep.mubr.f32.mxu0 0.0
      %1511 = vmatmul.mubr.f32.gmra.mxu0 %v1445
      %v1512 = vpop.f32.mrf.mxu0
      %v1513 = vadd.f32 %v251, %v1512
      %v1514 = vpop.f32.mrf.mxu0
      %v1515 = vadd.f32 %v251, %v1514
      %1516 = vdwg.mxu0
      %v1519 = vcombine.low %v1513, %v1515
      %s1521 = scalar_lea.vmem %s205, 80
      %1522 = vst [vmem:[%s1521] sm:$0x77] %v1519
      %v1523 = vtanh.pop %v1513
      %v1524 = vtanh.pop %v1515
      %v1527 = vcombine.low %v1523, %v1524
      %s1529 = scalar_lea.vmem %s210, 80
      %1530 = vst [vmem:[%s1529] sm:$0x77] %v1527
      %v1531 = vld [vmem:[%s1411] sm:$0xff]
      %v1532 = vld [vmem:[%s1411 + $0x8] sm:$0xff]
      %v1533 = vld [vmem:[%s1411 + $0x10] sm:$0xff]
      %v1534 = vld [vmem:[%s1411 + $0x18] sm:$0xff]
      %v1535 = vld [vmem:[%s1411 + $0x20] sm:$0xff]
      %v1536 = vld [vmem:[%s1411 + $0x28] sm:$0xff]
      %v1537 = vld [vmem:[%s1411 + $0x30] sm:$0xff]
      %v1538 = vld [vmem:[%s1411 + $0x38] sm:$0xff]
      %v1539 = vld [vmem:[%s1171] sm:$0xff]
      %v1540 = vld [vmem:[%s1171 + $0x8] sm:$0xff]
      %v1541 = vld [vmem:[%s1171 + $0x10] sm:$0xff]
      %v1542 = vld [vmem:[%s1171 + $0x18] sm:$0xff]
      %v1543 = vld [vmem:[%s1171 + $0x20] sm:$0xff]
      %v1544 = vld [vmem:[%s1171 + $0x28] sm:$0xff]
      %v1545 = vld [vmem:[%s1171 + $0x30] sm:$0xff]
      %v1546 = vld [vmem:[%s1171 + $0x38] sm:$0xff]
      %v1547 = vld [vmem:[%s455] sm:$0xff]
      %v1548 = vld [vmem:[%s455 + $0x8] sm:$0xff]
      %v1549 = vld [vmem:[%s455 + $0x10] sm:$0xff]
      %v1550 = vld [vmem:[%s455 + $0x18] sm:$0xff]
      %v1551 = vld [vmem:[%s455 + $0x20] sm:$0xff]
      %v1552 = vld [vmem:[%s455 + $0x28] sm:$0xff]
      %v1553 = vld [vmem:[%s455 + $0x30] sm:$0xff]
      %v1554 = vld [vmem:[%s455 + $0x38] sm:$0xff]
      %v1555 = vld [vmem:[%s212] sm:$0xff]
      %v1556 = vld [vmem:[%s212 + $0x8] sm:$0xff]
      %v1557 = vld [vmem:[%s212 + $0x10] sm:$0xff]
      %v1558 = vld [vmem:[%s212 + $0x18] sm:$0xff]
      %v1559 = vld [vmem:[%s212 + $0x20] sm:$0xff]
      %v1560 = vld [vmem:[%s212 + $0x28] sm:$0xff]
      %v1561 = vld [vmem:[%s212 + $0x30] sm:$0xff]
      %v1562 = vld [vmem:[%s212 + $0x38] sm:$0xff]
      %s1563 = scalar_lea.vmem %s1, 44
      %v1564 = vld [vmem:[%s1563] sm:$0x7]
      %1565 = vmatprep.subr.mxu0 %v1562
      %1566 = vmatpush1.msra.mxu0 %v1561
      %1567 = vmatprep.subr.mxu0 %v1560
      %1568 = vmatpush1.msra.mxu0 %v1559
      %1569 = vmatprep.subr.mxu0 %v1558
      %1570 = vmatpush1.msra.mxu0 %v1557
      %1571 = vmatprep.subr.mxu0 %v1556
      %1572 = vmatpush1.msra.mxu0 %v1555
      %1573 = vmatprep.subr.mxu0 %v1554
      %1574 = vmatpush1.msra.mxu0 %v1553
      %1575 = vmatprep.subr.mxu0 %v1552
      %1576 = vmatpush1.msra.mxu0 %v1551
      %1577 = vmatprep.subr.mxu0 %v1550
      %1578 = vmatpush1.msra.mxu0 %v1549
      %1579 = vmatprep.subr.mxu0 %v1548
      %1580 = vmatpush1.msra.mxu0 %v1547
      %1581 = vmatprep.subr.mxu0 %v1546
      %1582 = vmatpush1.msra.mxu0 %v1545
      %1583 = vmatprep.subr.mxu0 %v1544
      %1584 = vmatpush1.msra.mxu0 %v1543
      %1585 = vmatprep.subr.mxu0 %v1542
      %1586 = vmatpush1.msra.mxu0 %v1541
      %1587 = vmatprep.subr.mxu0 %v1540
      %1588 = vmatpush1.msra.mxu0 %v1539
      %1589 = vmatprep.subr.mxu0 %v1538
      %1590 = vmatpush1.msra.mxu0 %v1537
      %1591 = vmatprep.subr.mxu0 %v1536
      %1592 = vmatpush1.msra.mxu0 %v1535
      %1593 = vmatprep.subr.mxu0 %v1534
      %1594 = vmatpush1.msra.mxu0 %v1533
      %1595 = vmatprep.subr.mxu0 %v1532
      %1596 = vmatpush1.msra.mxu0 %v1531
      %1597 = vmatprep.subr.mxu0 0.0
      %1598 = vmatpush2.msra.mxu0 0.0
      %1599 = vmatprep.subr.mxu0 0.0
      %1600 = vmatpush2.msra.mxu0 0.0
      %1601 = vmatprep.subr.mxu0 0.0
      %1602 = vmatpush2.msra.mxu0 0.0
      %1603 = vmatprep.subr.mxu0 0.0
      %1604 = vmatpush2.msra.mxu0 0.0
      %1605 = vmatprep.subr.mxu0 0.0
      %1606 = vmatpush2.msra.mxu0 0.0
      %1607 = vmatprep.subr.mxu0 0.0
      %1608 = vmatpush2.msra.mxu0 0.0
      %1609 = vmatprep.subr.mxu0 0.0
      %1610 = vmatpush2.msra.mxu0 0.0
      %1611 = vmatprep.subr.mxu0 0.0
      %1612 = vmatpush2.msra.mxu0 0.0
      %1613 = vmatprep.subr.mxu0 0.0
      %1614 = vmatpush2.msra.mxu0 0.0
      %1615 = vmatprep.subr.mxu0 0.0
      %1616 = vmatpush2.msra.mxu0 0.0
      %1617 = vmatprep.subr.mxu0 0.0
      %1618 = vmatpush2.msra.mxu0 0.0
      %1619 = vmatprep.subr.mxu0 0.0
      %1620 = vmatpush2.msra.mxu0 0.0
      %1621 = vmatprep.subr.mxu0 0.0
      %1622 = vmatpush2.msra.mxu0 0.0
      %1623 = vmatprep.subr.mxu0 0.0
      %1624 = vmatpush2.msra.mxu0 0.0
      %1625 = vmatprep.subr.mxu0 0.0
      %1626 = vmatpush2.msra.mxu0 0.0
      %1627 = vmatprep.subr.mxu0 0.0
      %1628 = vmatpush2.msra.mxu0 0.0
      %1629 = vmatprep.mubr.f32.mxu0 0.0
      %1630 = vmatmul.mubr.f32.gmra.mxu0 %v1564
      %v1631 = vpop.f32.mrf.mxu0
      %v1632 = vadd.f32 %v251, %v1631
      %v1633 = vpop.f32.mrf.mxu0
      %v1634 = vadd.f32 %v251, %v1633
      %1635 = vdwg.mxu0
      %v1638 = vcombine.low %v1632, %v1634
      %s1640 = scalar_lea.vmem %s205, 88
      %1641 = vst [vmem:[%s1640] sm:$0x77] %v1638
      %v1642 = vtanh.pop %v1632
      %v1643 = vtanh.pop %v1634
      %v1646 = vcombine.low %v1642, %v1643
      %s1648 = scalar_lea.vmem %s210, 88
      %1649 = vst [vmem:[%s1648] sm:$0x77] %v1646
      %v1650 = vld [vmem:[%s1171] sm:$0xff]
      %v1651 = vld [vmem:[%s1171 + $0x8] sm:$0xff]
      %v1652 = vld [vmem:[%s1171 + $0x10] sm:$0xff]
      %v1653 = vld [vmem:[%s1171 + $0x18] sm:$0xff]
      %v1654 = vld [vmem:[%s1171 + $0x20] sm:$0xff]
      %v1655 = vld [vmem:[%s1171 + $0x28] sm:$0xff]
      %v1656 = vld [vmem:[%s1171 + $0x30] sm:$0xff]
      %v1657 = vld [vmem:[%s1171 + $0x38] sm:$0xff]
      %v1658 = vld [vmem:[%s1180] sm:$0xff]
      %v1659 = vld [vmem:[%s1180 + $0x8] sm:$0xff]
      %v1660 = vld [vmem:[%s1180 + $0x10] sm:$0xff]
      %v1661 = vld [vmem:[%s1180 + $0x18] sm:$0xff]
      %v1662 = vld [vmem:[%s1180 + $0x20] sm:$0xff]
      %v1663 = vld [vmem:[%s1180 + $0x28] sm:$0xff]
      %v1664 = vld [vmem:[%s1180 + $0x30] sm:$0xff]
      %v1665 = vld [vmem:[%s1180 + $0x38] sm:$0xff]
      %v1666 = vld [vmem:[%s212] sm:$0xff]
      %v1667 = vld [vmem:[%s212 + $0x8] sm:$0xff]
      %v1668 = vld [vmem:[%s212 + $0x10] sm:$0xff]
      %v1669 = vld [vmem:[%s212 + $0x18] sm:$0xff]
      %v1670 = vld [vmem:[%s212 + $0x20] sm:$0xff]
      %v1671 = vld [vmem:[%s212 + $0x28] sm:$0xff]
      %v1672 = vld [vmem:[%s212 + $0x30] sm:$0xff]
      %v1673 = vld [vmem:[%s212 + $0x38] sm:$0xff]
      %v1674 = vld [vmem:[%s221] sm:$0xff]
      %v1675 = vld [vmem:[%s221 + $0x8] sm:$0xff]
      %v1676 = vld [vmem:[%s221 + $0x10] sm:$0xff]
      %v1677 = vld [vmem:[%s221 + $0x18] sm:$0xff]
      %v1678 = vld [vmem:[%s221 + $0x20] sm:$0xff]
      %v1679 = vld [vmem:[%s221 + $0x28] sm:$0xff]
      %v1680 = vld [vmem:[%s221 + $0x30] sm:$0xff]
      %v1681 = vld [vmem:[%s221 + $0x38] sm:$0xff]
      %s1682 = scalar_lea.vmem %s1, 48
      %v1683 = vld [vmem:[%s1682] sm:$0x7]
      %1684 = vmatprep.subr.mxu0 %v1681
      %1685 = vmatpush1.msra.mxu0 %v1680
      %1686 = vmatprep.subr.mxu0 %v1679
      %1687 = vmatpush1.msra.mxu0 %v1678
      %1688 = vmatprep.subr.mxu0 %v1677
      %1689 = vmatpush1.msra.mxu0 %v1676
      %1690 = vmatprep.subr.mxu0 %v1675
      %1691 = vmatpush1.msra.mxu0 %v1674
      %1692 = vmatprep.subr.mxu0 %v1673
      %1693 = vmatpush1.msra.mxu0 %v1672
      %1694 = vmatprep.subr.mxu0 %v1671
      %1695 = vmatpush1.msra.mxu0 %v1670
      %1696 = vmatprep.subr.mxu0 %v1669
      %1697 = vmatpush1.msra.mxu0 %v1668
      %1698 = vmatprep.subr.mxu0 %v1667
      %1699 = vmatpush1.msra.mxu0 %v1666
      %1700 = vmatprep.subr.mxu0 %v1665
      %1701 = vmatpush1.msra.mxu0 %v1664
      %1702 = vmatprep.subr.mxu0 %v1663
      %1703 = vmatpush1.msra.mxu0 %v1662
      %1704 = vmatprep.subr.mxu0 %v1661
      %1705 = vmatpush1.msra.mxu0 %v1660
      %1706 = vmatprep.subr.mxu0 %v1659
      %1707 = vmatpush1.msra.mxu0 %v1658
      %1708 = vmatprep.subr.mxu0 %v1657
      %1709 = vmatpush1.msra.mxu0 %v1656
      %1710 = vmatprep.subr.mxu0 %v1655
      %1711 = vmatpush1.msra.mxu0 %v1654
      %1712 = vmatprep.subr.mxu0 %v1653
      %1713 = vmatpush1.msra.mxu0 %v1652
      %1714 = vmatprep.subr.mxu0 %v1651
      %1715 = vmatpush1.msra.mxu0 %v1650
      %1716 = vmatprep.subr.mxu0 0.0
      %1717 = vmatpush2.msra.mxu0 0.0
      %1718 = vmatprep.subr.mxu0 0.0
      %1719 = vmatpush2.msra.mxu0 0.0
      %1720 = vmatprep.subr.mxu0 0.0
      %1721 = vmatpush2.msra.mxu0 0.0
      %1722 = vmatprep.subr.mxu0 0.0
      %1723 = vmatpush2.msra.mxu0 0.0
      %1724 = vmatprep.subr.mxu0 0.0
      %1725 = vmatpush2.msra.mxu0 0.0
      %1726 = vmatprep.subr.mxu0 0.0
      %1727 = vmatpush2.msra.mxu0 0.0
      %1728 = vmatprep.subr.mxu0 0.0
      %1729 = vmatpush2.msra.mxu0 0.0
      %1730 = vmatprep.subr.mxu0 0.0
      %1731 = vmatpush2.msra.mxu0 0.0
      %1732 = vmatprep.subr.mxu0 0.0
      %1733 = vmatpush2.msra.mxu0 0.0
      %1734 = vmatprep.subr.mxu0 0.0
      %1735 = vmatpush2.msra.mxu0 0.0
      %1736 = vmatprep.subr.mxu0 0.0
      %1737 = vmatpush2.msra.mxu0 0.0
      %1738 = vmatprep.subr.mxu0 0.0
      %1739 = vmatpush2.msra.mxu0 0.0
      %1740 = vmatprep.subr.mxu0 0.0
      %1741 = vmatpush2.msra.mxu0 0.0
      %1742 = vmatprep.subr.mxu0 0.0
      %1743 = vmatpush2.msra.mxu0 0.0
      %1744 = vmatprep.subr.mxu0 0.0
      %1745 = vmatpush2.msra.mxu0 0.0
      %1746 = vmatprep.subr.mxu0 0.0
      %1747 = vmatpush2.msra.mxu0 0.0
      %1748 = vmatprep.mubr.f32.mxu0 0.0
      %1749 = vmatmul.mubr.f32.gmra.mxu0 %v1683
      %v1750 = vpop.f32.mrf.mxu0
      %v1751 = vadd.f32 %v251, %v1750
      %v1752 = vpop.f32.mrf.mxu0
      %v1753 = vadd.f32 %v251, %v1752
      %1754 = vdwg.mxu0
      %v1757 = vcombine.low %v1751, %v1753
      %s1759 = scalar_lea.vmem %s205, 96
      %1760 = vst [vmem:[%s1759] sm:$0x77] %v1757
      %v1761 = vtanh.pop %v1751
      %v1762 = vtanh.pop %v1753
      %v1765 = vcombine.low %v1761, %v1762
      %s1767 = scalar_lea.vmem %s210, 96
      %1768 = vst [vmem:[%s1767] sm:$0x77] %v1765
      %v1769 = vld [vmem:[%s1171] sm:$0xff]
      %v1770 = vld [vmem:[%s1171 + $0x8] sm:$0xff]
      %v1771 = vld [vmem:[%s1171 + $0x10] sm:$0xff]
      %v1772 = vld [vmem:[%s1171 + $0x18] sm:$0xff]
      %v1773 = vld [vmem:[%s1171 + $0x20] sm:$0xff]
      %v1774 = vld [vmem:[%s1171 + $0x28] sm:$0xff]
      %v1775 = vld [vmem:[%s1171 + $0x30] sm:$0xff]
      %v1776 = vld [vmem:[%s1171 + $0x38] sm:$0xff]
      %v1777 = vld [vmem:[%s1180] sm:$0xff]
      %v1778 = vld [vmem:[%s1180 + $0x8] sm:$0xff]
      %v1779 = vld [vmem:[%s1180 + $0x10] sm:$0xff]
      %v1780 = vld [vmem:[%s1180 + $0x18] sm:$0xff]
      %v1781 = vld [vmem:[%s1180 + $0x20] sm:$0xff]
      %v1782 = vld [vmem:[%s1180 + $0x28] sm:$0xff]
      %v1783 = vld [vmem:[%s1180 + $0x30] sm:$0xff]
      %v1784 = vld [vmem:[%s1180 + $0x38] sm:$0xff]
      %v1785 = vld [vmem:[%s212] sm:$0xff]
      %v1786 = vld [vmem:[%s212 + $0x8] sm:$0xff]
      %v1787 = vld [vmem:[%s212 + $0x10] sm:$0xff]
      %v1788 = vld [vmem:[%s212 + $0x18] sm:$0xff]
      %v1789 = vld [vmem:[%s212 + $0x20] sm:$0xff]
      %v1790 = vld [vmem:[%s212 + $0x28] sm:$0xff]
      %v1791 = vld [vmem:[%s212 + $0x30] sm:$0xff]
      %v1792 = vld [vmem:[%s212 + $0x38] sm:$0xff]
      %v1793 = vld [vmem:[%s221] sm:$0xff]
      %v1794 = vld [vmem:[%s221 + $0x8] sm:$0xff]
      %v1795 = vld [vmem:[%s221 + $0x10] sm:$0xff]
      %v1796 = vld [vmem:[%s221 + $0x18] sm:$0xff]
      %v1797 = vld [vmem:[%s221 + $0x20] sm:$0xff]
      %v1798 = vld [vmem:[%s221 + $0x28] sm:$0xff]
      %v1799 = vld [vmem:[%s221 + $0x30] sm:$0xff]
      %v1800 = vld [vmem:[%s221 + $0x38] sm:$0xff]
      %s1801 = scalar_lea.vmem %s1, 52
      %v1802 = vld [vmem:[%s1801] sm:$0x7]
      %1803 = vmatprep.subr.mxu0 %v1800
      %1804 = vmatpush1.msra.mxu0 %v1799
      %1805 = vmatprep.subr.mxu0 %v1798
      %1806 = vmatpush1.msra.mxu0 %v1797
      %1807 = vmatprep.subr.mxu0 %v1796
      %1808 = vmatpush1.msra.mxu0 %v1795
      %1809 = vmatprep.subr.mxu0 %v1794
      %1810 = vmatpush1.msra.mxu0 %v1793
      %1811 = vmatprep.subr.mxu0 %v1792
      %1812 = vmatpush1.msra.mxu0 %v1791
      %1813 = vmatprep.subr.mxu0 %v1790
      %1814 = vmatpush1.msra.mxu0 %v1789
      %1815 = vmatprep.subr.mxu0 %v1788
      %1816 = vmatpush1.msra.mxu0 %v1787
      %1817 = vmatprep.subr.mxu0 %v1786
      %1818 = vmatpush1.msra.mxu0 %v1785
      %1819 = vmatprep.subr.mxu0 %v1784
      %1820 = vmatpush1.msra.mxu0 %v1783
      %1821 = vmatprep.subr.mxu0 %v1782
      %1822 = vmatpush1.msra.mxu0 %v1781
      %1823 = vmatprep.subr.mxu0 %v1780
      %1824 = vmatpush1.msra.mxu0 %v1779
      %1825 = vmatprep.subr.mxu0 %v1778
      %1826 = vmatpush1.msra.mxu0 %v1777
      %1827 = vmatprep.subr.mxu0 %v1776
      %1828 = vmatpush1.msra.mxu0 %v1775
      %1829 = vmatprep.subr.mxu0 %v1774
      %1830 = vmatpush1.msra.mxu0 %v1773
      %1831 = vmatprep.subr.mxu0 %v1772
      %1832 = vmatpush1.msra.mxu0 %v1771
      %1833 = vmatprep.subr.mxu0 %v1770
      %1834 = vmatpush1.msra.mxu0 %v1769
      %1835 = vmatprep.subr.mxu0 0.0
      %1836 = vmatpush2.msra.mxu0 0.0
      %1837 = vmatprep.subr.mxu0 0.0
      %1838 = vmatpush2.msra.mxu0 0.0
      %1839 = vmatprep.subr.mxu0 0.0
      %1840 = vmatpush2.msra.mxu0 0.0
      %1841 = vmatprep.subr.mxu0 0.0
      %1842 = vmatpush2.msra.mxu0 0.0
      %1843 = vmatprep.subr.mxu0 0.0
      %1844 = vmatpush2.msra.mxu0 0.0
      %1845 = vmatprep.subr.mxu0 0.0
      %1846 = vmatpush2.msra.mxu0 0.0
      %1847 = vmatprep.subr.mxu0 0.0
      %1848 = vmatpush2.msra.mxu0 0.0
      %1849 = vmatprep.subr.mxu0 0.0
      %1850 = vmatpush2.msra.mxu0 0.0
      %1851 = vmatprep.subr.mxu0 0.0
      %1852 = vmatpush2.msra.mxu0 0.0
      %1853 = vmatprep.subr.mxu0 0.0
      %1854 = vmatpush2.msra.mxu0 0.0
      %1855 = vmatprep.subr.mxu0 0.0
      %1856 = vmatpush2.msra.mxu0 0.0
      %1857 = vmatprep.subr.mxu0 0.0
      %1858 = vmatpush2.msra.mxu0 0.0
      %1859 = vmatprep.subr.mxu0 0.0
      %1860 = vmatpush2.msra.mxu0 0.0
      %1861 = vmatprep.subr.mxu0 0.0
      %1862 = vmatpush2.msra.mxu0 0.0
      %1863 = vmatprep.subr.mxu0 0.0
      %1864 = vmatpush2.msra.mxu0 0.0
      %1865 = vmatprep.subr.mxu0 0.0
      %1866 = vmatpush2.msra.mxu0 0.0
      %1867 = vmatprep.mubr.f32.mxu0 0.0
      %1868 = vmatmul.mubr.f32.gmra.mxu0 %v1802
      %v1869 = vpop.f32.mrf.mxu0
      %v1870 = vadd.f32 %v251, %v1869
      %v1871 = vpop.f32.mrf.mxu0
      %v1872 = vadd.f32 %v251, %v1871
      %1873 = vdwg.mxu0
      %v1876 = vcombine.low %v1870, %v1872
      %s1878 = scalar_lea.vmem %s205, 104
      %1879 = vst [vmem:[%s1878] sm:$0x77] %v1876
      %v1880 = vtanh.pop %v1870
      %v1881 = vtanh.pop %v1872
      %v1884 = vcombine.low %v1880, %v1881
      %s1886 = scalar_lea.vmem %s210, 104
      %1887 = vst [vmem:[%s1886] sm:$0x77] %v1884
      %v1888 = vld [vmem:[%s1411] sm:$0xff]
      %v1889 = vld [vmem:[%s1411 + $0x8] sm:$0xff]
      %v1890 = vld [vmem:[%s1411 + $0x10] sm:$0xff]
      %v1891 = vld [vmem:[%s1411 + $0x18] sm:$0xff]
      %v1892 = vld [vmem:[%s1411 + $0x20] sm:$0xff]
      %v1893 = vld [vmem:[%s1411 + $0x28] sm:$0xff]
      %v1894 = vld [vmem:[%s1411 + $0x30] sm:$0xff]
      %v1895 = vld [vmem:[%s1411 + $0x38] sm:$0xff]
      %v1896 = vld [vmem:[%s1171] sm:$0xff]
      %v1897 = vld [vmem:[%s1171 + $0x8] sm:$0xff]
      %v1898 = vld [vmem:[%s1171 + $0x10] sm:$0xff]
      %v1899 = vld [vmem:[%s1171 + $0x18] sm:$0xff]
      %v1900 = vld [vmem:[%s1171 + $0x20] sm:$0xff]
      %v1901 = vld [vmem:[%s1171 + $0x28] sm:$0xff]
      %v1902 = vld [vmem:[%s1171 + $0x30] sm:$0xff]
      %v1903 = vld [vmem:[%s1171 + $0x38] sm:$0xff]
      %v1904 = vld [vmem:[%s455] sm:$0xff]
      %v1905 = vld [vmem:[%s455 + $0x8] sm:$0xff]
      %v1906 = vld [vmem:[%s455 + $0x10] sm:$0xff]
      %v1907 = vld [vmem:[%s455 + $0x18] sm:$0xff]
      %v1908 = vld [vmem:[%s455 + $0x20] sm:$0xff]
      %v1909 = vld [vmem:[%s455 + $0x28] sm:$0xff]
      %v1910 = vld [vmem:[%s455 + $0x30] sm:$0xff]
      %v1911 = vld [vmem:[%s455 + $0x38] sm:$0xff]
      %v1912 = vld [vmem:[%s212] sm:$0xff]
      %v1913 = vld [vmem:[%s212 + $0x8] sm:$0xff]
      %v1914 = vld [vmem:[%s212 + $0x10] sm:$0xff]
      %v1915 = vld [vmem:[%s212 + $0x18] sm:$0xff]
      %v1916 = vld [vmem:[%s212 + $0x20] sm:$0xff]
      %v1917 = vld [vmem:[%s212 + $0x28] sm:$0xff]
      %v1918 = vld [vmem:[%s212 + $0x30] sm:$0xff]
      %v1919 = vld [vmem:[%s212 + $0x38] sm:$0xff]
      %s1920 = scalar_lea.vmem %s1, 56
      %v1921 = vld [vmem:[%s1920] sm:$0x7]
      %1922 = vmatprep.subr.mxu0 %v1919
      %1923 = vmatpush1.msra.mxu0 %v1918
      %1924 = vmatprep.subr.mxu0 %v1917
      %1925 = vmatpush1.msra.mxu0 %v1916
      %1926 = vmatprep.subr.mxu0 %v1915
      %1927 = vmatpush1.msra.mxu0 %v1914
      %1928 = vmatprep.subr.mxu0 %v1913
      %1929 = vmatpush1.msra.mxu0 %v1912
      %1930 = vmatprep.subr.mxu0 %v1911
      %1931 = vmatpush1.msra.mxu0 %v1910
      %1932 = vmatprep.subr.mxu0 %v1909
      %1933 = vmatpush1.msra.mxu0 %v1908
      %1934 = vmatprep.subr.mxu0 %v1907
      %1935 = vmatpush1.msra.mxu0 %v1906
      %1936 = vmatprep.subr.mxu0 %v1905
      %1937 = vmatpush1.msra.mxu0 %v1904
      %1938 = vmatprep.subr.mxu0 %v1903
      %1939 = vmatpush1.msra.mxu0 %v1902
      %1940 = vmatprep.subr.mxu0 %v1901
      %1941 = vmatpush1.msra.mxu0 %v1900
      %1942 = vmatprep.subr.mxu0 %v1899
      %1943 = vmatpush1.msra.mxu0 %v1898
      %1944 = vmatprep.subr.mxu0 %v1897
      %1945 = vmatpush1.msra.mxu0 %v1896
      %1946 = vmatprep.subr.mxu0 %v1895
      %1947 = vmatpush1.msra.mxu0 %v1894
      %1948 = vmatprep.subr.mxu0 %v1893
      %1949 = vmatpush1.msra.mxu0 %v1892
      %1950 = vmatprep.subr.mxu0 %v1891
      %1951 = vmatpush1.msra.mxu0 %v1890
      %1952 = vmatprep.subr.mxu0 %v1889
      %1953 = vmatpush1.msra.mxu0 %v1888
      %1954 = vmatprep.subr.mxu0 0.0
      %1955 = vmatpush2.msra.mxu0 0.0
      %1956 = vmatprep.subr.mxu0 0.0
      %1957 = vmatpush2.msra.mxu0 0.0
      %1958 = vmatprep.subr.mxu0 0.0
      %1959 = vmatpush2.msra.mxu0 0.0
      %1960 = vmatprep.subr.mxu0 0.0
      %1961 = vmatpush2.msra.mxu0 0.0
      %1962 = vmatprep.subr.mxu0 0.0
      %1963 = vmatpush2.msra.mxu0 0.0
      %1964 = vmatprep.subr.mxu0 0.0
      %1965 = vmatpush2.msra.mxu0 0.0
      %1966 = vmatprep.subr.mxu0 0.0
      %1967 = vmatpush2.msra.mxu0 0.0
      %1968 = vmatprep.subr.mxu0 0.0
      %1969 = vmatpush2.msra.mxu0 0.0
      %1970 = vmatprep.subr.mxu0 0.0
      %1971 = vmatpush2.msra.mxu0 0.0
      %1972 = vmatprep.subr.mxu0 0.0
      %1973 = vmatpush2.msra.mxu0 0.0
      %1974 = vmatprep.subr.mxu0 0.0
      %1975 = vmatpush2.msra.mxu0 0.0
      %1976 = vmatprep.subr.mxu0 0.0
      %1977 = vmatpush2.msra.mxu0 0.0
      %1978 = vmatprep.subr.mxu0 0.0
      %1979 = vmatpush2.msra.mxu0 0.0
      %1980 = vmatprep.subr.mxu0 0.0
      %1981 = vmatpush2.msra.mxu0 0.0
      %1982 = vmatprep.subr.mxu0 0.0
      %1983 = vmatpush2.msra.mxu0 0.0
      %1984 = vmatprep.subr.mxu0 0.0
      %1985 = vmatpush2.msra.mxu0 0.0
      %1986 = vmatprep.mubr.f32.mxu0 0.0
      %1987 = vmatmul.mubr.f32.gmra.mxu0 %v1921
      %v1988 = vpop.f32.mrf.mxu0
      %v1989 = vadd.f32 %v251, %v1988
      %v1990 = vpop.f32.mrf.mxu0
      %v1991 = vadd.f32 %v251, %v1990
      %1992 = vdwg.mxu0
      %v1995 = vcombine.low %v1989, %v1991
      %s1997 = scalar_lea.vmem %s205, 112
      %1998 = vst [vmem:[%s1997] sm:$0x77] %v1995
      %v1999 = vtanh.pop %v1989
      %v2000 = vtanh.pop %v1991
      %v2003 = vcombine.low %v1999, %v2000
      %s2005 = scalar_lea.vmem %s210, 112
      %2006 = vst [vmem:[%s2005] sm:$0x77] %v2003
      %v2007 = vld [vmem:[%s1411] sm:$0xff]
      %v2008 = vld [vmem:[%s1411 + $0x8] sm:$0xff]
      %v2009 = vld [vmem:[%s1411 + $0x10] sm:$0xff]
      %v2010 = vld [vmem:[%s1411 + $0x18] sm:$0xff]
      %v2011 = vld [vmem:[%s1411 + $0x20] sm:$0xff]
      %v2012 = vld [vmem:[%s1411 + $0x28] sm:$0xff]
      %v2013 = vld [vmem:[%s1411 + $0x30] sm:$0xff]
      %v2014 = vld [vmem:[%s1411 + $0x38] sm:$0xff]
      %v2015 = vld [vmem:[%s1171] sm:$0xff]
      %v2016 = vld [vmem:[%s1171 + $0x8] sm:$0xff]
      %v2017 = vld [vmem:[%s1171 + $0x10] sm:$0xff]
      %v2018 = vld [vmem:[%s1171 + $0x18] sm:$0xff]
      %v2019 = vld [vmem:[%s1171 + $0x20] sm:$0xff]
      %v2020 = vld [vmem:[%s1171 + $0x28] sm:$0xff]
      %v2021 = vld [vmem:[%s1171 + $0x30] sm:$0xff]
      %v2022 = vld [vmem:[%s1171 + $0x38] sm:$0xff]
      %v2023 = vld [vmem:[%s455] sm:$0xff]
      %v2024 = vld [vmem:[%s455 + $0x8] sm:$0xff]
      %v2025 = vld [vmem:[%s455 + $0x10] sm:$0xff]
      %v2026 = vld [vmem:[%s455 + $0x18] sm:$0xff]
      %v2027 = vld [vmem:[%s455 + $0x20] sm:$0xff]
      %v2028 = vld [vmem:[%s455 + $0x28] sm:$0xff]
      %v2029 = vld [vmem:[%s455 + $0x30] sm:$0xff]
      %v2030 = vld [vmem:[%s455 + $0x38] sm:$0xff]
      %v2031 = vld [vmem:[%s212] sm:$0xff]
      %v2032 = vld [vmem:[%s212 + $0x8] sm:$0xff]
      %v2033 = vld [vmem:[%s212 + $0x10] sm:$0xff]
      %v2034 = vld [vmem:[%s212 + $0x18] sm:$0xff]
      %v2035 = vld [vmem:[%s212 + $0x20] sm:$0xff]
      %v2036 = vld [vmem:[%s212 + $0x28] sm:$0xff]
      %v2037 = vld [vmem:[%s212 + $0x30] sm:$0xff]
      %v2038 = vld [vmem:[%s212 + $0x38] sm:$0xff]
      %s2039 = scalar_lea.vmem %s1, 60
      %v2040 = vld [vmem:[%s2039] sm:$0x7]
      %2041 = vmatprep.subr.mxu0 %v2038
      %2042 = vmatpush1.msra.mxu0 %v2037
      %2043 = vmatprep.subr.mxu0 %v2036
      %2044 = vmatpush1.msra.mxu0 %v2035
      %2045 = vmatprep.subr.mxu0 %v2034
      %2046 = vmatpush1.msra.mxu0 %v2033
      %2047 = vmatprep.subr.mxu0 %v2032
      %2048 = vmatpush1.msra.mxu0 %v2031
      %2049 = vmatprep.subr.mxu0 %v2030
      %2050 = vmatpush1.msra.mxu0 %v2029
      %2051 = vmatprep.subr.mxu0 %v2028
      %2052 = vmatpush1.msra.mxu0 %v2027
      %2053 = vmatprep.subr.mxu0 %v2026
      %2054 = vmatpush1.msra.mxu0 %v2025
      %2055 = vmatprep.subr.mxu0 %v2024
      %2056 = vmatpush1.msra.mxu0 %v2023
      %2057 = vmatprep.subr.mxu0 %v2022
      %2058 = vmatpush1.msra.mxu0 %v2021
      %2059 = vmatprep.subr.mxu0 %v2020
      %2060 = vmatpush1.msra.mxu0 %v2019
      %2061 = vmatprep.subr.mxu0 %v2018
      %2062 = vmatpush1.msra.mxu0 %v2017
      %2063 = vmatprep.subr.mxu0 %v2016
      %2064 = vmatpush1.msra.mxu0 %v2015
      %2065 = vmatprep.subr.mxu0 %v2014
      %2066 = vmatpush1.msra.mxu0 %v2013
      %2067 = vmatprep.subr.mxu0 %v2012
      %2068 = vmatpush1.msra.mxu0 %v2011
      %2069 = vmatprep.subr.mxu0 %v2010
      %2070 = vmatpush1.msra.mxu0 %v2009
      %2071 = vmatprep.subr.mxu0 %v2008
      %2072 = vmatpush1.msra.mxu0 %v2007
      %2073 = vmatprep.subr.mxu0 0.0
      %2074 = vmatpush2.msra.mxu0 0.0
      %2075 = vmatprep.subr.mxu0 0.0
      %2076 = vmatpush2.msra.mxu0 0.0
      %2077 = vmatprep.subr.mxu0 0.0
      %2078 = vmatpush2.msra.mxu0 0.0
      %2079 = vmatprep.subr.mxu0 0.0
      %2080 = vmatpush2.msra.mxu0 0.0
      %2081 = vmatprep.subr.mxu0 0.0
      %2082 = vmatpush2.msra.mxu0 0.0
      %2083 = vmatprep.subr.mxu0 0.0
      %2084 = vmatpush2.msra.mxu0 0.0
      %2085 = vmatprep.subr.mxu0 0.0
      %2086 = vmatpush2.msra.mxu0 0.0
      %2087 = vmatprep.subr.mxu0 0.0
      %2088 = vmatpush2.msra.mxu0 0.0
      %2089 = vmatprep.subr.mxu0 0.0
      %2090 = vmatpush2.msra.mxu0 0.0
      %2091 = vmatprep.subr.mxu0 0.0
      %2092 = vmatpush2.msra.mxu0 0.0
      %2093 = vmatprep.subr.mxu0 0.0
      %2094 = vmatpush2.msra.mxu0 0.0
      %2095 = vmatprep.subr.mxu0 0.0
      %2096 = vmatpush2.msra.mxu0 0.0
      %2097 = vmatprep.subr.mxu0 0.0
      %2098 = vmatpush2.msra.mxu0 0.0
      %2099 = vmatprep.subr.mxu0 0.0
      %2100 = vmatpush2.msra.mxu0 0.0
      %2101 = vmatprep.subr.mxu0 0.0
      %2102 = vmatpush2.msra.mxu0 0.0
      %2103 = vmatprep.subr.mxu0 0.0
      %2104 = vmatpush2.msra.mxu0 0.0
      %2105 = vmatprep.mubr.f32.mxu0 0.0
      %2106 = vmatmul.mubr.f32.gmra.mxu0 %v2040
      %v2107 = vpop.f32.mrf.mxu0
      %v2108 = vadd.f32 %v251, %v2107
      %v2109 = vpop.f32.mrf.mxu0
      %v2110 = vadd.f32 %v251, %v2109
      %2111 = vdwg.mxu0
      %v2114 = vcombine.low %v2108, %v2110
      %s2116 = scalar_lea.vmem %s205, 120
      %2117 = vst [vmem:[%s2116] sm:$0x77] %v2114
      %v2118 = vtanh.pop %v2108
      %v2119 = vtanh.pop %v2110
      %v2122 = vcombine.low %v2118, %v2119
      %s2124 = scalar_lea.vmem %s210, 120
      %2125 = vst [vmem:[%s2124] sm:$0x77] %v2122
      %p2126 = scmp.lt.s32.totalorder %s16, 1
      %s2127 = scalar_select %p2126, %s16, 1
      %s2128 = smul.addr %s2127, 32
      %s2129 = smul.addr %s2128, 4
      %s2130 = scalar_lea.vmem %s3, %s2129
      %p2131 = scmp.lt.s32.totalorder %s16, 1
      %s2132 = scalar_select %p2131, %s16, 1
      %s2133 = smul.addr %s2132, 32
      %s2134 = smul.addr %s2133, 4
      %s2135 = scalar_lea.vmem %s4, %s2134
      // Predicated region
      $region33: #{generator3layers_forward.5} parent=31 // pred_check
        %p2136 = pneg %p102
      $region34: #{generator3layers_forward.5} parent=31 // pred_check_branch
        %2138 = sbr.rel (%p2136) target = $region36
      $region35: #{generator3layers_forward.5} parent=31 // pred_region
        _
      $region36: #{generator3layers_forward.5} parent=31 // pred_fallthru
        _
      // Predicated region
      $region37: #{generator3layers_forward.5} parent=31 // pred_check
        %p2139 = pneg %p128
      $region38: #{generator3layers_forward.5} parent=31 // pred_check_branch
        %2141 = sbr.rel (%p2139) target = $region40
      $region39: #{generator3layers_forward.5} parent=31 // pred_region
        _
      $region40: #{generator3layers_forward.5} parent=31 // pred_fallthru
        _
    $region32: #{generator3layers_forward.5} parent=5 // pred_fallthru
      _
    %p2142 = scmp.le.s32.totalorder 2, %s11
    // Predicated region
    $region41: #{generator3layers_forward.5} parent=5 // pred_check
      %p2143 = pneg %p2142
    $region42: #{generator3layers_forward.5} parent=5 // pred_check_branch
      %2145 = sbr.rel (%p2143) target = $region44
    $region43: #{generator3layers_forward.5} parent=5 // pred_region
      %s2146 = ssub.s32 %s11, 2
      // Predicated region
      $region45: #{generator3layers_forward.5} parent=43 // pred_check
        %p2147 = pneg %p108
      $region46: #{generator3layers_forward.5} parent=43 // pred_check_branch
        %2149 = sbr.rel (%p2147) target = $region48
      $region47: #{generator3layers_forward.5} parent=43 // pred_region
        %p2150 = scmp.lt.s32.totalorder %s17, 1
        %s2151 = scalar_select %p2150, %s17, 1
        %s2152 = smul.addr %s2151, 32
        %s2153 = smul.addr %s2152, 4
        %s2154 = scalar_lea.vmem %s3, %s2153
      $region48: #{generator3layers_forward.5} parent=43 // pred_fallthru
        _
      // Predicated region
      $region49: #{generator3layers_forward.5} parent=43 // pred_check
        %p2155 = pneg %p134
      $region50: #{generator3layers_forward.5} parent=43 // pred_check_branch
        %2157 = sbr.rel (%p2155) target = $region52
      $region51: #{generator3layers_forward.5} parent=43 // pred_region
        %p2158 = scmp.lt.s32.totalorder %s17, 1
        %s2159 = scalar_select %p2158, %s17, 1
        %s2160 = smul.addr %s2159, 32
        %s2161 = smul.addr %s2160, 4
        %s2162 = scalar_lea.vmem %s4, %s2161
      $region52: #{generator3layers_forward.5} parent=43 // pred_fallthru
        _
    $region44: #{generator3layers_forward.5} parent=5 // pred_fallthru
      _
  $region6: #{generator3layers_forward.5} parent=0 // loop_footer
    %s15 = sadd.s32 1, %s11
  $region7: #{generator3layers_forward.5} parent=0 // loop_footer_branch
    %10 = sbr.rel target = $region3
  $region8: #{generator3layers_forward.5} parent=0 // loop_exit
    _

// kernel: generator3layers_forward.4
$region0: #{generator3layers_forward.4}
  #allocation0 [shape = 'u32[]', space=smem, size = 0x4, offset = 0x4, fixed_abs, tag = 'smem constant byte address 0x4 - core index']
  #allocation1 [shape = 'u32[144,128]{1,0:T(1,128)}', space=vmem, size = 0x12000, scoped, tag = 'internal scratch']
  %s0 = inlined_call_operand.vmem [shape: f32[2,6,6,128], index: 0, kind: input, shape index: {}]
  %s1 = inlined_call_operand.hbm [shape: f32[16,4,128], index: 1, kind: input, shape index: {}]
  %s2 = inlined_call_operand.vmem [shape: f32[128,32], index: 2, kind: input, shape index: {}]
  %s3 = inlined_call_operand.hbm [shape: f32[1,32], index: 3, kind: input, shape index: {}]
  %s4 = inlined_call_operand.hbm [shape: f32[1,32], index: 4, kind: input, shape index: {}]
  %s5 = inlined_call_operand.vmem [shape: f32[16,32,32], index: 5, kind: output, shape index: {}]
  %s6 = sld [smem:[#allocation0]]
  $region42: #{generator3layers_forward.4} parent=0
    _
  %s8 = ssub.s32 1, %s6
  %s9 = scalar_select 0, %s8, %s6
  $region1: #{generator3layers_forward.4} parent=0
    #allocation2 [shape = 'u8[32768]{0}', space=vmem, size = 0x8000, scoped, tag = 'input window, operand 1, single buffered']
    #allocation3 [shape = 's32[1]{0}', space=sflag, size = 0x4, scoped, tag = 'scoped memory for generator3layers_forward.4']
    #allocation4 [shape = 'u8[512]{0}', space=vmem, size = 0x400, scoped, tag = 'input window, operand 3, single buffered']
    #allocation5 [shape = 's32[1]{0}', space=sflag, size = 0x4, scoped, tag = 'scoped memory for generator3layers_forward.4']
    #allocation6 [shape = 'u8[512]{0}', space=vmem, size = 0x400, scoped, tag = 'input window, operand 4, single buffered']
    %10 = vsyncpa [#allocation3], 0
    %11 = vsyncpa [#allocation5], 0
    // Predicated region
    $region2: #{generator3layers_forward.4} parent=1 // pred_check
      _
    $region3: #{generator3layers_forward.4} parent=1 // pred_check_branch
      %13 = sbr.rel (0) target = $region5
    $region4: #{generator3layers_forward.4} parent=1 // pred_region
      _
    $region5: #{generator3layers_forward.4} parent=1 // pred_fallthru
      _
    // Predicated region
    $region6: #{generator3layers_forward.4} parent=1 // pred_check
      _
    $region7: #{generator3layers_forward.4} parent=1 // pred_check_branch
      %15 = sbr.rel (0) target = $region9
    $region8: #{generator3layers_forward.4} parent=1 // pred_region
      %s17 = ssub.s32 1024, 1024
      %18 = vsyncadd [#allocation3], %s17
      %s19 = sshll.u32 [#allocation2], 4
      %s20 = int_to_ptr.vmem [resolvable:$true] %s19
      %25 = dma.hbm_to_vmem [thread:$0]  %s1, 1024, %s20, [#allocation3], 64, 64, 4
    $region9: #{generator3layers_forward.4} parent=1 // pred_fallthru
      _
    // Predicated region
    $region10: #{generator3layers_forward.4} parent=1 // pred_check
      _
    $region11: #{generator3layers_forward.4} parent=1 // pred_check_branch
      %27 = sbr.rel (0) target = $region13
    $region12: #{generator3layers_forward.4} parent=1 // pred_region
      _
    $region13: #{generator3layers_forward.4} parent=1 // pred_fallthru
      _
    // Predicated region
    $region14: #{generator3layers_forward.4} parent=1 // pred_check
      _
    $region15: #{generator3layers_forward.4} parent=1 // pred_check_branch
      %29 = sbr.rel (0) target = $region17
    $region16: #{generator3layers_forward.4} parent=1 // pred_region
      %s31 = ssub.s32 16, 16
      %32 = vsyncadd [#allocation5], %s31
      %s34 = sshll.u32 [#allocation4], 4
      %s35 = int_to_ptr.vmem [resolvable:$true] %s34
      %37 = dma.hbm_to_vmem [thread:$0]  %s3, 16, %s35, [#allocation5]
    $region17: #{generator3layers_forward.4} parent=1 // pred_fallthru
      _
    // Predicated region
    $region18: #{generator3layers_forward.4} parent=1 // pred_check
      _
    $region19: #{generator3layers_forward.4} parent=1 // pred_check_branch
      %39 = sbr.rel (0) target = $region21
    $region20: #{generator3layers_forward.4} parent=1 // pred_region
      %s41 = ssub.s32 16, 16
      %42 = vsyncadd [#allocation5], %s41
      %s44 = sshll.u32 [#allocation6], 4
      %s45 = int_to_ptr.vmem [resolvable:$true] %s44
      %47 = dma.hbm_to_vmem [thread:$0]  %s4, 16, %s45, [#allocation5]
    $region21: #{generator3layers_forward.4} parent=1 // pred_fallthru
      _
    // Predicated region
    $region22: #{generator3layers_forward.4} parent=1 // pred_check
      _
    $region23: #{generator3layers_forward.4} parent=1 // pred_check_branch
      %49 = sbr.rel (0) target = $region25
    $region24: #{generator3layers_forward.4} parent=1 // pred_region
      %50 = dma.done [#allocation3], 1024
    $region25: #{generator3layers_forward.4} parent=1 // pred_fallthru
      _
    // Predicated region
    $region26: #{generator3layers_forward.4} parent=1 // pred_check
      _
    $region27: #{generator3layers_forward.4} parent=1 // pred_check_branch
      %52 = sbr.rel (0) target = $region29
    $region28: #{generator3layers_forward.4} parent=1 // pred_region
      %53 = dma.done [#allocation5], 16
    $region29: #{generator3layers_forward.4} parent=1 // pred_fallthru
      _
    // Predicated region
    $region30: #{generator3layers_forward.4} parent=1 // pred_check
      _
    $region31: #{generator3layers_forward.4} parent=1 // pred_check_branch
      %55 = sbr.rel (0) target = $region33
    $region32: #{generator3layers_forward.4} parent=1 // pred_region
      %56 = dma.done [#allocation5], 16
    $region33: #{generator3layers_forward.4} parent=1 // pred_fallthru
      _
    %v57 = vld [vmem:[%s0] sm:$0x3f]
    %v58 = vld [vmem:[%s0 + $0x8] sm:$0x3f]
    %v59 = vld [vmem:[%s0 + $0x10] sm:$0x3f]
    %v60 = vld [vmem:[%s0 + $0x18] sm:$0x3f]
    %v61 = vld [vmem:[%s0 + $0x20] sm:$0x3f]
    %v62 = vld [vmem:[%s0 + $0x28] sm:$0x3f]
    %v63 = vld [vmem:[%s0 + $0x30] sm:$0x3f]
    %v64 = vld [vmem:[%s0 + $0x38] sm:$0x3f]
    %v65 = vld [vmem:[%s0 + $0x40] sm:$0x3f]
    %v66 = vld [vmem:[%s0 + $0x48] sm:$0x3f]
    %v67 = vld [vmem:[%s0 + $0x50] sm:$0x3f]
    %v68 = vld [vmem:[%s0 + $0x58] sm:$0x3f]
    %v69 = vld [vmem:[#allocation2] sm:$0x1]
    %v70 = vlaneseq
    %v71 = vshrl.u32 %v70, 7
    %v72 = vsub.s32 0, %v71
    %v73 = vrot.slane %v69, %v72
    %v74 = vmul.f32 %v58, %v73
    %v75 = vmul.f32 %v59, %v73
    %v76 = vmul.f32 %v60, %v73
    %v77 = vmul.f32 %v61, %v73
    %v78 = vmul.f32 %v64, %v73
    %v79 = vmul.f32 %v65, %v73
    %v80 = vmul.f32 %v66, %v73
    %v81 = vmul.f32 %v67, %v73
    %v82 = vadd.f32 %v74, 0.0
    %v83 = vadd.f32 %v75, 0.0
    %v84 = vadd.f32 %v76, 0.0
    %v85 = vadd.f32 %v77, 0.0
    %v86 = vadd.f32 %v78, 0.0
    %v87 = vadd.f32 %v79, 0.0
    %v88 = vadd.f32 %v80, 0.0
    %v89 = vadd.f32 %v81, 0.0
    %v90 = vld [vmem:[#allocation2 + $0x1] sm:$0x1]
    %v91 = vlaneseq
    %v92 = vshrl.u32 %v91, 7
    %v93 = vsub.s32 0, %v92
    %v94 = vrot.slane %v90, %v93
    %v95 = vmul.f32 %v58, %v94
    %v96 = vmul.f32 %v59, %v94
    %v97 = vmul.f32 %v60, %v94
    %v98 = vmul.f32 %v61, %v94
    %v99 = vmul.f32 %v64, %v94
    %v100 = vmul.f32 %v65, %v94
    %v101 = vmul.f32 %v66, %v94
    %v102 = vmul.f32 %v67, %v94
    %v111 = vrot.slane %v95, 7
    %v112 = vrot.slane %v96, 7
    %v113 = vrot.slane %v97, 7
    %v114 = vrot.slane %v98, 7
    %v115 = vrot.slane %v99, 7
    %v116 = vrot.slane %v100, 7
    %v117 = vrot.slane %v101, 7
    %v118 = vrot.slane %v102, 7
    %v127 = vadd.f32 %v82, %v111
    %v128 = vadd.f32 %v83, %v112
    %v129 = vadd.f32 %v84, %v113
    %v130 = vadd.f32 %v85, %v114
    %v131 = vadd.f32 %v86, %v115
    %v132 = vadd.f32 %v87, %v116
    %v133 = vadd.f32 %v88, %v117
    %v134 = vadd.f32 %v89, %v118
    %v135 = vld [vmem:[#allocation2 + $0x2] sm:$0x1]
    %v136 = vlaneseq
    %v137 = vshrl.u32 %v136, 7
    %v138 = vsub.s32 0, %v137
    %v139 = vrot.slane %v135, %v138
    %v140 = vmul.f32 %v57, %v139
    %v141 = vmul.f32 %v58, %v139
    %v142 = vmul.f32 %v59, %v139
    %v143 = vmul.f32 %v60, %v139
    %v144 = vmul.f32 %v63, %v139
    %v145 = vmul.f32 %v64, %v139
    %v146 = vmul.f32 %v65, %v139
    %v147 = vmul.f32 %v66, %v139
    %v148 = vadd.f32 %v127, %v140
    %v149 = vadd.f32 %v128, %v141
    %v150 = vadd.f32 %v129, %v142
    %v151 = vadd.f32 %v130, %v143
    %v152 = vadd.f32 %v131, %v144
    %v153 = vadd.f32 %v132, %v145
    %v154 = vadd.f32 %v133, %v146
    %v155 = vadd.f32 %v134, %v147
    %v156 = vld [vmem:[#allocation2 + $0x3] sm:$0x1]
    %v157 = vlaneseq
    %v158 = vshrl.u32 %v157, 7
    %v159 = vsub.s32 0, %v158
    %v160 = vrot.slane %v156, %v159
    %v161 = vmul.f32 %v57, %v160
    %v162 = vmul.f32 %v58, %v160
    %v163 = vmul.f32 %v59, %v160
    %v164 = vmul.f32 %v60, %v160
    %v165 = vmul.f32 %v63, %v160
    %v166 = vmul.f32 %v64, %v160
    %v167 = vmul.f32 %v65, %v160
    %v168 = vmul.f32 %v66, %v160
    %v177 = vrot.slane %v161, 7
    %v178 = vrot.slane %v162, 7
    %v179 = vrot.slane %v163, 7
    %v180 = vrot.slane %v164, 7
    %v181 = vrot.slane %v165, 7
    %v182 = vrot.slane %v166, 7
    %v183 = vrot.slane %v167, 7
    %v184 = vrot.slane %v168, 7
    %v193 = vadd.f32 %v148, %v177
    %v194 = vadd.f32 %v149, %v178
    %v195 = vadd.f32 %v150, %v179
    %v196 = vadd.f32 %v151, %v180
    %v197 = vadd.f32 %v152, %v181
    %v198 = vadd.f32 %v153, %v182
    %v199 = vadd.f32 %v154, %v183
    %v200 = vadd.f32 %v155, %v184
    %v209 = vcombine.high %v193, %v193
    %v210 = vcombine.high %v194, %v194
    %v211 = vcombine.high %v195, %v195
    %v212 = vcombine.high %v196, %v196
    %v213 = vcombine.high %v197, %v197
    %v214 = vcombine.high %v198, %v198
    %v215 = vcombine.high %v199, %v199
    %v216 = vcombine.high %v200, %v200
    %vm217 = vcmask 1042432
    %vm218 = vcmask 1046532
    %vm219 = vmor %vm217, %vm218
    %v220 = vrot.slane %v193, 5
    %v221 = vrot.slane %v220, 4
    %v222 = vrot.slane %v209, 5
    %v223 = vsel %vm219, %v221, %v222
    %v224 = vrot.slane %v194, 5
    %v225 = vrot.slane %v224, 4
    %v226 = vrot.slane %v210, 5
    %v227 = vsel %vm219, %v225, %v226
    %v228 = vrot.slane %v195, 5
    %v229 = vrot.slane %v228, 4
    %v230 = vrot.slane %v211, 5
    %v231 = vsel %vm219, %v229, %v230
    %v232 = vrot.slane %v196, 5
    %v233 = vrot.slane %v232, 4
    %v234 = vrot.slane %v212, 5
    %v235 = vsel %vm219, %v233, %v234
    %v236 = vrot.slane %v197, 5
    %v237 = vrot.slane %v236, 4
    %v238 = vrot.slane %v213, 5
    %v239 = vsel %vm219, %v237, %v238
    %v240 = vrot.slane %v198, 5
    %v241 = vrot.slane %v240, 4
    %v242 = vrot.slane %v214, 5
    %v243 = vsel %vm219, %v241, %v242
    %v244 = vrot.slane %v199, 5
    %v245 = vrot.slane %v244, 4
    %v246 = vrot.slane %v215, 5
    %v247 = vsel %vm219, %v245, %v246
    %v248 = vrot.slane %v200, 5
    %v249 = vrot.slane %v248, 4
    %v250 = vrot.slane %v216, 5
    %v251 = vsel %vm219, %v249, %v250
    %v252 = vld [vmem:[%s2] sm:$0xff]
    %v253 = vld [vmem:[%s2 + $0x8] sm:$0xff]
    %v254 = vld [vmem:[%s2 + $0x10] sm:$0xff]
    %v255 = vld [vmem:[%s2 + $0x18] sm:$0xff]
    %v256 = vld [vmem:[%s2 + $0x20] sm:$0xff]
    %v257 = vld [vmem:[%s2 + $0x28] sm:$0xff]
    %v258 = vld [vmem:[%s2 + $0x30] sm:$0xff]
    %v259 = vld [vmem:[%s2 + $0x38] sm:$0xff]
    %v260 = vld [vmem:[%s2 + $0x40] sm:$0xff]
    %v261 = vld [vmem:[%s2 + $0x48] sm:$0xff]
    %v262 = vld [vmem:[%s2 + $0x50] sm:$0xff]
    %v263 = vld [vmem:[%s2 + $0x58] sm:$0xff]
    %v264 = vld [vmem:[%s2 + $0x60] sm:$0xff]
    %v265 = vld [vmem:[%s2 + $0x68] sm:$0xff]
    %v266 = vld [vmem:[%s2 + $0x70] sm:$0xff]
    %v267 = vld [vmem:[%s2 + $0x78] sm:$0xff]
    %v268 = vcombine.low %v223, %v227
    %v269 = vcombine.low %v231, %v235
    %v270 = vcombine.low %v239, %v243
    %v271 = vcombine.low %v247, %v251
    %276 = vmatprep.subr.mxu0 0.0
    %277 = vmatpush1.msra.mxu0 %v267
    %278 = vmatprep.subr.mxu0 0.0
    %279 = vmatpush1.msra.mxu0 %v266
    %280 = vmatprep.subr.mxu0 0.0
    %281 = vmatpush1.msra.mxu0 %v265
    %282 = vmatprep.subr.mxu0 0.0
    %283 = vmatpush1.msra.mxu0 %v264
    %284 = vmatprep.subr.mxu0 0.0
    %285 = vmatpush1.msra.mxu0 %v263
    %286 = vmatprep.subr.mxu0 0.0
    %287 = vmatpush1.msra.mxu0 %v262
    %288 = vmatprep.subr.mxu0 0.0
    %289 = vmatpush1.msra.mxu0 %v261
    %290 = vmatprep.subr.mxu0 0.0
    %291 = vmatpush1.msra.mxu0 %v260
    %292 = vmatprep.subr.mxu0 0.0
    %293 = vmatpush1.msra.mxu0 %v259
    %294 = vmatprep.subr.mxu0 0.0
    %295 = vmatpush1.msra.mxu0 %v258
    %296 = vmatprep.subr.mxu0 0.0
    %297 = vmatpush1.msra.mxu0 %v257
    %298 = vmatprep.subr.mxu0 0.0
    %299 = vmatpush1.msra.mxu0 %v256
    %300 = vmatprep.subr.mxu0 0.0
    %301 = vmatpush1.msra.mxu0 %v255
    %302 = vmatprep.subr.mxu0 0.0
    %303 = vmatpush1.msra.mxu0 %v254
    %304 = vmatprep.subr.mxu0 0.0
    %305 = vmatpush1.msra.mxu0 %v253
    %306 = vmatprep.subr.mxu0 0.0
    %307 = vmatpush1.msra.mxu0 %v252
    %308 = vmatprep.subr.mxu0 0.0
    %309 = vmatpush2.msra.mxu0 0.0
    %310 = vmatprep.subr.mxu0 0.0
    %311 = vmatpush2.msra.mxu0 0.0
    %312 = vmatprep.subr.mxu0 0.0
    %313 = vmatpush2.msra.mxu0 0.0
    %314 = vmatprep.subr.mxu0 0.0
    %315 = vmatpush2.msra.mxu0 0.0
    %316 = vmatprep.subr.mxu0 0.0
    %317 = vmatpush2.msra.mxu0 0.0
    %318 = vmatprep.subr.mxu0 0.0
    %319 = vmatpush2.msra.mxu0 0.0
    %320 = vmatprep.subr.mxu0 0.0
    %321 = vmatpush2.msra.mxu0 0.0
    %322 = vmatprep.subr.mxu0 0.0
    %323 = vmatpush2.msra.mxu0 0.0
    %324 = vmatprep.subr.mxu0 0.0
    %325 = vmatpush2.msra.mxu0 0.0
    %326 = vmatprep.subr.mxu0 0.0
    %327 = vmatpush2.msra.mxu0 0.0
    %328 = vmatprep.subr.mxu0 0.0
    %329 = vmatpush2.msra.mxu0 0.0
    %330 = vmatprep.subr.mxu0 0.0
    %331 = vmatpush2.msra.mxu0 0.0
    %332 = vmatprep.subr.mxu0 0.0
    %333 = vmatpush2.msra.mxu0 0.0
    %334 = vmatprep.subr.mxu0 0.0
    %335 = vmatpush2.msra.mxu0 0.0
    %336 = vmatprep.subr.mxu0 0.0
    %337 = vmatpush2.msra.mxu0 0.0
    %338 = vmatprep.subr.mxu0 0.0
    %339 = vmatpush2.msra.mxu0 0.0
    %340 = vmatprep.mubr.f32.mxu0 0.0
    %341 = vmatmul.mubr.f32.gmra.mxu0 %v268
    %v342 = vpop.f32.mrf.mxu0
    %v343 = vadd.f32 0.0, %v342
    %v344 = vpop.f32.mrf.mxu0
    %345 = vmatprep.mubr.f32.mxu0 0.0
    %346 = vmatmul.mubr.f32.gmra.mxu0 %v269
    %v347 = vpop.f32.mrf.mxu0
    %v348 = vadd.f32 0.0, %v347
    %v349 = vpop.f32.mrf.mxu0
    %350 = vmatprep.mubr.f32.mxu0 0.0
    %351 = vmatmul.mubr.f32.gmra.mxu0 %v270
    %v352 = vpop.f32.mrf.mxu0
    %v353 = vadd.f32 0.0, %v352
    %v354 = vpop.f32.mrf.mxu0
    %355 = vmatprep.mubr.f32.mxu0 0.0
    %356 = vmatmul.mubr.f32.gmra.mxu0 %v271
    %v357 = vpop.f32.mrf.mxu0
    %v358 = vadd.f32 0.0, %v357
    %v359 = vpop.f32.mrf.mxu0
    %360 = vdwg.mxu0
    %vm361 = vcmask 261120
    %362 = vst.msk [vmem:[%s5] sm:$0xff] %vm361, %v343
    %363 = vst.msk [vmem:[%s5 + $0x8] sm:$0xff] %vm361, %v348
    %364 = vst.msk [vmem:[%s5 + $0x10] sm:$0xff] %vm361, %v353
    %365 = vst.msk [vmem:[%s5 + $0x18] sm:$0xff] %vm361, %v358
    %v366 = vsel %vm361, %v343, 0.0
    %v367 = vsel %vm361, %v348, 0.0
    %v368 = vadd.f32 %v366, %v367
    %v369 = vsel %vm361, %v353, 0.0
    %v370 = vadd.f32 %v368, %v369
    %v371 = vsel %vm361, %v358, 0.0
    %v372 = vadd.f32 %v370, %v371
    %v373 = vrot.slane %v372, 4
    %v374 = vadd.f32 %v372, %v373
    %v375 = vrot.slane %v374, 2
    %v376 = vadd.f32 %v374, %v375
    %v377 = vrot.slane %v376, 1
    %v378 = vadd.f32 %v376, %v377
    %v379 = vadd.f32 %v378, 0.0
    %v380 = vmul.f32 %v343, %v343
    %v381 = vmul.f32 %v348, %v348
    %v382 = vmul.f32 %v353, %v353
    %v383 = vmul.f32 %v358, %v358
    %v384 = vsel %vm361, %v380, 0.0
    %v385 = vsel %vm361, %v381, 0.0
    %v386 = vadd.f32 %v384, %v385
    %v387 = vsel %vm361, %v382, 0.0
    %v388 = vadd.f32 %v386, %v387
    %v389 = vsel %vm361, %v383, 0.0
    %v390 = vadd.f32 %v388, %v389
    %v391 = vrot.slane %v390, 4
    %v392 = vadd.f32 %v390, %v391
    %v393 = vrot.slane %v392, 2
    %v394 = vadd.f32 %v392, %v393
    %v395 = vrot.slane %v394, 1
    %v396 = vadd.f32 %v394, %v395
    %v397 = vadd.f32 %v396, 0.0
    %s398 = scalar_lea.vmem [#allocation2], 4
    %v399 = vld [vmem:[%s398] sm:$0x1]
    %v400 = vlaneseq
    %v401 = vshrl.u32 %v400, 7
    %v402 = vsub.s32 0, %v401
    %v403 = vrot.slane %v399, %v402
    %v404 = vmul.f32 %v58, %v403
    %v405 = vmul.f32 %v59, %v403
    %v406 = vmul.f32 %v60, %v403
    %v407 = vmul.f32 %v61, %v403
    %v408 = vmul.f32 %v64, %v403
    %v409 = vmul.f32 %v65, %v403
    %v410 = vmul.f32 %v66, %v403
    %v411 = vmul.f32 %v67, %v403
    %v412 = vadd.f32 %v404, 0.0
    %v413 = vadd.f32 %v405, 0.0
    %v414 = vadd.f32 %v406, 0.0
    %v415 = vadd.f32 %v407, 0.0
    %v416 = vadd.f32 %v408, 0.0
    %v417 = vadd.f32 %v409, 0.0
    %v418 = vadd.f32 %v410, 0.0
    %v419 = vadd.f32 %v411, 0.0
    %v420 = vld [vmem:[%s398 + $0x1] sm:$0x1]
    %v421 = vlaneseq
    %v422 = vshrl.u32 %v421, 7
    %v423 = vsub.s32 0, %v422
    %v424 = vrot.slane %v420, %v423
    %v425 = vmul.f32 %v58, %v424
    %v426 = vmul.f32 %v59, %v424
    %v427 = vmul.f32 %v60, %v424
    %v428 = vmul.f32 %v61, %v424
    %v429 = vmul.f32 %v64, %v424
    %v430 = vmul.f32 %v65, %v424
    %v431 = vmul.f32 %v66, %v424
    %v432 = vmul.f32 %v67, %v424
    %v441 = vrot.slane %v425, 7
    %v442 = vrot.slane %v426, 7
    %v443 = vrot.slane %v427, 7
    %v444 = vrot.slane %v428, 7
    %v445 = vrot.slane %v429, 7
    %v446 = vrot.slane %v430, 7
    %v447 = vrot.slane %v431, 7
    %v448 = vrot.slane %v432, 7
    %v457 = vadd.f32 %v412, %v441
    %v458 = vadd.f32 %v413, %v442
    %v459 = vadd.f32 %v414, %v443
    %v460 = vadd.f32 %v415, %v444
    %v461 = vadd.f32 %v416, %v445
    %v462 = vadd.f32 %v417, %v446
    %v463 = vadd.f32 %v418, %v447
    %v464 = vadd.f32 %v419, %v448
    %v465 = vld [vmem:[%s398 + $0x2] sm:$0x1]
    %v466 = vlaneseq
    %v467 = vshrl.u32 %v466, 7
    %v468 = vsub.s32 0, %v467
    %v469 = vrot.slane %v465, %v468
    %v470 = vmul.f32 %v57, %v469
    %v471 = vmul.f32 %v58, %v469
    %v472 = vmul.f32 %v59, %v469
    %v473 = vmul.f32 %v60, %v469
    %v474 = vmul.f32 %v63, %v469
    %v475 = vmul.f32 %v64, %v469
    %v476 = vmul.f32 %v65, %v469
    %v477 = vmul.f32 %v66, %v469
    %v478 = vadd.f32 %v457, %v470
    %v479 = vadd.f32 %v458, %v471
    %v480 = vadd.f32 %v459, %v472
    %v481 = vadd.f32 %v460, %v473
    %v482 = vadd.f32 %v461, %v474
    %v483 = vadd.f32 %v462, %v475
    %v484 = vadd.f32 %v463, %v476
    %v485 = vadd.f32 %v464, %v477
    %v486 = vld [vmem:[%s398 + $0x3] sm:$0x1]
    %v487 = vlaneseq
    %v488 = vshrl.u32 %v487, 7
    %v489 = vsub.s32 0, %v488
    %v490 = vrot.slane %v486, %v489
    %v491 = vmul.f32 %v57, %v490
    %v492 = vmul.f32 %v58, %v490
    %v493 = vmul.f32 %v59, %v490
    %v494 = vmul.f32 %v60, %v490
    %v495 = vmul.f32 %v63, %v490
    %v496 = vmul.f32 %v64, %v490
    %v497 = vmul.f32 %v65, %v490
    %v498 = vmul.f32 %v66, %v490
    %v507 = vrot.slane %v491, 7
    %v508 = vrot.slane %v492, 7
    %v509 = vrot.slane %v493, 7
    %v510 = vrot.slane %v494, 7
    %v511 = vrot.slane %v495, 7
    %v512 = vrot.slane %v496, 7
    %v513 = vrot.slane %v497, 7
    %v514 = vrot.slane %v498, 7
    %v523 = vadd.f32 %v478, %v507
    %v524 = vadd.f32 %v479, %v508
    %v525 = vadd.f32 %v480, %v509
    %v526 = vadd.f32 %v481, %v510
    %v527 = vadd.f32 %v482, %v511
    %v528 = vadd.f32 %v483, %v512
    %v529 = vadd.f32 %v484, %v513
    %v530 = vadd.f32 %v485, %v514
    %v539 = vcombine.high %v523, %v523
    %v540 = vcombine.high %v524, %v524
    %v541 = vcombine.high %v525, %v525
    %v542 = vcombine.high %v526, %v526
    %v543 = vcombine.high %v527, %v527
    %v544 = vcombine.high %v528, %v528
    %v545 = vcombine.high %v529, %v529
    %v546 = vcombine.high %v530, %v530
    %v547 = vrot.slane %v523, 5
    %v548 = vrot.slane %v547, 4
    %v549 = vrot.slane %v539, 5
    %v550 = vsel %vm219, %v548, %v549
    %v551 = vrot.slane %v524, 5
    %v552 = vrot.slane %v551, 4
    %v553 = vrot.slane %v540, 5
    %v554 = vsel %vm219, %v552, %v553
    %v555 = vrot.slane %v525, 5
    %v556 = vrot.slane %v555, 4
    %v557 = vrot.slane %v541, 5
    %v558 = vsel %vm219, %v556, %v557
    %v559 = vrot.slane %v526, 5
    %v560 = vrot.slane %v559, 4
    %v561 = vrot.slane %v542, 5
    %v562 = vsel %vm219, %v560, %v561
    %v563 = vrot.slane %v527, 5
    %v564 = vrot.slane %v563, 4
    %v565 = vrot.slane %v543, 5
    %v566 = vsel %vm219, %v564, %v565
    %v567 = vrot.slane %v528, 5
    %v568 = vrot.slane %v567, 4
    %v569 = vrot.slane %v544, 5
    %v570 = vsel %vm219, %v568, %v569
    %v571 = vrot.slane %v529, 5
    %v572 = vrot.slane %v571, 4
    %v573 = vrot.slane %v545, 5
    %v574 = vsel %vm219, %v572, %v573
    %v575 = vrot.slane %v530, 5
    %v576 = vrot.slane %v575, 4
    %v577 = vrot.slane %v546, 5
    %v578 = vsel %vm219, %v576, %v577
    %v579 = vld [vmem:[%s2] sm:$0xff]
    %v580 = vld [vmem:[%s2 + $0x8] sm:$0xff]
    %v581 = vld [vmem:[%s2 + $0x10] sm:$0xff]
    %v582 = vld [vmem:[%s2 + $0x18] sm:$0xff]
    %v583 = vld [vmem:[%s2 + $0x20] sm:$0xff]
    %v584 = vld [vmem:[%s2 + $0x28] sm:$0xff]
    %v585 = vld [vmem:[%s2 + $0x30] sm:$0xff]
    %v586 = vld [vmem:[%s2 + $0x38] sm:$0xff]
    %v587 = vld [vmem:[%s2 + $0x40] sm:$0xff]
    %v588 = vld [vmem:[%s2 + $0x48] sm:$0xff]
    %v589 = vld [vmem:[%s2 + $0x50] sm:$0xff]
    %v590 = vld [vmem:[%s2 + $0x58] sm:$0xff]
    %v591 = vld [vmem:[%s2 + $0x60] sm:$0xff]
    %v592 = vld [vmem:[%s2 + $0x68] sm:$0xff]
    %v593 = vld [vmem:[%s2 + $0x70] sm:$0xff]
    %v594 = vld [vmem:[%s2 + $0x78] sm:$0xff]
    %v595 = vcombine.low %v550, %v554
    %v596 = vcombine.low %v558, %v562
    %v597 = vcombine.low %v566, %v570
    %v598 = vcombine.low %v574, %v578
    %603 = vmatprep.subr.mxu0 0.0
    %604 = vmatpush1.msra.mxu0 %v594
    %605 = vmatprep.subr.mxu0 0.0
    %606 = vmatpush1.msra.mxu0 %v593
    %607 = vmatprep.subr.mxu0 0.0
    %608 = vmatpush1.msra.mxu0 %v592
    %609 = vmatprep.subr.mxu0 0.0
    %610 = vmatpush1.msra.mxu0 %v591
    %611 = vmatprep.subr.mxu0 0.0
    %612 = vmatpush1.msra.mxu0 %v590
    %613 = vmatprep.subr.mxu0 0.0
    %614 = vmatpush1.msra.mxu0 %v589
    %615 = vmatprep.subr.mxu0 0.0
    %616 = vmatpush1.msra.mxu0 %v588
    %617 = vmatprep.subr.mxu0 0.0
    %618 = vmatpush1.msra.mxu0 %v587
    %619 = vmatprep.subr.mxu0 0.0
    %620 = vmatpush1.msra.mxu0 %v586
    %621 = vmatprep.subr.mxu0 0.0
    %622 = vmatpush1.msra.mxu0 %v585
    %623 = vmatprep.subr.mxu0 0.0
    %624 = vmatpush1.msra.mxu0 %v584
    %625 = vmatprep.subr.mxu0 0.0
    %626 = vmatpush1.msra.mxu0 %v583
    %627 = vmatprep.subr.mxu0 0.0
    %628 = vmatpush1.msra.mxu0 %v582
    %629 = vmatprep.subr.mxu0 0.0
    %630 = vmatpush1.msra.mxu0 %v581
    %631 = vmatprep.subr.mxu0 0.0
    %632 = vmatpush1.msra.mxu0 %v580
    %633 = vmatprep.subr.mxu0 0.0
    %634 = vmatpush1.msra.mxu0 %v579
    %635 = vmatprep.subr.mxu0 0.0
    %636 = vmatpush2.msra.mxu0 0.0
    %637 = vmatprep.subr.mxu0 0.0
    %638 = vmatpush2.msra.mxu0 0.0
    %639 = vmatprep.subr.mxu0 0.0
    %640 = vmatpush2.msra.mxu0 0.0
    %641 = vmatprep.subr.mxu0 0.0
    %642 = vmatpush2.msra.mxu0 0.0
    %643 = vmatprep.subr.mxu0 0.0
    %644 = vmatpush2.msra.mxu0 0.0
    %645 = vmatprep.subr.mxu0 0.0
    %646 = vmatpush2.msra.mxu0 0.0
    %647 = vmatprep.subr.mxu0 0.0
    %648 = vmatpush2.msra.mxu0 0.0
    %649 = vmatprep.subr.mxu0 0.0
    %650 = vmatpush2.msra.mxu0 0.0
    %651 = vmatprep.subr.mxu0 0.0
    %652 = vmatpush2.msra.mxu0 0.0
    %653 = vmatprep.subr.mxu0 0.0
    %654 = vmatpush2.msra.mxu0 0.0
    %655 = vmatprep.subr.mxu0 0.0
    %656 = vmatpush2.msra.mxu0 0.0
    %657 = vmatprep.subr.mxu0 0.0
    %658 = vmatpush2.msra.mxu0 0.0
    %659 = vmatprep.subr.mxu0 0.0
    %660 = vmatpush2.msra.mxu0 0.0
    %661 = vmatprep.subr.mxu0 0.0
    %662 = vmatpush2.msra.mxu0 0.0
    %663 = vmatprep.subr.mxu0 0.0
    %664 = vmatpush2.msra.mxu0 0.0
    %665 = vmatprep.subr.mxu0 0.0
    %666 = vmatpush2.msra.mxu0 0.0
    %667 = vmatprep.mubr.f32.mxu0 0.0
    %668 = vmatmul.mubr.f32.gmra.mxu0 %v595
    %v669 = vpop.f32.mrf.mxu0
    %v670 = vadd.f32 0.0, %v669
    %v671 = vpop.f32.mrf.mxu0
    %672 = vmatprep.mubr.f32.mxu0 0.0
    %673 = vmatmul.mubr.f32.gmra.mxu0 %v596
    %v674 = vpop.f32.mrf.mxu0
    %v675 = vadd.f32 0.0, %v674
    %v676 = vpop.f32.mrf.mxu0
    %677 = vmatprep.mubr.f32.mxu0 0.0
    %678 = vmatmul.mubr.f32.gmra.mxu0 %v597
    %v679 = vpop.f32.mrf.mxu0
    %v680 = vadd.f32 0.0, %v679
    %v681 = vpop.f32.mrf.mxu0
    %682 = vmatprep.mubr.f32.mxu0 0.0
    %683 = vmatmul.mubr.f32.gmra.mxu0 %v598
    %v684 = vpop.f32.mrf.mxu0
    %v685 = vadd.f32 0.0, %v684
    %v686 = vpop.f32.mrf.mxu0
    %687 = vdwg.mxu0
    %s688 = scalar_lea.vmem %s5, 32
    %689 = vst.msk [vmem:[%s688] sm:$0xff] %vm361, %v670
    %690 = vst.msk [vmem:[%s688 + $0x8] sm:$0xff] %vm361, %v675
    %691 = vst.msk [vmem:[%s688 + $0x10] sm:$0xff] %vm361, %v680
    %692 = vst.msk [vmem:[%s688 + $0x18] sm:$0xff] %vm361, %v685
    %v693 = vsel %vm361, %v670, 0.0
    %v694 = vsel %vm361, %v675, 0.0
    %v695 = vadd.f32 %v693, %v694
    %v696 = vsel %vm361, %v680, 0.0
    %v697 = vadd.f32 %v695, %v696
    %v698 = vsel %vm361, %v685, 0.0
    %v699 = vadd.f32 %v697, %v698
    %v700 = vrot.slane %v699, 4
    %v701 = vadd.f32 %v699, %v700
    %v702 = vrot.slane %v701, 2
    %v703 = vadd.f32 %v701, %v702
    %v704 = vrot.slane %v703, 1
    %v705 = vadd.f32 %v703, %v704
    %v706 = vadd.f32 %v379, %v705
    %v707 = vmul.f32 %v670, %v670
    %v708 = vmul.f32 %v675, %v675
    %v709 = vmul.f32 %v680, %v680
    %v710 = vmul.f32 %v685, %v685
    %v711 = vsel %vm361, %v707, 0.0
    %v712 = vsel %vm361, %v708, 0.0
    %v713 = vadd.f32 %v711, %v712
    %v714 = vsel %vm361, %v709, 0.0
    %v715 = vadd.f32 %v713, %v714
    %v716 = vsel %vm361, %v710, 0.0
    %v717 = vadd.f32 %v715, %v716
    %v718 = vrot.slane %v717, 4
    %v719 = vadd.f32 %v717, %v718
    %v720 = vrot.slane %v719, 2
    %v721 = vadd.f32 %v719, %v720
    %v722 = vrot.slane %v721, 1
    %v723 = vadd.f32 %v721, %v722
    %v724 = vadd.f32 %v397, %v723
    %s725 = scalar_lea.vmem [#allocation2], 8
    %v726 = vld [vmem:[%s725] sm:$0x1]
    %v727 = vlaneseq
    %v728 = vshrl.u32 %v727, 7
    %v729 = vsub.s32 0, %v728
    %v730 = vrot.slane %v726, %v729
    %v731 = vmul.f32 %v58, %v730
    %v732 = vmul.f32 %v59, %v730
    %v733 = vmul.f32 %v60, %v730
    %v734 = vmul.f32 %v61, %v730
    %v735 = vmul.f32 %v64, %v730
    %v736 = vmul.f32 %v65, %v730
    %v737 = vmul.f32 %v66, %v730
    %v738 = vmul.f32 %v67, %v730
    %v739 = vadd.f32 %v731, 0.0
    %v740 = vadd.f32 %v732, 0.0
    %v741 = vadd.f32 %v733, 0.0
    %v742 = vadd.f32 %v734, 0.0
    %v743 = vadd.f32 %v735, 0.0
    %v744 = vadd.f32 %v736, 0.0
    %v745 = vadd.f32 %v737, 0.0
    %v746 = vadd.f32 %v738, 0.0
    %v747 = vld [vmem:[%s725 + $0x1] sm:$0x1]
    %v748 = vlaneseq
    %v749 = vshrl.u32 %v748, 7
    %v750 = vsub.s32 0, %v749
    %v751 = vrot.slane %v747, %v750
    %v752 = vmul.f32 %v58, %v751
    %v753 = vmul.f32 %v59, %v751
    %v754 = vmul.f32 %v60, %v751
    %v755 = vmul.f32 %v61, %v751
    %v756 = vmul.f32 %v64, %v751
    %v757 = vmul.f32 %v65, %v751
    %v758 = vmul.f32 %v66, %v751
    %v759 = vmul.f32 %v67, %v751
    %v768 = vrot.slane %v752, 7
    %v769 = vrot.slane %v753, 7
    %v770 = vrot.slane %v754, 7
    %v771 = vrot.slane %v755, 7
    %v772 = vrot.slane %v756, 7
    %v773 = vrot.slane %v757, 7
    %v774 = vrot.slane %v758, 7
    %v775 = vrot.slane %v759, 7
    %v784 = vadd.f32 %v739, %v768
    %v785 = vadd.f32 %v740, %v769
    %v786 = vadd.f32 %v741, %v770
    %v787 = vadd.f32 %v742, %v771
    %v788 = vadd.f32 %v743, %v772
    %v789 = vadd.f32 %v744, %v773
    %v790 = vadd.f32 %v745, %v774
    %v791 = vadd.f32 %v746, %v775
    %v792 = vld [vmem:[%s725 + $0x2] sm:$0x1]
    %v793 = vlaneseq
    %v794 = vshrl.u32 %v793, 7
    %v795 = vsub.s32 0, %v794
    %v796 = vrot.slane %v792, %v795
    %v797 = vmul.f32 %v57, %v796
    %v798 = vmul.f32 %v58, %v796
    %v799 = vmul.f32 %v59, %v796
    %v800 = vmul.f32 %v60, %v796
    %v801 = vmul.f32 %v63, %v796
    %v802 = vmul.f32 %v64, %v796
    %v803 = vmul.f32 %v65, %v796
    %v804 = vmul.f32 %v66, %v796
    %v805 = vadd.f32 %v784, %v797
    %v806 = vadd.f32 %v785, %v798
    %v807 = vadd.f32 %v786, %v799
    %v808 = vadd.f32 %v787, %v800
    %v809 = vadd.f32 %v788, %v801
    %v810 = vadd.f32 %v789, %v802
    %v811 = vadd.f32 %v790, %v803
    %v812 = vadd.f32 %v791, %v804
    %v813 = vld [vmem:[%s725 + $0x3] sm:$0x1]
    %v814 = vlaneseq
    %v815 = vshrl.u32 %v814, 7
    %v816 = vsub.s32 0, %v815
    %v817 = vrot.slane %v813, %v816
    %v818 = vmul.f32 %v57, %v817
    %v819 = vmul.f32 %v58, %v817
    %v820 = vmul.f32 %v59, %v817
    %v821 = vmul.f32 %v60, %v817
    %v822 = vmul.f32 %v63, %v817
    %v823 = vmul.f32 %v64, %v817
    %v824 = vmul.f32 %v65, %v817
    %v825 = vmul.f32 %v66, %v817
    %v834 = vrot.slane %v818, 7
    %v835 = vrot.slane %v819, 7
    %v836 = vrot.slane %v820, 7
    %v837 = vrot.slane %v821, 7
    %v838 = vrot.slane %v822, 7
    %v839 = vrot.slane %v823, 7
    %v840 = vrot.slane %v824, 7
    %v841 = vrot.slane %v825, 7
    %v850 = vadd.f32 %v805, %v834
    %v851 = vadd.f32 %v806, %v835
    %v852 = vadd.f32 %v807, %v836
    %v853 = vadd.f32 %v808, %v837
    %v854 = vadd.f32 %v809, %v838
    %v855 = vadd.f32 %v810, %v839
    %v856 = vadd.f32 %v811, %v840
    %v857 = vadd.f32 %v812, %v841
    %v866 = vcombine.high %v850, %v850
    %v867 = vcombine.high %v851, %v851
    %v868 = vcombine.high %v852, %v852
    %v869 = vcombine.high %v853, %v853
    %v870 = vcombine.high %v854, %v854
    %v871 = vcombine.high %v855, %v855
    %v872 = vcombine.high %v856, %v856
    %v873 = vcombine.high %v857, %v857
    %vm874 = vcmask 1041408
    %vm875 = vcmask 1045508
    %vm876 = vmor %vm874, %vm875
    %v877 = vrot.slane %v850, 6
    %v878 = vrot.slane %v877, 4
    %v879 = vrot.slane %v866, 6
    %v880 = vsel %vm876, %v878, %v879
    %v881 = vrot.slane %v851, 6
    %v882 = vrot.slane %v881, 4
    %v883 = vrot.slane %v867, 6
    %v884 = vsel %vm876, %v882, %v883
    %v885 = vrot.slane %v852, 6
    %v886 = vrot.slane %v885, 4
    %v887 = vrot.slane %v868, 6
    %v888 = vsel %vm876, %v886, %v887
    %v889 = vrot.slane %v853, 6
    %v890 = vrot.slane %v889, 4
    %v891 = vrot.slane %v869, 6
    %v892 = vsel %vm876, %v890, %v891
    %v893 = vrot.slane %v854, 6
    %v894 = vrot.slane %v893, 4
    %v895 = vrot.slane %v870, 6
    %v896 = vsel %vm876, %v894, %v895
    %v897 = vrot.slane %v855, 6
    %v898 = vrot.slane %v897, 4
    %v899 = vrot.slane %v871, 6
    %v900 = vsel %vm876, %v898, %v899
    %v901 = vrot.slane %v856, 6
    %v902 = vrot.slane %v901, 4
    %v903 = vrot.slane %v872, 6
    %v904 = vsel %vm876, %v902, %v903
    %v905 = vrot.slane %v857, 6
    %v906 = vrot.slane %v905, 4
    %v907 = vrot.slane %v873, 6
    %v908 = vsel %vm876, %v906, %v907
    %v909 = vld [vmem:[%s2] sm:$0xff]
    %v910 = vld [vmem:[%s2 + $0x8] sm:$0xff]
    %v911 = vld [vmem:[%s2 + $0x10] sm:$0xff]
    %v912 = vld [vmem:[%s2 + $0x18] sm:$0xff]
    %v913 = vld [vmem:[%s2 + $0x20] sm:$0xff]
    %v914 = vld [vmem:[%s2 + $0x28] sm:$0xff]
    %v915 = vld [vmem:[%s2 + $0x30] sm:$0xff]
    %v916 = vld [vmem:[%s2 + $0x38] sm:$0xff]
    %v917 = vld [vmem:[%s2 + $0x40] sm:$0xff]
    %v918 = vld [vmem:[%s2 + $0x48] sm:$0xff]
    %v919 = vld [vmem:[%s2 + $0x50] sm:$0xff]
    %v920 = vld [vmem:[%s2 + $0x58] sm:$0xff]
    %v921 = vld [vmem:[%s2 + $0x60] sm:$0xff]
    %v922 = vld [vmem:[%s2 + $0x68] sm:$0xff]
    %v923 = vld [vmem:[%s2 + $0x70] sm:$0xff]
    %v924 = vld [vmem:[%s2 + $0x78] sm:$0xff]
    %v925 = vcombine.low %v880, %v884
    %v926 = vcombine.low %v888, %v892
    %v927 = vcombine.low %v896, %v900
    %v928 = vcombine.low %v904, %v908
    %933 = vmatprep.subr.mxu0 0.0
    %934 = vmatpush1.msra.mxu0 %v924
    %935 = vmatprep.subr.mxu0 0.0
    %936 = vmatpush1.msra.mxu0 %v923
    %937 = vmatprep.subr.mxu0 0.0
    %938 = vmatpush1.msra.mxu0 %v922
    %939 = vmatprep.subr.mxu0 0.0
    %940 = vmatpush1.msra.mxu0 %v921
    %941 = vmatprep.subr.mxu0 0.0
    %942 = vmatpush1.msra.mxu0 %v920
    %943 = vmatprep.subr.mxu0 0.0
    %944 = vmatpush1.msra.mxu0 %v919
    %945 = vmatprep.subr.mxu0 0.0
    %946 = vmatpush1.msra.mxu0 %v918
    %947 = vmatprep.subr.mxu0 0.0
    %948 = vmatpush1.msra.mxu0 %v917
    %949 = vmatprep.subr.mxu0 0.0
    %950 = vmatpush1.msra.mxu0 %v916
    %951 = vmatprep.subr.mxu0 0.0
    %952 = vmatpush1.msra.mxu0 %v915
    %953 = vmatprep.subr.mxu0 0.0
    %954 = vmatpush1.msra.mxu0 %v914
    %955 = vmatprep.subr.mxu0 0.0
    %956 = vmatpush1.msra.mxu0 %v913
    %957 = vmatprep.subr.mxu0 0.0
    %958 = vmatpush1.msra.mxu0 %v912
    %959 = vmatprep.subr.mxu0 0.0
    %960 = vmatpush1.msra.mxu0 %v911
    %961 = vmatprep.subr.mxu0 0.0
    %962 = vmatpush1.msra.mxu0 %v910
    %963 = vmatprep.subr.mxu0 0.0
    %964 = vmatpush1.msra.mxu0 %v909
    %965 = vmatprep.subr.mxu0 0.0
    %966 = vmatpush2.msra.mxu0 0.0
    %967 = vmatprep.subr.mxu0 0.0
    %968 = vmatpush2.msra.mxu0 0.0
    %969 = vmatprep.subr.mxu0 0.0
    %970 = vmatpush2.msra.mxu0 0.0
    %971 = vmatprep.subr.mxu0 0.0
    %972 = vmatpush2.msra.mxu0 0.0
    %973 = vmatprep.subr.mxu0 0.0
    %974 = vmatpush2.msra.mxu0 0.0
    %975 = vmatprep.subr.mxu0 0.0
    %976 = vmatpush2.msra.mxu0 0.0
    %977 = vmatprep.subr.mxu0 0.0
    %978 = vmatpush2.msra.mxu0 0.0
    %979 = vmatprep.subr.mxu0 0.0
    %980 = vmatpush2.msra.mxu0 0.0
    %981 = vmatprep.subr.mxu0 0.0
    %982 = vmatpush2.msra.mxu0 0.0
    %983 = vmatprep.subr.mxu0 0.0
    %984 = vmatpush2.msra.mxu0 0.0
    %985 = vmatprep.subr.mxu0 0.0
    %986 = vmatpush2.msra.mxu0 0.0
    %987 = vmatprep.subr.mxu0 0.0
    %988 = vmatpush2.msra.mxu0 0.0
    %989 = vmatprep.subr.mxu0 0.0
    %990 = vmatpush2.msra.mxu0 0.0
    %991 = vmatprep.subr.mxu0 0.0
    %992 = vmatpush2.msra.mxu0 0.0
    %993 = vmatprep.subr.mxu0 0.0
    %994 = vmatpush2.msra.mxu0 0.0
    %995 = vmatprep.subr.mxu0 0.0
    %996 = vmatpush2.msra.mxu0 0.0
    %997 = vmatprep.mubr.f32.mxu0 0.0
    %998 = vmatmul.mubr.f32.gmra.mxu0 %v925
    %v999 = vpop.f32.mrf.mxu0
    %v1000 = vadd.f32 0.0, %v999
    %v1001 = vpop.f32.mrf.mxu0
    %1002 = vmatprep.mubr.f32.mxu0 0.0
    %1003 = vmatmul.mubr.f32.gmra.mxu0 %v926
    %v1004 = vpop.f32.mrf.mxu0
    %v1005 = vadd.f32 0.0, %v1004
    %v1006 = vpop.f32.mrf.mxu0
    %1007 = vmatprep.mubr.f32.mxu0 0.0
    %1008 = vmatmul.mubr.f32.gmra.mxu0 %v927
    %v1009 = vpop.f32.mrf.mxu0
    %v1010 = vadd.f32 0.0, %v1009
    %v1011 = vpop.f32.mrf.mxu0
    %1012 = vmatprep.mubr.f32.mxu0 0.0
    %1013 = vmatmul.mubr.f32.gmra.mxu0 %v928
    %v1014 = vpop.f32.mrf.mxu0
    %v1015 = vadd.f32 0.0, %v1014
    %v1016 = vpop.f32.mrf.mxu0
    %1017 = vdwg.mxu0
    %s1018 = scalar_lea.vmem %s5, 64
    %1019 = vst.msk [vmem:[%s1018] sm:$0xff] %vm361, %v1000
    %1020 = vst.msk [vmem:[%s1018 + $0x8] sm:$0xff] %vm361, %v1005
    %1021 = vst.msk [vmem:[%s1018 + $0x10] sm:$0xff] %vm361, %v1010
    %1022 = vst.msk [vmem:[%s1018 + $0x18] sm:$0xff] %vm361, %v1015
    %v1023 = vsel %vm361, %v1000, 0.0
    %v1024 = vsel %vm361, %v1005, 0.0
    %v1025 = vadd.f32 %v1023, %v1024
    %v1026 = vsel %vm361, %v1010, 0.0
    %v1027 = vadd.f32 %v1025, %v1026
    %v1028 = vsel %vm361, %v1015, 0.0
    %v1029 = vadd.f32 %v1027, %v1028
    %v1030 = vrot.slane %v1029, 4
    %v1031 = vadd.f32 %v1029, %v1030
    %v1032 = vrot.slane %v1031, 2
    %v1033 = vadd.f32 %v1031, %v1032
    %v1034 = vrot.slane %v1033, 1
    %v1035 = vadd.f32 %v1033, %v1034
    %v1036 = vadd.f32 %v706, %v1035
    %v1037 = vmul.f32 %v1000, %v1000
    %v1038 = vmul.f32 %v1005, %v1005
    %v1039 = vmul.f32 %v1010, %v1010
    %v1040 = vmul.f32 %v1015, %v1015
    %v1041 = vsel %vm361, %v1037, 0.0
    %v1042 = vsel %vm361, %v1038, 0.0
    %v1043 = vadd.f32 %v1041, %v1042
    %v1044 = vsel %vm361, %v1039, 0.0
    %v1045 = vadd.f32 %v1043, %v1044
    %v1046 = vsel %vm361, %v1040, 0.0
    %v1047 = vadd.f32 %v1045, %v1046
    %v1048 = vrot.slane %v1047, 4
    %v1049 = vadd.f32 %v1047, %v1048
    %v1050 = vrot.slane %v1049, 2
    %v1051 = vadd.f32 %v1049, %v1050
    %v1052 = vrot.slane %v1051, 1
    %v1053 = vadd.f32 %v1051, %v1052
    %v1054 = vadd.f32 %v724, %v1053
    %s1055 = scalar_lea.vmem [#allocation2], 12
    %v1056 = vld [vmem:[%s1055] sm:$0x1]
    %v1057 = vlaneseq
    %v1058 = vshrl.u32 %v1057, 7
    %v1059 = vsub.s32 0, %v1058
    %v1060 = vrot.slane %v1056, %v1059
    %v1061 = vmul.f32 %v58, %v1060
    %v1062 = vmul.f32 %v59, %v1060
    %v1063 = vmul.f32 %v60, %v1060
    %v1064 = vmul.f32 %v61, %v1060
    %v1065 = vmul.f32 %v64, %v1060
    %v1066 = vmul.f32 %v65, %v1060
    %v1067 = vmul.f32 %v66, %v1060
    %v1068 = vmul.f32 %v67, %v1060
    %v1069 = vadd.f32 %v1061, 0.0
    %v1070 = vadd.f32 %v1062, 0.0
    %v1071 = vadd.f32 %v1063, 0.0
    %v1072 = vadd.f32 %v1064, 0.0
    %v1073 = vadd.f32 %v1065, 0.0
    %v1074 = vadd.f32 %v1066, 0.0
    %v1075 = vadd.f32 %v1067, 0.0
    %v1076 = vadd.f32 %v1068, 0.0
    %v1077 = vld [vmem:[%s1055 + $0x1] sm:$0x1]
    %v1078 = vlaneseq
    %v1079 = vshrl.u32 %v1078, 7
    %v1080 = vsub.s32 0, %v1079
    %v1081 = vrot.slane %v1077, %v1080
    %v1082 = vmul.f32 %v58, %v1081
    %v1083 = vmul.f32 %v59, %v1081
    %v1084 = vmul.f32 %v60, %v1081
    %v1085 = vmul.f32 %v61, %v1081
    %v1086 = vmul.f32 %v64, %v1081
    %v1087 = vmul.f32 %v65, %v1081
    %v1088 = vmul.f32 %v66, %v1081
    %v1089 = vmul.f32 %v67, %v1081
    %v1098 = vrot.slane %v1082, 7
    %v1099 = vrot.slane %v1083, 7
    %v1100 = vrot.slane %v1084, 7
    %v1101 = vrot.slane %v1085, 7
    %v1102 = vrot.slane %v1086, 7
    %v1103 = vrot.slane %v1087, 7
    %v1104 = vrot.slane %v1088, 7
    %v1105 = vrot.slane %v1089, 7
    %v1114 = vadd.f32 %v1069, %v1098
    %v1115 = vadd.f32 %v1070, %v1099
    %v1116 = vadd.f32 %v1071, %v1100
    %v1117 = vadd.f32 %v1072, %v1101
    %v1118 = vadd.f32 %v1073, %v1102
    %v1119 = vadd.f32 %v1074, %v1103
    %v1120 = vadd.f32 %v1075, %v1104
    %v1121 = vadd.f32 %v1076, %v1105
    %v1122 = vld [vmem:[%s1055 + $0x2] sm:$0x1]
    %v1123 = vlaneseq
    %v1124 = vshrl.u32 %v1123, 7
    %v1125 = vsub.s32 0, %v1124
    %v1126 = vrot.slane %v1122, %v1125
    %v1127 = vmul.f32 %v57, %v1126
    %v1128 = vmul.f32 %v58, %v1126
    %v1129 = vmul.f32 %v59, %v1126
    %v1130 = vmul.f32 %v60, %v1126
    %v1131 = vmul.f32 %v63, %v1126
    %v1132 = vmul.f32 %v64, %v1126
    %v1133 = vmul.f32 %v65, %v1126
    %v1134 = vmul.f32 %v66, %v1126
    %v1135 = vadd.f32 %v1114, %v1127
    %v1136 = vadd.f32 %v1115, %v1128
    %v1137 = vadd.f32 %v1116, %v1129
    %v1138 = vadd.f32 %v1117, %v1130
    %v1139 = vadd.f32 %v1118, %v1131
    %v1140 = vadd.f32 %v1119, %v1132
    %v1141 = vadd.f32 %v1120, %v1133
    %v1142 = vadd.f32 %v1121, %v1134
    %v1143 = vld [vmem:[%s1055 + $0x3] sm:$0x1]
    %v1144 = vlaneseq
    %v1145 = vshrl.u32 %v1144, 7
    %v1146 = vsub.s32 0, %v1145
    %v1147 = vrot.slane %v1143, %v1146
    %v1148 = vmul.f32 %v57, %v1147
    %v1149 = vmul.f32 %v58, %v1147
    %v1150 = vmul.f32 %v59, %v1147
    %v1151 = vmul.f32 %v60, %v1147
    %v1152 = vmul.f32 %v63, %v1147
    %v1153 = vmul.f32 %v64, %v1147
    %v1154 = vmul.f32 %v65, %v1147
    %v1155 = vmul.f32 %v66, %v1147
    %v1164 = vrot.slane %v1148, 7
    %v1165 = vrot.slane %v1149, 7
    %v1166 = vrot.slane %v1150, 7
    %v1167 = vrot.slane %v1151, 7
    %v1168 = vrot.slane %v1152, 7
    %v1169 = vrot.slane %v1153, 7
    %v1170 = vrot.slane %v1154, 7
    %v1171 = vrot.slane %v1155, 7
    %v1180 = vadd.f32 %v1135, %v1164
    %v1181 = vadd.f32 %v1136, %v1165
    %v1182 = vadd.f32 %v1137, %v1166
    %v1183 = vadd.f32 %v1138, %v1167
    %v1184 = vadd.f32 %v1139, %v1168
    %v1185 = vadd.f32 %v1140, %v1169
    %v1186 = vadd.f32 %v1141, %v1170
    %v1187 = vadd.f32 %v1142, %v1171
    %v1196 = vcombine.high %v1180, %v1180
    %v1197 = vcombine.high %v1181, %v1181
    %v1198 = vcombine.high %v1182, %v1182
    %v1199 = vcombine.high %v1183, %v1183
    %v1200 = vcombine.high %v1184, %v1184
    %v1201 = vcombine.high %v1185, %v1185
    %v1202 = vcombine.high %v1186, %v1186
    %v1203 = vcombine.high %v1187, %v1187
    %v1204 = vrot.slane %v1180, 6
    %v1205 = vrot.slane %v1204, 4
    %v1206 = vrot.slane %v1196, 6
    %v1207 = vsel %vm876, %v1205, %v1206
    %v1208 = vrot.slane %v1181, 6
    %v1209 = vrot.slane %v1208, 4
    %v1210 = vrot.slane %v1197, 6
    %v1211 = vsel %vm876, %v1209, %v1210
    %v1212 = vrot.slane %v1182, 6
    %v1213 = vrot.slane %v1212, 4
    %v1214 = vrot.slane %v1198, 6
    %v1215 = vsel %vm876, %v1213, %v1214
    %v1216 = vrot.slane %v1183, 6
    %v1217 = vrot.slane %v1216, 4
    %v1218 = vrot.slane %v1199, 6
    %v1219 = vsel %vm876, %v1217, %v1218
    %v1220 = vrot.slane %v1184, 6
    %v1221 = vrot.slane %v1220, 4
    %v1222 = vrot.slane %v1200, 6
    %v1223 = vsel %vm876, %v1221, %v1222
    %v1224 = vrot.slane %v1185, 6
    %v1225 = vrot.slane %v1224, 4
    %v1226 = vrot.slane %v1201, 6
    %v1227 = vsel %vm876, %v1225, %v1226
    %v1228 = vrot.slane %v1186, 6
    %v1229 = vrot.slane %v1228, 4
    %v1230 = vrot.slane %v1202, 6
    %v1231 = vsel %vm876, %v1229, %v1230
    %v1232 = vrot.slane %v1187, 6
    %v1233 = vrot.slane %v1232, 4
    %v1234 = vrot.slane %v1203, 6
    %v1235 = vsel %vm876, %v1233, %v1234
    %v1236 = vld [vmem:[%s2] sm:$0xff]
    %v1237 = vld [vmem:[%s2 + $0x8] sm:$0xff]
    %v1238 = vld [vmem:[%s2 + $0x10] sm:$0xff]
    %v1239 = vld [vmem:[%s2 + $0x18] sm:$0xff]
    %v1240 = vld [vmem:[%s2 + $0x20] sm:$0xff]
    %v1241 = vld [vmem:[%s2 + $0x28] sm:$0xff]
    %v1242 = vld [vmem:[%s2 + $0x30] sm:$0xff]
    %v1243 = vld [vmem:[%s2 + $0x38] sm:$0xff]
    %v1244 = vld [vmem:[%s2 + $0x40] sm:$0xff]
    %v1245 = vld [vmem:[%s2 + $0x48] sm:$0xff]
    %v1246 = vld [vmem:[%s2 + $0x50] sm:$0xff]
    %v1247 = vld [vmem:[%s2 + $0x58] sm:$0xff]
    %v1248 = vld [vmem:[%s2 + $0x60] sm:$0xff]
    %v1249 = vld [vmem:[%s2 + $0x68] sm:$0xff]
    %v1250 = vld [vmem:[%s2 + $0x70] sm:$0xff]
    %v1251 = vld [vmem:[%s2 + $0x78] sm:$0xff]
    %v1252 = vcombine.low %v1207, %v1211
    %v1253 = vcombine.low %v1215, %v1219
    %v1254 = vcombine.low %v1223, %v1227
    %v1255 = vcombine.low %v1231, %v1235
    %1260 = vmatprep.subr.mxu0 0.0
    %1261 = vmatpush1.msra.mxu0 %v1251
    %1262 = vmatprep.subr.mxu0 0.0
    %1263 = vmatpush1.msra.mxu0 %v1250
    %1264 = vmatprep.subr.mxu0 0.0
    %1265 = vmatpush1.msra.mxu0 %v1249
    %1266 = vmatprep.subr.mxu0 0.0
    %1267 = vmatpush1.msra.mxu0 %v1248
    %1268 = vmatprep.subr.mxu0 0.0
    %1269 = vmatpush1.msra.mxu0 %v1247
    %1270 = vmatprep.subr.mxu0 0.0
    %1271 = vmatpush1.msra.mxu0 %v1246
    %1272 = vmatprep.subr.mxu0 0.0
    %1273 = vmatpush1.msra.mxu0 %v1245
    %1274 = vmatprep.subr.mxu0 0.0
    %1275 = vmatpush1.msra.mxu0 %v1244
    %1276 = vmatprep.subr.mxu0 0.0
    %1277 = vmatpush1.msra.mxu0 %v1243
    %1278 = vmatprep.subr.mxu0 0.0
    %1279 = vmatpush1.msra.mxu0 %v1242
    %1280 = vmatprep.subr.mxu0 0.0
    %1281 = vmatpush1.msra.mxu0 %v1241
    %1282 = vmatprep.subr.mxu0 0.0
    %1283 = vmatpush1.msra.mxu0 %v1240
    %1284 = vmatprep.subr.mxu0 0.0
    %1285 = vmatpush1.msra.mxu0 %v1239
    %1286 = vmatprep.subr.mxu0 0.0
    %1287 = vmatpush1.msra.mxu0 %v1238
    %1288 = vmatprep.subr.mxu0 0.0
    %1289 = vmatpush1.msra.mxu0 %v1237
    %1290 = vmatprep.subr.mxu0 0.0
    %1291 = vmatpush1.msra.mxu0 %v1236
    %1292 = vmatprep.subr.mxu0 0.0
    %1293 = vmatpush2.msra.mxu0 0.0
    %1294 = vmatprep.subr.mxu0 0.0
    %1295 = vmatpush2.msra.mxu0 0.0
    %1296 = vmatprep.subr.mxu0 0.0
    %1297 = vmatpush2.msra.mxu0 0.0
    %1298 = vmatprep.subr.mxu0 0.0
    %1299 = vmatpush2.msra.mxu0 0.0
    %1300 = vmatprep.subr.mxu0 0.0
    %1301 = vmatpush2.msra.mxu0 0.0
    %1302 = vmatprep.subr.mxu0 0.0
    %1303 = vmatpush2.msra.mxu0 0.0
    %1304 = vmatprep.subr.mxu0 0.0
    %1305 = vmatpush2.msra.mxu0 0.0
    %1306 = vmatprep.subr.mxu0 0.0
    %1307 = vmatpush2.msra.mxu0 0.0
    %1308 = vmatprep.subr.mxu0 0.0
    %1309 = vmatpush2.msra.mxu0 0.0
    %1310 = vmatprep.subr.mxu0 0.0
    %1311 = vmatpush2.msra.mxu0 0.0
    %1312 = vmatprep.subr.mxu0 0.0
    %1313 = vmatpush2.msra.mxu0 0.0
    %1314 = vmatprep.subr.mxu0 0.0
    %1315 = vmatpush2.msra.mxu0 0.0
    %1316 = vmatprep.subr.mxu0 0.0
    %1317 = vmatpush2.msra.mxu0 0.0
    %1318 = vmatprep.subr.mxu0 0.0
    %1319 = vmatpush2.msra.mxu0 0.0
    %1320 = vmatprep.subr.mxu0 0.0
    %1321 = vmatpush2.msra.mxu0 0.0
    %1322 = vmatprep.subr.mxu0 0.0
    %1323 = vmatpush2.msra.mxu0 0.0
    %1324 = vmatprep.mubr.f32.mxu0 0.0
    %1325 = vmatmul.mubr.f32.gmra.mxu0 %v1252
    %v1326 = vpop.f32.mrf.mxu0
    %v1327 = vadd.f32 0.0, %v1326
    %v1328 = vpop.f32.mrf.mxu0
    %1329 = vmatprep.mubr.f32.mxu0 0.0
    %1330 = vmatmul.mubr.f32.gmra.mxu0 %v1253
    %v1331 = vpop.f32.mrf.mxu0
    %v1332 = vadd.f32 0.0, %v1331
    %v1333 = vpop.f32.mrf.mxu0
    %1334 = vmatprep.mubr.f32.mxu0 0.0
    %1335 = vmatmul.mubr.f32.gmra.mxu0 %v1254
    %v1336 = vpop.f32.mrf.mxu0
    %v1337 = vadd.f32 0.0, %v1336
    %v1338 = vpop.f32.mrf.mxu0
    %1339 = vmatprep.mubr.f32.mxu0 0.0
    %1340 = vmatmul.mubr.f32.gmra.mxu0 %v1255
    %v1341 = vpop.f32.mrf.mxu0
    %v1342 = vadd.f32 0.0, %v1341
    %v1343 = vpop.f32.mrf.mxu0
    %1344 = vdwg.mxu0
    %s1345 = scalar_lea.vmem %s5, 96
    %1346 = vst.msk [vmem:[%s1345] sm:$0xff] %vm361, %v1327
    %1347 = vst.msk [vmem:[%s1345 + $0x8] sm:$0xff] %vm361, %v1332
    %1348 = vst.msk [vmem:[%s1345 + $0x10] sm:$0xff] %vm361, %v1337
    %1349 = vst.msk [vmem:[%s1345 + $0x18] sm:$0xff] %vm361, %v1342
    %v1350 = vsel %vm361, %v1327, 0.0
    %v1351 = vsel %vm361, %v1332, 0.0
    %v1352 = vadd.f32 %v1350, %v1351
    %v1353 = vsel %vm361, %v1337, 0.0
    %v1354 = vadd.f32 %v1352, %v1353
    %v1355 = vsel %vm361, %v1342, 0.0
    %v1356 = vadd.f32 %v1354, %v1355
    %v1357 = vrot.slane %v1356, 4
    %v1358 = vadd.f32 %v1356, %v1357
    %v1359 = vrot.slane %v1358, 2
    %v1360 = vadd.f32 %v1358, %v1359
    %v1361 = vrot.slane %v1360, 1
    %v1362 = vadd.f32 %v1360, %v1361
    %v1363 = vadd.f32 %v1036, %v1362
    %v1364 = vmul.f32 %v1327, %v1327
    %v1365 = vmul.f32 %v1332, %v1332
    %v1366 = vmul.f32 %v1337, %v1337
    %v1367 = vmul.f32 %v1342, %v1342
    %v1368 = vsel %vm361, %v1364, 0.0
    %v1369 = vsel %vm361, %v1365, 0.0
    %v1370 = vadd.f32 %v1368, %v1369
    %v1371 = vsel %vm361, %v1366, 0.0
    %v1372 = vadd.f32 %v1370, %v1371
    %v1373 = vsel %vm361, %v1367, 0.0
    %v1374 = vadd.f32 %v1372, %v1373
    %v1375 = vrot.slane %v1374, 4
    %v1376 = vadd.f32 %v1374, %v1375
    %v1377 = vrot.slane %v1376, 2
    %v1378 = vadd.f32 %v1376, %v1377
    %v1379 = vrot.slane %v1378, 1
    %v1380 = vadd.f32 %v1378, %v1379
    %v1381 = vadd.f32 %v1054, %v1380
    %s1382 = scalar_lea.vmem [#allocation2], 16
    %v1383 = vld [vmem:[%s1382] sm:$0x1]
    %v1384 = vlaneseq
    %v1385 = vshrl.u32 %v1384, 7
    %v1386 = vsub.s32 0, %v1385
    %v1387 = vrot.slane %v1383, %v1386
    %v1388 = vmul.f32 %v58, %v1387
    %v1389 = vmul.f32 %v59, %v1387
    %v1390 = vmul.f32 %v60, %v1387
    %v1391 = vmul.f32 %v61, %v1387
    %v1392 = vmul.f32 %v64, %v1387
    %v1393 = vmul.f32 %v65, %v1387
    %v1394 = vmul.f32 %v66, %v1387
    %v1395 = vmul.f32 %v67, %v1387
    %v1396 = vadd.f32 %v1388, 0.0
    %v1397 = vadd.f32 %v1389, 0.0
    %v1398 = vadd.f32 %v1390, 0.0
    %v1399 = vadd.f32 %v1391, 0.0
    %v1400 = vadd.f32 %v1392, 0.0
    %v1401 = vadd.f32 %v1393, 0.0
    %v1402 = vadd.f32 %v1394, 0.0
    %v1403 = vadd.f32 %v1395, 0.0
    %v1404 = vld [vmem:[%s1382 + $0x1] sm:$0x1]
    %v1405 = vlaneseq
    %v1406 = vshrl.u32 %v1405, 7
    %v1407 = vsub.s32 0, %v1406
    %v1408 = vrot.slane %v1404, %v1407
    %v1409 = vmul.f32 %v58, %v1408
    %v1410 = vmul.f32 %v59, %v1408
    %v1411 = vmul.f32 %v60, %v1408
    %v1412 = vmul.f32 %v61, %v1408
    %v1413 = vmul.f32 %v64, %v1408
    %v1414 = vmul.f32 %v65, %v1408
    %v1415 = vmul.f32 %v66, %v1408
    %v1416 = vmul.f32 %v67, %v1408
    %v1425 = vrot.slane %v1409, 7
    %v1426 = vrot.slane %v1410, 7
    %v1427 = vrot.slane %v1411, 7
    %v1428 = vrot.slane %v1412, 7
    %v1429 = vrot.slane %v1413, 7
    %v1430 = vrot.slane %v1414, 7
    %v1431 = vrot.slane %v1415, 7
    %v1432 = vrot.slane %v1416, 7
    %v1441 = vadd.f32 %v1396, %v1425
    %v1442 = vadd.f32 %v1397, %v1426
    %v1443 = vadd.f32 %v1398, %v1427
    %v1444 = vadd.f32 %v1399, %v1428
    %v1445 = vadd.f32 %v1400, %v1429
    %v1446 = vadd.f32 %v1401, %v1430
    %v1447 = vadd.f32 %v1402, %v1431
    %v1448 = vadd.f32 %v1403, %v1432
    %v1449 = vld [vmem:[%s1382 + $0x2] sm:$0x1]
    %v1450 = vlaneseq
    %v1451 = vshrl.u32 %v1450, 7
    %v1452 = vsub.s32 0, %v1451
    %v1453 = vrot.slane %v1449, %v1452
    %v1454 = vmul.f32 %v57, %v1453
    %v1455 = vmul.f32 %v58, %v1453
    %v1456 = vmul.f32 %v59, %v1453
    %v1457 = vmul.f32 %v60, %v1453
    %v1458 = vmul.f32 %v63, %v1453
    %v1459 = vmul.f32 %v64, %v1453
    %v1460 = vmul.f32 %v65, %v1453
    %v1461 = vmul.f32 %v66, %v1453
    %v1462 = vadd.f32 %v1441, %v1454
    %v1463 = vadd.f32 %v1442, %v1455
    %v1464 = vadd.f32 %v1443, %v1456
    %v1465 = vadd.f32 %v1444, %v1457
    %v1466 = vadd.f32 %v1445, %v1458
    %v1467 = vadd.f32 %v1446, %v1459
    %v1468 = vadd.f32 %v1447, %v1460
    %v1469 = vadd.f32 %v1448, %v1461
    %v1470 = vld [vmem:[%s1382 + $0x3] sm:$0x1]
    %v1471 = vlaneseq
    %v1472 = vshrl.u32 %v1471, 7
    %v1473 = vsub.s32 0, %v1472
    %v1474 = vrot.slane %v1470, %v1473
    %v1475 = vmul.f32 %v57, %v1474
    %v1476 = vmul.f32 %v58, %v1474
    %v1477 = vmul.f32 %v59, %v1474
    %v1478 = vmul.f32 %v60, %v1474
    %v1479 = vmul.f32 %v63, %v1474
    %v1480 = vmul.f32 %v64, %v1474
    %v1481 = vmul.f32 %v65, %v1474
    %v1482 = vmul.f32 %v66, %v1474
    %v1491 = vrot.slane %v1475, 7
    %v1492 = vrot.slane %v1476, 7
    %v1493 = vrot.slane %v1477, 7
    %v1494 = vrot.slane %v1478, 7
    %v1495 = vrot.slane %v1479, 7
    %v1496 = vrot.slane %v1480, 7
    %v1497 = vrot.slane %v1481, 7
    %v1498 = vrot.slane %v1482, 7
    %v1507 = vadd.f32 %v1462, %v1491
    %v1508 = vadd.f32 %v1463, %v1492
    %v1509 = vadd.f32 %v1464, %v1493
    %v1510 = vadd.f32 %v1465, %v1494
    %v1511 = vadd.f32 %v1466, %v1495
    %v1512 = vadd.f32 %v1467, %v1496
    %v1513 = vadd.f32 %v1468, %v1497
    %v1514 = vadd.f32 %v1469, %v1498
    %v1523 = vcombine.high %v1507, %v1507
    %v1524 = vcombine.high %v1508, %v1508
    %v1525 = vcombine.high %v1509, %v1509
    %v1526 = vcombine.high %v1510, %v1510
    %v1527 = vcombine.high %v1511, %v1511
    %v1528 = vcombine.high %v1512, %v1512
    %v1529 = vcombine.high %v1513, %v1513
    %v1530 = vcombine.high %v1514, %v1514
    %v1531 = vrot.slane %v1507, 5
    %v1532 = vrot.slane %v1531, 4
    %v1533 = vrot.slane %v1523, 5
    %v1534 = vsel %vm219, %v1532, %v1533
    %v1535 = vrot.slane %v1508, 5
    %v1536 = vrot.slane %v1535, 4
    %v1537 = vrot.slane %v1524, 5
    %v1538 = vsel %vm219, %v1536, %v1537
    %v1539 = vrot.slane %v1509, 5
    %v1540 = vrot.slane %v1539, 4
    %v1541 = vrot.slane %v1525, 5
    %v1542 = vsel %vm219, %v1540, %v1541
    %v1543 = vrot.slane %v1510, 5
    %v1544 = vrot.slane %v1543, 4
    %v1545 = vrot.slane %v1526, 5
    %v1546 = vsel %vm219, %v1544, %v1545
    %v1547 = vrot.slane %v1511, 5
    %v1548 = vrot.slane %v1547, 4
    %v1549 = vrot.slane %v1527, 5
    %v1550 = vsel %vm219, %v1548, %v1549
    %v1551 = vrot.slane %v1512, 5
    %v1552 = vrot.slane %v1551, 4
    %v1553 = vrot.slane %v1528, 5
    %v1554 = vsel %vm219, %v1552, %v1553
    %v1555 = vrot.slane %v1513, 5
    %v1556 = vrot.slane %v1555, 4
    %v1557 = vrot.slane %v1529, 5
    %v1558 = vsel %vm219, %v1556, %v1557
    %v1559 = vrot.slane %v1514, 5
    %v1560 = vrot.slane %v1559, 4
    %v1561 = vrot.slane %v1530, 5
    %v1562 = vsel %vm219, %v1560, %v1561
    %v1563 = vld [vmem:[%s2] sm:$0xff]
    %v1564 = vld [vmem:[%s2 + $0x8] sm:$0xff]
    %v1565 = vld [vmem:[%s2 + $0x10] sm:$0xff]
    %v1566 = vld [vmem:[%s2 + $0x18] sm:$0xff]
    %v1567 = vld [vmem:[%s2 + $0x20] sm:$0xff]
    %v1568 = vld [vmem:[%s2 + $0x28] sm:$0xff]
    %v1569 = vld [vmem:[%s2 + $0x30] sm:$0xff]
    %v1570 = vld [vmem:[%s2 + $0x38] sm:$0xff]
    %v1571 = vld [vmem:[%s2 + $0x40] sm:$0xff]
    %v1572 = vld [vmem:[%s2 + $0x48] sm:$0xff]
    %v1573 = vld [vmem:[%s2 + $0x50] sm:$0xff]
    %v1574 = vld [vmem:[%s2 + $0x58] sm:$0xff]
    %v1575 = vld [vmem:[%s2 + $0x60] sm:$0xff]
    %v1576 = vld [vmem:[%s2 + $0x68] sm:$0xff]
    %v1577 = vld [vmem:[%s2 + $0x70] sm:$0xff]
    %v1578 = vld [vmem:[%s2 + $0x78] sm:$0xff]
    %v1579 = vcombine.low %v1534, %v1538
    %v1580 = vcombine.low %v1542, %v1546
    %v1581 = vcombine.low %v1550, %v1554
    %v1582 = vcombine.low %v1558, %v1562
    %1587 = vmatprep.subr.mxu0 0.0
    %1588 = vmatpush1.msra.mxu0 %v1578
    %1589 = vmatprep.subr.mxu0 0.0
    %1590 = vmatpush1.msra.mxu0 %v1577
    %1591 = vmatprep.subr.mxu0 0.0
    %1592 = vmatpush1.msra.mxu0 %v1576
    %1593 = vmatprep.subr.mxu0 0.0
    %1594 = vmatpush1.msra.mxu0 %v1575
    %1595 = vmatprep.subr.mxu0 0.0
    %1596 = vmatpush1.msra.mxu0 %v1574
    %1597 = vmatprep.subr.mxu0 0.0
    %1598 = vmatpush1.msra.mxu0 %v1573
    %1599 = vmatprep.subr.mxu0 0.0
    %1600 = vmatpush1.msra.mxu0 %v1572
    %1601 = vmatprep.subr.mxu0 0.0
    %1602 = vmatpush1.msra.mxu0 %v1571
    %1603 = vmatprep.subr.mxu0 0.0
    %1604 = vmatpush1.msra.mxu0 %v1570
    %1605 = vmatprep.subr.mxu0 0.0
    %1606 = vmatpush1.msra.mxu0 %v1569
    %1607 = vmatprep.subr.mxu0 0.0
    %1608 = vmatpush1.msra.mxu0 %v1568
    %1609 = vmatprep.subr.mxu0 0.0
    %1610 = vmatpush1.msra.mxu0 %v1567
    %1611 = vmatprep.subr.mxu0 0.0
    %1612 = vmatpush1.msra.mxu0 %v1566
    %1613 = vmatprep.subr.mxu0 0.0
    %1614 = vmatpush1.msra.mxu0 %v1565
    %1615 = vmatprep.subr.mxu0 0.0
    %1616 = vmatpush1.msra.mxu0 %v1564
    %1617 = vmatprep.subr.mxu0 0.0
    %1618 = vmatpush1.msra.mxu0 %v1563
    %1619 = vmatprep.subr.mxu0 0.0
    %1620 = vmatpush2.msra.mxu0 0.0
    %1621 = vmatprep.subr.mxu0 0.0
    %1622 = vmatpush2.msra.mxu0 0.0
    %1623 = vmatprep.subr.mxu0 0.0
    %1624 = vmatpush2.msra.mxu0 0.0
    %1625 = vmatprep.subr.mxu0 0.0
    %1626 = vmatpush2.msra.mxu0 0.0
    %1627 = vmatprep.subr.mxu0 0.0
    %1628 = vmatpush2.msra.mxu0 0.0
    %1629 = vmatprep.subr.mxu0 0.0
    %1630 = vmatpush2.msra.mxu0 0.0
    %1631 = vmatprep.subr.mxu0 0.0
    %1632 = vmatpush2.msra.mxu0 0.0
    %1633 = vmatprep.subr.mxu0 0.0
    %1634 = vmatpush2.msra.mxu0 0.0
    %1635 = vmatprep.subr.mxu0 0.0
    %1636 = vmatpush2.msra.mxu0 0.0
    %1637 = vmatprep.subr.mxu0 0.0
    %1638 = vmatpush2.msra.mxu0 0.0
    %1639 = vmatprep.subr.mxu0 0.0
    %1640 = vmatpush2.msra.mxu0 0.0
    %1641 = vmatprep.subr.mxu0 0.0
    %1642 = vmatpush2.msra.mxu0 0.0
    %1643 = vmatprep.subr.mxu0 0.0
    %1644 = vmatpush2.msra.mxu0 0.0
    %1645 = vmatprep.subr.mxu0 0.0
    %1646 = vmatpush2.msra.mxu0 0.0
    %1647 = vmatprep.subr.mxu0 0.0
    %1648 = vmatpush2.msra.mxu0 0.0
    %1649 = vmatprep.subr.mxu0 0.0
    %1650 = vmatpush2.msra.mxu0 0.0
    %1651 = vmatprep.mubr.f32.mxu0 0.0
    %1652 = vmatmul.mubr.f32.gmra.mxu0 %v1579
    %v1653 = vpop.f32.mrf.mxu0
    %v1654 = vadd.f32 0.0, %v1653
    %v1655 = vpop.f32.mrf.mxu0
    %1656 = vmatprep.mubr.f32.mxu0 0.0
    %1657 = vmatmul.mubr.f32.gmra.mxu0 %v1580
    %v1658 = vpop.f32.mrf.mxu0
    %v1659 = vadd.f32 0.0, %v1658
    %v1660 = vpop.f32.mrf.mxu0
    %1661 = vmatprep.mubr.f32.mxu0 0.0
    %1662 = vmatmul.mubr.f32.gmra.mxu0 %v1581
    %v1663 = vpop.f32.mrf.mxu0
    %v1664 = vadd.f32 0.0, %v1663
    %v1665 = vpop.f32.mrf.mxu0
    %1666 = vmatprep.mubr.f32.mxu0 0.0
    %1667 = vmatmul.mubr.f32.gmra.mxu0 %v1582
    %v1668 = vpop.f32.mrf.mxu0
    %v1669 = vadd.f32 0.0, %v1668
    %v1670 = vpop.f32.mrf.mxu0
    %1671 = vdwg.mxu0
    %s1672 = scalar_lea.vmem %s5, 128
    %1673 = vst.msk [vmem:[%s1672] sm:$0xff] %vm361, %v1654
    %1674 = vst.msk [vmem:[%s1672 + $0x8] sm:$0xff] %vm361, %v1659
    %1675 = vst.msk [vmem:[%s1672 + $0x10] sm:$0xff] %vm361, %v1664
    %1676 = vst.msk [vmem:[%s1672 + $0x18] sm:$0xff] %vm361, %v1669
    %v1677 = vsel %vm361, %v1654, 0.0
    %v1678 = vsel %vm361, %v1659, 0.0
    %v1679 = vadd.f32 %v1677, %v1678
    %v1680 = vsel %vm361, %v1664, 0.0
    %v1681 = vadd.f32 %v1679, %v1680
    %v1682 = vsel %vm361, %v1669, 0.0
    %v1683 = vadd.f32 %v1681, %v1682
    %v1684 = vrot.slane %v1683, 4
    %v1685 = vadd.f32 %v1683, %v1684
    %v1686 = vrot.slane %v1685, 2
    %v1687 = vadd.f32 %v1685, %v1686
    %v1688 = vrot.slane %v1687, 1
    %v1689 = vadd.f32 %v1687, %v1688
    %v1690 = vadd.f32 %v1363, %v1689
    %v1691 = vmul.f32 %v1654, %v1654
    %v1692 = vmul.f32 %v1659, %v1659
    %v1693 = vmul.f32 %v1664, %v1664
    %v1694 = vmul.f32 %v1669, %v1669
    %v1695 = vsel %vm361, %v1691, 0.0
    %v1696 = vsel %vm361, %v1692, 0.0
    %v1697 = vadd.f32 %v1695, %v1696
    %v1698 = vsel %vm361, %v1693, 0.0
    %v1699 = vadd.f32 %v1697, %v1698
    %v1700 = vsel %vm361, %v1694, 0.0
    %v1701 = vadd.f32 %v1699, %v1700
    %v1702 = vrot.slane %v1701, 4
    %v1703 = vadd.f32 %v1701, %v1702
    %v1704 = vrot.slane %v1703, 2
    %v1705 = vadd.f32 %v1703, %v1704
    %v1706 = vrot.slane %v1705, 1
    %v1707 = vadd.f32 %v1705, %v1706
    %v1708 = vadd.f32 %v1381, %v1707
    %s1709 = scalar_lea.vmem [#allocation2], 20
    %v1710 = vld [vmem:[%s1709] sm:$0x1]
    %v1711 = vlaneseq
    %v1712 = vshrl.u32 %v1711, 7
    %v1713 = vsub.s32 0, %v1712
    %v1714 = vrot.slane %v1710, %v1713
    %v1715 = vmul.f32 %v58, %v1714
    %v1716 = vmul.f32 %v59, %v1714
    %v1717 = vmul.f32 %v60, %v1714
    %v1718 = vmul.f32 %v61, %v1714
    %v1719 = vmul.f32 %v64, %v1714
    %v1720 = vmul.f32 %v65, %v1714
    %v1721 = vmul.f32 %v66, %v1714
    %v1722 = vmul.f32 %v67, %v1714
    %v1723 = vadd.f32 %v1715, 0.0
    %v1724 = vadd.f32 %v1716, 0.0
    %v1725 = vadd.f32 %v1717, 0.0
    %v1726 = vadd.f32 %v1718, 0.0
    %v1727 = vadd.f32 %v1719, 0.0
    %v1728 = vadd.f32 %v1720, 0.0
    %v1729 = vadd.f32 %v1721, 0.0
    %v1730 = vadd.f32 %v1722, 0.0
    %v1731 = vld [vmem:[%s1709 + $0x1] sm:$0x1]
    %v1732 = vlaneseq
    %v1733 = vshrl.u32 %v1732, 7
    %v1734 = vsub.s32 0, %v1733
    %v1735 = vrot.slane %v1731, %v1734
    %v1736 = vmul.f32 %v58, %v1735
    %v1737 = vmul.f32 %v59, %v1735
    %v1738 = vmul.f32 %v60, %v1735
    %v1739 = vmul.f32 %v61, %v1735
    %v1740 = vmul.f32 %v64, %v1735
    %v1741 = vmul.f32 %v65, %v1735
    %v1742 = vmul.f32 %v66, %v1735
    %v1743 = vmul.f32 %v67, %v1735
    %v1752 = vrot.slane %v1736, 7
    %v1753 = vrot.slane %v1737, 7
    %v1754 = vrot.slane %v1738, 7
    %v1755 = vrot.slane %v1739, 7
    %v1756 = vrot.slane %v1740, 7
    %v1757 = vrot.slane %v1741, 7
    %v1758 = vrot.slane %v1742, 7
    %v1759 = vrot.slane %v1743, 7
    %v1768 = vadd.f32 %v1723, %v1752
    %v1769 = vadd.f32 %v1724, %v1753
    %v1770 = vadd.f32 %v1725, %v1754
    %v1771 = vadd.f32 %v1726, %v1755
    %v1772 = vadd.f32 %v1727, %v1756
    %v1773 = vadd.f32 %v1728, %v1757
    %v1774 = vadd.f32 %v1729, %v1758
    %v1775 = vadd.f32 %v1730, %v1759
    %v1776 = vld [vmem:[%s1709 + $0x2] sm:$0x1]
    %v1777 = vlaneseq
    %v1778 = vshrl.u32 %v1777, 7
    %v1779 = vsub.s32 0, %v1778
    %v1780 = vrot.slane %v1776, %v1779
    %v1781 = vmul.f32 %v57, %v1780
    %v1782 = vmul.f32 %v58, %v1780
    %v1783 = vmul.f32 %v59, %v1780
    %v1784 = vmul.f32 %v60, %v1780
    %v1785 = vmul.f32 %v63, %v1780
    %v1786 = vmul.f32 %v64, %v1780
    %v1787 = vmul.f32 %v65, %v1780
    %v1788 = vmul.f32 %v66, %v1780
    %v1789 = vadd.f32 %v1768, %v1781
    %v1790 = vadd.f32 %v1769, %v1782
    %v1791 = vadd.f32 %v1770, %v1783
    %v1792 = vadd.f32 %v1771, %v1784
    %v1793 = vadd.f32 %v1772, %v1785
    %v1794 = vadd.f32 %v1773, %v1786
    %v1795 = vadd.f32 %v1774, %v1787
    %v1796 = vadd.f32 %v1775, %v1788
    %v1797 = vld [vmem:[%s1709 + $0x3] sm:$0x1]
    %v1798 = vlaneseq
    %v1799 = vshrl.u32 %v1798, 7
    %v1800 = vsub.s32 0, %v1799
    %v1801 = vrot.slane %v1797, %v1800
    %v1802 = vmul.f32 %v57, %v1801
    %v1803 = vmul.f32 %v58, %v1801
    %v1804 = vmul.f32 %v59, %v1801
    %v1805 = vmul.f32 %v60, %v1801
    %v1806 = vmul.f32 %v63, %v1801
    %v1807 = vmul.f32 %v64, %v1801
    %v1808 = vmul.f32 %v65, %v1801
    %v1809 = vmul.f32 %v66, %v1801
    %v1818 = vrot.slane %v1802, 7
    %v1819 = vrot.slane %v1803, 7
    %v1820 = vrot.slane %v1804, 7
    %v1821 = vrot.slane %v1805, 7
    %v1822 = vrot.slane %v1806, 7
    %v1823 = vrot.slane %v1807, 7
    %v1824 = vrot.slane %v1808, 7
    %v1825 = vrot.slane %v1809, 7
    %v1834 = vadd.f32 %v1789, %v1818
    %v1835 = vadd.f32 %v1790, %v1819
    %v1836 = vadd.f32 %v1791, %v1820
    %v1837 = vadd.f32 %v1792, %v1821
    %v1838 = vadd.f32 %v1793, %v1822
    %v1839 = vadd.f32 %v1794, %v1823
    %v1840 = vadd.f32 %v1795, %v1824
    %v1841 = vadd.f32 %v1796, %v1825
    %v1850 = vcombine.high %v1834, %v1834
    %v1851 = vcombine.high %v1835, %v1835
    %v1852 = vcombine.high %v1836, %v1836
    %v1853 = vcombine.high %v1837, %v1837
    %v1854 = vcombine.high %v1838, %v1838
    %v1855 = vcombine.high %v1839, %v1839
    %v1856 = vcombine.high %v1840, %v1840
    %v1857 = vcombine.high %v1841, %v1841
    %v1858 = vrot.slane %v1834, 5
    %v1859 = vrot.slane %v1858, 4
    %v1860 = vrot.slane %v1850, 5
    %v1861 = vsel %vm219, %v1859, %v1860
    %v1862 = vrot.slane %v1835, 5
    %v1863 = vrot.slane %v1862, 4
    %v1864 = vrot.slane %v1851, 5
    %v1865 = vsel %vm219, %v1863, %v1864
    %v1866 = vrot.slane %v1836, 5
    %v1867 = vrot.slane %v1866, 4
    %v1868 = vrot.slane %v1852, 5
    %v1869 = vsel %vm219, %v1867, %v1868
    %v1870 = vrot.slane %v1837, 5
    %v1871 = vrot.slane %v1870, 4
    %v1872 = vrot.slane %v1853, 5
    %v1873 = vsel %vm219, %v1871, %v1872
    %v1874 = vrot.slane %v1838, 5
    %v1875 = vrot.slane %v1874, 4
    %v1876 = vrot.slane %v1854, 5
    %v1877 = vsel %vm219, %v1875, %v1876
    %v1878 = vrot.slane %v1839, 5
    %v1879 = vrot.slane %v1878, 4
    %v1880 = vrot.slane %v1855, 5
    %v1881 = vsel %vm219, %v1879, %v1880
    %v1882 = vrot.slane %v1840, 5
    %v1883 = vrot.slane %v1882, 4
    %v1884 = vrot.slane %v1856, 5
    %v1885 = vsel %vm219, %v1883, %v1884
    %v1886 = vrot.slane %v1841, 5
    %v1887 = vrot.slane %v1886, 4
    %v1888 = vrot.slane %v1857, 5
    %v1889 = vsel %vm219, %v1887, %v1888
    %v1890 = vld [vmem:[%s2] sm:$0xff]
    %v1891 = vld [vmem:[%s2 + $0x8] sm:$0xff]
    %v1892 = vld [vmem:[%s2 + $0x10] sm:$0xff]
    %v1893 = vld [vmem:[%s2 + $0x18] sm:$0xff]
    %v1894 = vld [vmem:[%s2 + $0x20] sm:$0xff]
    %v1895 = vld [vmem:[%s2 + $0x28] sm:$0xff]
    %v1896 = vld [vmem:[%s2 + $0x30] sm:$0xff]
    %v1897 = vld [vmem:[%s2 + $0x38] sm:$0xff]
    %v1898 = vld [vmem:[%s2 + $0x40] sm:$0xff]
    %v1899 = vld [vmem:[%s2 + $0x48] sm:$0xff]
    %v1900 = vld [vmem:[%s2 + $0x50] sm:$0xff]
    %v1901 = vld [vmem:[%s2 + $0x58] sm:$0xff]
    %v1902 = vld [vmem:[%s2 + $0x60] sm:$0xff]
    %v1903 = vld [vmem:[%s2 + $0x68] sm:$0xff]
    %v1904 = vld [vmem:[%s2 + $0x70] sm:$0xff]
    %v1905 = vld [vmem:[%s2 + $0x78] sm:$0xff]
    %v1906 = vcombine.low %v1861, %v1865
    %v1907 = vcombine.low %v1869, %v1873
    %v1908 = vcombine.low %v1877, %v1881
    %v1909 = vcombine.low %v1885, %v1889
    %1914 = vmatprep.subr.mxu0 0.0
    %1915 = vmatpush1.msra.mxu0 %v1905
    %1916 = vmatprep.subr.mxu0 0.0
    %1917 = vmatpush1.msra.mxu0 %v1904
    %1918 = vmatprep.subr.mxu0 0.0
    %1919 = vmatpush1.msra.mxu0 %v1903
    %1920 = vmatprep.subr.mxu0 0.0
    %1921 = vmatpush1.msra.mxu0 %v1902
    %1922 = vmatprep.subr.mxu0 0.0
    %1923 = vmatpush1.msra.mxu0 %v1901
    %1924 = vmatprep.subr.mxu0 0.0
    %1925 = vmatpush1.msra.mxu0 %v1900
    %1926 = vmatprep.subr.mxu0 0.0
    %1927 = vmatpush1.msra.mxu0 %v1899
    %1928 = vmatprep.subr.mxu0 0.0
    %1929 = vmatpush1.msra.mxu0 %v1898
    %1930 = vmatprep.subr.mxu0 0.0
    %1931 = vmatpush1.msra.mxu0 %v1897
    %1932 = vmatprep.subr.mxu0 0.0
    %1933 = vmatpush1.msra.mxu0 %v1896
    %1934 = vmatprep.subr.mxu0 0.0
    %1935 = vmatpush1.msra.mxu0 %v1895
    %1936 = vmatprep.subr.mxu0 0.0
    %1937 = vmatpush1.msra.mxu0 %v1894
    %1938 = vmatprep.subr.mxu0 0.0
    %1939 = vmatpush1.msra.mxu0 %v1893
    %1940 = vmatprep.subr.mxu0 0.0
    %1941 = vmatpush1.msra.mxu0 %v1892
    %1942 = vmatprep.subr.mxu0 0.0
    %1943 = vmatpush1.msra.mxu0 %v1891
    %1944 = vmatprep.subr.mxu0 0.0
    %1945 = vmatpush1.msra.mxu0 %v1890
    %1946 = vmatprep.subr.mxu0 0.0
    %1947 = vmatpush2.msra.mxu0 0.0
    %1948 = vmatprep.subr.mxu0 0.0
    %1949 = vmatpush2.msra.mxu0 0.0
    %1950 = vmatprep.subr.mxu0 0.0
    %1951 = vmatpush2.msra.mxu0 0.0
    %1952 = vmatprep.subr.mxu0 0.0
    %1953 = vmatpush2.msra.mxu0 0.0
    %1954 = vmatprep.subr.mxu0 0.0
    %1955 = vmatpush2.msra.mxu0 0.0
    %1956 = vmatprep.subr.mxu0 0.0
    %1957 = vmatpush2.msra.mxu0 0.0
    %1958 = vmatprep.subr.mxu0 0.0
    %1959 = vmatpush2.msra.mxu0 0.0
    %1960 = vmatprep.subr.mxu0 0.0
    %1961 = vmatpush2.msra.mxu0 0.0
    %1962 = vmatprep.subr.mxu0 0.0
    %1963 = vmatpush2.msra.mxu0 0.0
    %1964 = vmatprep.subr.mxu0 0.0
    %1965 = vmatpush2.msra.mxu0 0.0
    %1966 = vmatprep.subr.mxu0 0.0
    %1967 = vmatpush2.msra.mxu0 0.0
    %1968 = vmatprep.subr.mxu0 0.0
    %1969 = vmatpush2.msra.mxu0 0.0
    %1970 = vmatprep.subr.mxu0 0.0
    %1971 = vmatpush2.msra.mxu0 0.0
    %1972 = vmatprep.subr.mxu0 0.0
    %1973 = vmatpush2.msra.mxu0 0.0
    %1974 = vmatprep.subr.mxu0 0.0
    %1975 = vmatpush2.msra.mxu0 0.0
    %1976 = vmatprep.subr.mxu0 0.0
    %1977 = vmatpush2.msra.mxu0 0.0
    %1978 = vmatprep.mubr.f32.mxu0 0.0
    %1979 = vmatmul.mubr.f32.gmra.mxu0 %v1906
    %v1980 = vpop.f32.mrf.mxu0
    %v1981 = vadd.f32 0.0, %v1980
    %v1982 = vpop.f32.mrf.mxu0
    %1983 = vmatprep.mubr.f32.mxu0 0.0
    %1984 = vmatmul.mubr.f32.gmra.mxu0 %v1907
    %v1985 = vpop.f32.mrf.mxu0
    %v1986 = vadd.f32 0.0, %v1985
    %v1987 = vpop.f32.mrf.mxu0
    %1988 = vmatprep.mubr.f32.mxu0 0.0
    %1989 = vmatmul.mubr.f32.gmra.mxu0 %v1908
    %v1990 = vpop.f32.mrf.mxu0
    %v1991 = vadd.f32 0.0, %v1990
    %v1992 = vpop.f32.mrf.mxu0
    %1993 = vmatprep.mubr.f32.mxu0 0.0
    %1994 = vmatmul.mubr.f32.gmra.mxu0 %v1909
    %v1995 = vpop.f32.mrf.mxu0
    %v1996 = vadd.f32 0.0, %v1995
    %v1997 = vpop.f32.mrf.mxu0
    %1998 = vdwg.mxu0
    %s1999 = scalar_lea.vmem %s5, 160
    %2000 = vst.msk [vmem:[%s1999] sm:$0xff] %vm361, %v1981
    %2001 = vst.msk [vmem:[%s1999 + $0x8] sm:$0xff] %vm361, %v1986
    %2002 = vst.msk [vmem:[%s1999 + $0x10] sm:$0xff] %vm361, %v1991
    %2003 = vst.msk [vmem:[%s1999 + $0x18] sm:$0xff] %vm361, %v1996
    %v2004 = vsel %vm361, %v1981, 0.0
    %v2005 = vsel %vm361, %v1986, 0.0
    %v2006 = vadd.f32 %v2004, %v2005
    %v2007 = vsel %vm361, %v1991, 0.0
    %v2008 = vadd.f32 %v2006, %v2007
    %v2009 = vsel %vm361, %v1996, 0.0
    %v2010 = vadd.f32 %v2008, %v2009
    %v2011 = vrot.slane %v2010, 4
    %v2012 = vadd.f32 %v2010, %v2011
    %v2013 = vrot.slane %v2012, 2
    %v2014 = vadd.f32 %v2012, %v2013
    %v2015 = vrot.slane %v2014, 1
    %v2016 = vadd.f32 %v2014, %v2015
    %v2017 = vadd.f32 %v1690, %v2016
    %v2018 = vmul.f32 %v1981, %v1981
    %v2019 = vmul.f32 %v1986, %v1986
    %v2020 = vmul.f32 %v1991, %v1991
    %v2021 = vmul.f32 %v1996, %v1996
    %v2022 = vsel %vm361, %v2018, 0.0
    %v2023 = vsel %vm361, %v2019, 0.0
    %v2024 = vadd.f32 %v2022, %v2023
    %v2025 = vsel %vm361, %v2020, 0.0
    %v2026 = vadd.f32 %v2024, %v2025
    %v2027 = vsel %vm361, %v2021, 0.0
    %v2028 = vadd.f32 %v2026, %v2027
    %v2029 = vrot.slane %v2028, 4
    %v2030 = vadd.f32 %v2028, %v2029
    %v2031 = vrot.slane %v2030, 2
    %v2032 = vadd.f32 %v2030, %v2031
    %v2033 = vrot.slane %v2032, 1
    %v2034 = vadd.f32 %v2032, %v2033
    %v2035 = vadd.f32 %v1708, %v2034
    %s2036 = scalar_lea.vmem [#allocation2], 24
    %v2037 = vld [vmem:[%s2036] sm:$0x1]
    %v2038 = vlaneseq
    %v2039 = vshrl.u32 %v2038, 7
    %v2040 = vsub.s32 0, %v2039
    %v2041 = vrot.slane %v2037, %v2040
    %v2042 = vmul.f32 %v58, %v2041
    %v2043 = vmul.f32 %v59, %v2041
    %v2044 = vmul.f32 %v60, %v2041
    %v2045 = vmul.f32 %v61, %v2041
    %v2046 = vmul.f32 %v64, %v2041
    %v2047 = vmul.f32 %v65, %v2041
    %v2048 = vmul.f32 %v66, %v2041
    %v2049 = vmul.f32 %v67, %v2041
    %v2050 = vadd.f32 %v2042, 0.0
    %v2051 = vadd.f32 %v2043, 0.0
    %v2052 = vadd.f32 %v2044, 0.0
    %v2053 = vadd.f32 %v2045, 0.0
    %v2054 = vadd.f32 %v2046, 0.0
    %v2055 = vadd.f32 %v2047, 0.0
    %v2056 = vadd.f32 %v2048, 0.0
    %v2057 = vadd.f32 %v2049, 0.0
    %v2058 = vld [vmem:[%s2036 + $0x1] sm:$0x1]
    %v2059 = vlaneseq
    %v2060 = vshrl.u32 %v2059, 7
    %v2061 = vsub.s32 0, %v2060
    %v2062 = vrot.slane %v2058, %v2061
    %v2063 = vmul.f32 %v58, %v2062
    %v2064 = vmul.f32 %v59, %v2062
    %v2065 = vmul.f32 %v60, %v2062
    %v2066 = vmul.f32 %v61, %v2062
    %v2067 = vmul.f32 %v64, %v2062
    %v2068 = vmul.f32 %v65, %v2062
    %v2069 = vmul.f32 %v66, %v2062
    %v2070 = vmul.f32 %v67, %v2062
    %v2079 = vrot.slane %v2063, 7
    %v2080 = vrot.slane %v2064, 7
    %v2081 = vrot.slane %v2065, 7
    %v2082 = vrot.slane %v2066, 7
    %v2083 = vrot.slane %v2067, 7
    %v2084 = vrot.slane %v2068, 7
    %v2085 = vrot.slane %v2069, 7
    %v2086 = vrot.slane %v2070, 7
    %v2095 = vadd.f32 %v2050, %v2079
    %v2096 = vadd.f32 %v2051, %v2080
    %v2097 = vadd.f32 %v2052, %v2081
    %v2098 = vadd.f32 %v2053, %v2082
    %v2099 = vadd.f32 %v2054, %v2083
    %v2100 = vadd.f32 %v2055, %v2084
    %v2101 = vadd.f32 %v2056, %v2085
    %v2102 = vadd.f32 %v2057, %v2086
    %v2103 = vld [vmem:[%s2036 + $0x2] sm:$0x1]
    %v2104 = vlaneseq
    %v2105 = vshrl.u32 %v2104, 7
    %v2106 = vsub.s32 0, %v2105
    %v2107 = vrot.slane %v2103, %v2106
    %v2108 = vmul.f32 %v57, %v2107
    %v2109 = vmul.f32 %v58, %v2107
    %v2110 = vmul.f32 %v59, %v2107
    %v2111 = vmul.f32 %v60, %v2107
    %v2112 = vmul.f32 %v63, %v2107
    %v2113 = vmul.f32 %v64, %v2107
    %v2114 = vmul.f32 %v65, %v2107
    %v2115 = vmul.f32 %v66, %v2107
    %v2116 = vadd.f32 %v2095, %v2108
    %v2117 = vadd.f32 %v2096, %v2109
    %v2118 = vadd.f32 %v2097, %v2110
    %v2119 = vadd.f32 %v2098, %v2111
    %v2120 = vadd.f32 %v2099, %v2112
    %v2121 = vadd.f32 %v2100, %v2113
    %v2122 = vadd.f32 %v2101, %v2114
    %v2123 = vadd.f32 %v2102, %v2115
    %v2124 = vld [vmem:[%s2036 + $0x3] sm:$0x1]
    %v2125 = vlaneseq
    %v2126 = vshrl.u32 %v2125, 7
    %v2127 = vsub.s32 0, %v2126
    %v2128 = vrot.slane %v2124, %v2127
    %v2129 = vmul.f32 %v57, %v2128
    %v2130 = vmul.f32 %v58, %v2128
    %v2131 = vmul.f32 %v59, %v2128
    %v2132 = vmul.f32 %v60, %v2128
    %v2133 = vmul.f32 %v63, %v2128
    %v2134 = vmul.f32 %v64, %v2128
    %v2135 = vmul.f32 %v65, %v2128
    %v2136 = vmul.f32 %v66, %v2128
    %v2145 = vrot.slane %v2129, 7
    %v2146 = vrot.slane %v2130, 7
    %v2147 = vrot.slane %v2131, 7
    %v2148 = vrot.slane %v2132, 7
    %v2149 = vrot.slane %v2133, 7
    %v2150 = vrot.slane %v2134, 7
    %v2151 = vrot.slane %v2135, 7
    %v2152 = vrot.slane %v2136, 7
    %v2161 = vadd.f32 %v2116, %v2145
    %v2162 = vadd.f32 %v2117, %v2146
    %v2163 = vadd.f32 %v2118, %v2147
    %v2164 = vadd.f32 %v2119, %v2148
    %v2165 = vadd.f32 %v2120, %v2149
    %v2166 = vadd.f32 %v2121, %v2150
    %v2167 = vadd.f32 %v2122, %v2151
    %v2168 = vadd.f32 %v2123, %v2152
    %v2177 = vcombine.high %v2161, %v2161
    %v2178 = vcombine.high %v2162, %v2162
    %v2179 = vcombine.high %v2163, %v2163
    %v2180 = vcombine.high %v2164, %v2164
    %v2181 = vcombine.high %v2165, %v2165
    %v2182 = vcombine.high %v2166, %v2166
    %v2183 = vcombine.high %v2167, %v2167
    %v2184 = vcombine.high %v2168, %v2168
    %v2185 = vrot.slane %v2161, 6
    %v2186 = vrot.slane %v2185, 4
    %v2187 = vrot.slane %v2177, 6
    %v2188 = vsel %vm876, %v2186, %v2187
    %v2189 = vrot.slane %v2162, 6
    %v2190 = vrot.slane %v2189, 4
    %v2191 = vrot.slane %v2178, 6
    %v2192 = vsel %vm876, %v2190, %v2191
    %v2193 = vrot.slane %v2163, 6
    %v2194 = vrot.slane %v2193, 4
    %v2195 = vrot.slane %v2179, 6
    %v2196 = vsel %vm876, %v2194, %v2195
    %v2197 = vrot.slane %v2164, 6
    %v2198 = vrot.slane %v2197, 4
    %v2199 = vrot.slane %v2180, 6
    %v2200 = vsel %vm876, %v2198, %v2199
    %v2201 = vrot.slane %v2165, 6
    %v2202 = vrot.slane %v2201, 4
    %v2203 = vrot.slane %v2181, 6
    %v2204 = vsel %vm876, %v2202, %v2203
    %v2205 = vrot.slane %v2166, 6
    %v2206 = vrot.slane %v2205, 4
    %v2207 = vrot.slane %v2182, 6
    %v2208 = vsel %vm876, %v2206, %v2207
    %v2209 = vrot.slane %v2167, 6
    %v2210 = vrot.slane %v2209, 4
    %v2211 = vrot.slane %v2183, 6
    %v2212 = vsel %vm876, %v2210, %v2211
    %v2213 = vrot.slane %v2168, 6
    %v2214 = vrot.slane %v2213, 4
    %v2215 = vrot.slane %v2184, 6
    %v2216 = vsel %vm876, %v2214, %v2215
    %v2217 = vld [vmem:[%s2] sm:$0xff]
    %v2218 = vld [vmem:[%s2 + $0x8] sm:$0xff]
    %v2219 = vld [vmem:[%s2 + $0x10] sm:$0xff]
    %v2220 = vld [vmem:[%s2 + $0x18] sm:$0xff]
    %v2221 = vld [vmem:[%s2 + $0x20] sm:$0xff]
    %v2222 = vld [vmem:[%s2 + $0x28] sm:$0xff]
    %v2223 = vld [vmem:[%s2 + $0x30] sm:$0xff]
    %v2224 = vld [vmem:[%s2 + $0x38] sm:$0xff]
    %v2225 = vld [vmem:[%s2 + $0x40] sm:$0xff]
    %v2226 = vld [vmem:[%s2 + $0x48] sm:$0xff]
    %v2227 = vld [vmem:[%s2 + $0x50] sm:$0xff]
    %v2228 = vld [vmem:[%s2 + $0x58] sm:$0xff]
    %v2229 = vld [vmem:[%s2 + $0x60] sm:$0xff]
    %v2230 = vld [vmem:[%s2 + $0x68] sm:$0xff]
    %v2231 = vld [vmem:[%s2 + $0x70] sm:$0xff]
    %v2232 = vld [vmem:[%s2 + $0x78] sm:$0xff]
    %v2233 = vcombine.low %v2188, %v2192
    %v2234 = vcombine.low %v2196, %v2200
    %v2235 = vcombine.low %v2204, %v2208
    %v2236 = vcombine.low %v2212, %v2216
    %2241 = vmatprep.subr.mxu0 0.0
    %2242 = vmatpush1.msra.mxu0 %v2232
    %2243 = vmatprep.subr.mxu0 0.0
    %2244 = vmatpush1.msra.mxu0 %v2231
    %2245 = vmatprep.subr.mxu0 0.0
    %2246 = vmatpush1.msra.mxu0 %v2230
    %2247 = vmatprep.subr.mxu0 0.0
    %2248 = vmatpush1.msra.mxu0 %v2229
    %2249 = vmatprep.subr.mxu0 0.0
    %2250 = vmatpush1.msra.mxu0 %v2228
    %2251 = vmatprep.subr.mxu0 0.0
    %2252 = vmatpush1.msra.mxu0 %v2227
    %2253 = vmatprep.subr.mxu0 0.0
    %2254 = vmatpush1.msra.mxu0 %v2226
    %2255 = vmatprep.subr.mxu0 0.0
    %2256 = vmatpush1.msra.mxu0 %v2225
    %2257 = vmatprep.subr.mxu0 0.0
    %2258 = vmatpush1.msra.mxu0 %v2224
    %2259 = vmatprep.subr.mxu0 0.0
    %2260 = vmatpush1.msra.mxu0 %v2223
    %2261 = vmatprep.subr.mxu0 0.0
    %2262 = vmatpush1.msra.mxu0 %v2222
    %2263 = vmatprep.subr.mxu0 0.0
    %2264 = vmatpush1.msra.mxu0 %v2221
    %2265 = vmatprep.subr.mxu0 0.0
    %2266 = vmatpush1.msra.mxu0 %v2220
    %2267 = vmatprep.subr.mxu0 0.0
    %2268 = vmatpush1.msra.mxu0 %v2219
    %2269 = vmatprep.subr.mxu0 0.0
    %2270 = vmatpush1.msra.mxu0 %v2218
    %2271 = vmatprep.subr.mxu0 0.0
    %2272 = vmatpush1.msra.mxu0 %v2217
    %2273 = vmatprep.subr.mxu0 0.0
    %2274 = vmatpush2.msra.mxu0 0.0
    %2275 = vmatprep.subr.mxu0 0.0
    %2276 = vmatpush2.msra.mxu0 0.0
    %2277 = vmatprep.subr.mxu0 0.0
    %2278 = vmatpush2.msra.mxu0 0.0
    %2279 = vmatprep.subr.mxu0 0.0
    %2280 = vmatpush2.msra.mxu0 0.0
    %2281 = vmatprep.subr.mxu0 0.0
    %2282 = vmatpush2.msra.mxu0 0.0
    %2283 = vmatprep.subr.mxu0 0.0
    %2284 = vmatpush2.msra.mxu0 0.0
    %2285 = vmatprep.subr.mxu0 0.0
    %2286 = vmatpush2.msra.mxu0 0.0
    %2287 = vmatprep.subr.mxu0 0.0
    %2288 = vmatpush2.msra.mxu0 0.0
    %2289 = vmatprep.subr.mxu0 0.0
    %2290 = vmatpush2.msra.mxu0 0.0
    %2291 = vmatprep.subr.mxu0 0.0
    %2292 = vmatpush2.msra.mxu0 0.0
    %2293 = vmatprep.subr.mxu0 0.0
    %2294 = vmatpush2.msra.mxu0 0.0
    %2295 = vmatprep.subr.mxu0 0.0
    %2296 = vmatpush2.msra.mxu0 0.0
    %2297 = vmatprep.subr.mxu0 0.0
    %2298 = vmatpush2.msra.mxu0 0.0
    %2299 = vmatprep.subr.mxu0 0.0
    %2300 = vmatpush2.msra.mxu0 0.0
    %2301 = vmatprep.subr.mxu0 0.0
    %2302 = vmatpush2.msra.mxu0 0.0
    %2303 = vmatprep.subr.mxu0 0.0
    %2304 = vmatpush2.msra.mxu0 0.0
    %2305 = vmatprep.mubr.f32.mxu0 0.0
    %2306 = vmatmul.mubr.f32.gmra.mxu0 %v2233
    %v2307 = vpop.f32.mrf.mxu0
    %v2308 = vadd.f32 0.0, %v2307
    %v2309 = vpop.f32.mrf.mxu0
    %2310 = vmatprep.mubr.f32.mxu0 0.0
    %2311 = vmatmul.mubr.f32.gmra.mxu0 %v2234
    %v2312 = vpop.f32.mrf.mxu0
    %v2313 = vadd.f32 0.0, %v2312
    %v2314 = vpop.f32.mrf.mxu0
    %2315 = vmatprep.mubr.f32.mxu0 0.0
    %2316 = vmatmul.mubr.f32.gmra.mxu0 %v2235
    %v2317 = vpop.f32.mrf.mxu0
    %v2318 = vadd.f32 0.0, %v2317
    %v2319 = vpop.f32.mrf.mxu0
    %2320 = vmatprep.mubr.f32.mxu0 0.0
    %2321 = vmatmul.mubr.f32.gmra.mxu0 %v2236
    %v2322 = vpop.f32.mrf.mxu0
    %v2323 = vadd.f32 0.0, %v2322
    %v2324 = vpop.f32.mrf.mxu0
    %2325 = vdwg.mxu0
    %s2326 = scalar_lea.vmem %s5, 192
    %2327 = vst.msk [vmem:[%s2326] sm:$0xff] %vm361, %v2308
    %2328 = vst.msk [vmem:[%s2326 + $0x8] sm:$0xff] %vm361, %v2313
    %2329 = vst.msk [vmem:[%s2326 + $0x10] sm:$0xff] %vm361, %v2318
    %2330 = vst.msk [vmem:[%s2326 + $0x18] sm:$0xff] %vm361, %v2323
    %v2331 = vsel %vm361, %v2308, 0.0
    %v2332 = vsel %vm361, %v2313, 0.0
    %v2333 = vadd.f32 %v2331, %v2332
    %v2334 = vsel %vm361, %v2318, 0.0
    %v2335 = vadd.f32 %v2333, %v2334
    %v2336 = vsel %vm361, %v2323, 0.0
    %v2337 = vadd.f32 %v2335, %v2336
    %v2338 = vrot.slane %v2337, 4
    %v2339 = vadd.f32 %v2337, %v2338
    %v2340 = vrot.slane %v2339, 2
    %v2341 = vadd.f32 %v2339, %v2340
    %v2342 = vrot.slane %v2341, 1
    %v2343 = vadd.f32 %v2341, %v2342
    %v2344 = vadd.f32 %v2017, %v2343
    %v2345 = vmul.f32 %v2308, %v2308
    %v2346 = vmul.f32 %v2313, %v2313
    %v2347 = vmul.f32 %v2318, %v2318
    %v2348 = vmul.f32 %v2323, %v2323
    %v2349 = vsel %vm361, %v2345, 0.0
    %v2350 = vsel %vm361, %v2346, 0.0
    %v2351 = vadd.f32 %v2349, %v2350
    %v2352 = vsel %vm361, %v2347, 0.0
    %v2353 = vadd.f32 %v2351, %v2352
    %v2354 = vsel %vm361, %v2348, 0.0
    %v2355 = vadd.f32 %v2353, %v2354
    %v2356 = vrot.slane %v2355, 4
    %v2357 = vadd.f32 %v2355, %v2356
    %v2358 = vrot.slane %v2357, 2
    %v2359 = vadd.f32 %v2357, %v2358
    %v2360 = vrot.slane %v2359, 1
    %v2361 = vadd.f32 %v2359, %v2360
    %v2362 = vadd.f32 %v2035, %v2361
    %s2363 = scalar_lea.vmem [#allocation2], 28
    %v2364 = vld [vmem:[%s2363] sm:$0x1]
    %v2365 = vlaneseq
    %v2366 = vshrl.u32 %v2365, 7
    %v2367 = vsub.s32 0, %v2366
    %v2368 = vrot.slane %v2364, %v2367
    %v2369 = vmul.f32 %v58, %v2368
    %v2370 = vmul.f32 %v59, %v2368
    %v2371 = vmul.f32 %v60, %v2368
    %v2372 = vmul.f32 %v61, %v2368
    %v2373 = vmul.f32 %v64, %v2368
    %v2374 = vmul.f32 %v65, %v2368
    %v2375 = vmul.f32 %v66, %v2368
    %v2376 = vmul.f32 %v67, %v2368
    %v2377 = vadd.f32 %v2369, 0.0
    %v2378 = vadd.f32 %v2370, 0.0
    %v2379 = vadd.f32 %v2371, 0.0
    %v2380 = vadd.f32 %v2372, 0.0
    %v2381 = vadd.f32 %v2373, 0.0
    %v2382 = vadd.f32 %v2374, 0.0
    %v2383 = vadd.f32 %v2375, 0.0
    %v2384 = vadd.f32 %v2376, 0.0
    %v2385 = vld [vmem:[%s2363 + $0x1] sm:$0x1]
    %v2386 = vlaneseq
    %v2387 = vshrl.u32 %v2386, 7
    %v2388 = vsub.s32 0, %v2387
    %v2389 = vrot.slane %v2385, %v2388
    %v2390 = vmul.f32 %v58, %v2389
    %v2391 = vmul.f32 %v59, %v2389
    %v2392 = vmul.f32 %v60, %v2389
    %v2393 = vmul.f32 %v61, %v2389
    %v2394 = vmul.f32 %v64, %v2389
    %v2395 = vmul.f32 %v65, %v2389
    %v2396 = vmul.f32 %v66, %v2389
    %v2397 = vmul.f32 %v67, %v2389
    %v2406 = vrot.slane %v2390, 7
    %v2407 = vrot.slane %v2391, 7
    %v2408 = vrot.slane %v2392, 7
    %v2409 = vrot.slane %v2393, 7
    %v2410 = vrot.slane %v2394, 7
    %v2411 = vrot.slane %v2395, 7
    %v2412 = vrot.slane %v2396, 7
    %v2413 = vrot.slane %v2397, 7
    %v2422 = vadd.f32 %v2377, %v2406
    %v2423 = vadd.f32 %v2378, %v2407
    %v2424 = vadd.f32 %v2379, %v2408
    %v2425 = vadd.f32 %v2380, %v2409
    %v2426 = vadd.f32 %v2381, %v2410
    %v2427 = vadd.f32 %v2382, %v2411
    %v2428 = vadd.f32 %v2383, %v2412
    %v2429 = vadd.f32 %v2384, %v2413
    %v2430 = vld [vmem:[%s2363 + $0x2] sm:$0x1]
    %v2431 = vlaneseq
    %v2432 = vshrl.u32 %v2431, 7
    %v2433 = vsub.s32 0, %v2432
    %v2434 = vrot.slane %v2430, %v2433
    %v2435 = vmul.f32 %v57, %v2434
    %v2436 = vmul.f32 %v58, %v2434
    %v2437 = vmul.f32 %v59, %v2434
    %v2438 = vmul.f32 %v60, %v2434
    %v2439 = vmul.f32 %v63, %v2434
    %v2440 = vmul.f32 %v64, %v2434
    %v2441 = vmul.f32 %v65, %v2434
    %v2442 = vmul.f32 %v66, %v2434
    %v2443 = vadd.f32 %v2422, %v2435
    %v2444 = vadd.f32 %v2423, %v2436
    %v2445 = vadd.f32 %v2424, %v2437
    %v2446 = vadd.f32 %v2425, %v2438
    %v2447 = vadd.f32 %v2426, %v2439
    %v2448 = vadd.f32 %v2427, %v2440
    %v2449 = vadd.f32 %v2428, %v2441
    %v2450 = vadd.f32 %v2429, %v2442
    %v2451 = vld [vmem:[%s2363 + $0x3] sm:$0x1]
    %v2452 = vlaneseq
    %v2453 = vshrl.u32 %v2452, 7
    %v2454 = vsub.s32 0, %v2453
    %v2455 = vrot.slane %v2451, %v2454
    %v2456 = vmul.f32 %v57, %v2455
    %v2457 = vmul.f32 %v58, %v2455
    %v2458 = vmul.f32 %v59, %v2455
    %v2459 = vmul.f32 %v60, %v2455
    %v2460 = vmul.f32 %v63, %v2455
    %v2461 = vmul.f32 %v64, %v2455
    %v2462 = vmul.f32 %v65, %v2455
    %v2463 = vmul.f32 %v66, %v2455
    %v2472 = vrot.slane %v2456, 7
    %v2473 = vrot.slane %v2457, 7
    %v2474 = vrot.slane %v2458, 7
    %v2475 = vrot.slane %v2459, 7
    %v2476 = vrot.slane %v2460, 7
    %v2477 = vrot.slane %v2461, 7
    %v2478 = vrot.slane %v2462, 7
    %v2479 = vrot.slane %v2463, 7
    %v2488 = vadd.f32 %v2443, %v2472
    %v2489 = vadd.f32 %v2444, %v2473
    %v2490 = vadd.f32 %v2445, %v2474
    %v2491 = vadd.f32 %v2446, %v2475
    %v2492 = vadd.f32 %v2447, %v2476
    %v2493 = vadd.f32 %v2448, %v2477
    %v2494 = vadd.f32 %v2449, %v2478
    %v2495 = vadd.f32 %v2450, %v2479
    %v2504 = vcombine.high %v2488, %v2488
    %v2505 = vcombine.high %v2489, %v2489
    %v2506 = vcombine.high %v2490, %v2490
    %v2507 = vcombine.high %v2491, %v2491
    %v2508 = vcombine.high %v2492, %v2492
    %v2509 = vcombine.high %v2493, %v2493
    %v2510 = vcombine.high %v2494, %v2494
    %v2511 = vcombine.high %v2495, %v2495
    %v2512 = vrot.slane %v2488, 6
    %v2513 = vrot.slane %v2512, 4
    %v2514 = vrot.slane %v2504, 6
    %v2515 = vsel %vm876, %v2513, %v2514
    %v2516 = vrot.slane %v2489, 6
    %v2517 = vrot.slane %v2516, 4
    %v2518 = vrot.slane %v2505, 6
    %v2519 = vsel %vm876, %v2517, %v2518
    %v2520 = vrot.slane %v2490, 6
    %v2521 = vrot.slane %v2520, 4
    %v2522 = vrot.slane %v2506, 6
    %v2523 = vsel %vm876, %v2521, %v2522
    %v2524 = vrot.slane %v2491, 6
    %v2525 = vrot.slane %v2524, 4
    %v2526 = vrot.slane %v2507, 6
    %v2527 = vsel %vm876, %v2525, %v2526
    %v2528 = vrot.slane %v2492, 6
    %v2529 = vrot.slane %v2528, 4
    %v2530 = vrot.slane %v2508, 6
    %v2531 = vsel %vm876, %v2529, %v2530
    %v2532 = vrot.slane %v2493, 6
    %v2533 = vrot.slane %v2532, 4
    %v2534 = vrot.slane %v2509, 6
    %v2535 = vsel %vm876, %v2533, %v2534
    %v2536 = vrot.slane %v2494, 6
    %v2537 = vrot.slane %v2536, 4
    %v2538 = vrot.slane %v2510, 6
    %v2539 = vsel %vm876, %v2537, %v2538
    %v2540 = vrot.slane %v2495, 6
    %v2541 = vrot.slane %v2540, 4
    %v2542 = vrot.slane %v2511, 6
    %v2543 = vsel %vm876, %v2541, %v2542
    %v2544 = vld [vmem:[%s2] sm:$0xff]
    %v2545 = vld [vmem:[%s2 + $0x8] sm:$0xff]
    %v2546 = vld [vmem:[%s2 + $0x10] sm:$0xff]
    %v2547 = vld [vmem:[%s2 + $0x18] sm:$0xff]
    %v2548 = vld [vmem:[%s2 + $0x20] sm:$0xff]
    %v2549 = vld [vmem:[%s2 + $0x28] sm:$0xff]
    %v2550 = vld [vmem:[%s2 + $0x30] sm:$0xff]
    %v2551 = vld [vmem:[%s2 + $0x38] sm:$0xff]
    %v2552 = vld [vmem:[%s2 + $0x40] sm:$0xff]
    %v2553 = vld [vmem:[%s2 + $0x48] sm:$0xff]
    %v2554 = vld [vmem:[%s2 + $0x50] sm:$0xff]
    %v2555 = vld [vmem:[%s2 + $0x58] sm:$0xff]
    %v2556 = vld [vmem:[%s2 + $0x60] sm:$0xff]
    %v2557 = vld [vmem:[%s2 + $0x68] sm:$0xff]
    %v2558 = vld [vmem:[%s2 + $0x70] sm:$0xff]
    %v2559 = vld [vmem:[%s2 + $0x78] sm:$0xff]
    %v2560 = vcombine.low %v2515, %v2519
    %v2561 = vcombine.low %v2523, %v2527
    %v2562 = vcombine.low %v2531, %v2535
    %v2563 = vcombine.low %v2539, %v2543
    %2568 = vmatprep.subr.mxu0 0.0
    %2569 = vmatpush1.msra.mxu0 %v2559
    %2570 = vmatprep.subr.mxu0 0.0
    %2571 = vmatpush1.msra.mxu0 %v2558
    %2572 = vmatprep.subr.mxu0 0.0
    %2573 = vmatpush1.msra.mxu0 %v2557
    %2574 = vmatprep.subr.mxu0 0.0
    %2575 = vmatpush1.msra.mxu0 %v2556
    %2576 = vmatprep.subr.mxu0 0.0
    %2577 = vmatpush1.msra.mxu0 %v2555
    %2578 = vmatprep.subr.mxu0 0.0
    %2579 = vmatpush1.msra.mxu0 %v2554
    %2580 = vmatprep.subr.mxu0 0.0
    %2581 = vmatpush1.msra.mxu0 %v2553
    %2582 = vmatprep.subr.mxu0 0.0
    %2583 = vmatpush1.msra.mxu0 %v2552
    %2584 = vmatprep.subr.mxu0 0.0
    %2585 = vmatpush1.msra.mxu0 %v2551
    %2586 = vmatprep.subr.mxu0 0.0
    %2587 = vmatpush1.msra.mxu0 %v2550
    %2588 = vmatprep.subr.mxu0 0.0
    %2589 = vmatpush1.msra.mxu0 %v2549
    %2590 = vmatprep.subr.mxu0 0.0
    %2591 = vmatpush1.msra.mxu0 %v2548
    %2592 = vmatprep.subr.mxu0 0.0
    %2593 = vmatpush1.msra.mxu0 %v2547
    %2594 = vmatprep.subr.mxu0 0.0
    %2595 = vmatpush1.msra.mxu0 %v2546
    %2596 = vmatprep.subr.mxu0 0.0
    %2597 = vmatpush1.msra.mxu0 %v2545
    %2598 = vmatprep.subr.mxu0 0.0
    %2599 = vmatpush1.msra.mxu0 %v2544
    %2600 = vmatprep.subr.mxu0 0.0
    %2601 = vmatpush2.msra.mxu0 0.0
    %2602 = vmatprep.subr.mxu0 0.0
    %2603 = vmatpush2.msra.mxu0 0.0
    %2604 = vmatprep.subr.mxu0 0.0
    %2605 = vmatpush2.msra.mxu0 0.0
    %2606 = vmatprep.subr.mxu0 0.0
    %2607 = vmatpush2.msra.mxu0 0.0
    %2608 = vmatprep.subr.mxu0 0.0
    %2609 = vmatpush2.msra.mxu0 0.0
    %2610 = vmatprep.subr.mxu0 0.0
    %2611 = vmatpush2.msra.mxu0 0.0
    %2612 = vmatprep.subr.mxu0 0.0
    %2613 = vmatpush2.msra.mxu0 0.0
    %2614 = vmatprep.subr.mxu0 0.0
    %2615 = vmatpush2.msra.mxu0 0.0
    %2616 = vmatprep.subr.mxu0 0.0
    %2617 = vmatpush2.msra.mxu0 0.0
    %2618 = vmatprep.subr.mxu0 0.0
    %2619 = vmatpush2.msra.mxu0 0.0
    %2620 = vmatprep.subr.mxu0 0.0
    %2621 = vmatpush2.msra.mxu0 0.0
    %2622 = vmatprep.subr.mxu0 0.0
    %2623 = vmatpush2.msra.mxu0 0.0
    %2624 = vmatprep.subr.mxu0 0.0
    %2625 = vmatpush2.msra.mxu0 0.0
    %2626 = vmatprep.subr.mxu0 0.0
    %2627 = vmatpush2.msra.mxu0 0.0
    %2628 = vmatprep.subr.mxu0 0.0
    %2629 = vmatpush2.msra.mxu0 0.0
    %2630 = vmatprep.subr.mxu0 0.0
    %2631 = vmatpush2.msra.mxu0 0.0
    %2632 = vmatprep.mubr.f32.mxu0 0.0
    %2633 = vmatmul.mubr.f32.gmra.mxu0 %v2560
    %v2634 = vpop.f32.mrf.mxu0
    %v2635 = vadd.f32 0.0, %v2634
    %v2636 = vpop.f32.mrf.mxu0
    %2637 = vmatprep.mubr.f32.mxu0 0.0
    %2638 = vmatmul.mubr.f32.gmra.mxu0 %v2561
    %v2639 = vpop.f32.mrf.mxu0
    %v2640 = vadd.f32 0.0, %v2639
    %v2641 = vpop.f32.mrf.mxu0
    %2642 = vmatprep.mubr.f32.mxu0 0.0
    %2643 = vmatmul.mubr.f32.gmra.mxu0 %v2562
    %v2644 = vpop.f32.mrf.mxu0
    %v2645 = vadd.f32 0.0, %v2644
    %v2646 = vpop.f32.mrf.mxu0
    %2647 = vmatprep.mubr.f32.mxu0 0.0
    %2648 = vmatmul.mubr.f32.gmra.mxu0 %v2563
    %v2649 = vpop.f32.mrf.mxu0
    %v2650 = vadd.f32 0.0, %v2649
    %v2651 = vpop.f32.mrf.mxu0
    %2652 = vdwg.mxu0
    %s2653 = scalar_lea.vmem %s5, 224
    %2654 = vst.msk [vmem:[%s2653] sm:$0xff] %vm361, %v2635
    %2655 = vst.msk [vmem:[%s2653 + $0x8] sm:$0xff] %vm361, %v2640
    %2656 = vst.msk [vmem:[%s2653 + $0x10] sm:$0xff] %vm361, %v2645
    %2657 = vst.msk [vmem:[%s2653 + $0x18] sm:$0xff] %vm361, %v2650
    %v2658 = vsel %vm361, %v2635, 0.0
    %v2659 = vsel %vm361, %v2640, 0.0
    %v2660 = vadd.f32 %v2658, %v2659
    %v2661 = vsel %vm361, %v2645, 0.0
    %v2662 = vadd.f32 %v2660, %v2661
    %v2663 = vsel %vm361, %v2650, 0.0
    %v2664 = vadd.f32 %v2662, %v2663
    %v2665 = vrot.slane %v2664, 4
    %v2666 = vadd.f32 %v2664, %v2665
    %v2667 = vrot.slane %v2666, 2
    %v2668 = vadd.f32 %v2666, %v2667
    %v2669 = vrot.slane %v2668, 1
    %v2670 = vadd.f32 %v2668, %v2669
    %v2671 = vadd.f32 %v2344, %v2670
    %v2672 = vmul.f32 %v2635, %v2635
    %v2673 = vmul.f32 %v2640, %v2640
    %v2674 = vmul.f32 %v2645, %v2645
    %v2675 = vmul.f32 %v2650, %v2650
    %v2676 = vsel %vm361, %v2672, 0.0
    %v2677 = vsel %vm361, %v2673, 0.0
    %v2678 = vadd.f32 %v2676, %v2677
    %v2679 = vsel %vm361, %v2674, 0.0
    %v2680 = vadd.f32 %v2678, %v2679
    %v2681 = vsel %vm361, %v2675, 0.0
    %v2682 = vadd.f32 %v2680, %v2681
    %v2683 = vrot.slane %v2682, 4
    %v2684 = vadd.f32 %v2682, %v2683
    %v2685 = vrot.slane %v2684, 2
    %v2686 = vadd.f32 %v2684, %v2685
    %v2687 = vrot.slane %v2686, 1
    %v2688 = vadd.f32 %v2686, %v2687
    %v2689 = vadd.f32 %v2362, %v2688
    %s2690 = scalar_lea.vmem [#allocation2], 32
    %v2691 = vld [vmem:[%s2690] sm:$0x1]
    %v2692 = vlaneseq
    %v2693 = vshrl.u32 %v2692, 7
    %v2694 = vsub.s32 0, %v2693
    %v2695 = vrot.slane %v2691, %v2694
    %v2696 = vmul.f32 %v59, %v2695
    %v2697 = vmul.f32 %v60, %v2695
    %v2698 = vmul.f32 %v61, %v2695
    %v2699 = vmul.f32 %v62, %v2695
    %v2700 = vmul.f32 %v65, %v2695
    %v2701 = vmul.f32 %v66, %v2695
    %v2702 = vmul.f32 %v67, %v2695
    %v2703 = vmul.f32 %v68, %v2695
    %v2704 = vadd.f32 %v2696, 0.0
    %v2705 = vadd.f32 %v2697, 0.0
    %v2706 = vadd.f32 %v2698, 0.0
    %v2707 = vadd.f32 %v2699, 0.0
    %v2708 = vadd.f32 %v2700, 0.0
    %v2709 = vadd.f32 %v2701, 0.0
    %v2710 = vadd.f32 %v2702, 0.0
    %v2711 = vadd.f32 %v2703, 0.0
    %v2712 = vld [vmem:[%s2690 + $0x1] sm:$0x1]
    %v2713 = vlaneseq
    %v2714 = vshrl.u32 %v2713, 7
    %v2715 = vsub.s32 0, %v2714
    %v2716 = vrot.slane %v2712, %v2715
    %v2717 = vmul.f32 %v59, %v2716
    %v2718 = vmul.f32 %v60, %v2716
    %v2719 = vmul.f32 %v61, %v2716
    %v2720 = vmul.f32 %v62, %v2716
    %v2721 = vmul.f32 %v65, %v2716
    %v2722 = vmul.f32 %v66, %v2716
    %v2723 = vmul.f32 %v67, %v2716
    %v2724 = vmul.f32 %v68, %v2716
    %v2733 = vrot.slane %v2717, 7
    %v2734 = vrot.slane %v2718, 7
    %v2735 = vrot.slane %v2719, 7
    %v2736 = vrot.slane %v2720, 7
    %v2737 = vrot.slane %v2721, 7
    %v2738 = vrot.slane %v2722, 7
    %v2739 = vrot.slane %v2723, 7
    %v2740 = vrot.slane %v2724, 7
    %v2749 = vadd.f32 %v2704, %v2733
    %v2750 = vadd.f32 %v2705, %v2734
    %v2751 = vadd.f32 %v2706, %v2735
    %v2752 = vadd.f32 %v2707, %v2736
    %v2753 = vadd.f32 %v2708, %v2737
    %v2754 = vadd.f32 %v2709, %v2738
    %v2755 = vadd.f32 %v2710, %v2739
    %v2756 = vadd.f32 %v2711, %v2740
    %v2757 = vld [vmem:[%s2690 + $0x2] sm:$0x1]
    %v2758 = vlaneseq
    %v2759 = vshrl.u32 %v2758, 7
    %v2760 = vsub.s32 0, %v2759
    %v2761 = vrot.slane %v2757, %v2760
    %v2762 = vmul.f32 %v58, %v2761
    %v2763 = vmul.f32 %v59, %v2761
    %v2764 = vmul.f32 %v60, %v2761
    %v2765 = vmul.f32 %v61, %v2761
    %v2766 = vmul.f32 %v64, %v2761
    %v2767 = vmul.f32 %v65, %v2761
    %v2768 = vmul.f32 %v66, %v2761
    %v2769 = vmul.f32 %v67, %v2761
    %v2770 = vadd.f32 %v2749, %v2762
    %v2771 = vadd.f32 %v2750, %v2763
    %v2772 = vadd.f32 %v2751, %v2764
    %v2773 = vadd.f32 %v2752, %v2765
    %v2774 = vadd.f32 %v2753, %v2766
    %v2775 = vadd.f32 %v2754, %v2767
    %v2776 = vadd.f32 %v2755, %v2768
    %v2777 = vadd.f32 %v2756, %v2769
    %v2778 = vld [vmem:[%s2690 + $0x3] sm:$0x1]
    %v2779 = vlaneseq
    %v2780 = vshrl.u32 %v2779, 7
    %v2781 = vsub.s32 0, %v2780
    %v2782 = vrot.slane %v2778, %v2781
    %v2783 = vmul.f32 %v58, %v2782
    %v2784 = vmul.f32 %v59, %v2782
    %v2785 = vmul.f32 %v60, %v2782
    %v2786 = vmul.f32 %v61, %v2782
    %v2787 = vmul.f32 %v64, %v2782
    %v2788 = vmul.f32 %v65, %v2782
    %v2789 = vmul.f32 %v66, %v2782
    %v2790 = vmul.f32 %v67, %v2782
    %v2799 = vrot.slane %v2783, 7
    %v2800 = vrot.slane %v2784, 7
    %v2801 = vrot.slane %v2785, 7
    %v2802 = vrot.slane %v2786, 7
    %v2803 = vrot.slane %v2787, 7
    %v2804 = vrot.slane %v2788, 7
    %v2805 = vrot.slane %v2789, 7
    %v2806 = vrot.slane %v2790, 7
    %v2815 = vadd.f32 %v2770, %v2799
    %v2816 = vadd.f32 %v2771, %v2800
    %v2817 = vadd.f32 %v2772, %v2801
    %v2818 = vadd.f32 %v2773, %v2802
    %v2819 = vadd.f32 %v2774, %v2803
    %v2820 = vadd.f32 %v2775, %v2804
    %v2821 = vadd.f32 %v2776, %v2805
    %v2822 = vadd.f32 %v2777, %v2806
    %v2831 = vcombine.high %v2815, %v2815
    %v2832 = vcombine.high %v2816, %v2816
    %v2833 = vcombine.high %v2817, %v2817
    %v2834 = vcombine.high %v2818, %v2818
    %v2835 = vcombine.high %v2819, %v2819
    %v2836 = vcombine.high %v2820, %v2820
    %v2837 = vcombine.high %v2821, %v2821
    %v2838 = vcombine.high %v2822, %v2822
    %v2839 = vrot.slane %v2815, 5
    %v2840 = vrot.slane %v2839, 4
    %v2841 = vrot.slane %v2831, 5
    %v2842 = vsel %vm219, %v2840, %v2841
    %v2843 = vrot.slane %v2816, 5
    %v2844 = vrot.slane %v2843, 4
    %v2845 = vrot.slane %v2832, 5
    %v2846 = vsel %vm219, %v2844, %v2845
    %v2847 = vrot.slane %v2817, 5
    %v2848 = vrot.slane %v2847, 4
    %v2849 = vrot.slane %v2833, 5
    %v2850 = vsel %vm219, %v2848, %v2849
    %v2851 = vrot.slane %v2818, 5
    %v2852 = vrot.slane %v2851, 4
    %v2853 = vrot.slane %v2834, 5
    %v2854 = vsel %vm219, %v2852, %v2853
    %v2855 = vrot.slane %v2819, 5
    %v2856 = vrot.slane %v2855, 4
    %v2857 = vrot.slane %v2835, 5
    %v2858 = vsel %vm219, %v2856, %v2857
    %v2859 = vrot.slane %v2820, 5
    %v2860 = vrot.slane %v2859, 4
    %v2861 = vrot.slane %v2836, 5
    %v2862 = vsel %vm219, %v2860, %v2861
    %v2863 = vrot.slane %v2821, 5
    %v2864 = vrot.slane %v2863, 4
    %v2865 = vrot.slane %v2837, 5
    %v2866 = vsel %vm219, %v2864, %v2865
    %v2867 = vrot.slane %v2822, 5
    %v2868 = vrot.slane %v2867, 4
    %v2869 = vrot.slane %v2838, 5
    %v2870 = vsel %vm219, %v2868, %v2869
    %v2871 = vld [vmem:[%s2] sm:$0xff]
    %v2872 = vld [vmem:[%s2 + $0x8] sm:$0xff]
    %v2873 = vld [vmem:[%s2 + $0x10] sm:$0xff]
    %v2874 = vld [vmem:[%s2 + $0x18] sm:$0xff]
    %v2875 = vld [vmem:[%s2 + $0x20] sm:$0xff]
    %v2876 = vld [vmem:[%s2 + $0x28] sm:$0xff]
    %v2877 = vld [vmem:[%s2 + $0x30] sm:$0xff]
    %v2878 = vld [vmem:[%s2 + $0x38] sm:$0xff]
    %v2879 = vld [vmem:[%s2 + $0x40] sm:$0xff]
    %v2880 = vld [vmem:[%s2 + $0x48] sm:$0xff]
    %v2881 = vld [vmem:[%s2 + $0x50] sm:$0xff]
    %v2882 = vld [vmem:[%s2 + $0x58] sm:$0xff]
    %v2883 = vld [vmem:[%s2 + $0x60] sm:$0xff]
    %v2884 = vld [vmem:[%s2 + $0x68] sm:$0xff]
    %v2885 = vld [vmem:[%s2 + $0x70] sm:$0xff]
    %v2886 = vld [vmem:[%s2 + $0x78] sm:$0xff]
    %v2887 = vcombine.low %v2842, %v2846
    %v2888 = vcombine.low %v2850, %v2854
    %v2889 = vcombine.low %v2858, %v2862
    %v2890 = vcombine.low %v2866, %v2870
    %2895 = vmatprep.subr.mxu0 0.0
    %2896 = vmatpush1.msra.mxu0 %v2886
    %2897 = vmatprep.subr.mxu0 0.0
    %2898 = vmatpush1.msra.mxu0 %v2885
    %2899 = vmatprep.subr.mxu0 0.0
    %2900 = vmatpush1.msra.mxu0 %v2884
    %2901 = vmatprep.subr.mxu0 0.0
    %2902 = vmatpush1.msra.mxu0 %v2883
    %2903 = vmatprep.subr.mxu0 0.0
    %2904 = vmatpush1.msra.mxu0 %v2882
    %2905 = vmatprep.subr.mxu0 0.0
    %2906 = vmatpush1.msra.mxu0 %v2881
    %2907 = vmatprep.subr.mxu0 0.0
    %2908 = vmatpush1.msra.mxu0 %v2880
    %2909 = vmatprep.subr.mxu0 0.0
    %2910 = vmatpush1.msra.mxu0 %v2879
    %2911 = vmatprep.subr.mxu0 0.0
    %2912 = vmatpush1.msra.mxu0 %v2878
    %2913 = vmatprep.subr.mxu0 0.0
    %2914 = vmatpush1.msra.mxu0 %v2877
    %2915 = vmatprep.subr.mxu0 0.0
    %2916 = vmatpush1.msra.mxu0 %v2876
    %2917 = vmatprep.subr.mxu0 0.0
    %2918 = vmatpush1.msra.mxu0 %v2875
    %2919 = vmatprep.subr.mxu0 0.0
    %2920 = vmatpush1.msra.mxu0 %v2874
    %2921 = vmatprep.subr.mxu0 0.0
    %2922 = vmatpush1.msra.mxu0 %v2873
    %2923 = vmatprep.subr.mxu0 0.0
    %2924 = vmatpush1.msra.mxu0 %v2872
    %2925 = vmatprep.subr.mxu0 0.0
    %2926 = vmatpush1.msra.mxu0 %v2871
    %2927 = vmatprep.subr.mxu0 0.0
    %2928 = vmatpush2.msra.mxu0 0.0
    %2929 = vmatprep.subr.mxu0 0.0
    %2930 = vmatpush2.msra.mxu0 0.0
    %2931 = vmatprep.subr.mxu0 0.0
    %2932 = vmatpush2.msra.mxu0 0.0
    %2933 = vmatprep.subr.mxu0 0.0
    %2934 = vmatpush2.msra.mxu0 0.0
    %2935 = vmatprep.subr.mxu0 0.0
    %2936 = vmatpush2.msra.mxu0 0.0
    %2937 = vmatprep.subr.mxu0 0.0
    %2938 = vmatpush2.msra.mxu0 0.0
    %2939 = vmatprep.subr.mxu0 0.0
    %2940 = vmatpush2.msra.mxu0 0.0
    %2941 = vmatprep.subr.mxu0 0.0
    %2942 = vmatpush2.msra.mxu0 0.0
    %2943 = vmatprep.subr.mxu0 0.0
    %2944 = vmatpush2.msra.mxu0 0.0
    %2945 = vmatprep.subr.mxu0 0.0
    %2946 = vmatpush2.msra.mxu0 0.0
    %2947 = vmatprep.subr.mxu0 0.0
    %2948 = vmatpush2.msra.mxu0 0.0
    %2949 = vmatprep.subr.mxu0 0.0
    %2950 = vmatpush2.msra.mxu0 0.0
    %2951 = vmatprep.subr.mxu0 0.0
    %2952 = vmatpush2.msra.mxu0 0.0
    %2953 = vmatprep.subr.mxu0 0.0
    %2954 = vmatpush2.msra.mxu0 0.0
    %2955 = vmatprep.subr.mxu0 0.0
    %2956 = vmatpush2.msra.mxu0 0.0
    %2957 = vmatprep.subr.mxu0 0.0
    %2958 = vmatpush2.msra.mxu0 0.0
    %2959 = vmatprep.mubr.f32.mxu0 0.0
    %2960 = vmatmul.mubr.f32.gmra.mxu0 %v2887
    %v2961 = vpop.f32.mrf.mxu0
    %v2962 = vadd.f32 0.0, %v2961
    %v2963 = vpop.f32.mrf.mxu0
    %2964 = vmatprep.mubr.f32.mxu0 0.0
    %2965 = vmatmul.mubr.f32.gmra.mxu0 %v2888
    %v2966 = vpop.f32.mrf.mxu0
    %v2967 = vadd.f32 0.0, %v2966
    %v2968 = vpop.f32.mrf.mxu0
    %2969 = vmatprep.mubr.f32.mxu0 0.0
    %2970 = vmatmul.mubr.f32.gmra.mxu0 %v2889
    %v2971 = vpop.f32.mrf.mxu0
    %v2972 = vadd.f32 0.0, %v2971
    %v2973 = vpop.f32.mrf.mxu0
    %2974 = vmatprep.mubr.f32.mxu0 0.0
    %2975 = vmatmul.mubr.f32.gmra.mxu0 %v2890
    %v2976 = vpop.f32.mrf.mxu0
    %v2977 = vadd.f32 0.0, %v2976
    %v2978 = vpop.f32.mrf.mxu0
    %2979 = vdwg.mxu0
    %s2980 = scalar_lea.vmem %s5, 256
    %2981 = vst.msk [vmem:[%s2980] sm:$0xff] %vm361, %v2962
    %2982 = vst.msk [vmem:[%s2980 + $0x8] sm:$0xff] %vm361, %v2967
    %2983 = vst.msk [vmem:[%s2980 + $0x10] sm:$0xff] %vm361, %v2972
    %2984 = vst.msk [vmem:[%s2980 + $0x18] sm:$0xff] %vm361, %v2977
    %v2985 = vsel %vm361, %v2962, 0.0
    %v2986 = vsel %vm361, %v2967, 0.0
    %v2987 = vadd.f32 %v2985, %v2986
    %v2988 = vsel %vm361, %v2972, 0.0
    %v2989 = vadd.f32 %v2987, %v2988
    %v2990 = vsel %vm361, %v2977, 0.0
    %v2991 = vadd.f32 %v2989, %v2990
    %v2992 = vrot.slane %v2991, 4
    %v2993 = vadd.f32 %v2991, %v2992
    %v2994 = vrot.slane %v2993, 2
    %v2995 = vadd.f32 %v2993, %v2994
    %v2996 = vrot.slane %v2995, 1
    %v2997 = vadd.f32 %v2995, %v2996
    %v2998 = vadd.f32 %v2671, %v2997
    %v2999 = vmul.f32 %v2962, %v2962
    %v3000 = vmul.f32 %v2967, %v2967
    %v3001 = vmul.f32 %v2972, %v2972
    %v3002 = vmul.f32 %v2977, %v2977
    %v3003 = vsel %vm361, %v2999, 0.0
    %v3004 = vsel %vm361, %v3000, 0.0
    %v3005 = vadd.f32 %v3003, %v3004
    %v3006 = vsel %vm361, %v3001, 0.0
    %v3007 = vadd.f32 %v3005, %v3006
    %v3008 = vsel %vm361, %v3002, 0.0
    %v3009 = vadd.f32 %v3007, %v3008
    %v3010 = vrot.slane %v3009, 4
    %v3011 = vadd.f32 %v3009, %v3010
    %v3012 = vrot.slane %v3011, 2
    %v3013 = vadd.f32 %v3011, %v3012
    %v3014 = vrot.slane %v3013, 1
    %v3015 = vadd.f32 %v3013, %v3014
    %v3016 = vadd.f32 %v2689, %v3015
    %s3017 = scalar_lea.vmem [#allocation2], 36
    %v3018 = vld [vmem:[%s3017] sm:$0x1]
    %v3019 = vlaneseq
    %v3020 = vshrl.u32 %v3019, 7
    %v3021 = vsub.s32 0, %v3020
    %v3022 = vrot.slane %v3018, %v3021
    %v3023 = vmul.f32 %v59, %v3022
    %v3024 = vmul.f32 %v60, %v3022
    %v3025 = vmul.f32 %v61, %v3022
    %v3026 = vmul.f32 %v62, %v3022
    %v3027 = vmul.f32 %v65, %v3022
    %v3028 = vmul.f32 %v66, %v3022
    %v3029 = vmul.f32 %v67, %v3022
    %v3030 = vmul.f32 %v68, %v3022
    %v3031 = vadd.f32 %v3023, 0.0
    %v3032 = vadd.f32 %v3024, 0.0
    %v3033 = vadd.f32 %v3025, 0.0
    %v3034 = vadd.f32 %v3026, 0.0
    %v3035 = vadd.f32 %v3027, 0.0
    %v3036 = vadd.f32 %v3028, 0.0
    %v3037 = vadd.f32 %v3029, 0.0
    %v3038 = vadd.f32 %v3030, 0.0
    %v3039 = vld [vmem:[%s3017 + $0x1] sm:$0x1]
    %v3040 = vlaneseq
    %v3041 = vshrl.u32 %v3040, 7
    %v3042 = vsub.s32 0, %v3041
    %v3043 = vrot.slane %v3039, %v3042
    %v3044 = vmul.f32 %v59, %v3043
    %v3045 = vmul.f32 %v60, %v3043
    %v3046 = vmul.f32 %v61, %v3043
    %v3047 = vmul.f32 %v62, %v3043
    %v3048 = vmul.f32 %v65, %v3043
    %v3049 = vmul.f32 %v66, %v3043
    %v3050 = vmul.f32 %v67, %v3043
    %v3051 = vmul.f32 %v68, %v3043
    %v3060 = vrot.slane %v3044, 7
    %v3061 = vrot.slane %v3045, 7
    %v3062 = vrot.slane %v3046, 7
    %v3063 = vrot.slane %v3047, 7
    %v3064 = vrot.slane %v3048, 7
    %v3065 = vrot.slane %v3049, 7
    %v3066 = vrot.slane %v3050, 7
    %v3067 = vrot.slane %v3051, 7
    %v3076 = vadd.f32 %v3031, %v3060
    %v3077 = vadd.f32 %v3032, %v3061
    %v3078 = vadd.f32 %v3033, %v3062
    %v3079 = vadd.f32 %v3034, %v3063
    %v3080 = vadd.f32 %v3035, %v3064
    %v3081 = vadd.f32 %v3036, %v3065
    %v3082 = vadd.f32 %v3037, %v3066
    %v3083 = vadd.f32 %v3038, %v3067
    %v3084 = vld [vmem:[%s3017 + $0x2] sm:$0x1]
    %v3085 = vlaneseq
    %v3086 = vshrl.u32 %v3085, 7
    %v3087 = vsub.s32 0, %v3086
    %v3088 = vrot.slane %v3084, %v3087
    %v3089 = vmul.f32 %v58, %v3088
    %v3090 = vmul.f32 %v59, %v3088
    %v3091 = vmul.f32 %v60, %v3088
    %v3092 = vmul.f32 %v61, %v3088
    %v3093 = vmul.f32 %v64, %v3088
    %v3094 = vmul.f32 %v65, %v3088
    %v3095 = vmul.f32 %v66, %v3088
    %v3096 = vmul.f32 %v67, %v3088
    %v3097 = vadd.f32 %v3076, %v3089
    %v3098 = vadd.f32 %v3077, %v3090
    %v3099 = vadd.f32 %v3078, %v3091
    %v3100 = vadd.f32 %v3079, %v3092
    %v3101 = vadd.f32 %v3080, %v3093
    %v3102 = vadd.f32 %v3081, %v3094
    %v3103 = vadd.f32 %v3082, %v3095
    %v3104 = vadd.f32 %v3083, %v3096
    %v3105 = vld [vmem:[%s3017 + $0x3] sm:$0x1]
    %v3106 = vlaneseq
    %v3107 = vshrl.u32 %v3106, 7
    %v3108 = vsub.s32 0, %v3107
    %v3109 = vrot.slane %v3105, %v3108
    %v3110 = vmul.f32 %v58, %v3109
    %v3111 = vmul.f32 %v59, %v3109
    %v3112 = vmul.f32 %v60, %v3109
    %v3113 = vmul.f32 %v61, %v3109
    %v3114 = vmul.f32 %v64, %v3109
    %v3115 = vmul.f32 %v65, %v3109
    %v3116 = vmul.f32 %v66, %v3109
    %v3117 = vmul.f32 %v67, %v3109
    %v3126 = vrot.slane %v3110, 7
    %v3127 = vrot.slane %v3111, 7
    %v3128 = vrot.slane %v3112, 7
    %v3129 = vrot.slane %v3113, 7
    %v3130 = vrot.slane %v3114, 7
    %v3131 = vrot.slane %v3115, 7
    %v3132 = vrot.slane %v3116, 7
    %v3133 = vrot.slane %v3117, 7
    %v3142 = vadd.f32 %v3097, %v3126
    %v3143 = vadd.f32 %v3098, %v3127
    %v3144 = vadd.f32 %v3099, %v3128
    %v3145 = vadd.f32 %v3100, %v3129
    %v3146 = vadd.f32 %v3101, %v3130
    %v3147 = vadd.f32 %v3102, %v3131
    %v3148 = vadd.f32 %v3103, %v3132
    %v3149 = vadd.f32 %v3104, %v3133
    %v3158 = vcombine.high %v3142, %v3142
    %v3159 = vcombine.high %v3143, %v3143
    %v3160 = vcombine.high %v3144, %v3144
    %v3161 = vcombine.high %v3145, %v3145
    %v3162 = vcombine.high %v3146, %v3146
    %v3163 = vcombine.high %v3147, %v3147
    %v3164 = vcombine.high %v3148, %v3148
    %v3165 = vcombine.high %v3149, %v3149
    %v3166 = vrot.slane %v3142, 5
    %v3167 = vrot.slane %v3166, 4
    %v3168 = vrot.slane %v3158, 5
    %v3169 = vsel %vm219, %v3167, %v3168
    %v3170 = vrot.slane %v3143, 5
    %v3171 = vrot.slane %v3170, 4
    %v3172 = vrot.slane %v3159, 5
    %v3173 = vsel %vm219, %v3171, %v3172
    %v3174 = vrot.slane %v3144, 5
    %v3175 = vrot.slane %v3174, 4
    %v3176 = vrot.slane %v3160, 5
    %v3177 = vsel %vm219, %v3175, %v3176
    %v3178 = vrot.slane %v3145, 5
    %v3179 = vrot.slane %v3178, 4
    %v3180 = vrot.slane %v3161, 5
    %v3181 = vsel %vm219, %v3179, %v3180
    %v3182 = vrot.slane %v3146, 5
    %v3183 = vrot.slane %v3182, 4
    %v3184 = vrot.slane %v3162, 5
    %v3185 = vsel %vm219, %v3183, %v3184
    %v3186 = vrot.slane %v3147, 5
    %v3187 = vrot.slane %v3186, 4
    %v3188 = vrot.slane %v3163, 5
    %v3189 = vsel %vm219, %v3187, %v3188
    %v3190 = vrot.slane %v3148, 5
    %v3191 = vrot.slane %v3190, 4
    %v3192 = vrot.slane %v3164, 5
    %v3193 = vsel %vm219, %v3191, %v3192
    %v3194 = vrot.slane %v3149, 5
    %v3195 = vrot.slane %v3194, 4
    %v3196 = vrot.slane %v3165, 5
    %v3197 = vsel %vm219, %v3195, %v3196
    %v3198 = vld [vmem:[%s2] sm:$0xff]
    %v3199 = vld [vmem:[%s2 + $0x8] sm:$0xff]
    %v3200 = vld [vmem:[%s2 + $0x10] sm:$0xff]
    %v3201 = vld [vmem:[%s2 + $0x18] sm:$0xff]
    %v3202 = vld [vmem:[%s2 + $0x20] sm:$0xff]
    %v3203 = vld [vmem:[%s2 + $0x28] sm:$0xff]
    %v3204 = vld [vmem:[%s2 + $0x30] sm:$0xff]
    %v3205 = vld [vmem:[%s2 + $0x38] sm:$0xff]
    %v3206 = vld [vmem:[%s2 + $0x40] sm:$0xff]
    %v3207 = vld [vmem:[%s2 + $0x48] sm:$0xff]
    %v3208 = vld [vmem:[%s2 + $0x50] sm:$0xff]
    %v3209 = vld [vmem:[%s2 + $0x58] sm:$0xff]
    %v3210 = vld [vmem:[%s2 + $0x60] sm:$0xff]
    %v3211 = vld [vmem:[%s2 + $0x68] sm:$0xff]
    %v3212 = vld [vmem:[%s2 + $0x70] sm:$0xff]
    %v3213 = vld [vmem:[%s2 + $0x78] sm:$0xff]
    %v3214 = vcombine.low %v3169, %v3173
    %v3215 = vcombine.low %v3177, %v3181
    %v3216 = vcombine.low %v3185, %v3189
    %v3217 = vcombine.low %v3193, %v3197
    %3222 = vmatprep.subr.mxu0 0.0
    %3223 = vmatpush1.msra.mxu0 %v3213
    %3224 = vmatprep.subr.mxu0 0.0
    %3225 = vmatpush1.msra.mxu0 %v3212
    %3226 = vmatprep.subr.mxu0 0.0
    %3227 = vmatpush1.msra.mxu0 %v3211
    %3228 = vmatprep.subr.mxu0 0.0
    %3229 = vmatpush1.msra.mxu0 %v3210
    %3230 = vmatprep.subr.mxu0 0.0
    %3231 = vmatpush1.msra.mxu0 %v3209
    %3232 = vmatprep.subr.mxu0 0.0
    %3233 = vmatpush1.msra.mxu0 %v3208
    %3234 = vmatprep.subr.mxu0 0.0
    %3235 = vmatpush1.msra.mxu0 %v3207
    %3236 = vmatprep.subr.mxu0 0.0
    %3237 = vmatpush1.msra.mxu0 %v3206
    %3238 = vmatprep.subr.mxu0 0.0
    %3239 = vmatpush1.msra.mxu0 %v3205
    %3240 = vmatprep.subr.mxu0 0.0
    %3241 = vmatpush1.msra.mxu0 %v3204
    %3242 = vmatprep.subr.mxu0 0.0
    %3243 = vmatpush1.msra.mxu0 %v3203
    %3244 = vmatprep.subr.mxu0 0.0
    %3245 = vmatpush1.msra.mxu0 %v3202
    %3246 = vmatprep.subr.mxu0 0.0
    %3247 = vmatpush1.msra.mxu0 %v3201
    %3248 = vmatprep.subr.mxu0 0.0
    %3249 = vmatpush1.msra.mxu0 %v3200
    %3250 = vmatprep.subr.mxu0 0.0
    %3251 = vmatpush1.msra.mxu0 %v3199
    %3252 = vmatprep.subr.mxu0 0.0
    %3253 = vmatpush1.msra.mxu0 %v3198
    %3254 = vmatprep.subr.mxu0 0.0
    %3255 = vmatpush2.msra.mxu0 0.0
    %3256 = vmatprep.subr.mxu0 0.0
    %3257 = vmatpush2.msra.mxu0 0.0
    %3258 = vmatprep.subr.mxu0 0.0
    %3259 = vmatpush2.msra.mxu0 0.0
    %3260 = vmatprep.subr.mxu0 0.0
    %3261 = vmatpush2.msra.mxu0 0.0
    %3262 = vmatprep.subr.mxu0 0.0
    %3263 = vmatpush2.msra.mxu0 0.0
    %3264 = vmatprep.subr.mxu0 0.0
    %3265 = vmatpush2.msra.mxu0 0.0
    %3266 = vmatprep.subr.mxu0 0.0
    %3267 = vmatpush2.msra.mxu0 0.0
    %3268 = vmatprep.subr.mxu0 0.0
    %3269 = vmatpush2.msra.mxu0 0.0
    %3270 = vmatprep.subr.mxu0 0.0
    %3271 = vmatpush2.msra.mxu0 0.0
    %3272 = vmatprep.subr.mxu0 0.0
    %3273 = vmatpush2.msra.mxu0 0.0
    %3274 = vmatprep.subr.mxu0 0.0
    %3275 = vmatpush2.msra.mxu0 0.0
    %3276 = vmatprep.subr.mxu0 0.0
    %3277 = vmatpush2.msra.mxu0 0.0
    %3278 = vmatprep.subr.mxu0 0.0
    %3279 = vmatpush2.msra.mxu0 0.0
    %3280 = vmatprep.subr.mxu0 0.0
    %3281 = vmatpush2.msra.mxu0 0.0
    %3282 = vmatprep.subr.mxu0 0.0
    %3283 = vmatpush2.msra.mxu0 0.0
    %3284 = vmatprep.subr.mxu0 0.0
    %3285 = vmatpush2.msra.mxu0 0.0
    %3286 = vmatprep.mubr.f32.mxu0 0.0
    %3287 = vmatmul.mubr.f32.gmra.mxu0 %v3214
    %v3288 = vpop.f32.mrf.mxu0
    %v3289 = vadd.f32 0.0, %v3288
    %v3290 = vpop.f32.mrf.mxu0
    %3291 = vmatprep.mubr.f32.mxu0 0.0
    %3292 = vmatmul.mubr.f32.gmra.mxu0 %v3215
    %v3293 = vpop.f32.mrf.mxu0
    %v3294 = vadd.f32 0.0, %v3293
    %v3295 = vpop.f32.mrf.mxu0
    %3296 = vmatprep.mubr.f32.mxu0 0.0
    %3297 = vmatmul.mubr.f32.gmra.mxu0 %v3216
    %v3298 = vpop.f32.mrf.mxu0
    %v3299 = vadd.f32 0.0, %v3298
    %v3300 = vpop.f32.mrf.mxu0
    %3301 = vmatprep.mubr.f32.mxu0 0.0
    %3302 = vmatmul.mubr.f32.gmra.mxu0 %v3217
    %v3303 = vpop.f32.mrf.mxu0
    %v3304 = vadd.f32 0.0, %v3303
    %v3305 = vpop.f32.mrf.mxu0
    %3306 = vdwg.mxu0
    %s3307 = scalar_lea.vmem %s5, 288
    %3308 = vst.msk [vmem:[%s3307] sm:$0xff] %vm361, %v3289
    %3309 = vst.msk [vmem:[%s3307 + $0x8] sm:$0xff] %vm361, %v3294
    %3310 = vst.msk [vmem:[%s3307 + $0x10] sm:$0xff] %vm361, %v3299
    %3311 = vst.msk [vmem:[%s3307 + $0x18] sm:$0xff] %vm361, %v3304
    %v3312 = vsel %vm361, %v3289, 0.0
    %v3313 = vsel %vm361, %v3294, 0.0
    %v3314 = vadd.f32 %v3312, %v3313
    %v3315 = vsel %vm361, %v3299, 0.0
    %v3316 = vadd.f32 %v3314, %v3315
    %v3317 = vsel %vm361, %v3304, 0.0
    %v3318 = vadd.f32 %v3316, %v3317
    %v3319 = vrot.slane %v3318, 4
    %v3320 = vadd.f32 %v3318, %v3319
    %v3321 = vrot.slane %v3320, 2
    %v3322 = vadd.f32 %v3320, %v3321
    %v3323 = vrot.slane %v3322, 1
    %v3324 = vadd.f32 %v3322, %v3323
    %v3325 = vadd.f32 %v2998, %v3324
    %v3326 = vmul.f32 %v3289, %v3289
    %v3327 = vmul.f32 %v3294, %v3294
    %v3328 = vmul.f32 %v3299, %v3299
    %v3329 = vmul.f32 %v3304, %v3304
    %v3330 = vsel %vm361, %v3326, 0.0
    %v3331 = vsel %vm361, %v3327, 0.0
    %v3332 = vadd.f32 %v3330, %v3331
    %v3333 = vsel %vm361, %v3328, 0.0
    %v3334 = vadd.f32 %v3332, %v3333
    %v3335 = vsel %vm361, %v3329, 0.0
    %v3336 = vadd.f32 %v3334, %v3335
    %v3337 = vrot.slane %v3336, 4
    %v3338 = vadd.f32 %v3336, %v3337
    %v3339 = vrot.slane %v3338, 2
    %v3340 = vadd.f32 %v3338, %v3339
    %v3341 = vrot.slane %v3340, 1
    %v3342 = vadd.f32 %v3340, %v3341
    %v3343 = vadd.f32 %v3016, %v3342
    %s3344 = scalar_lea.vmem [#allocation2], 40
    %v3345 = vld [vmem:[%s3344] sm:$0x1]
    %v3346 = vlaneseq
    %v3347 = vshrl.u32 %v3346, 7
    %v3348 = vsub.s32 0, %v3347
    %v3349 = vrot.slane %v3345, %v3348
    %v3350 = vmul.f32 %v59, %v3349
    %v3351 = vmul.f32 %v60, %v3349
    %v3352 = vmul.f32 %v61, %v3349
    %v3353 = vmul.f32 %v62, %v3349
    %v3354 = vmul.f32 %v65, %v3349
    %v3355 = vmul.f32 %v66, %v3349
    %v3356 = vmul.f32 %v67, %v3349
    %v3357 = vmul.f32 %v68, %v3349
    %v3358 = vadd.f32 %v3350, 0.0
    %v3359 = vadd.f32 %v3351, 0.0
    %v3360 = vadd.f32 %v3352, 0.0
    %v3361 = vadd.f32 %v3353, 0.0
    %v3362 = vadd.f32 %v3354, 0.0
    %v3363 = vadd.f32 %v3355, 0.0
    %v3364 = vadd.f32 %v3356, 0.0
    %v3365 = vadd.f32 %v3357, 0.0
    %v3366 = vld [vmem:[%s3344 + $0x1] sm:$0x1]
    %v3367 = vlaneseq
    %v3368 = vshrl.u32 %v3367, 7
    %v3369 = vsub.s32 0, %v3368
    %v3370 = vrot.slane %v3366, %v3369
    %v3371 = vmul.f32 %v59, %v3370
    %v3372 = vmul.f32 %v60, %v3370
    %v3373 = vmul.f32 %v61, %v3370
    %v3374 = vmul.f32 %v62, %v3370
    %v3375 = vmul.f32 %v65, %v3370
    %v3376 = vmul.f32 %v66, %v3370
    %v3377 = vmul.f32 %v67, %v3370
    %v3378 = vmul.f32 %v68, %v3370
    %v3387 = vrot.slane %v3371, 7
    %v3388 = vrot.slane %v3372, 7
    %v3389 = vrot.slane %v3373, 7
    %v3390 = vrot.slane %v3374, 7
    %v3391 = vrot.slane %v3375, 7
    %v3392 = vrot.slane %v3376, 7
    %v3393 = vrot.slane %v3377, 7
    %v3394 = vrot.slane %v3378, 7
    %v3403 = vadd.f32 %v3358, %v3387
    %v3404 = vadd.f32 %v3359, %v3388
    %v3405 = vadd.f32 %v3360, %v3389
    %v3406 = vadd.f32 %v3361, %v3390
    %v3407 = vadd.f32 %v3362, %v3391
    %v3408 = vadd.f32 %v3363, %v3392
    %v3409 = vadd.f32 %v3364, %v3393
    %v3410 = vadd.f32 %v3365, %v3394
    %v3411 = vld [vmem:[%s3344 + $0x2] sm:$0x1]
    %v3412 = vlaneseq
    %v3413 = vshrl.u32 %v3412, 7
    %v3414 = vsub.s32 0, %v3413
    %v3415 = vrot.slane %v3411, %v3414
    %v3416 = vmul.f32 %v58, %v3415
    %v3417 = vmul.f32 %v59, %v3415
    %v3418 = vmul.f32 %v60, %v3415
    %v3419 = vmul.f32 %v61, %v3415
    %v3420 = vmul.f32 %v64, %v3415
    %v3421 = vmul.f32 %v65, %v3415
    %v3422 = vmul.f32 %v66, %v3415
    %v3423 = vmul.f32 %v67, %v3415
    %v3424 = vadd.f32 %v3403, %v3416
    %v3425 = vadd.f32 %v3404, %v3417
    %v3426 = vadd.f32 %v3405, %v3418
    %v3427 = vadd.f32 %v3406, %v3419
    %v3428 = vadd.f32 %v3407, %v3420
    %v3429 = vadd.f32 %v3408, %v3421
    %v3430 = vadd.f32 %v3409, %v3422
    %v3431 = vadd.f32 %v3410, %v3423
    %v3432 = vld [vmem:[%s3344 + $0x3] sm:$0x1]
    %v3433 = vlaneseq
    %v3434 = vshrl.u32 %v3433, 7
    %v3435 = vsub.s32 0, %v3434
    %v3436 = vrot.slane %v3432, %v3435
    %v3437 = vmul.f32 %v58, %v3436
    %v3438 = vmul.f32 %v59, %v3436
    %v3439 = vmul.f32 %v60, %v3436
    %v3440 = vmul.f32 %v61, %v3436
    %v3441 = vmul.f32 %v64, %v3436
    %v3442 = vmul.f32 %v65, %v3436
    %v3443 = vmul.f32 %v66, %v3436
    %v3444 = vmul.f32 %v67, %v3436
    %v3453 = vrot.slane %v3437, 7
    %v3454 = vrot.slane %v3438, 7
    %v3455 = vrot.slane %v3439, 7
    %v3456 = vrot.slane %v3440, 7
    %v3457 = vrot.slane %v3441, 7
    %v3458 = vrot.slane %v3442, 7
    %v3459 = vrot.slane %v3443, 7
    %v3460 = vrot.slane %v3444, 7
    %v3469 = vadd.f32 %v3424, %v3453
    %v3470 = vadd.f32 %v3425, %v3454
    %v3471 = vadd.f32 %v3426, %v3455
    %v3472 = vadd.f32 %v3427, %v3456
    %v3473 = vadd.f32 %v3428, %v3457
    %v3474 = vadd.f32 %v3429, %v3458
    %v3475 = vadd.f32 %v3430, %v3459
    %v3476 = vadd.f32 %v3431, %v3460
    %v3485 = vcombine.high %v3469, %v3469
    %v3486 = vcombine.high %v3470, %v3470
    %v3487 = vcombine.high %v3471, %v3471
    %v3488 = vcombine.high %v3472, %v3472
    %v3489 = vcombine.high %v3473, %v3473
    %v3490 = vcombine.high %v3474, %v3474
    %v3491 = vcombine.high %v3475, %v3475
    %v3492 = vcombine.high %v3476, %v3476
    %v3493 = vrot.slane %v3469, 6
    %v3494 = vrot.slane %v3493, 4
    %v3495 = vrot.slane %v3485, 6
    %v3496 = vsel %vm876, %v3494, %v3495
    %v3497 = vrot.slane %v3470, 6
    %v3498 = vrot.slane %v3497, 4
    %v3499 = vrot.slane %v3486, 6
    %v3500 = vsel %vm876, %v3498, %v3499
    %v3501 = vrot.slane %v3471, 6
    %v3502 = vrot.slane %v3501, 4
    %v3503 = vrot.slane %v3487, 6
    %v3504 = vsel %vm876, %v3502, %v3503
    %v3505 = vrot.slane %v3472, 6
    %v3506 = vrot.slane %v3505, 4
    %v3507 = vrot.slane %v3488, 6
    %v3508 = vsel %vm876, %v3506, %v3507
    %v3509 = vrot.slane %v3473, 6
    %v3510 = vrot.slane %v3509, 4
    %v3511 = vrot.slane %v3489, 6
    %v3512 = vsel %vm876, %v3510, %v3511
    %v3513 = vrot.slane %v3474, 6
    %v3514 = vrot.slane %v3513, 4
    %v3515 = vrot.slane %v3490, 6
    %v3516 = vsel %vm876, %v3514, %v3515
    %v3517 = vrot.slane %v3475, 6
    %v3518 = vrot.slane %v3517, 4
    %v3519 = vrot.slane %v3491, 6
    %v3520 = vsel %vm876, %v3518, %v3519
    %v3521 = vrot.slane %v3476, 6
    %v3522 = vrot.slane %v3521, 4
    %v3523 = vrot.slane %v3492, 6
    %v3524 = vsel %vm876, %v3522, %v3523
    %v3525 = vld [vmem:[%s2] sm:$0xff]
    %v3526 = vld [vmem:[%s2 + $0x8] sm:$0xff]
    %v3527 = vld [vmem:[%s2 + $0x10] sm:$0xff]
    %v3528 = vld [vmem:[%s2 + $0x18] sm:$0xff]
    %v3529 = vld [vmem:[%s2 + $0x20] sm:$0xff]
    %v3530 = vld [vmem:[%s2 + $0x28] sm:$0xff]
    %v3531 = vld [vmem:[%s2 + $0x30] sm:$0xff]
    %v3532 = vld [vmem:[%s2 + $0x38] sm:$0xff]
    %v3533 = vld [vmem:[%s2 + $0x40] sm:$0xff]
    %v3534 = vld [vmem:[%s2 + $0x48] sm:$0xff]
    %v3535 = vld [vmem:[%s2 + $0x50] sm:$0xff]
    %v3536 = vld [vmem:[%s2 + $0x58] sm:$0xff]
    %v3537 = vld [vmem:[%s2 + $0x60] sm:$0xff]
    %v3538 = vld [vmem:[%s2 + $0x68] sm:$0xff]
    %v3539 = vld [vmem:[%s2 + $0x70] sm:$0xff]
    %v3540 = vld [vmem:[%s2 + $0x78] sm:$0xff]
    %v3541 = vcombine.low %v3496, %v3500
    %v3542 = vcombine.low %v3504, %v3508
    %v3543 = vcombine.low %v3512, %v3516
    %v3544 = vcombine.low %v3520, %v3524
    %3549 = vmatprep.subr.mxu0 0.0
    %3550 = vmatpush1.msra.mxu0 %v3540
    %3551 = vmatprep.subr.mxu0 0.0
    %3552 = vmatpush1.msra.mxu0 %v3539
    %3553 = vmatprep.subr.mxu0 0.0
    %3554 = vmatpush1.msra.mxu0 %v3538
    %3555 = vmatprep.subr.mxu0 0.0
    %3556 = vmatpush1.msra.mxu0 %v3537
    %3557 = vmatprep.subr.mxu0 0.0
    %3558 = vmatpush1.msra.mxu0 %v3536
    %3559 = vmatprep.subr.mxu0 0.0
    %3560 = vmatpush1.msra.mxu0 %v3535
    %3561 = vmatprep.subr.mxu0 0.0
    %3562 = vmatpush1.msra.mxu0 %v3534
    %3563 = vmatprep.subr.mxu0 0.0
    %3564 = vmatpush1.msra.mxu0 %v3533
    %3565 = vmatprep.subr.mxu0 0.0
    %3566 = vmatpush1.msra.mxu0 %v3532
    %3567 = vmatprep.subr.mxu0 0.0
    %3568 = vmatpush1.msra.mxu0 %v3531
    %3569 = vmatprep.subr.mxu0 0.0
    %3570 = vmatpush1.msra.mxu0 %v3530
    %3571 = vmatprep.subr.mxu0 0.0
    %3572 = vmatpush1.msra.mxu0 %v3529
    %3573 = vmatprep.subr.mxu0 0.0
    %3574 = vmatpush1.msra.mxu0 %v3528
    %3575 = vmatprep.subr.mxu0 0.0
    %3576 = vmatpush1.msra.mxu0 %v3527
    %3577 = vmatprep.subr.mxu0 0.0
    %3578 = vmatpush1.msra.mxu0 %v3526
    %3579 = vmatprep.subr.mxu0 0.0
    %3580 = vmatpush1.msra.mxu0 %v3525
    %3581 = vmatprep.subr.mxu0 0.0
    %3582 = vmatpush2.msra.mxu0 0.0
    %3583 = vmatprep.subr.mxu0 0.0
    %3584 = vmatpush2.msra.mxu0 0.0
    %3585 = vmatprep.subr.mxu0 0.0
    %3586 = vmatpush2.msra.mxu0 0.0
    %3587 = vmatprep.subr.mxu0 0.0
    %3588 = vmatpush2.msra.mxu0 0.0
    %3589 = vmatprep.subr.mxu0 0.0
    %3590 = vmatpush2.msra.mxu0 0.0
    %3591 = vmatprep.subr.mxu0 0.0
    %3592 = vmatpush2.msra.mxu0 0.0
    %3593 = vmatprep.subr.mxu0 0.0
    %3594 = vmatpush2.msra.mxu0 0.0
    %3595 = vmatprep.subr.mxu0 0.0
    %3596 = vmatpush2.msra.mxu0 0.0
    %3597 = vmatprep.subr.mxu0 0.0
    %3598 = vmatpush2.msra.mxu0 0.0
    %3599 = vmatprep.subr.mxu0 0.0
    %3600 = vmatpush2.msra.mxu0 0.0
    %3601 = vmatprep.subr.mxu0 0.0
    %3602 = vmatpush2.msra.mxu0 0.0
    %3603 = vmatprep.subr.mxu0 0.0
    %3604 = vmatpush2.msra.mxu0 0.0
    %3605 = vmatprep.subr.mxu0 0.0
    %3606 = vmatpush2.msra.mxu0 0.0
    %3607 = vmatprep.subr.mxu0 0.0
    %3608 = vmatpush2.msra.mxu0 0.0
    %3609 = vmatprep.subr.mxu0 0.0
    %3610 = vmatpush2.msra.mxu0 0.0
    %3611 = vmatprep.subr.mxu0 0.0
    %3612 = vmatpush2.msra.mxu0 0.0
    %3613 = vmatprep.mubr.f32.mxu0 0.0
    %3614 = vmatmul.mubr.f32.gmra.mxu0 %v3541
    %v3615 = vpop.f32.mrf.mxu0
    %v3616 = vadd.f32 0.0, %v3615
    %v3617 = vpop.f32.mrf.mxu0
    %3618 = vmatprep.mubr.f32.mxu0 0.0
    %3619 = vmatmul.mubr.f32.gmra.mxu0 %v3542
    %v3620 = vpop.f32.mrf.mxu0
    %v3621 = vadd.f32 0.0, %v3620
    %v3622 = vpop.f32.mrf.mxu0
    %3623 = vmatprep.mubr.f32.mxu0 0.0
    %3624 = vmatmul.mubr.f32.gmra.mxu0 %v3543
    %v3625 = vpop.f32.mrf.mxu0
    %v3626 = vadd.f32 0.0, %v3625
    %v3627 = vpop.f32.mrf.mxu0
    %3628 = vmatprep.mubr.f32.mxu0 0.0
    %3629 = vmatmul.mubr.f32.gmra.mxu0 %v3544
    %v3630 = vpop.f32.mrf.mxu0
    %v3631 = vadd.f32 0.0, %v3630
    %v3632 = vpop.f32.mrf.mxu0
    %3633 = vdwg.mxu0
    %s3634 = scalar_lea.vmem %s5, 320
    %3635 = vst.msk [vmem:[%s3634] sm:$0xff] %vm361, %v3616
    %3636 = vst.msk [vmem:[%s3634 + $0x8] sm:$0xff] %vm361, %v3621
    %3637 = vst.msk [vmem:[%s3634 + $0x10] sm:$0xff] %vm361, %v3626
    %3638 = vst.msk [vmem:[%s3634 + $0x18] sm:$0xff] %vm361, %v3631
    %v3639 = vsel %vm361, %v3616, 0.0
    %v3640 = vsel %vm361, %v3621, 0.0
    %v3641 = vadd.f32 %v3639, %v3640
    %v3642 = vsel %vm361, %v3626, 0.0
    %v3643 = vadd.f32 %v3641, %v3642
    %v3644 = vsel %vm361, %v3631, 0.0
    %v3645 = vadd.f32 %v3643, %v3644
    %v3646 = vrot.slane %v3645, 4
    %v3647 = vadd.f32 %v3645, %v3646
    %v3648 = vrot.slane %v3647, 2
    %v3649 = vadd.f32 %v3647, %v3648
    %v3650 = vrot.slane %v3649, 1
    %v3651 = vadd.f32 %v3649, %v3650
    %v3652 = vadd.f32 %v3325, %v3651
    %v3653 = vmul.f32 %v3616, %v3616
    %v3654 = vmul.f32 %v3621, %v3621
    %v3655 = vmul.f32 %v3626, %v3626
    %v3656 = vmul.f32 %v3631, %v3631
    %v3657 = vsel %vm361, %v3653, 0.0
    %v3658 = vsel %vm361, %v3654, 0.0
    %v3659 = vadd.f32 %v3657, %v3658
    %v3660 = vsel %vm361, %v3655, 0.0
    %v3661 = vadd.f32 %v3659, %v3660
    %v3662 = vsel %vm361, %v3656, 0.0
    %v3663 = vadd.f32 %v3661, %v3662
    %v3664 = vrot.slane %v3663, 4
    %v3665 = vadd.f32 %v3663, %v3664
    %v3666 = vrot.slane %v3665, 2
    %v3667 = vadd.f32 %v3665, %v3666
    %v3668 = vrot.slane %v3667, 1
    %v3669 = vadd.f32 %v3667, %v3668
    %v3670 = vadd.f32 %v3343, %v3669
    %s3671 = scalar_lea.vmem [#allocation2], 44
    %v3672 = vld [vmem:[%s3671] sm:$0x1]
    %v3673 = vlaneseq
    %v3674 = vshrl.u32 %v3673, 7
    %v3675 = vsub.s32 0, %v3674
    %v3676 = vrot.slane %v3672, %v3675
    %v3677 = vmul.f32 %v59, %v3676
    %v3678 = vmul.f32 %v60, %v3676
    %v3679 = vmul.f32 %v61, %v3676
    %v3680 = vmul.f32 %v62, %v3676
    %v3681 = vmul.f32 %v65, %v3676
    %v3682 = vmul.f32 %v66, %v3676
    %v3683 = vmul.f32 %v67, %v3676
    %v3684 = vmul.f32 %v68, %v3676
    %v3685 = vadd.f32 %v3677, 0.0
    %v3686 = vadd.f32 %v3678, 0.0
    %v3687 = vadd.f32 %v3679, 0.0
    %v3688 = vadd.f32 %v3680, 0.0
    %v3689 = vadd.f32 %v3681, 0.0
    %v3690 = vadd.f32 %v3682, 0.0
    %v3691 = vadd.f32 %v3683, 0.0
    %v3692 = vadd.f32 %v3684, 0.0
    %v3693 = vld [vmem:[%s3671 + $0x1] sm:$0x1]
    %v3694 = vlaneseq
    %v3695 = vshrl.u32 %v3694, 7
    %v3696 = vsub.s32 0, %v3695
    %v3697 = vrot.slane %v3693, %v3696
    %v3698 = vmul.f32 %v59, %v3697
    %v3699 = vmul.f32 %v60, %v3697
    %v3700 = vmul.f32 %v61, %v3697
    %v3701 = vmul.f32 %v62, %v3697
    %v3702 = vmul.f32 %v65, %v3697
    %v3703 = vmul.f32 %v66, %v3697
    %v3704 = vmul.f32 %v67, %v3697
    %v3705 = vmul.f32 %v68, %v3697
    %v3714 = vrot.slane %v3698, 7
    %v3715 = vrot.slane %v3699, 7
    %v3716 = vrot.slane %v3700, 7
    %v3717 = vrot.slane %v3701, 7
    %v3718 = vrot.slane %v3702, 7
    %v3719 = vrot.slane %v3703, 7
    %v3720 = vrot.slane %v3704, 7
    %v3721 = vrot.slane %v3705, 7
    %v3730 = vadd.f32 %v3685, %v3714
    %v3731 = vadd.f32 %v3686, %v3715
    %v3732 = vadd.f32 %v3687, %v3716
    %v3733 = vadd.f32 %v3688, %v3717
    %v3734 = vadd.f32 %v3689, %v3718
    %v3735 = vadd.f32 %v3690, %v3719
    %v3736 = vadd.f32 %v3691, %v3720
    %v3737 = vadd.f32 %v3692, %v3721
    %v3738 = vld [vmem:[%s3671 + $0x2] sm:$0x1]
    %v3739 = vlaneseq
    %v3740 = vshrl.u32 %v3739, 7
    %v3741 = vsub.s32 0, %v3740
    %v3742 = vrot.slane %v3738, %v3741
    %v3743 = vmul.f32 %v58, %v3742
    %v3744 = vmul.f32 %v59, %v3742
    %v3745 = vmul.f32 %v60, %v3742
    %v3746 = vmul.f32 %v61, %v3742
    %v3747 = vmul.f32 %v64, %v3742
    %v3748 = vmul.f32 %v65, %v3742
    %v3749 = vmul.f32 %v66, %v3742
    %v3750 = vmul.f32 %v67, %v3742
    %v3751 = vadd.f32 %v3730, %v3743
    %v3752 = vadd.f32 %v3731, %v3744
    %v3753 = vadd.f32 %v3732, %v3745
    %v3754 = vadd.f32 %v3733, %v3746
    %v3755 = vadd.f32 %v3734, %v3747
    %v3756 = vadd.f32 %v3735, %v3748
    %v3757 = vadd.f32 %v3736, %v3749
    %v3758 = vadd.f32 %v3737, %v3750
    %v3759 = vld [vmem:[%s3671 + $0x3] sm:$0x1]
    %v3760 = vlaneseq
    %v3761 = vshrl.u32 %v3760, 7
    %v3762 = vsub.s32 0, %v3761
    %v3763 = vrot.slane %v3759, %v3762
    %v3764 = vmul.f32 %v58, %v3763
    %v3765 = vmul.f32 %v59, %v3763
    %v3766 = vmul.f32 %v60, %v3763
    %v3767 = vmul.f32 %v61, %v3763
    %v3768 = vmul.f32 %v64, %v3763
    %v3769 = vmul.f32 %v65, %v3763
    %v3770 = vmul.f32 %v66, %v3763
    %v3771 = vmul.f32 %v67, %v3763
    %v3780 = vrot.slane %v3764, 7
    %v3781 = vrot.slane %v3765, 7
    %v3782 = vrot.slane %v3766, 7
    %v3783 = vrot.slane %v3767, 7
    %v3784 = vrot.slane %v3768, 7
    %v3785 = vrot.slane %v3769, 7
    %v3786 = vrot.slane %v3770, 7
    %v3787 = vrot.slane %v3771, 7
    %v3796 = vadd.f32 %v3751, %v3780
    %v3797 = vadd.f32 %v3752, %v3781
    %v3798 = vadd.f32 %v3753, %v3782
    %v3799 = vadd.f32 %v3754, %v3783
    %v3800 = vadd.f32 %v3755, %v3784
    %v3801 = vadd.f32 %v3756, %v3785
    %v3802 = vadd.f32 %v3757, %v3786
    %v3803 = vadd.f32 %v3758, %v3787
    %v3812 = vcombine.high %v3796, %v3796
    %v3813 = vcombine.high %v3797, %v3797
    %v3814 = vcombine.high %v3798, %v3798
    %v3815 = vcombine.high %v3799, %v3799
    %v3816 = vcombine.high %v3800, %v3800
    %v3817 = vcombine.high %v3801, %v3801
    %v3818 = vcombine.high %v3802, %v3802
    %v3819 = vcombine.high %v3803, %v3803
    %v3820 = vrot.slane %v3796, 6
    %v3821 = vrot.slane %v3820, 4
    %v3822 = vrot.slane %v3812, 6
    %v3823 = vsel %vm876, %v3821, %v3822
    %v3824 = vrot.slane %v3797, 6
    %v3825 = vrot.slane %v3824, 4
    %v3826 = vrot.slane %v3813, 6
    %v3827 = vsel %vm876, %v3825, %v3826
    %v3828 = vrot.slane %v3798, 6
    %v3829 = vrot.slane %v3828, 4
    %v3830 = vrot.slane %v3814, 6
    %v3831 = vsel %vm876, %v3829, %v3830
    %v3832 = vrot.slane %v3799, 6
    %v3833 = vrot.slane %v3832, 4
    %v3834 = vrot.slane %v3815, 6
    %v3835 = vsel %vm876, %v3833, %v3834
    %v3836 = vrot.slane %v3800, 6
    %v3837 = vrot.slane %v3836, 4
    %v3838 = vrot.slane %v3816, 6
    %v3839 = vsel %vm876, %v3837, %v3838
    %v3840 = vrot.slane %v3801, 6
    %v3841 = vrot.slane %v3840, 4
    %v3842 = vrot.slane %v3817, 6
    %v3843 = vsel %vm876, %v3841, %v3842
    %v3844 = vrot.slane %v3802, 6
    %v3845 = vrot.slane %v3844, 4
    %v3846 = vrot.slane %v3818, 6
    %v3847 = vsel %vm876, %v3845, %v3846
    %v3848 = vrot.slane %v3803, 6
    %v3849 = vrot.slane %v3848, 4
    %v3850 = vrot.slane %v3819, 6
    %v3851 = vsel %vm876, %v3849, %v3850
    %v3852 = vld [vmem:[%s2] sm:$0xff]
    %v3853 = vld [vmem:[%s2 + $0x8] sm:$0xff]
    %v3854 = vld [vmem:[%s2 + $0x10] sm:$0xff]
    %v3855 = vld [vmem:[%s2 + $0x18] sm:$0xff]
    %v3856 = vld [vmem:[%s2 + $0x20] sm:$0xff]
    %v3857 = vld [vmem:[%s2 + $0x28] sm:$0xff]
    %v3858 = vld [vmem:[%s2 + $0x30] sm:$0xff]
    %v3859 = vld [vmem:[%s2 + $0x38] sm:$0xff]
    %v3860 = vld [vmem:[%s2 + $0x40] sm:$0xff]
    %v3861 = vld [vmem:[%s2 + $0x48] sm:$0xff]
    %v3862 = vld [vmem:[%s2 + $0x50] sm:$0xff]
    %v3863 = vld [vmem:[%s2 + $0x58] sm:$0xff]
    %v3864 = vld [vmem:[%s2 + $0x60] sm:$0xff]
    %v3865 = vld [vmem:[%s2 + $0x68] sm:$0xff]
    %v3866 = vld [vmem:[%s2 + $0x70] sm:$0xff]
    %v3867 = vld [vmem:[%s2 + $0x78] sm:$0xff]
    %v3868 = vcombine.low %v3823, %v3827
    %v3869 = vcombine.low %v3831, %v3835
    %v3870 = vcombine.low %v3839, %v3843
    %v3871 = vcombine.low %v3847, %v3851
    %3876 = vmatprep.subr.mxu0 0.0
    %3877 = vmatpush1.msra.mxu0 %v3867
    %3878 = vmatprep.subr.mxu0 0.0
    %3879 = vmatpush1.msra.mxu0 %v3866
    %3880 = vmatprep.subr.mxu0 0.0
    %3881 = vmatpush1.msra.mxu0 %v3865
    %3882 = vmatprep.subr.mxu0 0.0
    %3883 = vmatpush1.msra.mxu0 %v3864
    %3884 = vmatprep.subr.mxu0 0.0
    %3885 = vmatpush1.msra.mxu0 %v3863
    %3886 = vmatprep.subr.mxu0 0.0
    %3887 = vmatpush1.msra.mxu0 %v3862
    %3888 = vmatprep.subr.mxu0 0.0
    %3889 = vmatpush1.msra.mxu0 %v3861
    %3890 = vmatprep.subr.mxu0 0.0
    %3891 = vmatpush1.msra.mxu0 %v3860
    %3892 = vmatprep.subr.mxu0 0.0
    %3893 = vmatpush1.msra.mxu0 %v3859
    %3894 = vmatprep.subr.mxu0 0.0
    %3895 = vmatpush1.msra.mxu0 %v3858
    %3896 = vmatprep.subr.mxu0 0.0
    %3897 = vmatpush1.msra.mxu0 %v3857
    %3898 = vmatprep.subr.mxu0 0.0
    %3899 = vmatpush1.msra.mxu0 %v3856
    %3900 = vmatprep.subr.mxu0 0.0
    %3901 = vmatpush1.msra.mxu0 %v3855
    %3902 = vmatprep.subr.mxu0 0.0
    %3903 = vmatpush1.msra.mxu0 %v3854
    %3904 = vmatprep.subr.mxu0 0.0
    %3905 = vmatpush1.msra.mxu0 %v3853
    %3906 = vmatprep.subr.mxu0 0.0
    %3907 = vmatpush1.msra.mxu0 %v3852
    %3908 = vmatprep.subr.mxu0 0.0
    %3909 = vmatpush2.msra.mxu0 0.0
    %3910 = vmatprep.subr.mxu0 0.0
    %3911 = vmatpush2.msra.mxu0 0.0
    %3912 = vmatprep.subr.mxu0 0.0
    %3913 = vmatpush2.msra.mxu0 0.0
    %3914 = vmatprep.subr.mxu0 0.0
    %3915 = vmatpush2.msra.mxu0 0.0
    %3916 = vmatprep.subr.mxu0 0.0
    %3917 = vmatpush2.msra.mxu0 0.0
    %3918 = vmatprep.subr.mxu0 0.0
    %3919 = vmatpush2.msra.mxu0 0.0
    %3920 = vmatprep.subr.mxu0 0.0
    %3921 = vmatpush2.msra.mxu0 0.0
    %3922 = vmatprep.subr.mxu0 0.0
    %3923 = vmatpush2.msra.mxu0 0.0
    %3924 = vmatprep.subr.mxu0 0.0
    %3925 = vmatpush2.msra.mxu0 0.0
    %3926 = vmatprep.subr.mxu0 0.0
    %3927 = vmatpush2.msra.mxu0 0.0
    %3928 = vmatprep.subr.mxu0 0.0
    %3929 = vmatpush2.msra.mxu0 0.0
    %3930 = vmatprep.subr.mxu0 0.0
    %3931 = vmatpush2.msra.mxu0 0.0
    %3932 = vmatprep.subr.mxu0 0.0
    %3933 = vmatpush2.msra.mxu0 0.0
    %3934 = vmatprep.subr.mxu0 0.0
    %3935 = vmatpush2.msra.mxu0 0.0
    %3936 = vmatprep.subr.mxu0 0.0
    %3937 = vmatpush2.msra.mxu0 0.0
    %3938 = vmatprep.subr.mxu0 0.0
    %3939 = vmatpush2.msra.mxu0 0.0
    %3940 = vmatprep.mubr.f32.mxu0 0.0
    %3941 = vmatmul.mubr.f32.gmra.mxu0 %v3868
    %v3942 = vpop.f32.mrf.mxu0
    %v3943 = vadd.f32 0.0, %v3942
    %v3944 = vpop.f32.mrf.mxu0
    %3945 = vmatprep.mubr.f32.mxu0 0.0
    %3946 = vmatmul.mubr.f32.gmra.mxu0 %v3869
    %v3947 = vpop.f32.mrf.mxu0
    %v3948 = vadd.f32 0.0, %v3947
    %v3949 = vpop.f32.mrf.mxu0
    %3950 = vmatprep.mubr.f32.mxu0 0.0
    %3951 = vmatmul.mubr.f32.gmra.mxu0 %v3870
    %v3952 = vpop.f32.mrf.mxu0
    %v3953 = vadd.f32 0.0, %v3952
    %v3954 = vpop.f32.mrf.mxu0
    %3955 = vmatprep.mubr.f32.mxu0 0.0
    %3956 = vmatmul.mubr.f32.gmra.mxu0 %v3871
    %v3957 = vpop.f32.mrf.mxu0
    %v3958 = vadd.f32 0.0, %v3957
    %v3959 = vpop.f32.mrf.mxu0
    %3960 = vdwg.mxu0
    %s3961 = scalar_lea.vmem %s5, 352
    %3962 = vst.msk [vmem:[%s3961] sm:$0xff] %vm361, %v3943
    %3963 = vst.msk [vmem:[%s3961 + $0x8] sm:$0xff] %vm361, %v3948
    %3964 = vst.msk [vmem:[%s3961 + $0x10] sm:$0xff] %vm361, %v3953
    %3965 = vst.msk [vmem:[%s3961 + $0x18] sm:$0xff] %vm361, %v3958
    %v3966 = vsel %vm361, %v3943, 0.0
    %v3967 = vsel %vm361, %v3948, 0.0
    %v3968 = vadd.f32 %v3966, %v3967
    %v3969 = vsel %vm361, %v3953, 0.0
    %v3970 = vadd.f32 %v3968, %v3969
    %v3971 = vsel %vm361, %v3958, 0.0
    %v3972 = vadd.f32 %v3970, %v3971
    %v3973 = vrot.slane %v3972, 4
    %v3974 = vadd.f32 %v3972, %v3973
    %v3975 = vrot.slane %v3974, 2
    %v3976 = vadd.f32 %v3974, %v3975
    %v3977 = vrot.slane %v3976, 1
    %v3978 = vadd.f32 %v3976, %v3977
    %v3979 = vadd.f32 %v3652, %v3978
    %v3980 = vmul.f32 %v3943, %v3943
    %v3981 = vmul.f32 %v3948, %v3948
    %v3982 = vmul.f32 %v3953, %v3953
    %v3983 = vmul.f32 %v3958, %v3958
    %v3984 = vsel %vm361, %v3980, 0.0
    %v3985 = vsel %vm361, %v3981, 0.0
    %v3986 = vadd.f32 %v3984, %v3985
    %v3987 = vsel %vm361, %v3982, 0.0
    %v3988 = vadd.f32 %v3986, %v3987
    %v3989 = vsel %vm361, %v3983, 0.0
    %v3990 = vadd.f32 %v3988, %v3989
    %v3991 = vrot.slane %v3990, 4
    %v3992 = vadd.f32 %v3990, %v3991
    %v3993 = vrot.slane %v3992, 2
    %v3994 = vadd.f32 %v3992, %v3993
    %v3995 = vrot.slane %v3994, 1
    %v3996 = vadd.f32 %v3994, %v3995
    %v3997 = vadd.f32 %v3670, %v3996
    %s3998 = scalar_lea.vmem [#allocation2], 48
    %v3999 = vld [vmem:[%s3998] sm:$0x1]
    %v4000 = vlaneseq
    %v4001 = vshrl.u32 %v4000, 7
    %v4002 = vsub.s32 0, %v4001
    %v4003 = vrot.slane %v3999, %v4002
    %v4004 = vmul.f32 %v59, %v4003
    %v4005 = vmul.f32 %v60, %v4003
    %v4006 = vmul.f32 %v61, %v4003
    %v4007 = vmul.f32 %v62, %v4003
    %v4008 = vmul.f32 %v65, %v4003
    %v4009 = vmul.f32 %v66, %v4003
    %v4010 = vmul.f32 %v67, %v4003
    %v4011 = vmul.f32 %v68, %v4003
    %v4012 = vadd.f32 %v4004, 0.0
    %v4013 = vadd.f32 %v4005, 0.0
    %v4014 = vadd.f32 %v4006, 0.0
    %v4015 = vadd.f32 %v4007, 0.0
    %v4016 = vadd.f32 %v4008, 0.0
    %v4017 = vadd.f32 %v4009, 0.0
    %v4018 = vadd.f32 %v4010, 0.0
    %v4019 = vadd.f32 %v4011, 0.0
    %v4020 = vld [vmem:[%s3998 + $0x1] sm:$0x1]
    %v4021 = vlaneseq
    %v4022 = vshrl.u32 %v4021, 7
    %v4023 = vsub.s32 0, %v4022
    %v4024 = vrot.slane %v4020, %v4023
    %v4025 = vmul.f32 %v59, %v4024
    %v4026 = vmul.f32 %v60, %v4024
    %v4027 = vmul.f32 %v61, %v4024
    %v4028 = vmul.f32 %v62, %v4024
    %v4029 = vmul.f32 %v65, %v4024
    %v4030 = vmul.f32 %v66, %v4024
    %v4031 = vmul.f32 %v67, %v4024
    %v4032 = vmul.f32 %v68, %v4024
    %v4041 = vrot.slane %v4025, 7
    %v4042 = vrot.slane %v4026, 7
    %v4043 = vrot.slane %v4027, 7
    %v4044 = vrot.slane %v4028, 7
    %v4045 = vrot.slane %v4029, 7
    %v4046 = vrot.slane %v4030, 7
    %v4047 = vrot.slane %v4031, 7
    %v4048 = vrot.slane %v4032, 7
    %v4057 = vadd.f32 %v4012, %v4041
    %v4058 = vadd.f32 %v4013, %v4042
    %v4059 = vadd.f32 %v4014, %v4043
    %v4060 = vadd.f32 %v4015, %v4044
    %v4061 = vadd.f32 %v4016, %v4045
    %v4062 = vadd.f32 %v4017, %v4046
    %v4063 = vadd.f32 %v4018, %v4047
    %v4064 = vadd.f32 %v4019, %v4048
    %v4065 = vld [vmem:[%s3998 + $0x2] sm:$0x1]
    %v4066 = vlaneseq
    %v4067 = vshrl.u32 %v4066, 7
    %v4068 = vsub.s32 0, %v4067
    %v4069 = vrot.slane %v4065, %v4068
    %v4070 = vmul.f32 %v58, %v4069
    %v4071 = vmul.f32 %v59, %v4069
    %v4072 = vmul.f32 %v60, %v4069
    %v4073 = vmul.f32 %v61, %v4069
    %v4074 = vmul.f32 %v64, %v4069
    %v4075 = vmul.f32 %v65, %v4069
    %v4076 = vmul.f32 %v66, %v4069
    %v4077 = vmul.f32 %v67, %v4069
    %v4078 = vadd.f32 %v4057, %v4070
    %v4079 = vadd.f32 %v4058, %v4071
    %v4080 = vadd.f32 %v4059, %v4072
    %v4081 = vadd.f32 %v4060, %v4073
    %v4082 = vadd.f32 %v4061, %v4074
    %v4083 = vadd.f32 %v4062, %v4075
    %v4084 = vadd.f32 %v4063, %v4076
    %v4085 = vadd.f32 %v4064, %v4077
    %v4086 = vld [vmem:[%s3998 + $0x3] sm:$0x1]
    %v4087 = vlaneseq
    %v4088 = vshrl.u32 %v4087, 7
    %v4089 = vsub.s32 0, %v4088
    %v4090 = vrot.slane %v4086, %v4089
    %v4091 = vmul.f32 %v58, %v4090
    %v4092 = vmul.f32 %v59, %v4090
    %v4093 = vmul.f32 %v60, %v4090
    %v4094 = vmul.f32 %v61, %v4090
    %v4095 = vmul.f32 %v64, %v4090
    %v4096 = vmul.f32 %v65, %v4090
    %v4097 = vmul.f32 %v66, %v4090
    %v4098 = vmul.f32 %v67, %v4090
    %v4107 = vrot.slane %v4091, 7
    %v4108 = vrot.slane %v4092, 7
    %v4109 = vrot.slane %v4093, 7
    %v4110 = vrot.slane %v4094, 7
    %v4111 = vrot.slane %v4095, 7
    %v4112 = vrot.slane %v4096, 7
    %v4113 = vrot.slane %v4097, 7
    %v4114 = vrot.slane %v4098, 7
    %v4123 = vadd.f32 %v4078, %v4107
    %v4124 = vadd.f32 %v4079, %v4108
    %v4125 = vadd.f32 %v4080, %v4109
    %v4126 = vadd.f32 %v4081, %v4110
    %v4127 = vadd.f32 %v4082, %v4111
    %v4128 = vadd.f32 %v4083, %v4112
    %v4129 = vadd.f32 %v4084, %v4113
    %v4130 = vadd.f32 %v4085, %v4114
    %v4139 = vcombine.high %v4123, %v4123
    %v4140 = vcombine.high %v4124, %v4124
    %v4141 = vcombine.high %v4125, %v4125
    %v4142 = vcombine.high %v4126, %v4126
    %v4143 = vcombine.high %v4127, %v4127
    %v4144 = vcombine.high %v4128, %v4128
    %v4145 = vcombine.high %v4129, %v4129
    %v4146 = vcombine.high %v4130, %v4130
    %v4147 = vrot.slane %v4123, 5
    %v4148 = vrot.slane %v4147, 4
    %v4149 = vrot.slane %v4139, 5
    %v4150 = vsel %vm219, %v4148, %v4149
    %v4151 = vrot.slane %v4124, 5
    %v4152 = vrot.slane %v4151, 4
    %v4153 = vrot.slane %v4140, 5
    %v4154 = vsel %vm219, %v4152, %v4153
    %v4155 = vrot.slane %v4125, 5
    %v4156 = vrot.slane %v4155, 4
    %v4157 = vrot.slane %v4141, 5
    %v4158 = vsel %vm219, %v4156, %v4157
    %v4159 = vrot.slane %v4126, 5
    %v4160 = vrot.slane %v4159, 4
    %v4161 = vrot.slane %v4142, 5
    %v4162 = vsel %vm219, %v4160, %v4161
    %v4163 = vrot.slane %v4127, 5
    %v4164 = vrot.slane %v4163, 4
    %v4165 = vrot.slane %v4143, 5
    %v4166 = vsel %vm219, %v4164, %v4165
    %v4167 = vrot.slane %v4128, 5
    %v4168 = vrot.slane %v4167, 4
    %v4169 = vrot.slane %v4144, 5
    %v4170 = vsel %vm219, %v4168, %v4169
    %v4171 = vrot.slane %v4129, 5
    %v4172 = vrot.slane %v4171, 4
    %v4173 = vrot.slane %v4145, 5
    %v4174 = vsel %vm219, %v4172, %v4173
    %v4175 = vrot.slane %v4130, 5
    %v4176 = vrot.slane %v4175, 4
    %v4177 = vrot.slane %v4146, 5
    %v4178 = vsel %vm219, %v4176, %v4177
    %v4179 = vld [vmem:[%s2] sm:$0xff]
    %v4180 = vld [vmem:[%s2 + $0x8] sm:$0xff]
    %v4181 = vld [vmem:[%s2 + $0x10] sm:$0xff]
    %v4182 = vld [vmem:[%s2 + $0x18] sm:$0xff]
    %v4183 = vld [vmem:[%s2 + $0x20] sm:$0xff]
    %v4184 = vld [vmem:[%s2 + $0x28] sm:$0xff]
    %v4185 = vld [vmem:[%s2 + $0x30] sm:$0xff]
    %v4186 = vld [vmem:[%s2 + $0x38] sm:$0xff]
    %v4187 = vld [vmem:[%s2 + $0x40] sm:$0xff]
    %v4188 = vld [vmem:[%s2 + $0x48] sm:$0xff]
    %v4189 = vld [vmem:[%s2 + $0x50] sm:$0xff]
    %v4190 = vld [vmem:[%s2 + $0x58] sm:$0xff]
    %v4191 = vld [vmem:[%s2 + $0x60] sm:$0xff]
    %v4192 = vld [vmem:[%s2 + $0x68] sm:$0xff]
    %v4193 = vld [vmem:[%s2 + $0x70] sm:$0xff]
    %v4194 = vld [vmem:[%s2 + $0x78] sm:$0xff]
    %v4195 = vcombine.low %v4150, %v4154
    %v4196 = vcombine.low %v4158, %v4162
    %v4197 = vcombine.low %v4166, %v4170
    %v4198 = vcombine.low %v4174, %v4178
    %4203 = vmatprep.subr.mxu0 0.0
    %4204 = vmatpush1.msra.mxu0 %v4194
    %4205 = vmatprep.subr.mxu0 0.0
    %4206 = vmatpush1.msra.mxu0 %v4193
    %4207 = vmatprep.subr.mxu0 0.0
    %4208 = vmatpush1.msra.mxu0 %v4192
    %4209 = vmatprep.subr.mxu0 0.0
    %4210 = vmatpush1.msra.mxu0 %v4191
    %4211 = vmatprep.subr.mxu0 0.0
    %4212 = vmatpush1.msra.mxu0 %v4190
    %4213 = vmatprep.subr.mxu0 0.0
    %4214 = vmatpush1.msra.mxu0 %v4189
    %4215 = vmatprep.subr.mxu0 0.0
    %4216 = vmatpush1.msra.mxu0 %v4188
    %4217 = vmatprep.subr.mxu0 0.0
    %4218 = vmatpush1.msra.mxu0 %v4187
    %4219 = vmatprep.subr.mxu0 0.0
    %4220 = vmatpush1.msra.mxu0 %v4186
    %4221 = vmatprep.subr.mxu0 0.0
    %4222 = vmatpush1.msra.mxu0 %v4185
    %4223 = vmatprep.subr.mxu0 0.0
    %4224 = vmatpush1.msra.mxu0 %v4184
    %4225 = vmatprep.subr.mxu0 0.0
    %4226 = vmatpush1.msra.mxu0 %v4183
    %4227 = vmatprep.subr.mxu0 0.0
    %4228 = vmatpush1.msra.mxu0 %v4182
    %4229 = vmatprep.subr.mxu0 0.0
    %4230 = vmatpush1.msra.mxu0 %v4181
    %4231 = vmatprep.subr.mxu0 0.0
    %4232 = vmatpush1.msra.mxu0 %v4180
    %4233 = vmatprep.subr.mxu0 0.0
    %4234 = vmatpush1.msra.mxu0 %v4179
    %4235 = vmatprep.subr.mxu0 0.0
    %4236 = vmatpush2.msra.mxu0 0.0
    %4237 = vmatprep.subr.mxu0 0.0
    %4238 = vmatpush2.msra.mxu0 0.0
    %4239 = vmatprep.subr.mxu0 0.0
    %4240 = vmatpush2.msra.mxu0 0.0
    %4241 = vmatprep.subr.mxu0 0.0
    %4242 = vmatpush2.msra.mxu0 0.0
    %4243 = vmatprep.subr.mxu0 0.0
    %4244 = vmatpush2.msra.mxu0 0.0
    %4245 = vmatprep.subr.mxu0 0.0
    %4246 = vmatpush2.msra.mxu0 0.0
    %4247 = vmatprep.subr.mxu0 0.0
    %4248 = vmatpush2.msra.mxu0 0.0
    %4249 = vmatprep.subr.mxu0 0.0
    %4250 = vmatpush2.msra.mxu0 0.0
    %4251 = vmatprep.subr.mxu0 0.0
    %4252 = vmatpush2.msra.mxu0 0.0
    %4253 = vmatprep.subr.mxu0 0.0
    %4254 = vmatpush2.msra.mxu0 0.0
    %4255 = vmatprep.subr.mxu0 0.0
    %4256 = vmatpush2.msra.mxu0 0.0
    %4257 = vmatprep.subr.mxu0 0.0
    %4258 = vmatpush2.msra.mxu0 0.0
    %4259 = vmatprep.subr.mxu0 0.0
    %4260 = vmatpush2.msra.mxu0 0.0
    %4261 = vmatprep.subr.mxu0 0.0
    %4262 = vmatpush2.msra.mxu0 0.0
    %4263 = vmatprep.subr.mxu0 0.0
    %4264 = vmatpush2.msra.mxu0 0.0
    %4265 = vmatprep.subr.mxu0 0.0
    %4266 = vmatpush2.msra.mxu0 0.0
    %4267 = vmatprep.mubr.f32.mxu0 0.0
    %4268 = vmatmul.mubr.f32.gmra.mxu0 %v4195
    %v4269 = vpop.f32.mrf.mxu0
    %v4270 = vadd.f32 0.0, %v4269
    %v4271 = vpop.f32.mrf.mxu0
    %4272 = vmatprep.mubr.f32.mxu0 0.0
    %4273 = vmatmul.mubr.f32.gmra.mxu0 %v4196
    %v4274 = vpop.f32.mrf.mxu0
    %v4275 = vadd.f32 0.0, %v4274
    %v4276 = vpop.f32.mrf.mxu0
    %4277 = vmatprep.mubr.f32.mxu0 0.0
    %4278 = vmatmul.mubr.f32.gmra.mxu0 %v4197
    %v4279 = vpop.f32.mrf.mxu0
    %v4280 = vadd.f32 0.0, %v4279
    %v4281 = vpop.f32.mrf.mxu0
    %4282 = vmatprep.mubr.f32.mxu0 0.0
    %4283 = vmatmul.mubr.f32.gmra.mxu0 %v4198
    %v4284 = vpop.f32.mrf.mxu0
    %v4285 = vadd.f32 0.0, %v4284
    %v4286 = vpop.f32.mrf.mxu0
    %4287 = vdwg.mxu0
    %s4288 = scalar_lea.vmem %s5, 384
    %4289 = vst.msk [vmem:[%s4288] sm:$0xff] %vm361, %v4270
    %4290 = vst.msk [vmem:[%s4288 + $0x8] sm:$0xff] %vm361, %v4275
    %4291 = vst.msk [vmem:[%s4288 + $0x10] sm:$0xff] %vm361, %v4280
    %4292 = vst.msk [vmem:[%s4288 + $0x18] sm:$0xff] %vm361, %v4285
    %v4293 = vsel %vm361, %v4270, 0.0
    %v4294 = vsel %vm361, %v4275, 0.0
    %v4295 = vadd.f32 %v4293, %v4294
    %v4296 = vsel %vm361, %v4280, 0.0
    %v4297 = vadd.f32 %v4295, %v4296
    %v4298 = vsel %vm361, %v4285, 0.0
    %v4299 = vadd.f32 %v4297, %v4298
    %v4300 = vrot.slane %v4299, 4
    %v4301 = vadd.f32 %v4299, %v4300
    %v4302 = vrot.slane %v4301, 2
    %v4303 = vadd.f32 %v4301, %v4302
    %v4304 = vrot.slane %v4303, 1
    %v4305 = vadd.f32 %v4303, %v4304
    %v4306 = vadd.f32 %v3979, %v4305
    %v4307 = vmul.f32 %v4270, %v4270
    %v4308 = vmul.f32 %v4275, %v4275
    %v4309 = vmul.f32 %v4280, %v4280
    %v4310 = vmul.f32 %v4285, %v4285
    %v4311 = vsel %vm361, %v4307, 0.0
    %v4312 = vsel %vm361, %v4308, 0.0
    %v4313 = vadd.f32 %v4311, %v4312
    %v4314 = vsel %vm361, %v4309, 0.0
    %v4315 = vadd.f32 %v4313, %v4314
    %v4316 = vsel %vm361, %v4310, 0.0
    %v4317 = vadd.f32 %v4315, %v4316
    %v4318 = vrot.slane %v4317, 4
    %v4319 = vadd.f32 %v4317, %v4318
    %v4320 = vrot.slane %v4319, 2
    %v4321 = vadd.f32 %v4319, %v4320
    %v4322 = vrot.slane %v4321, 1
    %v4323 = vadd.f32 %v4321, %v4322
    %v4324 = vadd.f32 %v3997, %v4323
    %s4325 = scalar_lea.vmem [#allocation2], 52
    %v4326 = vld [vmem:[%s4325] sm:$0x1]
    %v4327 = vlaneseq
    %v4328 = vshrl.u32 %v4327, 7
    %v4329 = vsub.s32 0, %v4328
    %v4330 = vrot.slane %v4326, %v4329
    %v4331 = vmul.f32 %v59, %v4330
    %v4332 = vmul.f32 %v60, %v4330
    %v4333 = vmul.f32 %v61, %v4330
    %v4334 = vmul.f32 %v62, %v4330
    %v4335 = vmul.f32 %v65, %v4330
    %v4336 = vmul.f32 %v66, %v4330
    %v4337 = vmul.f32 %v67, %v4330
    %v4338 = vmul.f32 %v68, %v4330
    %v4339 = vadd.f32 %v4331, 0.0
    %v4340 = vadd.f32 %v4332, 0.0
    %v4341 = vadd.f32 %v4333, 0.0
    %v4342 = vadd.f32 %v4334, 0.0
    %v4343 = vadd.f32 %v4335, 0.0
    %v4344 = vadd.f32 %v4336, 0.0
    %v4345 = vadd.f32 %v4337, 0.0
    %v4346 = vadd.f32 %v4338, 0.0
    %v4347 = vld [vmem:[%s4325 + $0x1] sm:$0x1]
    %v4348 = vlaneseq
    %v4349 = vshrl.u32 %v4348, 7
    %v4350 = vsub.s32 0, %v4349
    %v4351 = vrot.slane %v4347, %v4350
    %v4352 = vmul.f32 %v59, %v4351
    %v4353 = vmul.f32 %v60, %v4351
    %v4354 = vmul.f32 %v61, %v4351
    %v4355 = vmul.f32 %v62, %v4351
    %v4356 = vmul.f32 %v65, %v4351
    %v4357 = vmul.f32 %v66, %v4351
    %v4358 = vmul.f32 %v67, %v4351
    %v4359 = vmul.f32 %v68, %v4351
    %v4368 = vrot.slane %v4352, 7
    %v4369 = vrot.slane %v4353, 7
    %v4370 = vrot.slane %v4354, 7
    %v4371 = vrot.slane %v4355, 7
    %v4372 = vrot.slane %v4356, 7
    %v4373 = vrot.slane %v4357, 7
    %v4374 = vrot.slane %v4358, 7
    %v4375 = vrot.slane %v4359, 7
    %v4384 = vadd.f32 %v4339, %v4368
    %v4385 = vadd.f32 %v4340, %v4369
    %v4386 = vadd.f32 %v4341, %v4370
    %v4387 = vadd.f32 %v4342, %v4371
    %v4388 = vadd.f32 %v4343, %v4372
    %v4389 = vadd.f32 %v4344, %v4373
    %v4390 = vadd.f32 %v4345, %v4374
    %v4391 = vadd.f32 %v4346, %v4375
    %v4392 = vld [vmem:[%s4325 + $0x2] sm:$0x1]
    %v4393 = vlaneseq
    %v4394 = vshrl.u32 %v4393, 7
    %v4395 = vsub.s32 0, %v4394
    %v4396 = vrot.slane %v4392, %v4395
    %v4397 = vmul.f32 %v58, %v4396
    %v4398 = vmul.f32 %v59, %v4396
    %v4399 = vmul.f32 %v60, %v4396
    %v4400 = vmul.f32 %v61, %v4396
    %v4401 = vmul.f32 %v64, %v4396
    %v4402 = vmul.f32 %v65, %v4396
    %v4403 = vmul.f32 %v66, %v4396
    %v4404 = vmul.f32 %v67, %v4396
    %v4405 = vadd.f32 %v4384, %v4397
    %v4406 = vadd.f32 %v4385, %v4398
    %v4407 = vadd.f32 %v4386, %v4399
    %v4408 = vadd.f32 %v4387, %v4400
    %v4409 = vadd.f32 %v4388, %v4401
    %v4410 = vadd.f32 %v4389, %v4402
    %v4411 = vadd.f32 %v4390, %v4403
    %v4412 = vadd.f32 %v4391, %v4404
    %v4413 = vld [vmem:[%s4325 + $0x3] sm:$0x1]
    %v4414 = vlaneseq
    %v4415 = vshrl.u32 %v4414, 7
    %v4416 = vsub.s32 0, %v4415
    %v4417 = vrot.slane %v4413, %v4416
    %v4418 = vmul.f32 %v58, %v4417
    %v4419 = vmul.f32 %v59, %v4417
    %v4420 = vmul.f32 %v60, %v4417
    %v4421 = vmul.f32 %v61, %v4417
    %v4422 = vmul.f32 %v64, %v4417
    %v4423 = vmul.f32 %v65, %v4417
    %v4424 = vmul.f32 %v66, %v4417
    %v4425 = vmul.f32 %v67, %v4417
    %v4434 = vrot.slane %v4418, 7
    %v4435 = vrot.slane %v4419, 7
    %v4436 = vrot.slane %v4420, 7
    %v4437 = vrot.slane %v4421, 7
    %v4438 = vrot.slane %v4422, 7
    %v4439 = vrot.slane %v4423, 7
    %v4440 = vrot.slane %v4424, 7
    %v4441 = vrot.slane %v4425, 7
    %v4450 = vadd.f32 %v4405, %v4434
    %v4451 = vadd.f32 %v4406, %v4435
    %v4452 = vadd.f32 %v4407, %v4436
    %v4453 = vadd.f32 %v4408, %v4437
    %v4454 = vadd.f32 %v4409, %v4438
    %v4455 = vadd.f32 %v4410, %v4439
    %v4456 = vadd.f32 %v4411, %v4440
    %v4457 = vadd.f32 %v4412, %v4441
    %v4466 = vcombine.high %v4450, %v4450
    %v4467 = vcombine.high %v4451, %v4451
    %v4468 = vcombine.high %v4452, %v4452
    %v4469 = vcombine.high %v4453, %v4453
    %v4470 = vcombine.high %v4454, %v4454
    %v4471 = vcombine.high %v4455, %v4455
    %v4472 = vcombine.high %v4456, %v4456
    %v4473 = vcombine.high %v4457, %v4457
    %v4474 = vrot.slane %v4450, 5
    %v4475 = vrot.slane %v4474, 4
    %v4476 = vrot.slane %v4466, 5
    %v4477 = vsel %vm219, %v4475, %v4476
    %v4478 = vrot.slane %v4451, 5
    %v4479 = vrot.slane %v4478, 4
    %v4480 = vrot.slane %v4467, 5
    %v4481 = vsel %vm219, %v4479, %v4480
    %v4482 = vrot.slane %v4452, 5
    %v4483 = vrot.slane %v4482, 4
    %v4484 = vrot.slane %v4468, 5
    %v4485 = vsel %vm219, %v4483, %v4484
    %v4486 = vrot.slane %v4453, 5
    %v4487 = vrot.slane %v4486, 4
    %v4488 = vrot.slane %v4469, 5
    %v4489 = vsel %vm219, %v4487, %v4488
    %v4490 = vrot.slane %v4454, 5
    %v4491 = vrot.slane %v4490, 4
    %v4492 = vrot.slane %v4470, 5
    %v4493 = vsel %vm219, %v4491, %v4492
    %v4494 = vrot.slane %v4455, 5
    %v4495 = vrot.slane %v4494, 4
    %v4496 = vrot.slane %v4471, 5
    %v4497 = vsel %vm219, %v4495, %v4496
    %v4498 = vrot.slane %v4456, 5
    %v4499 = vrot.slane %v4498, 4
    %v4500 = vrot.slane %v4472, 5
    %v4501 = vsel %vm219, %v4499, %v4500
    %v4502 = vrot.slane %v4457, 5
    %v4503 = vrot.slane %v4502, 4
    %v4504 = vrot.slane %v4473, 5
    %v4505 = vsel %vm219, %v4503, %v4504
    %v4506 = vld [vmem:[%s2] sm:$0xff]
    %v4507 = vld [vmem:[%s2 + $0x8] sm:$0xff]
    %v4508 = vld [vmem:[%s2 + $0x10] sm:$0xff]
    %v4509 = vld [vmem:[%s2 + $0x18] sm:$0xff]
    %v4510 = vld [vmem:[%s2 + $0x20] sm:$0xff]
    %v4511 = vld [vmem:[%s2 + $0x28] sm:$0xff]
    %v4512 = vld [vmem:[%s2 + $0x30] sm:$0xff]
    %v4513 = vld [vmem:[%s2 + $0x38] sm:$0xff]
    %v4514 = vld [vmem:[%s2 + $0x40] sm:$0xff]
    %v4515 = vld [vmem:[%s2 + $0x48] sm:$0xff]
    %v4516 = vld [vmem:[%s2 + $0x50] sm:$0xff]
    %v4517 = vld [vmem:[%s2 + $0x58] sm:$0xff]
    %v4518 = vld [vmem:[%s2 + $0x60] sm:$0xff]
    %v4519 = vld [vmem:[%s2 + $0x68] sm:$0xff]
    %v4520 = vld [vmem:[%s2 + $0x70] sm:$0xff]
    %v4521 = vld [vmem:[%s2 + $0x78] sm:$0xff]
    %v4522 = vcombine.low %v4477, %v4481
    %v4523 = vcombine.low %v4485, %v4489
    %v4524 = vcombine.low %v4493, %v4497
    %v4525 = vcombine.low %v4501, %v4505
    %4530 = vmatprep.subr.mxu0 0.0
    %4531 = vmatpush1.msra.mxu0 %v4521
    %4532 = vmatprep.subr.mxu0 0.0
    %4533 = vmatpush1.msra.mxu0 %v4520
    %4534 = vmatprep.subr.mxu0 0.0
    %4535 = vmatpush1.msra.mxu0 %v4519
    %4536 = vmatprep.subr.mxu0 0.0
    %4537 = vmatpush1.msra.mxu0 %v4518
    %4538 = vmatprep.subr.mxu0 0.0
    %4539 = vmatpush1.msra.mxu0 %v4517
    %4540 = vmatprep.subr.mxu0 0.0
    %4541 = vmatpush1.msra.mxu0 %v4516
    %4542 = vmatprep.subr.mxu0 0.0
    %4543 = vmatpush1.msra.mxu0 %v4515
    %4544 = vmatprep.subr.mxu0 0.0
    %4545 = vmatpush1.msra.mxu0 %v4514
    %4546 = vmatprep.subr.mxu0 0.0
    %4547 = vmatpush1.msra.mxu0 %v4513
    %4548 = vmatprep.subr.mxu0 0.0
    %4549 = vmatpush1.msra.mxu0 %v4512
    %4550 = vmatprep.subr.mxu0 0.0
    %4551 = vmatpush1.msra.mxu0 %v4511
    %4552 = vmatprep.subr.mxu0 0.0
    %4553 = vmatpush1.msra.mxu0 %v4510
    %4554 = vmatprep.subr.mxu0 0.0
    %4555 = vmatpush1.msra.mxu0 %v4509
    %4556 = vmatprep.subr.mxu0 0.0
    %4557 = vmatpush1.msra.mxu0 %v4508
    %4558 = vmatprep.subr.mxu0 0.0
    %4559 = vmatpush1.msra.mxu0 %v4507
    %4560 = vmatprep.subr.mxu0 0.0
    %4561 = vmatpush1.msra.mxu0 %v4506
    %4562 = vmatprep.subr.mxu0 0.0
    %4563 = vmatpush2.msra.mxu0 0.0
    %4564 = vmatprep.subr.mxu0 0.0
    %4565 = vmatpush2.msra.mxu0 0.0
    %4566 = vmatprep.subr.mxu0 0.0
    %4567 = vmatpush2.msra.mxu0 0.0
    %4568 = vmatprep.subr.mxu0 0.0
    %4569 = vmatpush2.msra.mxu0 0.0
    %4570 = vmatprep.subr.mxu0 0.0
    %4571 = vmatpush2.msra.mxu0 0.0
    %4572 = vmatprep.subr.mxu0 0.0
    %4573 = vmatpush2.msra.mxu0 0.0
    %4574 = vmatprep.subr.mxu0 0.0
    %4575 = vmatpush2.msra.mxu0 0.0
    %4576 = vmatprep.subr.mxu0 0.0
    %4577 = vmatpush2.msra.mxu0 0.0
    %4578 = vmatprep.subr.mxu0 0.0
    %4579 = vmatpush2.msra.mxu0 0.0
    %4580 = vmatprep.subr.mxu0 0.0
    %4581 = vmatpush2.msra.mxu0 0.0
    %4582 = vmatprep.subr.mxu0 0.0
    %4583 = vmatpush2.msra.mxu0 0.0
    %4584 = vmatprep.subr.mxu0 0.0
    %4585 = vmatpush2.msra.mxu0 0.0
    %4586 = vmatprep.subr.mxu0 0.0
    %4587 = vmatpush2.msra.mxu0 0.0
    %4588 = vmatprep.subr.mxu0 0.0
    %4589 = vmatpush2.msra.mxu0 0.0
    %4590 = vmatprep.subr.mxu0 0.0
    %4591 = vmatpush2.msra.mxu0 0.0
    %4592 = vmatprep.subr.mxu0 0.0
    %4593 = vmatpush2.msra.mxu0 0.0
    %4594 = vmatprep.mubr.f32.mxu0 0.0
    %4595 = vmatmul.mubr.f32.gmra.mxu0 %v4522
    %v4596 = vpop.f32.mrf.mxu0
    %v4597 = vadd.f32 0.0, %v4596
    %v4598 = vpop.f32.mrf.mxu0
    %4599 = vmatprep.mubr.f32.mxu0 0.0
    %4600 = vmatmul.mubr.f32.gmra.mxu0 %v4523
    %v4601 = vpop.f32.mrf.mxu0
    %v4602 = vadd.f32 0.0, %v4601
    %v4603 = vpop.f32.mrf.mxu0
    %4604 = vmatprep.mubr.f32.mxu0 0.0
    %4605 = vmatmul.mubr.f32.gmra.mxu0 %v4524
    %v4606 = vpop.f32.mrf.mxu0
    %v4607 = vadd.f32 0.0, %v4606
    %v4608 = vpop.f32.mrf.mxu0
    %4609 = vmatprep.mubr.f32.mxu0 0.0
    %4610 = vmatmul.mubr.f32.gmra.mxu0 %v4525
    %v4611 = vpop.f32.mrf.mxu0
    %v4612 = vadd.f32 0.0, %v4611
    %v4613 = vpop.f32.mrf.mxu0
    %4614 = vdwg.mxu0
    %s4615 = scalar_lea.vmem %s5, 416
    %4616 = vst.msk [vmem:[%s4615] sm:$0xff] %vm361, %v4597
    %4617 = vst.msk [vmem:[%s4615 + $0x8] sm:$0xff] %vm361, %v4602
    %4618 = vst.msk [vmem:[%s4615 + $0x10] sm:$0xff] %vm361, %v4607
    %4619 = vst.msk [vmem:[%s4615 + $0x18] sm:$0xff] %vm361, %v4612
    %v4620 = vsel %vm361, %v4597, 0.0
    %v4621 = vsel %vm361, %v4602, 0.0
    %v4622 = vadd.f32 %v4620, %v4621
    %v4623 = vsel %vm361, %v4607, 0.0
    %v4624 = vadd.f32 %v4622, %v4623
    %v4625 = vsel %vm361, %v4612, 0.0
    %v4626 = vadd.f32 %v4624, %v4625
    %v4627 = vrot.slane %v4626, 4
    %v4628 = vadd.f32 %v4626, %v4627
    %v4629 = vrot.slane %v4628, 2
    %v4630 = vadd.f32 %v4628, %v4629
    %v4631 = vrot.slane %v4630, 1
    %v4632 = vadd.f32 %v4630, %v4631
    %v4633 = vadd.f32 %v4306, %v4632
    %v4634 = vmul.f32 %v4597, %v4597
    %v4635 = vmul.f32 %v4602, %v4602
    %v4636 = vmul.f32 %v4607, %v4607
    %v4637 = vmul.f32 %v4612, %v4612
    %v4638 = vsel %vm361, %v4634, 0.0
    %v4639 = vsel %vm361, %v4635, 0.0
    %v4640 = vadd.f32 %v4638, %v4639
    %v4641 = vsel %vm361, %v4636, 0.0
    %v4642 = vadd.f32 %v4640, %v4641
    %v4643 = vsel %vm361, %v4637, 0.0
    %v4644 = vadd.f32 %v4642, %v4643
    %v4645 = vrot.slane %v4644, 4
    %v4646 = vadd.f32 %v4644, %v4645
    %v4647 = vrot.slane %v4646, 2
    %v4648 = vadd.f32 %v4646, %v4647
    %v4649 = vrot.slane %v4648, 1
    %v4650 = vadd.f32 %v4648, %v4649
    %v4651 = vadd.f32 %v4324, %v4650
    %s4652 = scalar_lea.vmem [#allocation2], 56
    %v4653 = vld [vmem:[%s4652] sm:$0x1]
    %v4654 = vlaneseq
    %v4655 = vshrl.u32 %v4654, 7
    %v4656 = vsub.s32 0, %v4655
    %v4657 = vrot.slane %v4653, %v4656
    %v4658 = vmul.f32 %v59, %v4657
    %v4659 = vmul.f32 %v60, %v4657
    %v4660 = vmul.f32 %v61, %v4657
    %v4661 = vmul.f32 %v62, %v4657
    %v4662 = vmul.f32 %v65, %v4657
    %v4663 = vmul.f32 %v66, %v4657
    %v4664 = vmul.f32 %v67, %v4657
    %v4665 = vmul.f32 %v68, %v4657
    %v4666 = vadd.f32 %v4658, 0.0
    %v4667 = vadd.f32 %v4659, 0.0
    %v4668 = vadd.f32 %v4660, 0.0
    %v4669 = vadd.f32 %v4661, 0.0
    %v4670 = vadd.f32 %v4662, 0.0
    %v4671 = vadd.f32 %v4663, 0.0
    %v4672 = vadd.f32 %v4664, 0.0
    %v4673 = vadd.f32 %v4665, 0.0
    %v4674 = vld [vmem:[%s4652 + $0x1] sm:$0x1]
    %v4675 = vlaneseq
    %v4676 = vshrl.u32 %v4675, 7
    %v4677 = vsub.s32 0, %v4676
    %v4678 = vrot.slane %v4674, %v4677
    %v4679 = vmul.f32 %v59, %v4678
    %v4680 = vmul.f32 %v60, %v4678
    %v4681 = vmul.f32 %v61, %v4678
    %v4682 = vmul.f32 %v62, %v4678
    %v4683 = vmul.f32 %v65, %v4678
    %v4684 = vmul.f32 %v66, %v4678
    %v4685 = vmul.f32 %v67, %v4678
    %v4686 = vmul.f32 %v68, %v4678
    %v4695 = vrot.slane %v4679, 7
    %v4696 = vrot.slane %v4680, 7
    %v4697 = vrot.slane %v4681, 7
    %v4698 = vrot.slane %v4682, 7
    %v4699 = vrot.slane %v4683, 7
    %v4700 = vrot.slane %v4684, 7
    %v4701 = vrot.slane %v4685, 7
    %v4702 = vrot.slane %v4686, 7
    %v4711 = vadd.f32 %v4666, %v4695
    %v4712 = vadd.f32 %v4667, %v4696
    %v4713 = vadd.f32 %v4668, %v4697
    %v4714 = vadd.f32 %v4669, %v4698
    %v4715 = vadd.f32 %v4670, %v4699
    %v4716 = vadd.f32 %v4671, %v4700
    %v4717 = vadd.f32 %v4672, %v4701
    %v4718 = vadd.f32 %v4673, %v4702
    %v4719 = vld [vmem:[%s4652 + $0x2] sm:$0x1]
    %v4720 = vlaneseq
    %v4721 = vshrl.u32 %v4720, 7
    %v4722 = vsub.s32 0, %v4721
    %v4723 = vrot.slane %v4719, %v4722
    %v4724 = vmul.f32 %v58, %v4723
    %v4725 = vmul.f32 %v59, %v4723
    %v4726 = vmul.f32 %v60, %v4723
    %v4727 = vmul.f32 %v61, %v4723
    %v4728 = vmul.f32 %v64, %v4723
    %v4729 = vmul.f32 %v65, %v4723
    %v4730 = vmul.f32 %v66, %v4723
    %v4731 = vmul.f32 %v67, %v4723
    %v4732 = vadd.f32 %v4711, %v4724
    %v4733 = vadd.f32 %v4712, %v4725
    %v4734 = vadd.f32 %v4713, %v4726
    %v4735 = vadd.f32 %v4714, %v4727
    %v4736 = vadd.f32 %v4715, %v4728
    %v4737 = vadd.f32 %v4716, %v4729
    %v4738 = vadd.f32 %v4717, %v4730
    %v4739 = vadd.f32 %v4718, %v4731
    %v4740 = vld [vmem:[%s4652 + $0x3] sm:$0x1]
    %v4741 = vlaneseq
    %v4742 = vshrl.u32 %v4741, 7
    %v4743 = vsub.s32 0, %v4742
    %v4744 = vrot.slane %v4740, %v4743
    %v4745 = vmul.f32 %v58, %v4744
    %v4746 = vmul.f32 %v59, %v4744
    %v4747 = vmul.f32 %v60, %v4744
    %v4748 = vmul.f32 %v61, %v4744
    %v4749 = vmul.f32 %v64, %v4744
    %v4750 = vmul.f32 %v65, %v4744
    %v4751 = vmul.f32 %v66, %v4744
    %v4752 = vmul.f32 %v67, %v4744
    %v4761 = vrot.slane %v4745, 7
    %v4762 = vrot.slane %v4746, 7
    %v4763 = vrot.slane %v4747, 7
    %v4764 = vrot.slane %v4748, 7
    %v4765 = vrot.slane %v4749, 7
    %v4766 = vrot.slane %v4750, 7
    %v4767 = vrot.slane %v4751, 7
    %v4768 = vrot.slane %v4752, 7
    %v4777 = vadd.f32 %v4732, %v4761
    %v4778 = vadd.f32 %v4733, %v4762
    %v4779 = vadd.f32 %v4734, %v4763
    %v4780 = vadd.f32 %v4735, %v4764
    %v4781 = vadd.f32 %v4736, %v4765
    %v4782 = vadd.f32 %v4737, %v4766
    %v4783 = vadd.f32 %v4738, %v4767
    %v4784 = vadd.f32 %v4739, %v4768
    %v4793 = vcombine.high %v4777, %v4777
    %v4794 = vcombine.high %v4778, %v4778
    %v4795 = vcombine.high %v4779, %v4779
    %v4796 = vcombine.high %v4780, %v4780
    %v4797 = vcombine.high %v4781, %v4781
    %v4798 = vcombine.high %v4782, %v4782
    %v4799 = vcombine.high %v4783, %v4783
    %v4800 = vcombine.high %v4784, %v4784
    %v4801 = vrot.slane %v4777, 6
    %v4802 = vrot.slane %v4801, 4
    %v4803 = vrot.slane %v4793, 6
    %v4804 = vsel %vm876, %v4802, %v4803
    %v4805 = vrot.slane %v4778, 6
    %v4806 = vrot.slane %v4805, 4
    %v4807 = vrot.slane %v4794, 6
    %v4808 = vsel %vm876, %v4806, %v4807
    %v4809 = vrot.slane %v4779, 6
    %v4810 = vrot.slane %v4809, 4
    %v4811 = vrot.slane %v4795, 6
    %v4812 = vsel %vm876, %v4810, %v4811
    %v4813 = vrot.slane %v4780, 6
    %v4814 = vrot.slane %v4813, 4
    %v4815 = vrot.slane %v4796, 6
    %v4816 = vsel %vm876, %v4814, %v4815
    %v4817 = vrot.slane %v4781, 6
    %v4818 = vrot.slane %v4817, 4
    %v4819 = vrot.slane %v4797, 6
    %v4820 = vsel %vm876, %v4818, %v4819
    %v4821 = vrot.slane %v4782, 6
    %v4822 = vrot.slane %v4821, 4
    %v4823 = vrot.slane %v4798, 6
    %v4824 = vsel %vm876, %v4822, %v4823
    %v4825 = vrot.slane %v4783, 6
    %v4826 = vrot.slane %v4825, 4
    %v4827 = vrot.slane %v4799, 6
    %v4828 = vsel %vm876, %v4826, %v4827
    %v4829 = vrot.slane %v4784, 6
    %v4830 = vrot.slane %v4829, 4
    %v4831 = vrot.slane %v4800, 6
    %v4832 = vsel %vm876, %v4830, %v4831
    %v4833 = vld [vmem:[%s2] sm:$0xff]
    %v4834 = vld [vmem:[%s2 + $0x8] sm:$0xff]
    %v4835 = vld [vmem:[%s2 + $0x10] sm:$0xff]
    %v4836 = vld [vmem:[%s2 + $0x18] sm:$0xff]
    %v4837 = vld [vmem:[%s2 + $0x20] sm:$0xff]
    %v4838 = vld [vmem:[%s2 + $0x28] sm:$0xff]
    %v4839 = vld [vmem:[%s2 + $0x30] sm:$0xff]
    %v4840 = vld [vmem:[%s2 + $0x38] sm:$0xff]
    %v4841 = vld [vmem:[%s2 + $0x40] sm:$0xff]
    %v4842 = vld [vmem:[%s2 + $0x48] sm:$0xff]
    %v4843 = vld [vmem:[%s2 + $0x50] sm:$0xff]
    %v4844 = vld [vmem:[%s2 + $0x58] sm:$0xff]
    %v4845 = vld [vmem:[%s2 + $0x60] sm:$0xff]
    %v4846 = vld [vmem:[%s2 + $0x68] sm:$0xff]
    %v4847 = vld [vmem:[%s2 + $0x70] sm:$0xff]
    %v4848 = vld [vmem:[%s2 + $0x78] sm:$0xff]
    %v4849 = vcombine.low %v4804, %v4808
    %v4850 = vcombine.low %v4812, %v4816
    %v4851 = vcombine.low %v4820, %v4824
    %v4852 = vcombine.low %v4828, %v4832
    %4857 = vmatprep.subr.mxu0 0.0
    %4858 = vmatpush1.msra.mxu0 %v4848
    %4859 = vmatprep.subr.mxu0 0.0
    %4860 = vmatpush1.msra.mxu0 %v4847
    %4861 = vmatprep.subr.mxu0 0.0
    %4862 = vmatpush1.msra.mxu0 %v4846
    %4863 = vmatprep.subr.mxu0 0.0
    %4864 = vmatpush1.msra.mxu0 %v4845
    %4865 = vmatprep.subr.mxu0 0.0
    %4866 = vmatpush1.msra.mxu0 %v4844
    %4867 = vmatprep.subr.mxu0 0.0
    %4868 = vmatpush1.msra.mxu0 %v4843
    %4869 = vmatprep.subr.mxu0 0.0
    %4870 = vmatpush1.msra.mxu0 %v4842
    %4871 = vmatprep.subr.mxu0 0.0
    %4872 = vmatpush1.msra.mxu0 %v4841
    %4873 = vmatprep.subr.mxu0 0.0
    %4874 = vmatpush1.msra.mxu0 %v4840
    %4875 = vmatprep.subr.mxu0 0.0
    %4876 = vmatpush1.msra.mxu0 %v4839
    %4877 = vmatprep.subr.mxu0 0.0
    %4878 = vmatpush1.msra.mxu0 %v4838
    %4879 = vmatprep.subr.mxu0 0.0
    %4880 = vmatpush1.msra.mxu0 %v4837
    %4881 = vmatprep.subr.mxu0 0.0
    %4882 = vmatpush1.msra.mxu0 %v4836
    %4883 = vmatprep.subr.mxu0 0.0
    %4884 = vmatpush1.msra.mxu0 %v4835
    %4885 = vmatprep.subr.mxu0 0.0
    %4886 = vmatpush1.msra.mxu0 %v4834
    %4887 = vmatprep.subr.mxu0 0.0
    %4888 = vmatpush1.msra.mxu0 %v4833
    %4889 = vmatprep.subr.mxu0 0.0
    %4890 = vmatpush2.msra.mxu0 0.0
    %4891 = vmatprep.subr.mxu0 0.0
    %4892 = vmatpush2.msra.mxu0 0.0
    %4893 = vmatprep.subr.mxu0 0.0
    %4894 = vmatpush2.msra.mxu0 0.0
    %4895 = vmatprep.subr.mxu0 0.0
    %4896 = vmatpush2.msra.mxu0 0.0
    %4897 = vmatprep.subr.mxu0 0.0
    %4898 = vmatpush2.msra.mxu0 0.0
    %4899 = vmatprep.subr.mxu0 0.0
    %4900 = vmatpush2.msra.mxu0 0.0
    %4901 = vmatprep.subr.mxu0 0.0
    %4902 = vmatpush2.msra.mxu0 0.0
    %4903 = vmatprep.subr.mxu0 0.0
    %4904 = vmatpush2.msra.mxu0 0.0
    %4905 = vmatprep.subr.mxu0 0.0
    %4906 = vmatpush2.msra.mxu0 0.0
    %4907 = vmatprep.subr.mxu0 0.0
    %4908 = vmatpush2.msra.mxu0 0.0
    %4909 = vmatprep.subr.mxu0 0.0
    %4910 = vmatpush2.msra.mxu0 0.0
    %4911 = vmatprep.subr.mxu0 0.0
    %4912 = vmatpush2.msra.mxu0 0.0
    %4913 = vmatprep.subr.mxu0 0.0
    %4914 = vmatpush2.msra.mxu0 0.0
    %4915 = vmatprep.subr.mxu0 0.0
    %4916 = vmatpush2.msra.mxu0 0.0
    %4917 = vmatprep.subr.mxu0 0.0
    %4918 = vmatpush2.msra.mxu0 0.0
    %4919 = vmatprep.subr.mxu0 0.0
    %4920 = vmatpush2.msra.mxu0 0.0
    %4921 = vmatprep.mubr.f32.mxu0 0.0
    %4922 = vmatmul.mubr.f32.gmra.mxu0 %v4849
    %v4923 = vpop.f32.mrf.mxu0
    %v4924 = vadd.f32 0.0, %v4923
    %v4925 = vpop.f32.mrf.mxu0
    %4926 = vmatprep.mubr.f32.mxu0 0.0
    %4927 = vmatmul.mubr.f32.gmra.mxu0 %v4850
    %v4928 = vpop.f32.mrf.mxu0
    %v4929 = vadd.f32 0.0, %v4928
    %v4930 = vpop.f32.mrf.mxu0
    %4931 = vmatprep.mubr.f32.mxu0 0.0
    %4932 = vmatmul.mubr.f32.gmra.mxu0 %v4851
    %v4933 = vpop.f32.mrf.mxu0
    %v4934 = vadd.f32 0.0, %v4933
    %v4935 = vpop.f32.mrf.mxu0
    %4936 = vmatprep.mubr.f32.mxu0 0.0
    %4937 = vmatmul.mubr.f32.gmra.mxu0 %v4852
    %v4938 = vpop.f32.mrf.mxu0
    %v4939 = vadd.f32 0.0, %v4938
    %v4940 = vpop.f32.mrf.mxu0
    %4941 = vdwg.mxu0
    %s4942 = scalar_lea.vmem %s5, 448
    %4943 = vst.msk [vmem:[%s4942] sm:$0xff] %vm361, %v4924
    %4944 = vst.msk [vmem:[%s4942 + $0x8] sm:$0xff] %vm361, %v4929
    %4945 = vst.msk [vmem:[%s4942 + $0x10] sm:$0xff] %vm361, %v4934
    %4946 = vst.msk [vmem:[%s4942 + $0x18] sm:$0xff] %vm361, %v4939
    %v4947 = vsel %vm361, %v4924, 0.0
    %v4948 = vsel %vm361, %v4929, 0.0
    %v4949 = vadd.f32 %v4947, %v4948
    %v4950 = vsel %vm361, %v4934, 0.0
    %v4951 = vadd.f32 %v4949, %v4950
    %v4952 = vsel %vm361, %v4939, 0.0
    %v4953 = vadd.f32 %v4951, %v4952
    %v4954 = vrot.slane %v4953, 4
    %v4955 = vadd.f32 %v4953, %v4954
    %v4956 = vrot.slane %v4955, 2
    %v4957 = vadd.f32 %v4955, %v4956
    %v4958 = vrot.slane %v4957, 1
    %v4959 = vadd.f32 %v4957, %v4958
    %v4960 = vadd.f32 %v4633, %v4959
    %v4961 = vmul.f32 %v4924, %v4924
    %v4962 = vmul.f32 %v4929, %v4929
    %v4963 = vmul.f32 %v4934, %v4934
    %v4964 = vmul.f32 %v4939, %v4939
    %v4965 = vsel %vm361, %v4961, 0.0
    %v4966 = vsel %vm361, %v4962, 0.0
    %v4967 = vadd.f32 %v4965, %v4966
    %v4968 = vsel %vm361, %v4963, 0.0
    %v4969 = vadd.f32 %v4967, %v4968
    %v4970 = vsel %vm361, %v4964, 0.0
    %v4971 = vadd.f32 %v4969, %v4970
    %v4972 = vrot.slane %v4971, 4
    %v4973 = vadd.f32 %v4971, %v4972
    %v4974 = vrot.slane %v4973, 2
    %v4975 = vadd.f32 %v4973, %v4974
    %v4976 = vrot.slane %v4975, 1
    %v4977 = vadd.f32 %v4975, %v4976
    %v4978 = vadd.f32 %v4651, %v4977
    %s4979 = scalar_lea.vmem [#allocation2], 60
    %v4980 = vld [vmem:[%s4979] sm:$0x1]
    %v4981 = vlaneseq
    %v4982 = vshrl.u32 %v4981, 7
    %v4983 = vsub.s32 0, %v4982
    %v4984 = vrot.slane %v4980, %v4983
    %v4985 = vmul.f32 %v59, %v4984
    %v4986 = vmul.f32 %v60, %v4984
    %v4987 = vmul.f32 %v61, %v4984
    %v4988 = vmul.f32 %v62, %v4984
    %v4989 = vmul.f32 %v65, %v4984
    %v4990 = vmul.f32 %v66, %v4984
    %v4991 = vmul.f32 %v67, %v4984
    %v4992 = vmul.f32 %v68, %v4984
    %v4993 = vadd.f32 %v4985, 0.0
    %v4994 = vadd.f32 %v4986, 0.0
    %v4995 = vadd.f32 %v4987, 0.0
    %v4996 = vadd.f32 %v4988, 0.0
    %v4997 = vadd.f32 %v4989, 0.0
    %v4998 = vadd.f32 %v4990, 0.0
    %v4999 = vadd.f32 %v4991, 0.0
    %v5000 = vadd.f32 %v4992, 0.0
    %v5001 = vld [vmem:[%s4979 + $0x1] sm:$0x1]
    %v5002 = vlaneseq
    %v5003 = vshrl.u32 %v5002, 7
    %v5004 = vsub.s32 0, %v5003
    %v5005 = vrot.slane %v5001, %v5004
    %v5006 = vmul.f32 %v59, %v5005
    %v5007 = vmul.f32 %v60, %v5005
    %v5008 = vmul.f32 %v61, %v5005
    %v5009 = vmul.f32 %v62, %v5005
    %v5010 = vmul.f32 %v65, %v5005
    %v5011 = vmul.f32 %v66, %v5005
    %v5012 = vmul.f32 %v67, %v5005
    %v5013 = vmul.f32 %v68, %v5005
    %v5022 = vrot.slane %v5006, 7
    %v5023 = vrot.slane %v5007, 7
    %v5024 = vrot.slane %v5008, 7
    %v5025 = vrot.slane %v5009, 7
    %v5026 = vrot.slane %v5010, 7
    %v5027 = vrot.slane %v5011, 7
    %v5028 = vrot.slane %v5012, 7
    %v5029 = vrot.slane %v5013, 7
    %v5038 = vadd.f32 %v4993, %v5022
    %v5039 = vadd.f32 %v4994, %v5023
    %v5040 = vadd.f32 %v4995, %v5024
    %v5041 = vadd.f32 %v4996, %v5025
    %v5042 = vadd.f32 %v4997, %v5026
    %v5043 = vadd.f32 %v4998, %v5027
    %v5044 = vadd.f32 %v4999, %v5028
    %v5045 = vadd.f32 %v5000, %v5029
    %v5046 = vld [vmem:[%s4979 + $0x2] sm:$0x1]
    %v5047 = vlaneseq
    %v5048 = vshrl.u32 %v5047, 7
    %v5049 = vsub.s32 0, %v5048
    %v5050 = vrot.slane %v5046, %v5049
    %v5051 = vmul.f32 %v58, %v5050
    %v5052 = vmul.f32 %v59, %v5050
    %v5053 = vmul.f32 %v60, %v5050
    %v5054 = vmul.f32 %v61, %v5050
    %v5055 = vmul.f32 %v64, %v5050
    %v5056 = vmul.f32 %v65, %v5050
    %v5057 = vmul.f32 %v66, %v5050
    %v5058 = vmul.f32 %v67, %v5050
    %v5059 = vadd.f32 %v5038, %v5051
    %v5060 = vadd.f32 %v5039, %v5052
    %v5061 = vadd.f32 %v5040, %v5053
    %v5062 = vadd.f32 %v5041, %v5054
    %v5063 = vadd.f32 %v5042, %v5055
    %v5064 = vadd.f32 %v5043, %v5056
    %v5065 = vadd.f32 %v5044, %v5057
    %v5066 = vadd.f32 %v5045, %v5058
    %v5067 = vld [vmem:[%s4979 + $0x3] sm:$0x1]
    %v5068 = vlaneseq
    %v5069 = vshrl.u32 %v5068, 7
    %v5070 = vsub.s32 0, %v5069
    %v5071 = vrot.slane %v5067, %v5070
    %v5072 = vmul.f32 %v58, %v5071
    %v5073 = vmul.f32 %v59, %v5071
    %v5074 = vmul.f32 %v60, %v5071
    %v5075 = vmul.f32 %v61, %v5071
    %v5076 = vmul.f32 %v64, %v5071
    %v5077 = vmul.f32 %v65, %v5071
    %v5078 = vmul.f32 %v66, %v5071
    %v5079 = vmul.f32 %v67, %v5071
    %v5088 = vrot.slane %v5072, 7
    %v5089 = vrot.slane %v5073, 7
    %v5090 = vrot.slane %v5074, 7
    %v5091 = vrot.slane %v5075, 7
    %v5092 = vrot.slane %v5076, 7
    %v5093 = vrot.slane %v5077, 7
    %v5094 = vrot.slane %v5078, 7
    %v5095 = vrot.slane %v5079, 7
    %v5104 = vadd.f32 %v5059, %v5088
    %v5105 = vadd.f32 %v5060, %v5089
    %v5106 = vadd.f32 %v5061, %v5090
    %v5107 = vadd.f32 %v5062, %v5091
    %v5108 = vadd.f32 %v5063, %v5092
    %v5109 = vadd.f32 %v5064, %v5093
    %v5110 = vadd.f32 %v5065, %v5094
    %v5111 = vadd.f32 %v5066, %v5095
    %v5120 = vcombine.high %v5104, %v5104
    %v5121 = vcombine.high %v5105, %v5105
    %v5122 = vcombine.high %v5106, %v5106
    %v5123 = vcombine.high %v5107, %v5107
    %v5124 = vcombine.high %v5108, %v5108
    %v5125 = vcombine.high %v5109, %v5109
    %v5126 = vcombine.high %v5110, %v5110
    %v5127 = vcombine.high %v5111, %v5111
    %v5128 = vrot.slane %v5104, 6
    %v5129 = vrot.slane %v5128, 4
    %v5130 = vrot.slane %v5120, 6
    %v5131 = vsel %vm876, %v5129, %v5130
    %v5132 = vrot.slane %v5105, 6
    %v5133 = vrot.slane %v5132, 4
    %v5134 = vrot.slane %v5121, 6
    %v5135 = vsel %vm876, %v5133, %v5134
    %v5136 = vrot.slane %v5106, 6
    %v5137 = vrot.slane %v5136, 4
    %v5138 = vrot.slane %v5122, 6
    %v5139 = vsel %vm876, %v5137, %v5138
    %v5140 = vrot.slane %v5107, 6
    %v5141 = vrot.slane %v5140, 4
    %v5142 = vrot.slane %v5123, 6
    %v5143 = vsel %vm876, %v5141, %v5142
    %v5144 = vrot.slane %v5108, 6
    %v5145 = vrot.slane %v5144, 4
    %v5146 = vrot.slane %v5124, 6
    %v5147 = vsel %vm876, %v5145, %v5146
    %v5148 = vrot.slane %v5109, 6
    %v5149 = vrot.slane %v5148, 4
    %v5150 = vrot.slane %v5125, 6
    %v5151 = vsel %vm876, %v5149, %v5150
    %v5152 = vrot.slane %v5110, 6
    %v5153 = vrot.slane %v5152, 4
    %v5154 = vrot.slane %v5126, 6
    %v5155 = vsel %vm876, %v5153, %v5154
    %v5156 = vrot.slane %v5111, 6
    %v5157 = vrot.slane %v5156, 4
    %v5158 = vrot.slane %v5127, 6
    %v5159 = vsel %vm876, %v5157, %v5158
    %v5160 = vld [vmem:[%s2] sm:$0xff]
    %v5161 = vld [vmem:[%s2 + $0x8] sm:$0xff]
    %v5162 = vld [vmem:[%s2 + $0x10] sm:$0xff]
    %v5163 = vld [vmem:[%s2 + $0x18] sm:$0xff]
    %v5164 = vld [vmem:[%s2 + $0x20] sm:$0xff]
    %v5165 = vld [vmem:[%s2 + $0x28] sm:$0xff]
    %v5166 = vld [vmem:[%s2 + $0x30] sm:$0xff]
    %v5167 = vld [vmem:[%s2 + $0x38] sm:$0xff]
    %v5168 = vld [vmem:[%s2 + $0x40] sm:$0xff]
    %v5169 = vld [vmem:[%s2 + $0x48] sm:$0xff]
    %v5170 = vld [vmem:[%s2 + $0x50] sm:$0xff]
    %v5171 = vld [vmem:[%s2 + $0x58] sm:$0xff]
    %v5172 = vld [vmem:[%s2 + $0x60] sm:$0xff]
    %v5173 = vld [vmem:[%s2 + $0x68] sm:$0xff]
    %v5174 = vld [vmem:[%s2 + $0x70] sm:$0xff]
    %v5175 = vld [vmem:[%s2 + $0x78] sm:$0xff]
    %v5176 = vcombine.low %v5131, %v5135
    %v5177 = vcombine.low %v5139, %v5143
    %v5178 = vcombine.low %v5147, %v5151
    %v5179 = vcombine.low %v5155, %v5159
    %5184 = vmatprep.subr.mxu0 0.0
    %5185 = vmatpush1.msra.mxu0 %v5175
    %5186 = vmatprep.subr.mxu0 0.0
    %5187 = vmatpush1.msra.mxu0 %v5174
    %5188 = vmatprep.subr.mxu0 0.0
    %5189 = vmatpush1.msra.mxu0 %v5173
    %5190 = vmatprep.subr.mxu0 0.0
    %5191 = vmatpush1.msra.mxu0 %v5172
    %5192 = vmatprep.subr.mxu0 0.0
    %5193 = vmatpush1.msra.mxu0 %v5171
    %5194 = vmatprep.subr.mxu0 0.0
    %5195 = vmatpush1.msra.mxu0 %v5170
    %5196 = vmatprep.subr.mxu0 0.0
    %5197 = vmatpush1.msra.mxu0 %v5169
    %5198 = vmatprep.subr.mxu0 0.0
    %5199 = vmatpush1.msra.mxu0 %v5168
    %5200 = vmatprep.subr.mxu0 0.0
    %5201 = vmatpush1.msra.mxu0 %v5167
    %5202 = vmatprep.subr.mxu0 0.0
    %5203 = vmatpush1.msra.mxu0 %v5166
    %5204 = vmatprep.subr.mxu0 0.0
    %5205 = vmatpush1.msra.mxu0 %v5165
    %5206 = vmatprep.subr.mxu0 0.0
    %5207 = vmatpush1.msra.mxu0 %v5164
    %5208 = vmatprep.subr.mxu0 0.0
    %5209 = vmatpush1.msra.mxu0 %v5163
    %5210 = vmatprep.subr.mxu0 0.0
    %5211 = vmatpush1.msra.mxu0 %v5162
    %5212 = vmatprep.subr.mxu0 0.0
    %5213 = vmatpush1.msra.mxu0 %v5161
    %5214 = vmatprep.subr.mxu0 0.0
    %5215 = vmatpush1.msra.mxu0 %v5160
    %5216 = vmatprep.subr.mxu0 0.0
    %5217 = vmatpush2.msra.mxu0 0.0
    %5218 = vmatprep.subr.mxu0 0.0
    %5219 = vmatpush2.msra.mxu0 0.0
    %5220 = vmatprep.subr.mxu0 0.0
    %5221 = vmatpush2.msra.mxu0 0.0
    %5222 = vmatprep.subr.mxu0 0.0
    %5223 = vmatpush2.msra.mxu0 0.0
    %5224 = vmatprep.subr.mxu0 0.0
    %5225 = vmatpush2.msra.mxu0 0.0
    %5226 = vmatprep.subr.mxu0 0.0
    %5227 = vmatpush2.msra.mxu0 0.0
    %5228 = vmatprep.subr.mxu0 0.0
    %5229 = vmatpush2.msra.mxu0 0.0
    %5230 = vmatprep.subr.mxu0 0.0
    %5231 = vmatpush2.msra.mxu0 0.0
    %5232 = vmatprep.subr.mxu0 0.0
    %5233 = vmatpush2.msra.mxu0 0.0
    %5234 = vmatprep.subr.mxu0 0.0
    %5235 = vmatpush2.msra.mxu0 0.0
    %5236 = vmatprep.subr.mxu0 0.0
    %5237 = vmatpush2.msra.mxu0 0.0
    %5238 = vmatprep.subr.mxu0 0.0
    %5239 = vmatpush2.msra.mxu0 0.0
    %5240 = vmatprep.subr.mxu0 0.0
    %5241 = vmatpush2.msra.mxu0 0.0
    %5242 = vmatprep.subr.mxu0 0.0
    %5243 = vmatpush2.msra.mxu0 0.0
    %5244 = vmatprep.subr.mxu0 0.0
    %5245 = vmatpush2.msra.mxu0 0.0
    %5246 = vmatprep.subr.mxu0 0.0
    %5247 = vmatpush2.msra.mxu0 0.0
    %5248 = vmatprep.mubr.f32.mxu0 0.0
    %5249 = vmatmul.mubr.f32.gmra.mxu0 %v5176
    %v5250 = vpop.f32.mrf.mxu0
    %v5251 = vadd.f32 0.0, %v5250
    %v5252 = vpop.f32.mrf.mxu0
    %5253 = vmatprep.mubr.f32.mxu0 0.0
    %5254 = vmatmul.mubr.f32.gmra.mxu0 %v5177
    %v5255 = vpop.f32.mrf.mxu0
    %v5256 = vadd.f32 0.0, %v5255
    %v5257 = vpop.f32.mrf.mxu0
    %5258 = vmatprep.mubr.f32.mxu0 0.0
    %5259 = vmatmul.mubr.f32.gmra.mxu0 %v5178
    %v5260 = vpop.f32.mrf.mxu0
    %v5261 = vadd.f32 0.0, %v5260
    %v5262 = vpop.f32.mrf.mxu0
    %5263 = vmatprep.mubr.f32.mxu0 0.0
    %5264 = vmatmul.mubr.f32.gmra.mxu0 %v5179
    %v5265 = vpop.f32.mrf.mxu0
    %v5266 = vadd.f32 0.0, %v5265
    %v5267 = vpop.f32.mrf.mxu0
    %5268 = vdwg.mxu0
    %s5269 = scalar_lea.vmem %s5, 480
    %5270 = vst.msk [vmem:[%s5269] sm:$0xff] %vm361, %v5251
    %5271 = vst.msk [vmem:[%s5269 + $0x8] sm:$0xff] %vm361, %v5256
    %5272 = vst.msk [vmem:[%s5269 + $0x10] sm:$0xff] %vm361, %v5261
    %5273 = vst.msk [vmem:[%s5269 + $0x18] sm:$0xff] %vm361, %v5266
    %v5274 = vsel %vm361, %v5251, 0.0
    %v5275 = vsel %vm361, %v5256, 0.0
    %v5276 = vadd.f32 %v5274, %v5275
    %v5277 = vsel %vm361, %v5261, 0.0
    %v5278 = vadd.f32 %v5276, %v5277
    %v5279 = vsel %vm361, %v5266, 0.0
    %v5280 = vadd.f32 %v5278, %v5279
    %v5281 = vrot.slane %v5280, 4
    %v5282 = vadd.f32 %v5280, %v5281
    %v5283 = vrot.slane %v5282, 2
    %v5284 = vadd.f32 %v5282, %v5283
    %v5285 = vrot.slane %v5284, 1
    %v5286 = vadd.f32 %v5284, %v5285
    %v5287 = vadd.f32 %v4960, %v5286
    %v5288 = vmul.f32 %v5251, %v5251
    %v5289 = vmul.f32 %v5256, %v5256
    %v5290 = vmul.f32 %v5261, %v5261
    %v5291 = vmul.f32 %v5266, %v5266
    %v5292 = vsel %vm361, %v5288, 0.0
    %v5293 = vsel %vm361, %v5289, 0.0
    %v5294 = vadd.f32 %v5292, %v5293
    %v5295 = vsel %vm361, %v5290, 0.0
    %v5296 = vadd.f32 %v5294, %v5295
    %v5297 = vsel %vm361, %v5291, 0.0
    %v5298 = vadd.f32 %v5296, %v5297
    %v5299 = vrot.slane %v5298, 4
    %v5300 = vadd.f32 %v5298, %v5299
    %v5301 = vrot.slane %v5300, 2
    %v5302 = vadd.f32 %v5300, %v5301
    %v5303 = vrot.slane %v5302, 1
    %v5304 = vadd.f32 %v5302, %v5303
    %v5305 = vadd.f32 %v4978, %v5304
    %v5306 = vrcp.pop 512.0
    %v5307 = vmul.f32 %v5287, %v5306
    %v5308 = vmul.f32 %v5305, %v5306
    %v5309 = vmul.f32 %v5307, %v5307
    %v5310 = vsub.f32 %v5308, %v5309
    %v5311 = vadd.f32 %v5310, 1e-05
    %v5312 = vrsqrt.pop %v5311
    %v5313 = vld [vmem:[#allocation4] sm:$0x1]
    %v5314 = vmul.f32 %v5312, %v5313
    %v5315 = vld [vmem:[#allocation6] sm:$0x1]
    %v5316 = vmul.f32 %v5307, %v5314
    %v5317 = vsub.f32 %v5315, %v5316
    %v5318 = vld [vmem:[%s5] sm:$0xff]
    %v5319 = vld [vmem:[%s5 + $0x8] sm:$0xff]
    %v5320 = vld [vmem:[%s5 + $0x10] sm:$0xff]
    %v5321 = vld [vmem:[%s5 + $0x18] sm:$0xff]
    %v5322 = vlaneseq
    %v5323 = vshrl.u32 %v5322, 7
    %v5324 = vsub.s32 0, %v5323
    %v5325 = vrot.slane %v5314, %v5324
    %v5326 = vmul.f32 %v5318, %v5325
    %v5327 = vmul.f32 %v5319, %v5325
    %v5328 = vmul.f32 %v5320, %v5325
    %v5329 = vmul.f32 %v5321, %v5325
    %v5331 = vlaneseq
    %v5332 = vshrl.u32 %v5331, 7
    %v5333 = vsub.s32 0, %v5332
    %v5334 = vrot.slane %v5317, %v5333
    %v5336 = vadd.f32 %v5326, %v5334
    %v5337 = vadd.f32 %v5327, %v5334
    %v5338 = vadd.f32 %v5328, %v5334
    %v5339 = vadd.f32 %v5329, %v5334
    %v5340 = vmax.f32 %v5336, 0.0
    %v5341 = vmax.f32 %v5337, 0.0
    %v5342 = vmax.f32 %v5338, 0.0
    %v5343 = vmax.f32 %v5339, 0.0
    %5344 = vst.msk [vmem:[%s5] sm:$0xff] %vm361, %v5340
    %5345 = vst.msk [vmem:[%s5 + $0x8] sm:$0xff] %vm361, %v5341
    %5346 = vst.msk [vmem:[%s5 + $0x10] sm:$0xff] %vm361, %v5342
    %5347 = vst.msk [vmem:[%s5 + $0x18] sm:$0xff] %vm361, %v5343
    %v5348 = vld [vmem:[%s688] sm:$0xff]
    %v5349 = vld [vmem:[%s688 + $0x8] sm:$0xff]
    %v5350 = vld [vmem:[%s688 + $0x10] sm:$0xff]
    %v5351 = vld [vmem:[%s688 + $0x18] sm:$0xff]
    %v5352 = vmul.f32 %v5348, %v5325
    %v5353 = vmul.f32 %v5349, %v5325
    %v5354 = vmul.f32 %v5350, %v5325
    %v5355 = vmul.f32 %v5351, %v5325
    %v5356 = vadd.f32 %v5352, %v5334
    %v5357 = vadd.f32 %v5353, %v5334
    %v5358 = vadd.f32 %v5354, %v5334
    %v5359 = vadd.f32 %v5355, %v5334
    %v5360 = vmax.f32 %v5356, 0.0
    %v5361 = vmax.f32 %v5357, 0.0
    %v5362 = vmax.f32 %v5358, 0.0
    %v5363 = vmax.f32 %v5359, 0.0
    %5364 = vst.msk [vmem:[%s688] sm:$0xff] %vm361, %v5360
    %5365 = vst.msk [vmem:[%s688 + $0x8] sm:$0xff] %vm361, %v5361
    %5366 = vst.msk [vmem:[%s688 + $0x10] sm:$0xff] %vm361, %v5362
    %5367 = vst.msk [vmem:[%s688 + $0x18] sm:$0xff] %vm361, %v5363
    %v5368 = vld [vmem:[%s1018] sm:$0xff]
    %v5369 = vld [vmem:[%s1018 + $0x8] sm:$0xff]
    %v5370 = vld [vmem:[%s1018 + $0x10] sm:$0xff]
    %v5371 = vld [vmem:[%s1018 + $0x18] sm:$0xff]
    %v5372 = vmul.f32 %v5368, %v5325
    %v5373 = vmul.f32 %v5369, %v5325
    %v5374 = vmul.f32 %v5370, %v5325
    %v5375 = vmul.f32 %v5371, %v5325
    %v5376 = vadd.f32 %v5372, %v5334
    %v5377 = vadd.f32 %v5373, %v5334
    %v5378 = vadd.f32 %v5374, %v5334
    %v5379 = vadd.f32 %v5375, %v5334
    %v5380 = vmax.f32 %v5376, 0.0
    %v5381 = vmax.f32 %v5377, 0.0
    %v5382 = vmax.f32 %v5378, 0.0
    %v5383 = vmax.f32 %v5379, 0.0
    %5384 = vst.msk [vmem:[%s1018] sm:$0xff] %vm361, %v5380
    %5385 = vst.msk [vmem:[%s1018 + $0x8] sm:$0xff] %vm361, %v5381
    %5386 = vst.msk [vmem:[%s1018 + $0x10] sm:$0xff] %vm361, %v5382
    %5387 = vst.msk [vmem:[%s1018 + $0x18] sm:$0xff] %vm361, %v5383
    %v5388 = vld [vmem:[%s1345] sm:$0xff]
    %v5389 = vld [vmem:[%s1345 + $0x8] sm:$0xff]
    %v5390 = vld [vmem:[%s1345 + $0x10] sm:$0xff]
    %v5391 = vld [vmem:[%s1345 + $0x18] sm:$0xff]
    %v5392 = vmul.f32 %v5388, %v5325
    %v5393 = vmul.f32 %v5389, %v5325
    %v5394 = vmul.f32 %v5390, %v5325
    %v5395 = vmul.f32 %v5391, %v5325
    %v5396 = vadd.f32 %v5392, %v5334
    %v5397 = vadd.f32 %v5393, %v5334
    %v5398 = vadd.f32 %v5394, %v5334
    %v5399 = vadd.f32 %v5395, %v5334
    %v5400 = vmax.f32 %v5396, 0.0
    %v5401 = vmax.f32 %v5397, 0.0
    %v5402 = vmax.f32 %v5398, 0.0
    %v5403 = vmax.f32 %v5399, 0.0
    %5404 = vst.msk [vmem:[%s1345] sm:$0xff] %vm361, %v5400
    %5405 = vst.msk [vmem:[%s1345 + $0x8] sm:$0xff] %vm361, %v5401
    %5406 = vst.msk [vmem:[%s1345 + $0x10] sm:$0xff] %vm361, %v5402
    %5407 = vst.msk [vmem:[%s1345 + $0x18] sm:$0xff] %vm361, %v5403
    %v5408 = vld [vmem:[%s1672] sm:$0xff]
    %v5409 = vld [vmem:[%s1672 + $0x8] sm:$0xff]
    %v5410 = vld [vmem:[%s1672 + $0x10] sm:$0xff]
    %v5411 = vld [vmem:[%s1672 + $0x18] sm:$0xff]
    %v5412 = vmul.f32 %v5408, %v5325
    %v5413 = vmul.f32 %v5409, %v5325
    %v5414 = vmul.f32 %v5410, %v5325
    %v5415 = vmul.f32 %v5411, %v5325
    %v5416 = vadd.f32 %v5412, %v5334
    %v5417 = vadd.f32 %v5413, %v5334
    %v5418 = vadd.f32 %v5414, %v5334
    %v5419 = vadd.f32 %v5415, %v5334
    %v5420 = vmax.f32 %v5416, 0.0
    %v5421 = vmax.f32 %v5417, 0.0
    %v5422 = vmax.f32 %v5418, 0.0
    %v5423 = vmax.f32 %v5419, 0.0
    %5424 = vst.msk [vmem:[%s1672] sm:$0xff] %vm361, %v5420
    %5425 = vst.msk [vmem:[%s1672 + $0x8] sm:$0xff] %vm361, %v5421
    %5426 = vst.msk [vmem:[%s1672 + $0x10] sm:$0xff] %vm361, %v5422
    %5427 = vst.msk [vmem:[%s1672 + $0x18] sm:$0xff] %vm361, %v5423
    %v5428 = vld [vmem:[%s1999] sm:$0xff]
    %v5429 = vld [vmem:[%s1999 + $0x8] sm:$0xff]
    %v5430 = vld [vmem:[%s1999 + $0x10] sm:$0xff]
    %v5431 = vld [vmem:[%s1999 + $0x18] sm:$0xff]
    %v5432 = vmul.f32 %v5428, %v5325
    %v5433 = vmul.f32 %v5429, %v5325
    %v5434 = vmul.f32 %v5430, %v5325
    %v5435 = vmul.f32 %v5431, %v5325
    %v5436 = vadd.f32 %v5432, %v5334
    %v5437 = vadd.f32 %v5433, %v5334
    %v5438 = vadd.f32 %v5434, %v5334
    %v5439 = vadd.f32 %v5435, %v5334
    %v5440 = vmax.f32 %v5436, 0.0
    %v5441 = vmax.f32 %v5437, 0.0
    %v5442 = vmax.f32 %v5438, 0.0
    %v5443 = vmax.f32 %v5439, 0.0
    %5444 = vst.msk [vmem:[%s1999] sm:$0xff] %vm361, %v5440
    %5445 = vst.msk [vmem:[%s1999 + $0x8] sm:$0xff] %vm361, %v5441
    %5446 = vst.msk [vmem:[%s1999 + $0x10] sm:$0xff] %vm361, %v5442
    %5447 = vst.msk [vmem:[%s1999 + $0x18] sm:$0xff] %vm361, %v5443
    %v5448 = vld [vmem:[%s2326] sm:$0xff]
    %v5449 = vld [vmem:[%s2326 + $0x8] sm:$0xff]
    %v5450 = vld [vmem:[%s2326 + $0x10] sm:$0xff]
    %v5451 = vld [vmem:[%s2326 + $0x18] sm:$0xff]
    %v5452 = vmul.f32 %v5448, %v5325
    %v5453 = vmul.f32 %v5449, %v5325
    %v5454 = vmul.f32 %v5450, %v5325
    %v5455 = vmul.f32 %v5451, %v5325
    %v5456 = vadd.f32 %v5452, %v5334
    %v5457 = vadd.f32 %v5453, %v5334
    %v5458 = vadd.f32 %v5454, %v5334
    %v5459 = vadd.f32 %v5455, %v5334
    %v5460 = vmax.f32 %v5456, 0.0
    %v5461 = vmax.f32 %v5457, 0.0
    %v5462 = vmax.f32 %v5458, 0.0
    %v5463 = vmax.f32 %v5459, 0.0
    %5464 = vst.msk [vmem:[%s2326] sm:$0xff] %vm361, %v5460
    %5465 = vst.msk [vmem:[%s2326 + $0x8] sm:$0xff] %vm361, %v5461
    %5466 = vst.msk [vmem:[%s2326 + $0x10] sm:$0xff] %vm361, %v5462
    %5467 = vst.msk [vmem:[%s2326 + $0x18] sm:$0xff] %vm361, %v5463
    %v5468 = vld [vmem:[%s2653] sm:$0xff]
    %v5469 = vld [vmem:[%s2653 + $0x8] sm:$0xff]
    %v5470 = vld [vmem:[%s2653 + $0x10] sm:$0xff]
    %v5471 = vld [vmem:[%s2653 + $0x18] sm:$0xff]
    %v5472 = vmul.f32 %v5468, %v5325
    %v5473 = vmul.f32 %v5469, %v5325
    %v5474 = vmul.f32 %v5470, %v5325
    %v5475 = vmul.f32 %v5471, %v5325
    %v5476 = vadd.f32 %v5472, %v5334
    %v5477 = vadd.f32 %v5473, %v5334
    %v5478 = vadd.f32 %v5474, %v5334
    %v5479 = vadd.f32 %v5475, %v5334
    %v5480 = vmax.f32 %v5476, 0.0
    %v5481 = vmax.f32 %v5477, 0.0
    %v5482 = vmax.f32 %v5478, 0.0
    %v5483 = vmax.f32 %v5479, 0.0
    %5484 = vst.msk [vmem:[%s2653] sm:$0xff] %vm361, %v5480
    %5485 = vst.msk [vmem:[%s2653 + $0x8] sm:$0xff] %vm361, %v5481
    %5486 = vst.msk [vmem:[%s2653 + $0x10] sm:$0xff] %vm361, %v5482
    %5487 = vst.msk [vmem:[%s2653 + $0x18] sm:$0xff] %vm361, %v5483
    %v5488 = vld [vmem:[%s2980] sm:$0xff]
    %v5489 = vld [vmem:[%s2980 + $0x8] sm:$0xff]
    %v5490 = vld [vmem:[%s2980 + $0x10] sm:$0xff]
    %v5491 = vld [vmem:[%s2980 + $0x18] sm:$0xff]
    %v5492 = vmul.f32 %v5488, %v5325
    %v5493 = vmul.f32 %v5489, %v5325
    %v5494 = vmul.f32 %v5490, %v5325
    %v5495 = vmul.f32 %v5491, %v5325
    %v5496 = vadd.f32 %v5492, %v5334
    %v5497 = vadd.f32 %v5493, %v5334
    %v5498 = vadd.f32 %v5494, %v5334
    %v5499 = vadd.f32 %v5495, %v5334
    %v5500 = vmax.f32 %v5496, 0.0
    %v5501 = vmax.f32 %v5497, 0.0
    %v5502 = vmax.f32 %v5498, 0.0
    %v5503 = vmax.f32 %v5499, 0.0
    %5504 = vst.msk [vmem:[%s2980] sm:$0xff] %vm361, %v5500
    %5505 = vst.msk [vmem:[%s2980 + $0x8] sm:$0xff] %vm361, %v5501
    %5506 = vst.msk [vmem:[%s2980 + $0x10] sm:$0xff] %vm361, %v5502
    %5507 = vst.msk [vmem:[%s2980 + $0x18] sm:$0xff] %vm361, %v5503
    %v5508 = vld [vmem:[%s3307] sm:$0xff]
    %v5509 = vld [vmem:[%s3307 + $0x8] sm:$0xff]
    %v5510 = vld [vmem:[%s3307 + $0x10] sm:$0xff]
    %v5511 = vld [vmem:[%s3307 + $0x18] sm:$0xff]
    %v5512 = vmul.f32 %v5508, %v5325
    %v5513 = vmul.f32 %v5509, %v5325
    %v5514 = vmul.f32 %v5510, %v5325
    %v5515 = vmul.f32 %v5511, %v5325
    %v5516 = vadd.f32 %v5512, %v5334
    %v5517 = vadd.f32 %v5513, %v5334
    %v5518 = vadd.f32 %v5514, %v5334
    %v5519 = vadd.f32 %v5515, %v5334
    %v5520 = vmax.f32 %v5516, 0.0
    %v5521 = vmax.f32 %v5517, 0.0
    %v5522 = vmax.f32 %v5518, 0.0
    %v5523 = vmax.f32 %v5519, 0.0
    %5524 = vst.msk [vmem:[%s3307] sm:$0xff] %vm361, %v5520
    %5525 = vst.msk [vmem:[%s3307 + $0x8] sm:$0xff] %vm361, %v5521
    %5526 = vst.msk [vmem:[%s3307 + $0x10] sm:$0xff] %vm361, %v5522
    %5527 = vst.msk [vmem:[%s3307 + $0x18] sm:$0xff] %vm361, %v5523
    %v5528 = vld [vmem:[%s3634] sm:$0xff]
    %v5529 = vld [vmem:[%s3634 + $0x8] sm:$0xff]
    %v5530 = vld [vmem:[%s3634 + $0x10] sm:$0xff]
    %v5531 = vld [vmem:[%s3634 + $0x18] sm:$0xff]
    %v5532 = vmul.f32 %v5528, %v5325
    %v5533 = vmul.f32 %v5529, %v5325
    %v5534 = vmul.f32 %v5530, %v5325
    %v5535 = vmul.f32 %v5531, %v5325
    %v5536 = vadd.f32 %v5532, %v5334
    %v5537 = vadd.f32 %v5533, %v5334
    %v5538 = vadd.f32 %v5534, %v5334
    %v5539 = vadd.f32 %v5535, %v5334
    %v5540 = vmax.f32 %v5536, 0.0
    %v5541 = vmax.f32 %v5537, 0.0
    %v5542 = vmax.f32 %v5538, 0.0
    %v5543 = vmax.f32 %v5539, 0.0
    %5544 = vst.msk [vmem:[%s3634] sm:$0xff] %vm361, %v5540
    %5545 = vst.msk [vmem:[%s3634 + $0x8] sm:$0xff] %vm361, %v5541
    %5546 = vst.msk [vmem:[%s3634 + $0x10] sm:$0xff] %vm361, %v5542
    %5547 = vst.msk [vmem:[%s3634 + $0x18] sm:$0xff] %vm361, %v5543
    %v5548 = vld [vmem:[%s3961] sm:$0xff]
    %v5549 = vld [vmem:[%s3961 + $0x8] sm:$0xff]
    %v5550 = vld [vmem:[%s3961 + $0x10] sm:$0xff]
    %v5551 = vld [vmem:[%s3961 + $0x18] sm:$0xff]
    %v5552 = vmul.f32 %v5548, %v5325
    %v5553 = vmul.f32 %v5549, %v5325
    %v5554 = vmul.f32 %v5550, %v5325
    %v5555 = vmul.f32 %v5551, %v5325
    %v5556 = vadd.f32 %v5552, %v5334
    %v5557 = vadd.f32 %v5553, %v5334
    %v5558 = vadd.f32 %v5554, %v5334
    %v5559 = vadd.f32 %v5555, %v5334
    %v5560 = vmax.f32 %v5556, 0.0
    %v5561 = vmax.f32 %v5557, 0.0
    %v5562 = vmax.f32 %v5558, 0.0
    %v5563 = vmax.f32 %v5559, 0.0
    %5564 = vst.msk [vmem:[%s3961] sm:$0xff] %vm361, %v5560
    %5565 = vst.msk [vmem:[%s3961 + $0x8] sm:$0xff] %vm361, %v5561
    %5566 = vst.msk [vmem:[%s3961 + $0x10] sm:$0xff] %vm361, %v5562
    %5567 = vst.msk [vmem:[%s3961 + $0x18] sm:$0xff] %vm361, %v5563
    %v5568 = vld [vmem:[%s4288] sm:$0xff]
    %v5569 = vld [vmem:[%s4288 + $0x8] sm:$0xff]
    %v5570 = vld [vmem:[%s4288 + $0x10] sm:$0xff]
    %v5571 = vld [vmem:[%s4288 + $0x18] sm:$0xff]
    %v5572 = vmul.f32 %v5568, %v5325
    %v5573 = vmul.f32 %v5569, %v5325
    %v5574 = vmul.f32 %v5570, %v5325
    %v5575 = vmul.f32 %v5571, %v5325
    %v5576 = vadd.f32 %v5572, %v5334
    %v5577 = vadd.f32 %v5573, %v5334
    %v5578 = vadd.f32 %v5574, %v5334
    %v5579 = vadd.f32 %v5575, %v5334
    %v5580 = vmax.f32 %v5576, 0.0
    %v5581 = vmax.f32 %v5577, 0.0
    %v5582 = vmax.f32 %v5578, 0.0
    %v5583 = vmax.f32 %v5579, 0.0
    %5584 = vst.msk [vmem:[%s4288] sm:$0xff] %vm361, %v5580
    %5585 = vst.msk [vmem:[%s4288 + $0x8] sm:$0xff] %vm361, %v5581
    %5586 = vst.msk [vmem:[%s4288 + $0x10] sm:$0xff] %vm361, %v5582
    %5587 = vst.msk [vmem:[%s4288 + $0x18] sm:$0xff] %vm361, %v5583
    %v5588 = vld [vmem:[%s4615] sm:$0xff]
    %v5589 = vld [vmem:[%s4615 + $0x8] sm:$0xff]
    %v5590 = vld [vmem:[%s4615 + $0x10] sm:$0xff]
    %v5591 = vld [vmem:[%s4615 + $0x18] sm:$0xff]
    %v5592 = vmul.f32 %v5588, %v5325
    %v5593 = vmul.f32 %v5589, %v5325
    %v5594 = vmul.f32 %v5590, %v5325
    %v5595 = vmul.f32 %v5591, %v5325
    %v5596 = vadd.f32 %v5592, %v5334
    %v5597 = vadd.f32 %v5593, %v5334
    %v5598 = vadd.f32 %v5594, %v5334
    %v5599 = vadd.f32 %v5595, %v5334
    %v5600 = vmax.f32 %v5596, 0.0
    %v5601 = vmax.f32 %v5597, 0.0
    %v5602 = vmax.f32 %v5598, 0.0
    %v5603 = vmax.f32 %v5599, 0.0
    %5604 = vst.msk [vmem:[%s4615] sm:$0xff] %vm361, %v5600
    %5605 = vst.msk [vmem:[%s4615 + $0x8] sm:$0xff] %vm361, %v5601
    %5606 = vst.msk [vmem:[%s4615 + $0x10] sm:$0xff] %vm361, %v5602
    %5607 = vst.msk [vmem:[%s4615 + $0x18] sm:$0xff] %vm361, %v5603
    %v5608 = vld [vmem:[%s4942] sm:$0xff]
    %v5609 = vld [vmem:[%s4942 + $0x8] sm:$0xff]
    %v5610 = vld [vmem:[%s4942 + $0x10] sm:$0xff]
    %v5611 = vld [vmem:[%s4942 + $0x18] sm:$0xff]
    %v5612 = vmul.f32 %v5608, %v5325
    %v5613 = vmul.f32 %v5609, %v5325
    %v5614 = vmul.f32 %v5610, %v5325
    %v5615 = vmul.f32 %v5611, %v5325
    %v5616 = vadd.f32 %v5612, %v5334
    %v5617 = vadd.f32 %v5613, %v5334
    %v5618 = vadd.f32 %v5614, %v5334
    %v5619 = vadd.f32 %v5615, %v5334
    %v5620 = vmax.f32 %v5616, 0.0
    %v5621 = vmax.f32 %v5617, 0.0
    %v5622 = vmax.f32 %v5618, 0.0
    %v5623 = vmax.f32 %v5619, 0.0
    %5624 = vst.msk [vmem:[%s4942] sm:$0xff] %vm361, %v5620
    %5625 = vst.msk [vmem:[%s4942 + $0x8] sm:$0xff] %vm361, %v5621
    %5626 = vst.msk [vmem:[%s4942 + $0x10] sm:$0xff] %vm361, %v5622
    %5627 = vst.msk [vmem:[%s4942 + $0x18] sm:$0xff] %vm361, %v5623
    %v5628 = vld [vmem:[%s5269] sm:$0xff]
    %v5629 = vld [vmem:[%s5269 + $0x8] sm:$0xff]
    %v5630 = vld [vmem:[%s5269 + $0x10] sm:$0xff]
    %v5631 = vld [vmem:[%s5269 + $0x18] sm:$0xff]
    %v5632 = vmul.f32 %v5628, %v5325
    %v5633 = vmul.f32 %v5629, %v5325
    %v5634 = vmul.f32 %v5630, %v5325
    %v5635 = vmul.f32 %v5631, %v5325
    %v5636 = vadd.f32 %v5632, %v5334
    %v5637 = vadd.f32 %v5633, %v5334
    %v5638 = vadd.f32 %v5634, %v5334
    %v5639 = vadd.f32 %v5635, %v5334
    %v5640 = vmax.f32 %v5636, 0.0
    %v5641 = vmax.f32 %v5637, 0.0
    %v5642 = vmax.f32 %v5638, 0.0
    %v5643 = vmax.f32 %v5639, 0.0
    %5644 = vst.msk [vmem:[%s5269] sm:$0xff] %vm361, %v5640
    %5645 = vst.msk [vmem:[%s5269 + $0x8] sm:$0xff] %vm361, %v5641
    %5646 = vst.msk [vmem:[%s5269 + $0x10] sm:$0xff] %vm361, %v5642
    %5647 = vst.msk [vmem:[%s5269 + $0x18] sm:$0xff] %vm361, %v5643
    // Predicated region
    $region34: #{generator3layers_forward.4} parent=1 // pred_check
      _
    $region35: #{generator3layers_forward.4} parent=1 // pred_check_branch
      %5649 = sbr.rel (0) target = $region37
    $region36: #{generator3layers_forward.4} parent=1 // pred_region
      _
    $region37: #{generator3layers_forward.4} parent=1 // pred_fallthru
      _
    // Predicated region
    $region38: #{generator3layers_forward.4} parent=1 // pred_check
      _
    $region39: #{generator3layers_forward.4} parent=1 // pred_check_branch
      %5651 = sbr.rel (0) target = $region41
    $region40: #{generator3layers_forward.4} parent=1 // pred_region
      _
    $region41: #{generator3layers_forward.4} parent=1 // pred_fallthru
      _
    %5652 = vsyncpa [#allocation3], 1
    %5653 = vsyncpa [#allocation5], 1

</llo_original>
